<compile_context>
chip_gen: v7x
topology: tpu7x:2x2x1
jax: 0.10.0
libtpu: 0.0.40
codegen_flags: <defaults>
</compile_context>

<pallas_src>
import jax
import jax.numpy as jnp
from jax.experimental import pallas as pl
from jax.experimental.pallas import tpu as pltpu

# Set to jnp.bfloat16 to halve DMA bytes and double MXU rate (accumulation stays f32).
# Kept at float32 to match the PyTorch module's numerics exactly.
COMPUTE_DTYPE = jnp.float32

# (H == W, Cin, Cout) for the three conv stages of the 64x64 ShapesBaseModel.
_STAGES = ((64, 3, 8), (32, 8, 16), (16, 16, 32))


# ---------------------- fused conv3x3 + bias + ReLU + maxpool2x2 ----------------------

def _conv_pool_kernel(x_ref, w_ref, b_ref, o_ref):
    """One image per grid step.

    x_ref: (Ho+1, 2*(W+2)*Cin)  padded input, two image rows packed per sublane row,
                                lanes are (w, cin) channel-fastest.
    w_ref: (2, 2*(W+2)*Cin, 2*W*Cout)  banded conv weights; slab 0 multiplies packed
                                row q, slab 1 multiplies packed row q+1.  Output cols:
                                [even conv row | odd conv row], each [even-w | odd-w].
    b_ref: (1, W*Cout)          bias tiled across w (channel fastest).
    o_ref: (Ho, (W//2)*Cout)    ReLU + 2x2-maxpooled output, lanes = (w, cout).
    """
    Ho = o_ref.shape[0]
    half = o_ref.shape[1]          # (W//2) * Cout
    wc = 2 * half                  # W * Cout
    acc = jnp.dot(x_ref[pl.ds(0, Ho), :], w_ref[0],
                  preferred_element_type=jnp.float32)
    acc = acc + jnp.dot(x_ref[pl.ds(1, Ho), :], w_ref[1],
                        preferred_element_type=jnp.float32)
    # vertical half of the 2x2 pool (max over the two conv rows), then bias + ReLU
    v = jnp.maximum(jnp.maximum(acc[:, :wc], acc[:, wc:]) + b_ref[...], 0.0)
    # horizontal half of the pool: max over the [even-w | odd-w] column halves
    o_ref[...] = jnp.maximum(v[:, :half], v[:, half:]).astype(o_ref.dtype)


def conv_relu_pool(x_packed, w_packed, b_tiled):
    """x_packed: (B, H//2+1, 2*(W+2)*Cin) -> (B, H//2, (W//2)*Cout)."""
    B, Hq, L = x_packed.shape
    WC = b_tiled.shape[1]
    Ho, half = Hq - 1, WC // 2
    return pl.pallas_call(
        _conv_pool_kernel,
        grid=(B,),
        in_specs=[
            pl.BlockSpec((None, Hq, L), lambda b: (b, 0, 0)),
            pl.BlockSpec(w_packed.shape, lambda b: (0, 0, 0)),   # resident weights
            pl.BlockSpec(b_tiled.shape, lambda b: (0, 0)),       # resident bias
        ],
        out_specs=pl.BlockSpec((None, Ho, half), lambda b: (b, 0, 0)),
        out_shape=jax.ShapeDtypeStruct((B, Ho, half), x_packed.dtype),
        compiler_params=pltpu.CompilerParams(dimension_semantics=("parallel",)),
    )(x_packed, w_packed, b_tiled)


# ----------------------------------------- head ----------------------------------------

def _make_head_kernel(use_sigmoid, use_relu, hard, two_layers):
    def kernel(feat_ref, w1_ref, b1_ref, wa_ref, ba_ref, wi_ref, bi_ref,
               wf_ref, bf_ref, logits_ref, concepts_ref):
        # fc1 + ReLU (end of ShapesBaseModel.forward)
        h = jnp.dot(feat_ref[...], w1_ref[...], preferred_element_type=jnp.float32)
        h = jnp.maximum(h + b1_ref[...], 0.0)
        # dropout: identity at inference time
        concepts = jnp.dot(h.astype(wa_ref.dtype), wa_ref[...],
                           preferred_element_type=jnp.float32) + ba_ref[...]
        concepts_ref[...] = concepts.astype(concepts_ref.dtype)
        z = concepts
        if use_sigmoid:
            z = jax.nn.sigmoid(z)
        elif use_relu:
            z = jnp.maximum(z, 0.0)
        if hard:
            z = jnp.round(z)
        if two_layers:
            z = jnp.dot(z.astype(wi_ref.dtype), wi_ref[...],
                        preferred_element_type=jnp.float32) + bi_ref[...]
            z = jnp.maximum(z, 0.0)
        logits = jnp.dot(z.astype(wf_ref.dtype), wf_ref[...],
                         preferred_element_type=jnp.float32) + bf_ref[...]
        logits_ref[...] = logits.astype(logits_ref.dtype)
    return kernel


def cbm_head(feat, kp, *, use_sigmoid=False, use_relu=False, hard=False,
             two_layers=True, block_b=256):
    B, F = feat.shape
    n_attr = kp["attr_b"].shape[-1]
    n_classes = kp["final_b"].shape[-1]
    TB = min(B, block_b)

    def full(a):
        return pl.BlockSpec(a.shape, lambda i, _nd=a.ndim: (0,) * _nd)

    return pl.pallas_call(
        _make_head_kernel(use_sigmoid, use_relu, hard, two_layers),
        grid=(pl.cdiv(B, TB),),
        in_specs=[
            pl.BlockSpec((TB, F), lambda i: (i, 0)),
            full(kp["fc1_w"]), full(kp["fc1_b"]),
            full(kp["attr_w"]), full(kp["attr_b"]),
            full(kp["inter_w"]), full(kp["inter_b"]),
            full(kp["final_w"]), full(kp["final_b"]),
        ],
        out_specs=(pl.BlockSpec((TB, n_classes), lambda i: (i, 0)),
                   pl.BlockSpec((TB, n_attr), lambda i: (i, 0))),
        out_shape=(jax.ShapeDtypeStruct((B, n_classes), jnp.float32),
                   jax.ShapeDtypeStruct((B, n_attr), jnp.float32)),
        compiler_params=pltpu.CompilerParams(dimension_semantics=("parallel",)),
    )(feat, kp["fc1_w"], kp["fc1_b"], kp["attr_w"], kp["attr_b"],
      kp["inter_w"], kp["inter_b"], kp["final_w"], kp["final_b"])


# ------------------------------------ full forward -------------------------------------

def shapes_cbm_forward(x_nchw, kp, *, use_sigmoid=False, use_relu=False, hard=False,
                       two_layers=True):
    B = x_nchw.shape[0]
    act_dtype = kp["fc1_w"].dtype
    # NCHW -> lane-dense (B, H, W*Cin) channel-fastest layout
    x = jnp.transpose(x_nchw, (0, 2, 3, 1)).reshape(B, 64, 64 * 3).astype(act_dtype)
    for (W, Cin, Cout), w_packed, b_tiled in zip(_STAGES, kp["conv_w"], kp["conv_b"]):
        H = W
        x = jnp.pad(x, ((0, 0), (1, 1), (Cin, Cin)))            # 'same' padding
        x = x.reshape(B, (H + 2) // 2, 2 * (W + 2) * Cin)       # pack row pairs
        x = conv_relu_pool(x, w_packed, b_tiled)                # (B, H//2, (W//2)*Cout)
    feat = x.reshape(B, 8 * 8 * 32)                             # (B, 2048), no transpose
    return cbm_head(feat, kp, use_sigmoid=use_sigmoid, use_relu=use_relu, hard=hard,
                    two_layers=two_layers)


# --------------------------- offline parameter transformations --------------------------

def _make_packed_conv_weights(w_hwio, W, dtype):
    """(3,3,Cin,Cout) conv kernel -> (2, 2*(W+2)*Cin, 2*W*Cout) banded GEMM weights."""
    _, _, Cin, Cout = w_hwio.shape
    WpC = (W + 2) * Cin
    WC = W * Cout
    half = (W // 2) * Cout
    # output-column permutation: [even-w | odd-w], channel fastest within each block
    p = jnp.arange(WC)
    parity, within = p // half, p % half
    col_src = (2 * (within // Cout) + parity) * Cout + (within % Cout)
    eye = jnp.eye(W, dtype=jnp.float32)
    big = []
    for kh in range(3):
        acc = jnp.zeros((WpC, WC), jnp.float32)
        for kw in range(3):
            bd = jnp.einsum("wv,co->wcvo", eye,
                            w_hwio[kh, kw].astype(jnp.float32)).reshape(W * Cin, WC)
            acc = acc.at[kw * Cin:kw * Cin + W * Cin, :].add(bd)
        big.append(acc[:, col_src])
    zero = jnp.zeros_like(big[0])
    # slab 0 hits packed row q = (P[2q], P[2q+1]); slab 1 hits row q+1 = (P[2q+2], P[2q+3])
    w0 = jnp.concatenate([jnp.concatenate([big[0], big[1]], axis=0),   # even conv rows
                          jnp.concatenate([zero,   big[0]], axis=0)],  # odd conv rows
                         axis=1)
    w1 = jnp.concatenate([jnp.concatenate([big[2], zero], axis=0),
                          jnp.concatenate([big[1], big[2]], axis=0)],
                         axis=1)
    return jnp.stack([w0, w1], axis=0).astype(dtype)


def prepare_kernel_params(p, dtype=COMPUTE_DTYPE):
    kp = {"conv_w": [], "conv_b": []}
    for idx, (W, _, Cout) in enumerate(_STAGES, start=1):
        kp["conv_w"].append(_make_packed_conv_weights(p[f"conv{idx}_w"], W, dtype))
        kp["conv_b"].append(jnp.tile(p[f"conv{idx}_b"], (W,)).reshape(1, W * Cout)
                            .astype(jnp.float32))
    # fold torch.flatten(NCHW) order into fc1's rows (done once, offline)
    Ho, Wo, C = 8, 8, 32
    i = jnp.arange(Ho * Wo * C)
    h, w, c = i // (Wo * C), (i % (Wo * C)) // C, i % C
    torch_idx = c * (Ho * Wo) + h * Wo + w
    kp["fc1_w"] = p["fc1_w"][torch_idx, :].astype(dtype)
    kp["fc1_b"] = p["fc1_b"].reshape(1, -1).astype(jnp.float32)
    for name in ("attr", "inter", "final"):
        kp[f"{name}_w"] = p[f"{name}_w"].astype(dtype)
        kp[f"{name}_b"] = p[f"{name}_b"].reshape(1, -1).astype(jnp.float32)
    return kp


def _uniform_init(key, fan_in, shape_w, shape_b):
    kw, kb = jax.random.split(key)
    bound = 1.0 / jnp.sqrt(float(fan_in))
    w = jax.random.uniform(kw, shape_w, jnp.float32, -bound, bound)
    b = jax.random.uniform(kb, shape_b, jnp.float32, -bound, bound)
    return w, b


def make_params(key, n_classes, n_attr, n_linear_output=64):
    ks = jax.random.split(key, 7)
    p = {}
    p["conv1_w"], p["conv1_b"] = _uniform_init(ks[0], 3 * 3 * 3, (3, 3, 3, 8), (8,))
    p["conv2_w"], p["conv2_b"] = _uniform_init(ks[1], 3 * 3 * 8, (3, 3, 8, 16), (16,))
    p["conv3_w"], p["conv3_b"] = _uniform_init(ks[2], 3 * 3 * 16, (3, 3, 16, 32), (32,))
    p["fc1_w"], p["fc1_b"] = _uniform_init(ks[3], 2048, (2048, n_linear_output),
                                           (n_linear_output,))
    p["attr_w"], p["attr_b"] = _uniform_init(ks[4], n_linear_output,
                                             (n_linear_output, n_attr), (n_attr,))
    p["inter_w"], p["inter_b"] = _uniform_init(ks[5], n_attr, (n_attr, n_attr), (n_attr,))
    p["final_w"], p["final_b"] = _uniform_init(ks[6], n_attr, (n_attr, n_classes),
                                               (n_classes,))
    return p


if __name__ == "__main__":
    n_classes, n_attr = 5, 8
    key = jax.random.PRNGKey(0)
    kx, kparam = jax.random.split(key)
    # Spatial size is fixed at 64x64 by the module (fc1 expects 2048 = 32*8*8).
    x = jax.random.normal(kx, (2, 3, 64, 64), jnp.float32)
    params = make_params(kparam, n_classes, n_attr)
    kp = prepare_kernel_params(params)

    fwd = jax.jit(shapes_cbm_forward)
    logits, concepts = fwd(x, kp)
    jax.block_until_ready((logits, concepts))

    assert logits.shape == (2, n_classes) and concepts.shape == (2, n_attr)
    assert bool(jnp.all(jnp.isfinite(logits))) and bool(jnp.all(jnp.isfinite(concepts)))
    print("KERNEL_OK")
</pallas_src>

<mosaic_0001>
module attributes {stable_mosaic.version = 11 : i64} {
  func.func @_conv_pool_kernel(%arg0: i32, %arg1: memref<1x33x396xf32, #tpu.memory_space<vmem>>, %arg2: memref<2x396x1024xf32, #tpu.memory_space<vmem>>, %arg3: memref<1x512xf32, #tpu.memory_space<vmem>>, %arg4: memref<1x32x256xf32, #tpu.memory_space<vmem>>) attributes {dimension_semantics = [#tpu.dimension_semantics<parallel>], iteration_bounds = array<i64: 2>, scalar_prefetch = 0 : i64, scratch_operands = 0 : i64, tpu.core_type = #tpu.core_type<tc>, window_params = [{transform_indices = @transform_0, window_bounds = array<i64: 1, 33, 396>}, {pipeline_mode = #tpu.pipeline_mode<synchronous>, transform_indices = @transform_1, window_bounds = array<i64: 2, 396, 1024>}, {pipeline_mode = #tpu.pipeline_mode<synchronous>, transform_indices = @transform_2, window_bounds = array<i64: 1, 512>}, {transform_indices = @transform_3, window_bounds = array<i64: 1, 32, 256>}]} {
    %c0 = arith.constant 0 : index
    %c0_0 = arith.constant 0 : index
    %c0_1 = arith.constant 0 : index
    %0 = vector.load %arg1[%c0, %c0_0, %c0_1] : memref<1x33x396xf32, #tpu.memory_space<vmem>>, vector<1x32x396xf32>
    %1 = vector.shape_cast %0 : vector<1x32x396xf32> to vector<32x396xf32>
    %c0_2 = arith.constant 0 : index
    %c0_3 = arith.constant 0 : index
    %c0_4 = arith.constant 0 : index
    %2 = vector.load %arg2[%c0_2, %c0_3, %c0_4] : memref<2x396x1024xf32, #tpu.memory_space<vmem>>, vector<1x396x1024xf32>
    %3 = vector.shape_cast %2 : vector<1x396x1024xf32> to vector<396x1024xf32>
    %cst = arith.constant dense<0.000000e+00> : vector<32x1024xf32>
    %4 = tpu.matmul %1, %3, %cst {dimension_numbers = #tpu.dot_dimension_numbers<[1], [0], [0], [1], [0, 0, 1, 1], [], []>} : vector<32x396xf32>, vector<396x1024xf32>, vector<32x1024xf32> -> vector<32x1024xf32>
    %c0_5 = arith.constant 0 : index
    %c1 = arith.constant 1 : index
    %c0_6 = arith.constant 0 : index
    %5 = vector.load %arg1[%c0_5, %c1, %c0_6] : memref<1x33x396xf32, #tpu.memory_space<vmem>>, vector<1x32x396xf32>
    %6 = vector.shape_cast %5 : vector<1x32x396xf32> to vector<32x396xf32>
    %c1_7 = arith.constant 1 : index
    %c0_8 = arith.constant 0 : index
    %c0_9 = arith.constant 0 : index
    %7 = vector.load %arg2[%c1_7, %c0_8, %c0_9] : memref<2x396x1024xf32, #tpu.memory_space<vmem>>, vector<1x396x1024xf32>
    %8 = vector.shape_cast %7 : vector<1x396x1024xf32> to vector<396x1024xf32>
    %cst_10 = arith.constant dense<0.000000e+00> : vector<32x1024xf32>
    %9 = tpu.matmul %6, %8, %cst_10 {dimension_numbers = #tpu.dot_dimension_numbers<[1], [0], [0], [1], [0, 0, 1, 1], [], []>} : vector<32x396xf32>, vector<396x1024xf32>, vector<32x1024xf32> -> vector<32x1024xf32>
    %10 = arith.addf %4, %9 : vector<32x1024xf32>
    %11 = vector.extract_strided_slice %10 {offsets = [0, 0], sizes = [32, 512], strides = [1, 1]} : vector<32x1024xf32> to vector<32x512xf32>
    %12 = vector.extract_strided_slice %10 {offsets = [0, 512], sizes = [32, 512], strides = [1, 1]} : vector<32x1024xf32> to vector<32x512xf32>
    %13 = arith.maximumf %11, %12 : vector<32x512xf32>
    %c0_11 = arith.constant 0 : index
    %c0_12 = arith.constant 0 : index
    %14 = vector.load %arg3[%c0_11, %c0_12] : memref<1x512xf32, #tpu.memory_space<vmem>>, vector<1x512xf32>
    %15 = vector.broadcast %14 : vector<1x512xf32> to vector<32x512xf32>
    %16 = arith.addf %13, %15 : vector<32x512xf32>
    %cst_13 = arith.constant 0.000000e+00 : f32
    %17 = vector.broadcast %cst_13 : f32 to vector<32x512xf32>
    %18 = arith.maximumf %16, %17 : vector<32x512xf32>
    %19 = vector.extract_strided_slice %18 {offsets = [0, 0], sizes = [32, 256], strides = [1, 1]} : vector<32x512xf32> to vector<32x256xf32>
    %20 = vector.extract_strided_slice %18 {offsets = [0, 256], sizes = [32, 256], strides = [1, 1]} : vector<32x512xf32> to vector<32x256xf32>
    %21 = arith.maximumf %19, %20 : vector<32x256xf32>
    %c0_14 = arith.constant 0 : index
    %c0_15 = arith.constant 0 : index
    %c0_16 = arith.constant 0 : index
    %22 = vector.load %arg4[%c0_14, %c0_15, %c0_16] : memref<1x32x256xf32, #tpu.memory_space<vmem>>, vector<1x32x256xf32>
    %23 = vector.shape_cast %22 : vector<1x32x256xf32> to vector<32x256xf32>
    %24 = vector.shape_cast %21 : vector<32x256xf32> to vector<1x32x256xf32>
    tpu.vector_store %arg4[%c0_14, %c0_15, %c0_16], %24 {strides = array<i32>} : memref<1x32x256xf32, #tpu.memory_space<vmem>>, vector<1x32x256xf32>,
    return
  }
  func.func @transform_0(%arg0: i32) -> (i32, i32, i32) {
    %c0_i32 = arith.constant 0 : i32
    %c0_i32_0 = arith.constant 0 : i32
    %c0_i32_1 = arith.constant 0 : i32
    return %arg0, %c0_i32, %c0_i32_0 : i32, i32, i32
  }
  func.func @transform_1(%arg0: i32) -> (i32, i32, i32) {
    %c0_i32 = arith.constant 0 : i32
    %c0_i32_0 = arith.constant 0 : i32
    %c0_i32_1 = arith.constant 0 : i32
    %c0_i32_2 = arith.constant 0 : i32
    return %c0_i32, %c0_i32_0, %c0_i32_1 : i32, i32, i32
  }
  func.func @transform_2(%arg0: i32) -> (i32, i32) {
    %c0_i32 = arith.constant 0 : i32
    %c0_i32_0 = arith.constant 0 : i32
    %c0_i32_1 = arith.constant 0 : i32
    return %c0_i32, %c0_i32_0 : i32, i32
  }
  func.func @transform_3(%arg0: i32) -> (i32, i32, i32) {
    %c0_i32 = arith.constant 0 : i32
    %c0_i32_0 = arith.constant 0 : i32
    %c0_i32_1 = arith.constant 0 : i32
    return %arg0, %c0_i32, %c0_i32_0 : i32, i32, i32
  }
}

module attributes {stable_mosaic.version = 11 : i64} {
  func.func @_conv_pool_kernel(%arg0: i32, %arg1: memref<1x17x544xf32, #tpu.memory_space<vmem>>, %arg2: memref<2x544x1024xf32, #tpu.memory_space<vmem>>, %arg3: memref<1x512xf32, #tpu.memory_space<vmem>>, %arg4: memref<1x16x256xf32, #tpu.memory_space<vmem>>) attributes {dimension_semantics = [#tpu.dimension_semantics<parallel>], iteration_bounds = array<i64: 2>, scalar_prefetch = 0 : i64, scratch_operands = 0 : i64, tpu.core_type = #tpu.core_type<tc>, window_params = [{transform_indices = @transform_0, window_bounds = array<i64: 1, 17, 544>}, {pipeline_mode = #tpu.pipeline_mode<synchronous>, transform_indices = @transform_1, window_bounds = array<i64: 2, 544, 1024>}, {pipeline_mode = #tpu.pipeline_mode<synchronous>, transform_indices = @transform_2, window_bounds = array<i64: 1, 512>}, {transform_indices = @transform_3, window_bounds = array<i64: 1, 16, 256>}]} {
    %c0 = arith.constant 0 : index
    %c0_0 = arith.constant 0 : index
    %c0_1 = arith.constant 0 : index
    %0 = vector.load %arg1[%c0, %c0_0, %c0_1] : memref<1x17x544xf32, #tpu.memory_space<vmem>>, vector<1x16x544xf32>
    %1 = vector.shape_cast %0 : vector<1x16x544xf32> to vector<16x544xf32>
    %c0_2 = arith.constant 0 : index
    %c0_3 = arith.constant 0 : index
    %c0_4 = arith.constant 0 : index
    %2 = vector.load %arg2[%c0_2, %c0_3, %c0_4] : memref<2x544x1024xf32, #tpu.memory_space<vmem>>, vector<1x544x1024xf32>
    %3 = vector.shape_cast %2 : vector<1x544x1024xf32> to vector<544x1024xf32>
    %cst = arith.constant dense<0.000000e+00> : vector<16x1024xf32>
    %4 = tpu.matmul %1, %3, %cst {dimension_numbers = #tpu.dot_dimension_numbers<[1], [0], [0], [1], [0, 0, 1, 1], [], []>} : vector<16x544xf32>, vector<544x1024xf32>, vector<16x1024xf32> -> vector<16x1024xf32>
    %c0_5 = arith.constant 0 : index
    %c1 = arith.constant 1 : index
    %c0_6 = arith.constant 0 : index
    %5 = vector.load %arg1[%c0_5, %c1, %c0_6] : memref<1x17x544xf32, #tpu.memory_space<vmem>>, vector<1x16x544xf32>
    %6 = vector.shape_cast %5 : vector<1x16x544xf32> to vector<16x544xf32>
    %c1_7 = arith.constant 1 : index
    %c0_8 = arith.constant 0 : index
    %c0_9 = arith.constant 0 : index
    %7 = vector.load %arg2[%c1_7, %c0_8, %c0_9] : memref<2x544x1024xf32, #tpu.memory_space<vmem>>, vector<1x544x1024xf32>
    %8 = vector.shape_cast %7 : vector<1x544x1024xf32> to vector<544x1024xf32>
    %cst_10 = arith.constant dense<0.000000e+00> : vector<16x1024xf32>
    %9 = tpu.matmul %6, %8, %cst_10 {dimension_numbers = #tpu.dot_dimension_numbers<[1], [0], [0], [1], [0, 0, 1, 1], [], []>} : vector<16x544xf32>, vector<544x1024xf32>, vector<16x1024xf32> -> vector<16x1024xf32>
    %10 = arith.addf %4, %9 : vector<16x1024xf32>
    %11 = vector.extract_strided_slice %10 {offsets = [0, 0], sizes = [16, 512], strides = [1, 1]} : vector<16x1024xf32> to vector<16x512xf32>
    %12 = vector.extract_strided_slice %10 {offsets = [0, 512], sizes = [16, 512], strides = [1, 1]} : vector<16x1024xf32> to vector<16x512xf32>
    %13 = arith.maximumf %11, %12 : vector<16x512xf32>
    %c0_11 = arith.constant 0 : index
    %c0_12 = arith.constant 0 : index
    %14 = vector.load %arg3[%c0_11, %c0_12] : memref<1x512xf32, #tpu.memory_space<vmem>>, vector<1x512xf32>
    %15 = vector.broadcast %14 : vector<1x512xf32> to vector<16x512xf32>
    %16 = arith.addf %13, %15 : vector<16x512xf32>
    %cst_13 = arith.constant 0.000000e+00 : f32
    %17 = vector.broadcast %cst_13 : f32 to vector<16x512xf32>
    %18 = arith.maximumf %16, %17 : vector<16x512xf32>
    %19 = vector.extract_strided_slice %18 {offsets = [0, 0], sizes = [16, 256], strides = [1, 1]} : vector<16x512xf32> to vector<16x256xf32>
    %20 = vector.extract_strided_slice %18 {offsets = [0, 256], sizes = [16, 256], strides = [1, 1]} : vector<16x512xf32> to vector<16x256xf32>
    %21 = arith.maximumf %19, %20 : vector<16x256xf32>
    %c0_14 = arith.constant 0 : index
    %c0_15 = arith.constant 0 : index
    %c0_16 = arith.constant 0 : index
    %22 = vector.load %arg4[%c0_14, %c0_15, %c0_16] : memref<1x16x256xf32, #tpu.memory_space<vmem>>, vector<1x16x256xf32>
    %23 = vector.shape_cast %22 : vector<1x16x256xf32> to vector<16x256xf32>
    %24 = vector.shape_cast %21 : vector<16x256xf32> to vector<1x16x256xf32>
    tpu.vector_store %arg4[%c0_14, %c0_15, %c0_16], %24 {strides = array<i32>} : memref<1x16x256xf32, #tpu.memory_space<vmem>>, vector<1x16x256xf32>,
    return
  }
  func.func @transform_0(%arg0: i32) -> (i32, i32, i32) {
    %c0_i32 = arith.constant 0 : i32
    %c0_i32_0 = arith.constant 0 : i32
    %c0_i32_1 = arith.constant 0 : i32
    return %arg0, %c0_i32, %c0_i32_0 : i32, i32, i32
  }
  func.func @transform_1(%arg0: i32) -> (i32, i32, i32) {
    %c0_i32 = arith.constant 0 : i32
    %c0_i32_0 = arith.constant 0 : i32
    %c0_i32_1 = arith.constant 0 : i32
    %c0_i32_2 = arith.constant 0 : i32
    return %c0_i32, %c0_i32_0, %c0_i32_1 : i32, i32, i32
  }
  func.func @transform_2(%arg0: i32) -> (i32, i32) {
    %c0_i32 = arith.constant 0 : i32
    %c0_i32_0 = arith.constant 0 : i32
    %c0_i32_1 = arith.constant 0 : i32
    return %c0_i32, %c0_i32_0 : i32, i32
  }
  func.func @transform_3(%arg0: i32) -> (i32, i32, i32) {
    %c0_i32 = arith.constant 0 : i32
    %c0_i32_0 = arith.constant 0 : i32
    %c0_i32_1 = arith.constant 0 : i32
    return %arg0, %c0_i32, %c0_i32_0 : i32, i32, i32
  }
}

module attributes {stable_mosaic.version = 11 : i64} {
  func.func @_conv_pool_kernel(%arg0: i32, %arg1: memref<1x9x576xf32, #tpu.memory_space<vmem>>, %arg2: memref<2x576x1024xf32, #tpu.memory_space<vmem>>, %arg3: memref<1x512xf32, #tpu.memory_space<vmem>>, %arg4: memref<1x8x256xf32, #tpu.memory_space<vmem>>) attributes {dimension_semantics = [#tpu.dimension_semantics<parallel>], iteration_bounds = array<i64: 2>, scalar_prefetch = 0 : i64, scratch_operands = 0 : i64, tpu.core_type = #tpu.core_type<tc>, window_params = [{transform_indices = @transform_0, window_bounds = array<i64: 1, 9, 576>}, {pipeline_mode = #tpu.pipeline_mode<synchronous>, transform_indices = @transform_1, window_bounds = array<i64: 2, 576, 1024>}, {pipeline_mode = #tpu.pipeline_mode<synchronous>, transform_indices = @transform_2, window_bounds = array<i64: 1, 512>}, {transform_indices = @transform_3, window_bounds = array<i64: 1, 8, 256>}]} {
    %c0 = arith.constant 0 : index
    %c0_0 = arith.constant 0 : index
    %c0_1 = arith.constant 0 : index
    %0 = vector.load %arg1[%c0, %c0_0, %c0_1] : memref<1x9x576xf32, #tpu.memory_space<vmem>>, vector<1x8x576xf32>
    %1 = vector.shape_cast %0 : vector<1x8x576xf32> to vector<8x576xf32>
    %c0_2 = arith.constant 0 : index
    %c0_3 = arith.constant 0 : index
    %c0_4 = arith.constant 0 : index
    %2 = vector.load %arg2[%c0_2, %c0_3, %c0_4] : memref<2x576x1024xf32, #tpu.memory_space<vmem>>, vector<1x576x1024xf32>
    %3 = vector.shape_cast %2 : vector<1x576x1024xf32> to vector<576x1024xf32>
    %cst = arith.constant dense<0.000000e+00> : vector<8x1024xf32>
    %4 = tpu.matmul %1, %3, %cst {dimension_numbers = #tpu.dot_dimension_numbers<[1], [0], [0], [1], [0, 0, 1, 1], [], []>} : vector<8x576xf32>, vector<576x1024xf32>, vector<8x1024xf32> -> vector<8x1024xf32>
    %c0_5 = arith.constant 0 : index
    %c1 = arith.constant 1 : index
    %c0_6 = arith.constant 0 : index
    %5 = vector.load %arg1[%c0_5, %c1, %c0_6] : memref<1x9x576xf32, #tpu.memory_space<vmem>>, vector<1x8x576xf32>
    %6 = vector.shape_cast %5 : vector<1x8x576xf32> to vector<8x576xf32>
    %c1_7 = arith.constant 1 : index
    %c0_8 = arith.constant 0 : index
    %c0_9 = arith.constant 0 : index
    %7 = vector.load %arg2[%c1_7, %c0_8, %c0_9] : memref<2x576x1024xf32, #tpu.memory_space<vmem>>, vector<1x576x1024xf32>
    %8 = vector.shape_cast %7 : vector<1x576x1024xf32> to vector<576x1024xf32>
    %cst_10 = arith.constant dense<0.000000e+00> : vector<8x1024xf32>
    %9 = tpu.matmul %6, %8, %cst_10 {dimension_numbers = #tpu.dot_dimension_numbers<[1], [0], [0], [1], [0, 0, 1, 1], [], []>} : vector<8x576xf32>, vector<576x1024xf32>, vector<8x1024xf32> -> vector<8x1024xf32>
    %10 = arith.addf %4, %9 : vector<8x1024xf32>
    %11 = vector.extract_strided_slice %10 {offsets = [0, 0], sizes = [8, 512], strides = [1, 1]} : vector<8x1024xf32> to vector<8x512xf32>
    %12 = vector.extract_strided_slice %10 {offsets = [0, 512], sizes = [8, 512], strides = [1, 1]} : vector<8x1024xf32> to vector<8x512xf32>
    %13 = arith.maximumf %11, %12 : vector<8x512xf32>
    %c0_11 = arith.constant 0 : index
    %c0_12 = arith.constant 0 : index
    %14 = vector.load %arg3[%c0_11, %c0_12] : memref<1x512xf32, #tpu.memory_space<vmem>>, vector<1x512xf32>
    %15 = vector.broadcast %14 : vector<1x512xf32> to vector<8x512xf32>
    %16 = arith.addf %13, %15 : vector<8x512xf32>
    %cst_13 = arith.constant 0.000000e+00 : f32
    %17 = vector.broadcast %cst_13 : f32 to vector<8x512xf32>
    %18 = arith.maximumf %16, %17 : vector<8x512xf32>
    %19 = vector.extract_strided_slice %18 {offsets = [0, 0], sizes = [8, 256], strides = [1, 1]} : vector<8x512xf32> to vector<8x256xf32>
    %20 = vector.extract_strided_slice %18 {offsets = [0, 256], sizes = [8, 256], strides = [1, 1]} : vector<8x512xf32> to vector<8x256xf32>
    %21 = arith.maximumf %19, %20 : vector<8x256xf32>
    %c0_14 = arith.constant 0 : index
    %c0_15 = arith.constant 0 : index
    %c0_16 = arith.constant 0 : index
    %22 = vector.load %arg4[%c0_14, %c0_15, %c0_16] : memref<1x8x256xf32, #tpu.memory_space<vmem>>, vector<1x8x256xf32>
    %23 = vector.shape_cast %22 : vector<1x8x256xf32> to vector<8x256xf32>
    %24 = vector.shape_cast %21 : vector<8x256xf32> to vector<1x8x256xf32>
    tpu.vector_store %arg4[%c0_14, %c0_15, %c0_16], %24 {strides = array<i32>} : memref<1x8x256xf32, #tpu.memory_space<vmem>>, vector<1x8x256xf32>,
    return
  }
  func.func @transform_0(%arg0: i32) -> (i32, i32, i32) {
    %c0_i32 = arith.constant 0 : i32
    %c0_i32_0 = arith.constant 0 : i32
    %c0_i32_1 = arith.constant 0 : i32
    return %arg0, %c0_i32, %c0_i32_0 : i32, i32, i32
  }
  func.func @transform_1(%arg0: i32) -> (i32, i32, i32) {
    %c0_i32 = arith.constant 0 : i32
    %c0_i32_0 = arith.constant 0 : i32
    %c0_i32_1 = arith.constant 0 : i32
    %c0_i32_2 = arith.constant 0 : i32
    return %c0_i32, %c0_i32_0, %c0_i32_1 : i32, i32, i32
  }
  func.func @transform_2(%arg0: i32) -> (i32, i32) {
    %c0_i32 = arith.constant 0 : i32
    %c0_i32_0 = arith.constant 0 : i32
    %c0_i32_1 = arith.constant 0 : i32
    return %c0_i32, %c0_i32_0 : i32, i32
  }
  func.func @transform_3(%arg0: i32) -> (i32, i32, i32) {
    %c0_i32 = arith.constant 0 : i32
    %c0_i32_0 = arith.constant 0 : i32
    %c0_i32_1 = arith.constant 0 : i32
    return %arg0, %c0_i32, %c0_i32_0 : i32, i32, i32
  }
}

module attributes {stable_mosaic.version = 11 : i64} {
  func.func @kernel(%arg0: i32, %arg1: memref<2x2048xf32, #tpu.memory_space<vmem>>, %arg2: memref<2048x64xf32, #tpu.memory_space<vmem>>, %arg3: memref<1x64xf32, #tpu.memory_space<vmem>>, %arg4: memref<64x8xf32, #tpu.memory_space<vmem>>, %arg5: memref<1x8xf32, #tpu.memory_space<vmem>>, %arg6: memref<8x8xf32, #tpu.memory_space<vmem>>, %arg7: memref<1x8xf32, #tpu.memory_space<vmem>>, %arg8: memref<8x5xf32, #tpu.memory_space<vmem>>, %arg9: memref<1x5xf32, #tpu.memory_space<vmem>>, %arg10: memref<2x5xf32, #tpu.memory_space<vmem>>, %arg11: memref<2x8xf32, #tpu.memory_space<vmem>>) attributes {dimension_semantics = [#tpu.dimension_semantics<parallel>], iteration_bounds = array<i64: 1>, scalar_prefetch = 0 : i64, scratch_operands = 0 : i64, tpu.core_type = #tpu.core_type<tc>, window_params = [{transform_indices = @transform_0, window_bounds = array<i64: 2, 2048>}, {pipeline_mode = #tpu.pipeline_mode<synchronous>, transform_indices = @transform_1, window_bounds = array<i64: 2048, 64>}, {pipeline_mode = #tpu.pipeline_mode<synchronous>, transform_indices = @transform_2, window_bounds = array<i64: 1, 64>}, {pipeline_mode = #tpu.pipeline_mode<synchronous>, transform_indices = @transform_3, window_bounds = array<i64: 64, 8>}, {pipeline_mode = #tpu.pipeline_mode<synchronous>, transform_indices = @transform_4, window_bounds = array<i64: 1, 8>}, {pipeline_mode = #tpu.pipeline_mode<synchronous>, transform_indices = @transform_5, window_bounds = array<i64: 8, 8>}, {pipeline_mode = #tpu.pipeline_mode<synchronous>, transform_indices = @transform_6, window_bounds = array<i64: 1, 8>}, {pipeline_mode = #tpu.pipeline_mode<synchronous>, transform_indices = @transform_7, window_bounds = array<i64: 8, 5>}, {pipeline_mode = #tpu.pipeline_mode<synchronous>, transform_indices = @transform_8, window_bounds = array<i64: 1, 5>}, {transform_indices = @transform_9, window_bounds = array<i64: 2, 5>}, {transform_indices = @transform_10, window_bounds = array<i64: 2, 8>}]} {
    %c0 = arith.constant 0 : index
    %c0_0 = arith.constant 0 : index
    %0 = vector.load %arg1[%c0, %c0_0] : memref<2x2048xf32, #tpu.memory_space<vmem>>, vector<2x2048xf32>
    %c0_1 = arith.constant 0 : index
    %c0_2 = arith.constant 0 : index
    %1 = vector.load %arg2[%c0_1, %c0_2] : memref<2048x64xf32, #tpu.memory_space<vmem>>, vector<2048x64xf32>
    %cst = arith.constant dense<0.000000e+00> : vector<2x64xf32>
    %2 = tpu.matmul %0, %1, %cst {dimension_numbers = #tpu.dot_dimension_numbers<[1], [0], [0], [1], [0, 0, 1, 1], [], []>} : vector<2x2048xf32>, vector<2048x64xf32>, vector<2x64xf32> -> vector<2x64xf32>
    %c0_3 = arith.constant 0 : index
    %c0_4 = arith.constant 0 : index
    %3 = vector.load %arg3[%c0_3, %c0_4] : memref<1x64xf32, #tpu.memory_space<vmem>>, vector<1x64xf32>
    %4 = vector.broadcast %3 : vector<1x64xf32> to vector<2x64xf32>
    %5 = arith.addf %2, %4 : vector<2x64xf32>
    %cst_5 = arith.constant 0.000000e+00 : f32
    %6 = vector.broadcast %cst_5 : f32 to vector<2x64xf32>
    %7 = arith.maximumf %5, %6 : vector<2x64xf32>
    %c0_6 = arith.constant 0 : index
    %c0_7 = arith.constant 0 : index
    %8 = vector.load %arg4[%c0_6, %c0_7] : memref<64x8xf32, #tpu.memory_space<vmem>>, vector<64x8xf32>
    %cst_8 = arith.constant dense<0.000000e+00> : vector<2x8xf32>
    %9 = tpu.matmul %7, %8, %cst_8 {dimension_numbers = #tpu.dot_dimension_numbers<[1], [0], [0], [1], [0, 0, 1, 1], [], []>} : vector<2x64xf32>, vector<64x8xf32>, vector<2x8xf32> -> vector<2x8xf32>
    %c0_9 = arith.constant 0 : index
    %c0_10 = arith.constant 0 : index
    %10 = vector.load %arg5[%c0_9, %c0_10] : memref<1x8xf32, #tpu.memory_space<vmem>>, vector<1x8xf32>
    %11 = vector.broadcast %10 : vector<1x8xf32> to vector<2x8xf32>
    %12 = arith.addf %9, %11 : vector<2x8xf32>
    %c0_11 = arith.constant 0 : index
    %c0_12 = arith.constant 0 : index
    %13 = vector.load %arg11[%c0_11, %c0_12] : memref<2x8xf32, #tpu.memory_space<vmem>>, vector<2x8xf32>
    tpu.vector_store %arg11[%c0_11, %c0_12], %12 {strides = array<i32>} : memref<2x8xf32, #tpu.memory_space<vmem>>, vector<2x8xf32>,
    %c0_13 = arith.constant 0 : index
    %c0_14 = arith.constant 0 : index
    %14 = vector.load %arg6[%c0_13, %c0_14] : memref<8x8xf32, #tpu.memory_space<vmem>>, vector<8x8xf32>
    %cst_15 = arith.constant dense<0.000000e+00> : vector<2x8xf32>
    %15 = tpu.matmul %12, %14, %cst_15 {dimension_numbers = #tpu.dot_dimension_numbers<[1], [0], [0], [1], [0, 0, 1, 1], [], []>} : vector<2x8xf32>, vector<8x8xf32>, vector<2x8xf32> -> vector<2x8xf32>
    %c0_16 = arith.constant 0 : index
    %c0_17 = arith.constant 0 : index
    %16 = vector.load %arg7[%c0_16, %c0_17] : memref<1x8xf32, #tpu.memory_space<vmem>>, vector<1x8xf32>
    %17 = vector.broadcast %16 : vector<1x8xf32> to vector<2x8xf32>
    %18 = arith.addf %15, %17 : vector<2x8xf32>
    %cst_18 = arith.constant 0.000000e+00 : f32
    %19 = vector.broadcast %cst_18 : f32 to vector<2x8xf32>
    %20 = arith.maximumf %18, %19 : vector<2x8xf32>
    %c0_19 = arith.constant 0 : index
    %c0_20 = arith.constant 0 : index
    %21 = vector.load %arg8[%c0_19, %c0_20] : memref<8x5xf32, #tpu.memory_space<vmem>>, vector<8x5xf32>
    %cst_21 = arith.constant dense<0.000000e+00> : vector<2x5xf32>
    %22 = tpu.matmul %20, %21, %cst_21 {dimension_numbers = #tpu.dot_dimension_numbers<[1], [0], [0], [1], [0, 0, 1, 1], [], []>} : vector<2x8xf32>, vector<8x5xf32>, vector<2x5xf32> -> vector<2x5xf32>
    %c0_22 = arith.constant 0 : index
    %c0_23 = arith.constant 0 : index
    %23 = vector.load %arg9[%c0_22, %c0_23] : memref<1x5xf32, #tpu.memory_space<vmem>>, vector<1x5xf32>
    %24 = vector.broadcast %23 : vector<1x5xf32> to vector<2x5xf32>
    %25 = arith.addf %22, %24 : vector<2x5xf32>
    %c0_24 = arith.constant 0 : index
    %c0_25 = arith.constant 0 : index
    %26 = vector.load %arg10[%c0_24, %c0_25] : memref<2x5xf32, #tpu.memory_space<vmem>>, vector<2x5xf32>
    tpu.vector_store %arg10[%c0_24, %c0_25], %25 {strides = array<i32>} : memref<2x5xf32, #tpu.memory_space<vmem>>, vector<2x5xf32>,
    return
  }
  func.func @transform_0(%arg0: i32) -> (i32, i32) {
    %c0_i32 = arith.constant 0 : i32
    %c0_i32_0 = arith.constant 0 : i32
    return %arg0, %c0_i32 : i32, i32
  }
  func.func @transform_1(%arg0: i32) -> (i32, i32) {
    %c0_i32 = arith.constant 0 : i32
    %c0_i32_0 = arith.constant 0 : i32
    %c0_i32_1 = arith.constant 0 : i32
    return %c0_i32, %c0_i32_0 : i32, i32
  }
  func.func @transform_2(%arg0: i32) -> (i32, i32) {
    %c0_i32 = arith.constant 0 : i32
    %c0_i32_0 = arith.constant 0 : i32
    %c0_i32_1 = arith.constant 0 : i32
    return %c0_i32, %c0_i32_0 : i32, i32
  }
  func.func @transform_3(%arg0: i32) -> (i32, i32) {
    %c0_i32 = arith.constant 0 : i32
    %c0_i32_0 = arith.constant 0 : i32
    %c0_i32_1 = arith.constant 0 : i32
    return %c0_i32, %c0_i32_0 : i32, i32
  }
  func.func @transform_4(%arg0: i32) -> (i32, i32) {
    %c0_i32 = arith.constant 0 : i32
    %c0_i32_0 = arith.constant 0 : i32
    %c0_i32_1 = arith.constant 0 : i32
    return %c0_i32, %c0_i32_0 : i32, i32
  }
  func.func @transform_5(%arg0: i32) -> (i32, i32) {
    %c0_i32 = arith.constant 0 : i32
    %c0_i32_0 = arith.constant 0 : i32
    %c0_i32_1 = arith.constant 0 : i32
    return %c0_i32, %c0_i32_0 : i32, i32
  }
  func.func @transform_6(%arg0: i32) -> (i32, i32) {
    %c0_i32 = arith.constant 0 : i32
    %c0_i32_0 = arith.constant 0 : i32
    %c0_i32_1 = arith.constant 0 : i32
    return %c0_i32, %c0_i32_0 : i32, i32
  }
  func.func @transform_7(%arg0: i32) -> (i32, i32) {
    %c0_i32 = arith.constant 0 : i32
    %c0_i32_0 = arith.constant 0 : i32
    %c0_i32_1 = arith.constant 0 : i32
    return %c0_i32, %c0_i32_0 : i32, i32
  }
  func.func @transform_8(%arg0: i32) -> (i32, i32) {
    %c0_i32 = arith.constant 0 : i32
    %c0_i32_0 = arith.constant 0 : i32
    %c0_i32_1 = arith.constant 0 : i32
    return %c0_i32, %c0_i32_0 : i32, i32
  }
  func.func @transform_9(%arg0: i32) -> (i32, i32) {
    %c0_i32 = arith.constant 0 : i32
    %c0_i32_0 = arith.constant 0 : i32
    return %arg0, %c0_i32 : i32, i32
  }
  func.func @transform_10(%arg0: i32) -> (i32, i32) {
    %c0_i32 = arith.constant 0 : i32
    %c0_i32_0 = arith.constant 0 : i32
    return %arg0, %c0_i32 : i32, i32
  }
}

</mosaic_0001>

<llo_original>
// kernel: shapes_cbm_forward.4
$region0: #{shapes_cbm_forward.4}
  #allocation0 [shape = 'u32[]', space=smem, size = 0x4, offset = 0x4, fixed_abs, tag = 'smem constant byte address 0x4 - core index']
  #allocation1 [shape = 'u32[144,128]{1,0:T(1,128)}', space=vmem, size = 0x12000, scoped, tag = 'internal scratch']
  %s0 = inlined_call_operand.vmem [shape: f32[2,33,396], index: 0, kind: input, shape index: {}]
  %s1 = inlined_call_operand.vmem [shape: f32[2,396,1024], index: 1, kind: input, shape index: {}]
  %s2 = inlined_call_operand.vmem [shape: f32[1,512], index: 2, kind: input, shape index: {}]
  %s3 = inlined_call_operand.vmem [shape: f32[2,32,256], index: 3, kind: output, shape index: {}]
  %s4 = sld [smem:[#allocation0]]
  $region45: #{shapes_cbm_forward.4} parent=0
    _
  %s6 = ssub.s32 1, %s4
  %s7 = scalar_select 0, %s6, %s4
  loop: start=0, step=1, limit=4
  $region2: #{shapes_cbm_forward.4} parent=0 // loop_pre_header
    _
  $region3: #{shapes_cbm_forward.4} parent=0 // loop_header
    %s9 = sphi 0, %s13
    %p10 = scmp.ge.s32.totalorder %s9, 4
    %s19 = sphi 0, %s21
    %s22 = sphi 0, %s19
    %s23 = sphi 0, %s22
    %s39 = sphi 0, %s23
    %s43 = sphi 0, %s43
    %s45 = sphi 0, %s43
    %s46 = sphi 0, %s45
    %s60 = sphi 0, %s46
    %s64 = sphi 0, %s64
    %s66 = sphi 0, %s64
    %s67 = sphi 0, %s66
    %s81 = sphi 0, %s67
    %s87 = sphi 0, %s89
    %s90 = sphi 0, %s87
    %s91 = sphi 0, %s90
    %s107 = sphi 0, %s91
  $region4: #{shapes_cbm_forward.4} parent=0 // loop_header_branch
    %12 = sbr.rel (%p10) target = $region8
  $region5: #{shapes_cbm_forward.4} parent=0 // loop_body
    %s14 = ssub.s32 %s9, 1
    %s15 = ssub.s32 %s9, 2
    %s16 = sadd.s32 %s9, 1
    %s17 = ssub.s32 %s9, %s16
    %p18 = scmp.eq.s32.totalorder %s17, 0
    %s20 = sadd.s32 %s19, 1
    %s21 = scalar_select %p18, %s19, %s20
    %p24 = pneg %p18
    %p25 = scmp.eq.s32.totalorder %s9, 1
    %p26 = por %p24, %p25
    %p27 = scmp.ne.s32.totalorder %s19, %s22
    %p28 = scmp.eq.s32.totalorder %s9, 0
    %p29 = por %p27, %p28
    %p30 = scmp.ne.s32.totalorder %s19, %s22
    %p31 = scmp.eq.s32.totalorder %s14, 1
    %p32 = por %p30, %p31
    %p33 = scmp.ne.s32.totalorder %s22, %s23
    %p34 = scmp.eq.s32.totalorder %s14, 0
    %p35 = por %p33, %p34
    %p36 = scmp.ne.s32.totalorder %s22, %s23
    %p37 = scmp.eq.s32.totalorder %s15, 1
    %p38 = por %p36, %p37
    %p40 = scmp.ne.s32.totalorder %s23, %s39
    %p41 = scmp.eq.s32.totalorder %s15, 0
    %p42 = por %p40, %p41
    %s44 = sadd.s32 %s43, 1
    %p47 = scmp.eq.s32.totalorder %s9, 1
    %p48 = scmp.ne.s32.totalorder %s43, %s45
    %p49 = scmp.eq.s32.totalorder %s9, 0
    %p50 = por %p48, %p49
    %p51 = scmp.ne.s32.totalorder %s43, %s45
    %p52 = scmp.eq.s32.totalorder %s14, 1
    %p53 = por %p51, %p52
    %p54 = scmp.ne.s32.totalorder %s45, %s46
    %p55 = scmp.eq.s32.totalorder %s14, 0
    %p56 = por %p54, %p55
    %p57 = scmp.ne.s32.totalorder %s45, %s46
    %p58 = scmp.eq.s32.totalorder %s15, 1
    %p59 = por %p57, %p58
    %p61 = scmp.ne.s32.totalorder %s46, %s60
    %p62 = scmp.eq.s32.totalorder %s15, 0
    %p63 = por %p61, %p62
    %s65 = sadd.s32 %s64, 1
    %p68 = scmp.eq.s32.totalorder %s9, 1
    %p69 = scmp.ne.s32.totalorder %s64, %s66
    %p70 = scmp.eq.s32.totalorder %s9, 0
    %p71 = por %p69, %p70
    %p72 = scmp.ne.s32.totalorder %s64, %s66
    %p73 = scmp.eq.s32.totalorder %s14, 1
    %p74 = por %p72, %p73
    %p75 = scmp.ne.s32.totalorder %s66, %s67
    %p76 = scmp.eq.s32.totalorder %s14, 0
    %p77 = por %p75, %p76
    %p78 = scmp.ne.s32.totalorder %s66, %s67
    %p79 = scmp.eq.s32.totalorder %s15, 1
    %p80 = por %p78, %p79
    %p82 = scmp.ne.s32.totalorder %s67, %s81
    %p83 = scmp.eq.s32.totalorder %s15, 0
    %p84 = por %p82, %p83
    %s85 = ssub.s32 %s9, %s16
    %p86 = scmp.eq.s32.totalorder %s85, 0
    %s88 = sadd.s32 %s87, 1
    %s89 = scalar_select %p86, %s87, %s88
    %p92 = pneg %p86
    %p93 = scmp.eq.s32.totalorder %s9, 1
    %p94 = por %p92, %p93
    %p95 = scmp.ne.s32.totalorder %s87, %s90
    %p96 = scmp.eq.s32.totalorder %s9, 0
    %p97 = por %p95, %p96
    %p98 = scmp.ne.s32.totalorder %s87, %s90
    %p99 = scmp.eq.s32.totalorder %s14, 1
    %p100 = por %p98, %p99
    %p101 = scmp.ne.s32.totalorder %s90, %s91
    %p102 = scmp.eq.s32.totalorder %s14, 0
    %p103 = por %p101, %p102
    %p104 = scmp.ne.s32.totalorder %s90, %s91
    %p105 = scmp.eq.s32.totalorder %s15, 1
    %p106 = por %p104, %p105
    %p108 = scmp.ne.s32.totalorder %s91, %s107
    %p109 = scmp.eq.s32.totalorder %s15, 0
    %p110 = por %p108, %p109
    %p111 = scmp.le.s32.totalorder 1, %s9
    %p112 = scmp.lt.s32.totalorder %s9, 3
    %p113 = pnand %p111, %p112
    %p114 = pneg %p113
    // Predicated region
    $region9: #{shapes_cbm_forward.4} parent=5 // pred_check
      _
    $region10: #{shapes_cbm_forward.4} parent=5 // pred_check_branch
      %116 = sbr.rel (%p113) target = $region12
    $region11: #{shapes_cbm_forward.4} parent=5 // pred_region
      %s117 = ssub.s32 %s9, 1
      // Predicated region
      $region13: #{shapes_cbm_forward.4} parent=11 // pred_check
        %p118 = pneg %p56
      $region14: #{shapes_cbm_forward.4} parent=11 // pred_check_branch
        %120 = sbr.rel (%p118) target = $region16
      $region15: #{shapes_cbm_forward.4} parent=11 // pred_region
        _
      $region16: #{shapes_cbm_forward.4} parent=11 // pred_fallthru
        _
      // Predicated region
      $region17: #{shapes_cbm_forward.4} parent=11 // pred_check
        %p121 = pneg %p77
      $region18: #{shapes_cbm_forward.4} parent=11 // pred_check_branch
        %123 = sbr.rel (%p121) target = $region20
      $region19: #{shapes_cbm_forward.4} parent=11 // pred_region
        _
      $region20: #{shapes_cbm_forward.4} parent=11 // pred_fallthru
        _
    $region12: #{shapes_cbm_forward.4} parent=5 // pred_fallthru
      _
    %p124 = scmp.lt.s32.totalorder %s9, 2
    // Predicated region
    $region21: #{shapes_cbm_forward.4} parent=5 // pred_check
      %p125 = pneg %p124
    $region22: #{shapes_cbm_forward.4} parent=5 // pred_check_branch
      %127 = sbr.rel (%p125) target = $region24
    $region23: #{shapes_cbm_forward.4} parent=5 // pred_region
      // Predicated region
      $region25: #{shapes_cbm_forward.4} parent=23 // pred_check
        %p128 = pneg %p29
      $region26: #{shapes_cbm_forward.4} parent=23 // pred_check_branch
        %130 = sbr.rel (%p128) target = $region28
      $region27: #{shapes_cbm_forward.4} parent=23 // pred_region
        %p131 = scmp.lt.s32.totalorder %s9, 1
        %s132 = scalar_select %p131, %s9, 1
        %s133 = smul.addr %s132, 20
        %s134 = smul.addr %s133, 8
        %s135 = scalar_lea.vmem %s0, %s134
      $region28: #{shapes_cbm_forward.4} parent=23 // pred_fallthru
        _
    $region24: #{shapes_cbm_forward.4} parent=5 // pred_fallthru
      _
    %p136 = scmp.le.s32.totalorder 1, %s9
    %p137 = scmp.lt.s32.totalorder %s9, 3
    %p138 = pnand %p136, %p137
    %p139 = pneg %p138
    // Predicated region
    $region29: #{shapes_cbm_forward.4} parent=5 // pred_check
      _
    $region30: #{shapes_cbm_forward.4} parent=5 // pred_check_branch
      %141 = sbr.rel (%p138) target = $region32
    $region31: #{shapes_cbm_forward.4} parent=5 // pred_region
      %s142 = ssub.s32 %s9, 1
      %p143 = scmp.lt.s32.totalorder %s14, 1
      %s144 = scalar_select %p143, %s14, 1
      %s145 = smul.addr %s144, 20
      %s146 = smul.addr %s145, 8
      %s147 = scalar_lea.vmem %s0, %s146
      %p148 = pneg %p35
      %p149 = pneg %p32
      %p150 = pneg %p56
      %p151 = pneg %p53
      %p152 = pneg %p77
      %p153 = pneg %p74
      %p154 = pneg %p103
      %p155 = pneg %p100
      %p156 = scmp.lt.s32.totalorder %s14, 1
      %s157 = scalar_select %p156, %s14, 1
      %s158 = smul.addr %s157, 8
      %s159 = smul.addr %s158, 8
      %s160 = scalar_lea.vmem %s3, %s159
      %p161 = scmp.lt.s32.totalorder %s14, 1
      %s162 = scalar_select %p161, %s14, 1
      %s163 = smul.addr %s162, 20
      %s164 = smul.addr %s163, 8
      %s165 = scalar_lea.vmem %s0, %s164
      %p166 = scmp.lt.s32.totalorder %s14, 1
      %s167 = scalar_select %p166, %s14, 1
      %s168 = smul.addr %s167, 8
      %s169 = smul.addr %s168, 8
      %s170 = scalar_lea.vmem %s3, %s169
      %v171 = vld [vmem:[%s165] sm:$0xff]
      %v172 = vld [vmem:[%s165 + $0x8] sm:$0xff]
      %v173 = vld [vmem:[%s165 + $0x10] sm:$0xff]
      %v174 = vld [vmem:[%s165 + $0x18] sm:$0xff]
      %v175 = vld [vmem:[%s165 + $0x20] sm:$0xff]
      %v176 = vld [vmem:[%s165 + $0x28] sm:$0xff]
      %v177 = vld [vmem:[%s165 + $0x30] sm:$0xff]
      %v178 = vld [vmem:[%s165 + $0x38] sm:$0xff]
      %v179 = vld [vmem:[%s165 + $0x40] sm:$0xff]
      %v180 = vld [vmem:[%s165 + $0x48] sm:$0xff]
      %v181 = vld [vmem:[%s165 + $0x50] sm:$0xff]
      %v182 = vld [vmem:[%s165 + $0x58] sm:$0xff]
      %v183 = vld [vmem:[%s165 + $0x60] sm:$0xff]
      %v184 = vld [vmem:[%s165 + $0x68] sm:$0xff]
      %v185 = vld [vmem:[%s165 + $0x70] sm:$0xff]
      %v186 = vld [vmem:[%s165 + $0x78] sm:$0xff]
      %v187 = vld [vmem:[%s1] sm:$0xff]
      %v188 = vld [vmem:[%s1 + $0x8] sm:$0xff]
      %v189 = vld [vmem:[%s1 + $0x10] sm:$0xff]
      %v190 = vld [vmem:[%s1 + $0x18] sm:$0xff]
      %v191 = vld [vmem:[%s1 + $0x20] sm:$0xff]
      %v192 = vld [vmem:[%s1 + $0x28] sm:$0xff]
      %v193 = vld [vmem:[%s1 + $0x30] sm:$0xff]
      %v194 = vld [vmem:[%s1 + $0x38] sm:$0xff]
      %v195 = vld [vmem:[%s1 + $0x40] sm:$0xff]
      %v196 = vld [vmem:[%s1 + $0x48] sm:$0xff]
      %v197 = vld [vmem:[%s1 + $0x50] sm:$0xff]
      %v198 = vld [vmem:[%s1 + $0x58] sm:$0xff]
      %v199 = vld [vmem:[%s1 + $0x60] sm:$0xff]
      %v200 = vld [vmem:[%s1 + $0x68] sm:$0xff]
      %v201 = vld [vmem:[%s1 + $0x70] sm:$0xff]
      %v202 = vld [vmem:[%s1 + $0x78] sm:$0xff]
      %v203 = vld [vmem:[%s1 + $0x80] sm:$0xff]
      %v204 = vld [vmem:[%s1 + $0x88] sm:$0xff]
      %v205 = vld [vmem:[%s1 + $0x90] sm:$0xff]
      %v206 = vld [vmem:[%s1 + $0x98] sm:$0xff]
      %v207 = vld [vmem:[%s1 + $0xa0] sm:$0xff]
      %v208 = vld [vmem:[%s1 + $0xa8] sm:$0xff]
      %v209 = vld [vmem:[%s1 + $0xb0] sm:$0xff]
      %v210 = vld [vmem:[%s1 + $0xb8] sm:$0xff]
      %v211 = vld [vmem:[%s1 + $0xc0] sm:$0xff]
      %v212 = vld [vmem:[%s1 + $0xc8] sm:$0xff]
      %v213 = vld [vmem:[%s1 + $0xd0] sm:$0xff]
      %v214 = vld [vmem:[%s1 + $0xd8] sm:$0xff]
      %v215 = vld [vmem:[%s1 + $0xe0] sm:$0xff]
      %v216 = vld [vmem:[%s1 + $0xe8] sm:$0xff]
      %v217 = vld [vmem:[%s1 + $0xf0] sm:$0xff]
      %v218 = vld [vmem:[%s1 + $0xf8] sm:$0xff]
      %v219 = vld [vmem:[%s1 + $0x100] sm:$0xff]
      %v220 = vld [vmem:[%s1 + $0x108] sm:$0xff]
      %v221 = vld [vmem:[%s1 + $0x110] sm:$0xff]
      %v222 = vld [vmem:[%s1 + $0x118] sm:$0xff]
      %v223 = vld [vmem:[%s1 + $0x120] sm:$0xff]
      %v224 = vld [vmem:[%s1 + $0x128] sm:$0xff]
      %v225 = vld [vmem:[%s1 + $0x130] sm:$0xff]
      %v226 = vld [vmem:[%s1 + $0x138] sm:$0xff]
      %v227 = vld [vmem:[%s1 + $0x140] sm:$0xff]
      %v228 = vld [vmem:[%s1 + $0x148] sm:$0xff]
      %v229 = vld [vmem:[%s1 + $0x150] sm:$0xff]
      %v230 = vld [vmem:[%s1 + $0x158] sm:$0xff]
      %v231 = vld [vmem:[%s1 + $0x160] sm:$0xff]
      %v232 = vld [vmem:[%s1 + $0x168] sm:$0xff]
      %v233 = vld [vmem:[%s1 + $0x170] sm:$0xff]
      %v234 = vld [vmem:[%s1 + $0x178] sm:$0xff]
      %v235 = vld [vmem:[%s1 + $0x180] sm:$0xff]
      %v236 = vld [vmem:[%s1 + $0x188] sm:$0xff]
      %v237 = vld [vmem:[%s1 + $0x190] sm:$0xff]
      %v238 = vld [vmem:[%s1 + $0x198] sm:$0xff]
      %v239 = vld [vmem:[%s1 + $0x1a0] sm:$0xff]
      %v240 = vld [vmem:[%s1 + $0x1a8] sm:$0xff]
      %v241 = vld [vmem:[%s1 + $0x1b0] sm:$0xff]
      %v242 = vld [vmem:[%s1 + $0x1b8] sm:$0xff]
      %v243 = vld [vmem:[%s1 + $0x1c0] sm:$0xff]
      %v244 = vld [vmem:[%s1 + $0x1c8] sm:$0xff]
      %v245 = vld [vmem:[%s1 + $0x1d0] sm:$0xff]
      %v246 = vld [vmem:[%s1 + $0x1d8] sm:$0xff]
      %v247 = vld [vmem:[%s1 + $0x1e0] sm:$0xff]
      %v248 = vld [vmem:[%s1 + $0x1e8] sm:$0xff]
      %v249 = vld [vmem:[%s1 + $0x1f0] sm:$0xff]
      %v250 = vld [vmem:[%s1 + $0x1f8] sm:$0xff]
      %v251 = vld [vmem:[%s1 + $0x200] sm:$0xff]
      %v252 = vld [vmem:[%s1 + $0x208] sm:$0xff]
      %v253 = vld [vmem:[%s1 + $0x210] sm:$0xff]
      %v254 = vld [vmem:[%s1 + $0x218] sm:$0xff]
      %v255 = vld [vmem:[%s1 + $0x220] sm:$0xff]
      %v256 = vld [vmem:[%s1 + $0x228] sm:$0xff]
      %v257 = vld [vmem:[%s1 + $0x230] sm:$0xff]
      %v258 = vld [vmem:[%s1 + $0x238] sm:$0xff]
      %v259 = vld [vmem:[%s1 + $0x240] sm:$0xff]
      %v260 = vld [vmem:[%s1 + $0x248] sm:$0xff]
      %v261 = vld [vmem:[%s1 + $0x250] sm:$0xff]
      %v262 = vld [vmem:[%s1 + $0x258] sm:$0xff]
      %v263 = vld [vmem:[%s1 + $0x260] sm:$0xff]
      %v264 = vld [vmem:[%s1 + $0x268] sm:$0xff]
      %v265 = vld [vmem:[%s1 + $0x270] sm:$0xff]
      %v266 = vld [vmem:[%s1 + $0x278] sm:$0xff]
      %v267 = vld [vmem:[%s1 + $0x280] sm:$0xff]
      %v268 = vld [vmem:[%s1 + $0x288] sm:$0xff]
      %v269 = vld [vmem:[%s1 + $0x290] sm:$0xff]
      %v270 = vld [vmem:[%s1 + $0x298] sm:$0xff]
      %v271 = vld [vmem:[%s1 + $0x2a0] sm:$0xff]
      %v272 = vld [vmem:[%s1 + $0x2a8] sm:$0xff]
      %v273 = vld [vmem:[%s1 + $0x2b0] sm:$0xff]
      %v274 = vld [vmem:[%s1 + $0x2b8] sm:$0xff]
      %v275 = vld [vmem:[%s1 + $0x2c0] sm:$0xff]
      %v276 = vld [vmem:[%s1 + $0x2c8] sm:$0xff]
      %v277 = vld [vmem:[%s1 + $0x2d0] sm:$0xff]
      %v278 = vld [vmem:[%s1 + $0x2d8] sm:$0xff]
      %v279 = vld [vmem:[%s1 + $0x2e0] sm:$0xff]
      %v280 = vld [vmem:[%s1 + $0x2e8] sm:$0xff]
      %v281 = vld [vmem:[%s1 + $0x2f0] sm:$0xff]
      %v282 = vld [vmem:[%s1 + $0x2f8] sm:$0xff]
      %v283 = vld [vmem:[%s1 + $0x300] sm:$0xff]
      %v284 = vld [vmem:[%s1 + $0x308] sm:$0xff]
      %v285 = vld [vmem:[%s1 + $0x310] sm:$0xff]
      %v286 = vld [vmem:[%s1 + $0x318] sm:$0xff]
      %v287 = vld [vmem:[%s1 + $0x320] sm:$0xff]
      %v288 = vld [vmem:[%s1 + $0x328] sm:$0xff]
      %v289 = vld [vmem:[%s1 + $0x330] sm:$0xff]
      %v290 = vld [vmem:[%s1 + $0x338] sm:$0xff]
      %v291 = vld [vmem:[%s1 + $0x340] sm:$0xff]
      %v292 = vld [vmem:[%s1 + $0x348] sm:$0xff]
      %v293 = vld [vmem:[%s1 + $0x350] sm:$0xff]
      %v294 = vld [vmem:[%s1 + $0x358] sm:$0xff]
      %v295 = vld [vmem:[%s1 + $0x360] sm:$0xff]
      %v296 = vld [vmem:[%s1 + $0x368] sm:$0xff]
      %v297 = vld [vmem:[%s1 + $0x370] sm:$0xff]
      %v298 = vld [vmem:[%s1 + $0x378] sm:$0xff]
      %v299 = vld [vmem:[%s1 + $0x380] sm:$0xff]
      %v300 = vld [vmem:[%s1 + $0x388] sm:$0xff]
      %v301 = vld [vmem:[%s1 + $0x390] sm:$0xff]
      %v302 = vld [vmem:[%s1 + $0x398] sm:$0xff]
      %v303 = vld [vmem:[%s1 + $0x3a0] sm:$0xff]
      %v304 = vld [vmem:[%s1 + $0x3a8] sm:$0xff]
      %v305 = vld [vmem:[%s1 + $0x3b0] sm:$0xff]
      %v306 = vld [vmem:[%s1 + $0x3b8] sm:$0xff]
      %v307 = vld [vmem:[%s1 + $0x3c0] sm:$0xff]
      %v308 = vld [vmem:[%s1 + $0x3c8] sm:$0xff]
      %v309 = vld [vmem:[%s1 + $0x3d0] sm:$0xff]
      %v310 = vld [vmem:[%s1 + $0x3d8] sm:$0xff]
      %v311 = vld [vmem:[%s1 + $0x3e0] sm:$0xff]
      %v312 = vld [vmem:[%s1 + $0x3e8] sm:$0xff]
      %v313 = vld [vmem:[%s1 + $0x3f0] sm:$0xff]
      %v314 = vld [vmem:[%s1 + $0x3f8] sm:$0xff]
      %v315 = vld [vmem:[%s1 + $0x400] sm:$0xff]
      %v316 = vld [vmem:[%s1 + $0x408] sm:$0xff]
      %v317 = vld [vmem:[%s1 + $0x410] sm:$0xff]
      %v318 = vld [vmem:[%s1 + $0x418] sm:$0xff]
      %v319 = vld [vmem:[%s1 + $0x420] sm:$0xff]
      %v320 = vld [vmem:[%s1 + $0x428] sm:$0xff]
      %v321 = vld [vmem:[%s1 + $0x430] sm:$0xff]
      %v322 = vld [vmem:[%s1 + $0x438] sm:$0xff]
      %v323 = vld [vmem:[%s1 + $0x440] sm:$0xff]
      %v324 = vld [vmem:[%s1 + $0x448] sm:$0xff]
      %v325 = vld [vmem:[%s1 + $0x450] sm:$0xff]
      %v326 = vld [vmem:[%s1 + $0x458] sm:$0xff]
      %v327 = vld [vmem:[%s1 + $0x460] sm:$0xff]
      %v328 = vld [vmem:[%s1 + $0x468] sm:$0xff]
      %v329 = vld [vmem:[%s1 + $0x470] sm:$0xff]
      %v330 = vld [vmem:[%s1 + $0x478] sm:$0xff]
      %v331 = vld [vmem:[%s1 + $0x480] sm:$0xff]
      %v332 = vld [vmem:[%s1 + $0x488] sm:$0xff]
      %v333 = vld [vmem:[%s1 + $0x490] sm:$0xff]
      %v334 = vld [vmem:[%s1 + $0x498] sm:$0xff]
      %v335 = vld [vmem:[%s1 + $0x4a0] sm:$0xff]
      %v336 = vld [vmem:[%s1 + $0x4a8] sm:$0xff]
      %v337 = vld [vmem:[%s1 + $0x4b0] sm:$0xff]
      %v338 = vld [vmem:[%s1 + $0x4b8] sm:$0xff]
      %v339 = vld [vmem:[%s1 + $0x4c0] sm:$0xff]
      %v340 = vld [vmem:[%s1 + $0x4c8] sm:$0xff]
      %v341 = vld [vmem:[%s1 + $0x4d0] sm:$0xff]
      %v342 = vld [vmem:[%s1 + $0x4d8] sm:$0xff]
      %v343 = vld [vmem:[%s1 + $0x4e0] sm:$0xff]
      %v344 = vld [vmem:[%s1 + $0x4e8] sm:$0xff]
      %v345 = vld [vmem:[%s1 + $0x4f0] sm:$0xff]
      %v346 = vld [vmem:[%s1 + $0x4f8] sm:$0xff]
      %v347 = vld [vmem:[%s1 + $0x500] sm:$0xff]
      %v348 = vld [vmem:[%s1 + $0x508] sm:$0xff]
      %v349 = vld [vmem:[%s1 + $0x510] sm:$0xff]
      %v350 = vld [vmem:[%s1 + $0x518] sm:$0xff]
      %v351 = vld [vmem:[%s1 + $0x520] sm:$0xff]
      %v352 = vld [vmem:[%s1 + $0x528] sm:$0xff]
      %v353 = vld [vmem:[%s1 + $0x530] sm:$0xff]
      %v354 = vld [vmem:[%s1 + $0x538] sm:$0xff]
      %v355 = vld [vmem:[%s1 + $0x540] sm:$0xff]
      %v356 = vld [vmem:[%s1 + $0x548] sm:$0xff]
      %v357 = vld [vmem:[%s1 + $0x550] sm:$0xff]
      %v358 = vld [vmem:[%s1 + $0x558] sm:$0xff]
      %v359 = vld [vmem:[%s1 + $0x560] sm:$0xff]
      %v360 = vld [vmem:[%s1 + $0x568] sm:$0xff]
      %v361 = vld [vmem:[%s1 + $0x570] sm:$0xff]
      %v362 = vld [vmem:[%s1 + $0x578] sm:$0xff]
      %v363 = vld [vmem:[%s1 + $0x580] sm:$0xff]
      %v364 = vld [vmem:[%s1 + $0x588] sm:$0xff]
      %v365 = vld [vmem:[%s1 + $0x590] sm:$0xff]
      %v366 = vld [vmem:[%s1 + $0x598] sm:$0xff]
      %v367 = vld [vmem:[%s1 + $0x5a0] sm:$0xff]
      %v368 = vld [vmem:[%s1 + $0x5a8] sm:$0xff]
      %v369 = vld [vmem:[%s1 + $0x5b0] sm:$0xff]
      %v370 = vld [vmem:[%s1 + $0x5b8] sm:$0xff]
      %v371 = vld [vmem:[%s1 + $0x5c0] sm:$0xff]
      %v372 = vld [vmem:[%s1 + $0x5c8] sm:$0xff]
      %v373 = vld [vmem:[%s1 + $0x5d0] sm:$0xff]
      %v374 = vld [vmem:[%s1 + $0x5d8] sm:$0xff]
      %v375 = vld [vmem:[%s1 + $0x5e0] sm:$0xff]
      %v376 = vld [vmem:[%s1 + $0x5e8] sm:$0xff]
      %v377 = vld [vmem:[%s1 + $0x5f0] sm:$0xff]
      %v378 = vld [vmem:[%s1 + $0x5f8] sm:$0xff]
      %v379 = vld [vmem:[%s1 + $0x600] sm:$0xff]
      %v380 = vld [vmem:[%s1 + $0x608] sm:$0xff]
      %v381 = vld [vmem:[%s1 + $0x610] sm:$0xff]
      %v382 = vld [vmem:[%s1 + $0x618] sm:$0xff]
      %v383 = vld [vmem:[%s1 + $0x620] sm:$0xff]
      %v384 = vld [vmem:[%s1 + $0x628] sm:$0xff]
      %v385 = vld [vmem:[%s1 + $0x630] sm:$0xff]
      %v386 = vld [vmem:[%s1 + $0x638] sm:$0xff]
      %v387 = vld [vmem:[%s1 + $0x640] sm:$0xff]
      %v388 = vld [vmem:[%s1 + $0x648] sm:$0xff]
      %v389 = vld [vmem:[%s1 + $0x650] sm:$0xff]
      %v390 = vld [vmem:[%s1 + $0x658] sm:$0xff]
      %v391 = vld [vmem:[%s1 + $0x660] sm:$0xff]
      %v392 = vld [vmem:[%s1 + $0x668] sm:$0xff]
      %v393 = vld [vmem:[%s1 + $0x670] sm:$0xff]
      %v394 = vld [vmem:[%s1 + $0x678] sm:$0xff]
      %v395 = vld [vmem:[%s1 + $0x680] sm:$0xff]
      %v396 = vld [vmem:[%s1 + $0x688] sm:$0xff]
      %v397 = vld [vmem:[%s1 + $0x690] sm:$0xff]
      %v398 = vld [vmem:[%s1 + $0x698] sm:$0xff]
      %v399 = vld [vmem:[%s1 + $0x6a0] sm:$0xff]
      %v400 = vld [vmem:[%s1 + $0x6a8] sm:$0xff]
      %v401 = vld [vmem:[%s1 + $0x6b0] sm:$0xff]
      %v402 = vld [vmem:[%s1 + $0x6b8] sm:$0xff]
      %v403 = vld [vmem:[%s1 + $0x6c0] sm:$0xff]
      %v404 = vld [vmem:[%s1 + $0x6c8] sm:$0xff]
      %v405 = vld [vmem:[%s1 + $0x6d0] sm:$0xff]
      %v406 = vld [vmem:[%s1 + $0x6d8] sm:$0xff]
      %v407 = vld [vmem:[%s1 + $0x6e0] sm:$0xff]
      %v408 = vld [vmem:[%s1 + $0x6e8] sm:$0xff]
      %v409 = vld [vmem:[%s1 + $0x6f0] sm:$0xff]
      %v410 = vld [vmem:[%s1 + $0x6f8] sm:$0xff]
      %v411 = vld [vmem:[%s1 + $0x700] sm:$0xff]
      %v412 = vld [vmem:[%s1 + $0x708] sm:$0xff]
      %v413 = vld [vmem:[%s1 + $0x710] sm:$0xff]
      %v414 = vld [vmem:[%s1 + $0x718] sm:$0xff]
      %v415 = vld [vmem:[%s1 + $0x720] sm:$0xff]
      %v416 = vld [vmem:[%s1 + $0x728] sm:$0xff]
      %v417 = vld [vmem:[%s1 + $0x730] sm:$0xff]
      %v418 = vld [vmem:[%s1 + $0x738] sm:$0xff]
      %v419 = vld [vmem:[%s1 + $0x740] sm:$0xff]
      %v420 = vld [vmem:[%s1 + $0x748] sm:$0xff]
      %v421 = vld [vmem:[%s1 + $0x750] sm:$0xff]
      %v422 = vld [vmem:[%s1 + $0x758] sm:$0xff]
      %v423 = vld [vmem:[%s1 + $0x760] sm:$0xff]
      %v424 = vld [vmem:[%s1 + $0x768] sm:$0xff]
      %v425 = vld [vmem:[%s1 + $0x770] sm:$0xff]
      %v426 = vld [vmem:[%s1 + $0x778] sm:$0xff]
      %v427 = vld [vmem:[%s1 + $0x780] sm:$0xff]
      %v428 = vld [vmem:[%s1 + $0x788] sm:$0xff]
      %v429 = vld [vmem:[%s1 + $0x790] sm:$0xff]
      %v430 = vld [vmem:[%s1 + $0x798] sm:$0xff]
      %v431 = vld [vmem:[%s1 + $0x7a0] sm:$0xff]
      %v432 = vld [vmem:[%s1 + $0x7a8] sm:$0xff]
      %v433 = vld [vmem:[%s1 + $0x7b0] sm:$0xff]
      %v434 = vld [vmem:[%s1 + $0x7b8] sm:$0xff]
      %v435 = vld [vmem:[%s1 + $0x7c0] sm:$0xff]
      %v436 = vld [vmem:[%s1 + $0x7c8] sm:$0xff]
      %v437 = vld [vmem:[%s1 + $0x7d0] sm:$0xff]
      %v438 = vld [vmem:[%s1 + $0x7d8] sm:$0xff]
      %v439 = vld [vmem:[%s1 + $0x7e0] sm:$0xff]
      %v440 = vld [vmem:[%s1 + $0x7e8] sm:$0xff]
      %v441 = vld [vmem:[%s1 + $0x7f0] sm:$0xff]
      %v442 = vld [vmem:[%s1 + $0x7f8] sm:$0xff]
      %v443 = vld [vmem:[%s1 + $0x800] sm:$0xff]
      %v444 = vld [vmem:[%s1 + $0x808] sm:$0xff]
      %v445 = vld [vmem:[%s1 + $0x810] sm:$0xff]
      %v446 = vld [vmem:[%s1 + $0x818] sm:$0xff]
      %v447 = vld [vmem:[%s1 + $0x820] sm:$0xff]
      %v448 = vld [vmem:[%s1 + $0x828] sm:$0xff]
      %v449 = vld [vmem:[%s1 + $0x830] sm:$0xff]
      %v450 = vld [vmem:[%s1 + $0x838] sm:$0xff]
      %v451 = vld [vmem:[%s1 + $0x840] sm:$0xff]
      %v452 = vld [vmem:[%s1 + $0x848] sm:$0xff]
      %v453 = vld [vmem:[%s1 + $0x850] sm:$0xff]
      %v454 = vld [vmem:[%s1 + $0x858] sm:$0xff]
      %v455 = vld [vmem:[%s1 + $0x860] sm:$0xff]
      %v456 = vld [vmem:[%s1 + $0x868] sm:$0xff]
      %v457 = vld [vmem:[%s1 + $0x870] sm:$0xff]
      %v458 = vld [vmem:[%s1 + $0x878] sm:$0xff]
      %v459 = vld [vmem:[%s1 + $0x880] sm:$0xff]
      %v460 = vld [vmem:[%s1 + $0x888] sm:$0xff]
      %v461 = vld [vmem:[%s1 + $0x890] sm:$0xff]
      %v462 = vld [vmem:[%s1 + $0x898] sm:$0xff]
      %v463 = vld [vmem:[%s1 + $0x8a0] sm:$0xff]
      %v464 = vld [vmem:[%s1 + $0x8a8] sm:$0xff]
      %v465 = vld [vmem:[%s1 + $0x8b0] sm:$0xff]
      %v466 = vld [vmem:[%s1 + $0x8b8] sm:$0xff]
      %v467 = vld [vmem:[%s1 + $0x8c0] sm:$0xff]
      %v468 = vld [vmem:[%s1 + $0x8c8] sm:$0xff]
      %v469 = vld [vmem:[%s1 + $0x8d0] sm:$0xff]
      %v470 = vld [vmem:[%s1 + $0x8d8] sm:$0xff]
      %v471 = vld [vmem:[%s1 + $0x8e0] sm:$0xff]
      %v472 = vld [vmem:[%s1 + $0x8e8] sm:$0xff]
      %v473 = vld [vmem:[%s1 + $0x8f0] sm:$0xff]
      %v474 = vld [vmem:[%s1 + $0x8f8] sm:$0xff]
      %v475 = vld [vmem:[%s1 + $0x900] sm:$0xff]
      %v476 = vld [vmem:[%s1 + $0x908] sm:$0xff]
      %v477 = vld [vmem:[%s1 + $0x910] sm:$0xff]
      %v478 = vld [vmem:[%s1 + $0x918] sm:$0xff]
      %v479 = vld [vmem:[%s1 + $0x920] sm:$0xff]
      %v480 = vld [vmem:[%s1 + $0x928] sm:$0xff]
      %v481 = vld [vmem:[%s1 + $0x930] sm:$0xff]
      %v482 = vld [vmem:[%s1 + $0x938] sm:$0xff]
      %v483 = vld [vmem:[%s1 + $0x940] sm:$0xff]
      %v484 = vld [vmem:[%s1 + $0x948] sm:$0xff]
      %v485 = vld [vmem:[%s1 + $0x950] sm:$0xff]
      %v486 = vld [vmem:[%s1 + $0x958] sm:$0xff]
      %v487 = vld [vmem:[%s1 + $0x960] sm:$0xff]
      %v488 = vld [vmem:[%s1 + $0x968] sm:$0xff]
      %v489 = vld [vmem:[%s1 + $0x970] sm:$0xff]
      %v490 = vld [vmem:[%s1 + $0x978] sm:$0xff]
      %v491 = vld [vmem:[%s1 + $0x980] sm:$0xff]
      %v492 = vld [vmem:[%s1 + $0x988] sm:$0xff]
      %v493 = vld [vmem:[%s1 + $0x990] sm:$0xff]
      %v494 = vld [vmem:[%s1 + $0x998] sm:$0xff]
      %v495 = vld [vmem:[%s1 + $0x9a0] sm:$0xff]
      %v496 = vld [vmem:[%s1 + $0x9a8] sm:$0xff]
      %v497 = vld [vmem:[%s1 + $0x9b0] sm:$0xff]
      %v498 = vld [vmem:[%s1 + $0x9b8] sm:$0xff]
      %v499 = vld [vmem:[%s1 + $0x9c0] sm:$0xff]
      %v500 = vld [vmem:[%s1 + $0x9c8] sm:$0xff]
      %v501 = vld [vmem:[%s1 + $0x9d0] sm:$0xff]
      %v502 = vld [vmem:[%s1 + $0x9d8] sm:$0xff]
      %v503 = vld [vmem:[%s1 + $0x9e0] sm:$0xff]
      %v504 = vld [vmem:[%s1 + $0x9e8] sm:$0xff]
      %v505 = vld [vmem:[%s1 + $0x9f0] sm:$0xff]
      %v506 = vld [vmem:[%s1 + $0x9f8] sm:$0xff]
      %v507 = vld [vmem:[%s1 + $0xa00] sm:$0xff]
      %v508 = vld [vmem:[%s1 + $0xa08] sm:$0xff]
      %v509 = vld [vmem:[%s1 + $0xa10] sm:$0xff]
      %v510 = vld [vmem:[%s1 + $0xa18] sm:$0xff]
      %v511 = vld [vmem:[%s1 + $0xa20] sm:$0xff]
      %v512 = vld [vmem:[%s1 + $0xa28] sm:$0xff]
      %v513 = vld [vmem:[%s1 + $0xa30] sm:$0xff]
      %v514 = vld [vmem:[%s1 + $0xa38] sm:$0xff]
      %v515 = vld [vmem:[%s1 + $0xa40] sm:$0xff]
      %v516 = vld [vmem:[%s1 + $0xa48] sm:$0xff]
      %v517 = vld [vmem:[%s1 + $0xa50] sm:$0xff]
      %v518 = vld [vmem:[%s1 + $0xa58] sm:$0xff]
      %v519 = vld [vmem:[%s1 + $0xa60] sm:$0xff]
      %v520 = vld [vmem:[%s1 + $0xa68] sm:$0xff]
      %v521 = vld [vmem:[%s1 + $0xa70] sm:$0xff]
      %v522 = vld [vmem:[%s1 + $0xa78] sm:$0xff]
      %v523 = vld [vmem:[%s1 + $0xa80] sm:$0xff]
      %v524 = vld [vmem:[%s1 + $0xa88] sm:$0xff]
      %v525 = vld [vmem:[%s1 + $0xa90] sm:$0xff]
      %v526 = vld [vmem:[%s1 + $0xa98] sm:$0xff]
      %v527 = vld [vmem:[%s1 + $0xaa0] sm:$0xff]
      %v528 = vld [vmem:[%s1 + $0xaa8] sm:$0xff]
      %v529 = vld [vmem:[%s1 + $0xab0] sm:$0xff]
      %v530 = vld [vmem:[%s1 + $0xab8] sm:$0xff]
      %v531 = vld [vmem:[%s1 + $0xac0] sm:$0xff]
      %v532 = vld [vmem:[%s1 + $0xac8] sm:$0xff]
      %v533 = vld [vmem:[%s1 + $0xad0] sm:$0xff]
      %v534 = vld [vmem:[%s1 + $0xad8] sm:$0xff]
      %v535 = vld [vmem:[%s1 + $0xae0] sm:$0xff]
      %v536 = vld [vmem:[%s1 + $0xae8] sm:$0xff]
      %v537 = vld [vmem:[%s1 + $0xaf0] sm:$0xff]
      %v538 = vld [vmem:[%s1 + $0xaf8] sm:$0xff]
      %v539 = vld [vmem:[%s1 + $0xb00] sm:$0xff]
      %v540 = vld [vmem:[%s1 + $0xb08] sm:$0xff]
      %v541 = vld [vmem:[%s1 + $0xb10] sm:$0xff]
      %v542 = vld [vmem:[%s1 + $0xb18] sm:$0xff]
      %v543 = vld [vmem:[%s1 + $0xb20] sm:$0xff]
      %v544 = vld [vmem:[%s1 + $0xb28] sm:$0xff]
      %v545 = vld [vmem:[%s1 + $0xb30] sm:$0xff]
      %v546 = vld [vmem:[%s1 + $0xb38] sm:$0xff]
      %v547 = vld [vmem:[%s1 + $0xb40] sm:$0xff]
      %v548 = vld [vmem:[%s1 + $0xb48] sm:$0xff]
      %v549 = vld [vmem:[%s1 + $0xb50] sm:$0xff]
      %v550 = vld [vmem:[%s1 + $0xb58] sm:$0xff]
      %v551 = vld [vmem:[%s1 + $0xb60] sm:$0xff]
      %v552 = vld [vmem:[%s1 + $0xb68] sm:$0xff]
      %v553 = vld [vmem:[%s1 + $0xb70] sm:$0xff]
      %v554 = vld [vmem:[%s1 + $0xb78] sm:$0xff]
      %v555 = vld [vmem:[%s1 + $0xb80] sm:$0xff]
      %v556 = vld [vmem:[%s1 + $0xb88] sm:$0xff]
      %v557 = vld [vmem:[%s1 + $0xb90] sm:$0xff]
      %v558 = vld [vmem:[%s1 + $0xb98] sm:$0xff]
      %v559 = vld [vmem:[%s1 + $0xba0] sm:$0xff]
      %v560 = vld [vmem:[%s1 + $0xba8] sm:$0xff]
      %v561 = vld [vmem:[%s1 + $0xbb0] sm:$0xff]
      %v562 = vld [vmem:[%s1 + $0xbb8] sm:$0xff]
      %v563 = vld [vmem:[%s1 + $0xbc0] sm:$0xff]
      %v564 = vld [vmem:[%s1 + $0xbc8] sm:$0xff]
      %v565 = vld [vmem:[%s1 + $0xbd0] sm:$0xff]
      %v566 = vld [vmem:[%s1 + $0xbd8] sm:$0xff]
      %v567 = vld [vmem:[%s1 + $0xbe0] sm:$0xff]
      %v568 = vld [vmem:[%s1 + $0xbe8] sm:$0xff]
      %v569 = vld [vmem:[%s1 + $0xbf0] sm:$0xff]
      %v570 = vld [vmem:[%s1 + $0xbf8] sm:$0xff]
      %v571 = vld [vmem:[%s1 + $0xc00] sm:$0xff]
      %v572 = vld [vmem:[%s1 + $0xc08] sm:$0xff]
      %v573 = vld [vmem:[%s1 + $0xc10] sm:$0xff]
      %v574 = vld [vmem:[%s1 + $0xc18] sm:$0xff]
      %v575 = vld [vmem:[%s1 + $0xc20] sm:$0xff]
      %v576 = vld [vmem:[%s1 + $0xc28] sm:$0xff]
      %v577 = vld [vmem:[%s1 + $0xc30] sm:$0xff]
      %v578 = vld [vmem:[%s1 + $0xc38] sm:$0xff]
      %v579 = vld [vmem:[%s1 + $0xc40] sm:$0xf]
      %v580 = vld [vmem:[%s1 + $0xc48] sm:$0xf]
      %v581 = vld [vmem:[%s1 + $0xc50] sm:$0xf]
      %v582 = vld [vmem:[%s1 + $0xc58] sm:$0xf]
      %v583 = vld [vmem:[%s1 + $0xc60] sm:$0xf]
      %v584 = vld [vmem:[%s1 + $0xc68] sm:$0xf]
      %v585 = vld [vmem:[%s1 + $0xc70] sm:$0xf]
      %v586 = vld [vmem:[%s1 + $0xc78] sm:$0xf]
      %v587 = vld [vmem:[%s165] sm:$0xfe]
      %v588 = vld [vmem:[%s165 + $0x8] sm:$0xfe]
      %v589 = vld [vmem:[%s165 + $0x10] sm:$0xfe]
      %v590 = vld [vmem:[%s165 + $0x18] sm:$0xfe]
      %v591 = vld [vmem:[%s165 + $0x80] sm:$0x1]
      %v592 = vld [vmem:[%s165 + $0x88] sm:$0x1]
      %v593 = vld [vmem:[%s165 + $0x90] sm:$0x1]
      %v594 = vld [vmem:[%s165 + $0x98] sm:$0x1]
      %s595 = scalar_lea.vmem %s1, 3200
      %v596 = vld [vmem:[%s595] sm:$0xff]
      %v597 = vld [vmem:[%s595 + $0x8] sm:$0xff]
      %v598 = vld [vmem:[%s595 + $0x10] sm:$0xff]
      %v599 = vld [vmem:[%s595 + $0x18] sm:$0xff]
      %v600 = vld [vmem:[%s595 + $0x20] sm:$0xff]
      %v601 = vld [vmem:[%s595 + $0x28] sm:$0xff]
      %v602 = vld [vmem:[%s595 + $0x30] sm:$0xff]
      %v603 = vld [vmem:[%s595 + $0x38] sm:$0xff]
      %v604 = vld [vmem:[%s595 + $0x40] sm:$0xff]
      %v605 = vld [vmem:[%s595 + $0x48] sm:$0xff]
      %v606 = vld [vmem:[%s595 + $0x50] sm:$0xff]
      %v607 = vld [vmem:[%s595 + $0x58] sm:$0xff]
      %v608 = vld [vmem:[%s595 + $0x60] sm:$0xff]
      %v609 = vld [vmem:[%s595 + $0x68] sm:$0xff]
      %v610 = vld [vmem:[%s595 + $0x70] sm:$0xff]
      %v611 = vld [vmem:[%s595 + $0x78] sm:$0xff]
      %v612 = vld [vmem:[%s595 + $0x80] sm:$0xff]
      %v613 = vld [vmem:[%s595 + $0x88] sm:$0xff]
      %v614 = vld [vmem:[%s595 + $0x90] sm:$0xff]
      %v615 = vld [vmem:[%s595 + $0x98] sm:$0xff]
      %v616 = vld [vmem:[%s595 + $0xa0] sm:$0xff]
      %v617 = vld [vmem:[%s595 + $0xa8] sm:$0xff]
      %v618 = vld [vmem:[%s595 + $0xb0] sm:$0xff]
      %v619 = vld [vmem:[%s595 + $0xb8] sm:$0xff]
      %v620 = vld [vmem:[%s595 + $0xc0] sm:$0xff]
      %v621 = vld [vmem:[%s595 + $0xc8] sm:$0xff]
      %v622 = vld [vmem:[%s595 + $0xd0] sm:$0xff]
      %v623 = vld [vmem:[%s595 + $0xd8] sm:$0xff]
      %v624 = vld [vmem:[%s595 + $0xe0] sm:$0xff]
      %v625 = vld [vmem:[%s595 + $0xe8] sm:$0xff]
      %v626 = vld [vmem:[%s595 + $0xf0] sm:$0xff]
      %v627 = vld [vmem:[%s595 + $0xf8] sm:$0xff]
      %v628 = vld [vmem:[%s595 + $0x100] sm:$0xff]
      %v629 = vld [vmem:[%s595 + $0x108] sm:$0xff]
      %v630 = vld [vmem:[%s595 + $0x110] sm:$0xff]
      %v631 = vld [vmem:[%s595 + $0x118] sm:$0xff]
      %v632 = vld [vmem:[%s595 + $0x120] sm:$0xff]
      %v633 = vld [vmem:[%s595 + $0x128] sm:$0xff]
      %v634 = vld [vmem:[%s595 + $0x130] sm:$0xff]
      %v635 = vld [vmem:[%s595 + $0x138] sm:$0xff]
      %v636 = vld [vmem:[%s595 + $0x140] sm:$0xff]
      %v637 = vld [vmem:[%s595 + $0x148] sm:$0xff]
      %v638 = vld [vmem:[%s595 + $0x150] sm:$0xff]
      %v639 = vld [vmem:[%s595 + $0x158] sm:$0xff]
      %v640 = vld [vmem:[%s595 + $0x160] sm:$0xff]
      %v641 = vld [vmem:[%s595 + $0x168] sm:$0xff]
      %v642 = vld [vmem:[%s595 + $0x170] sm:$0xff]
      %v643 = vld [vmem:[%s595 + $0x178] sm:$0xff]
      %v644 = vld [vmem:[%s595 + $0x180] sm:$0xff]
      %v645 = vld [vmem:[%s595 + $0x188] sm:$0xff]
      %v646 = vld [vmem:[%s595 + $0x190] sm:$0xff]
      %v647 = vld [vmem:[%s595 + $0x198] sm:$0xff]
      %v648 = vld [vmem:[%s595 + $0x1a0] sm:$0xff]
      %v649 = vld [vmem:[%s595 + $0x1a8] sm:$0xff]
      %v650 = vld [vmem:[%s595 + $0x1b0] sm:$0xff]
      %v651 = vld [vmem:[%s595 + $0x1b8] sm:$0xff]
      %v652 = vld [vmem:[%s595 + $0x1c0] sm:$0xff]
      %v653 = vld [vmem:[%s595 + $0x1c8] sm:$0xff]
      %v654 = vld [vmem:[%s595 + $0x1d0] sm:$0xff]
      %v655 = vld [vmem:[%s595 + $0x1d8] sm:$0xff]
      %v656 = vld [vmem:[%s595 + $0x1e0] sm:$0xff]
      %v657 = vld [vmem:[%s595 + $0x1e8] sm:$0xff]
      %v658 = vld [vmem:[%s595 + $0x1f0] sm:$0xff]
      %v659 = vld [vmem:[%s595 + $0x1f8] sm:$0xff]
      %v660 = vld [vmem:[%s595 + $0x200] sm:$0xff]
      %v661 = vld [vmem:[%s595 + $0x208] sm:$0xff]
      %v662 = vld [vmem:[%s595 + $0x210] sm:$0xff]
      %v663 = vld [vmem:[%s595 + $0x218] sm:$0xff]
      %v664 = vld [vmem:[%s595 + $0x220] sm:$0xff]
      %v665 = vld [vmem:[%s595 + $0x228] sm:$0xff]
      %v666 = vld [vmem:[%s595 + $0x230] sm:$0xff]
      %v667 = vld [vmem:[%s595 + $0x238] sm:$0xff]
      %v668 = vld [vmem:[%s595 + $0x240] sm:$0xff]
      %v669 = vld [vmem:[%s595 + $0x248] sm:$0xff]
      %v670 = vld [vmem:[%s595 + $0x250] sm:$0xff]
      %v671 = vld [vmem:[%s595 + $0x258] sm:$0xff]
      %v672 = vld [vmem:[%s595 + $0x260] sm:$0xff]
      %v673 = vld [vmem:[%s595 + $0x268] sm:$0xff]
      %v674 = vld [vmem:[%s595 + $0x270] sm:$0xff]
      %v675 = vld [vmem:[%s595 + $0x278] sm:$0xff]
      %v676 = vld [vmem:[%s595 + $0x280] sm:$0xff]
      %v677 = vld [vmem:[%s595 + $0x288] sm:$0xff]
      %v678 = vld [vmem:[%s595 + $0x290] sm:$0xff]
      %v679 = vld [vmem:[%s595 + $0x298] sm:$0xff]
      %v680 = vld [vmem:[%s595 + $0x2a0] sm:$0xff]
      %v681 = vld [vmem:[%s595 + $0x2a8] sm:$0xff]
      %v682 = vld [vmem:[%s595 + $0x2b0] sm:$0xff]
      %v683 = vld [vmem:[%s595 + $0x2b8] sm:$0xff]
      %v684 = vld [vmem:[%s595 + $0x2c0] sm:$0xff]
      %v685 = vld [vmem:[%s595 + $0x2c8] sm:$0xff]
      %v686 = vld [vmem:[%s595 + $0x2d0] sm:$0xff]
      %v687 = vld [vmem:[%s595 + $0x2d8] sm:$0xff]
      %v688 = vld [vmem:[%s595 + $0x2e0] sm:$0xff]
      %v689 = vld [vmem:[%s595 + $0x2e8] sm:$0xff]
      %v690 = vld [vmem:[%s595 + $0x2f0] sm:$0xff]
      %v691 = vld [vmem:[%s595 + $0x2f8] sm:$0xff]
      %v692 = vld [vmem:[%s595 + $0x300] sm:$0xff]
      %v693 = vld [vmem:[%s595 + $0x308] sm:$0xff]
      %v694 = vld [vmem:[%s595 + $0x310] sm:$0xff]
      %v695 = vld [vmem:[%s595 + $0x318] sm:$0xff]
      %v696 = vld [vmem:[%s595 + $0x320] sm:$0xff]
      %v697 = vld [vmem:[%s595 + $0x328] sm:$0xff]
      %v698 = vld [vmem:[%s595 + $0x330] sm:$0xff]
      %v699 = vld [vmem:[%s595 + $0x338] sm:$0xff]
      %v700 = vld [vmem:[%s595 + $0x340] sm:$0xff]
      %v701 = vld [vmem:[%s595 + $0x348] sm:$0xff]
      %v702 = vld [vmem:[%s595 + $0x350] sm:$0xff]
      %v703 = vld [vmem:[%s595 + $0x358] sm:$0xff]
      %v704 = vld [vmem:[%s595 + $0x360] sm:$0xff]
      %v705 = vld [vmem:[%s595 + $0x368] sm:$0xff]
      %v706 = vld [vmem:[%s595 + $0x370] sm:$0xff]
      %v707 = vld [vmem:[%s595 + $0x378] sm:$0xff]
      %v708 = vld [vmem:[%s595 + $0x380] sm:$0xff]
      %v709 = vld [vmem:[%s595 + $0x388] sm:$0xff]
      %v710 = vld [vmem:[%s595 + $0x390] sm:$0xff]
      %v711 = vld [vmem:[%s595 + $0x398] sm:$0xff]
      %v712 = vld [vmem:[%s595 + $0x3a0] sm:$0xff]
      %v713 = vld [vmem:[%s595 + $0x3a8] sm:$0xff]
      %v714 = vld [vmem:[%s595 + $0x3b0] sm:$0xff]
      %v715 = vld [vmem:[%s595 + $0x3b8] sm:$0xff]
      %v716 = vld [vmem:[%s595 + $0x3c0] sm:$0xff]
      %v717 = vld [vmem:[%s595 + $0x3c8] sm:$0xff]
      %v718 = vld [vmem:[%s595 + $0x3d0] sm:$0xff]
      %v719 = vld [vmem:[%s595 + $0x3d8] sm:$0xff]
      %v720 = vld [vmem:[%s595 + $0x3e0] sm:$0xff]
      %v721 = vld [vmem:[%s595 + $0x3e8] sm:$0xff]
      %v722 = vld [vmem:[%s595 + $0x3f0] sm:$0xff]
      %v723 = vld [vmem:[%s595 + $0x3f8] sm:$0xff]
      %v724 = vld [vmem:[%s595 + $0x400] sm:$0xff]
      %v725 = vld [vmem:[%s595 + $0x408] sm:$0xff]
      %v726 = vld [vmem:[%s595 + $0x410] sm:$0xff]
      %v727 = vld [vmem:[%s595 + $0x418] sm:$0xff]
      %v728 = vld [vmem:[%s595 + $0x420] sm:$0xff]
      %v729 = vld [vmem:[%s595 + $0x428] sm:$0xff]
      %v730 = vld [vmem:[%s595 + $0x430] sm:$0xff]
      %v731 = vld [vmem:[%s595 + $0x438] sm:$0xff]
      %v732 = vld [vmem:[%s595 + $0x440] sm:$0xff]
      %v733 = vld [vmem:[%s595 + $0x448] sm:$0xff]
      %v734 = vld [vmem:[%s595 + $0x450] sm:$0xff]
      %v735 = vld [vmem:[%s595 + $0x458] sm:$0xff]
      %v736 = vld [vmem:[%s595 + $0x460] sm:$0xff]
      %v737 = vld [vmem:[%s595 + $0x468] sm:$0xff]
      %v738 = vld [vmem:[%s595 + $0x470] sm:$0xff]
      %v739 = vld [vmem:[%s595 + $0x478] sm:$0xff]
      %v740 = vld [vmem:[%s595 + $0x480] sm:$0xff]
      %v741 = vld [vmem:[%s595 + $0x488] sm:$0xff]
      %v742 = vld [vmem:[%s595 + $0x490] sm:$0xff]
      %v743 = vld [vmem:[%s595 + $0x498] sm:$0xff]
      %v744 = vld [vmem:[%s595 + $0x4a0] sm:$0xff]
      %v745 = vld [vmem:[%s595 + $0x4a8] sm:$0xff]
      %v746 = vld [vmem:[%s595 + $0x4b0] sm:$0xff]
      %v747 = vld [vmem:[%s595 + $0x4b8] sm:$0xff]
      %v748 = vld [vmem:[%s595 + $0x4c0] sm:$0xff]
      %v749 = vld [vmem:[%s595 + $0x4c8] sm:$0xff]
      %v750 = vld [vmem:[%s595 + $0x4d0] sm:$0xff]
      %v751 = vld [vmem:[%s595 + $0x4d8] sm:$0xff]
      %v752 = vld [vmem:[%s595 + $0x4e0] sm:$0xff]
      %v753 = vld [vmem:[%s595 + $0x4e8] sm:$0xff]
      %v754 = vld [vmem:[%s595 + $0x4f0] sm:$0xff]
      %v755 = vld [vmem:[%s595 + $0x4f8] sm:$0xff]
      %v756 = vld [vmem:[%s595 + $0x500] sm:$0xff]
      %v757 = vld [vmem:[%s595 + $0x508] sm:$0xff]
      %v758 = vld [vmem:[%s595 + $0x510] sm:$0xff]
      %v759 = vld [vmem:[%s595 + $0x518] sm:$0xff]
      %v760 = vld [vmem:[%s595 + $0x520] sm:$0xff]
      %v761 = vld [vmem:[%s595 + $0x528] sm:$0xff]
      %v762 = vld [vmem:[%s595 + $0x530] sm:$0xff]
      %v763 = vld [vmem:[%s595 + $0x538] sm:$0xff]
      %v764 = vld [vmem:[%s595 + $0x540] sm:$0xff]
      %v765 = vld [vmem:[%s595 + $0x548] sm:$0xff]
      %v766 = vld [vmem:[%s595 + $0x550] sm:$0xff]
      %v767 = vld [vmem:[%s595 + $0x558] sm:$0xff]
      %v768 = vld [vmem:[%s595 + $0x560] sm:$0xff]
      %v769 = vld [vmem:[%s595 + $0x568] sm:$0xff]
      %v770 = vld [vmem:[%s595 + $0x570] sm:$0xff]
      %v771 = vld [vmem:[%s595 + $0x578] sm:$0xff]
      %v772 = vld [vmem:[%s595 + $0x580] sm:$0xff]
      %v773 = vld [vmem:[%s595 + $0x588] sm:$0xff]
      %v774 = vld [vmem:[%s595 + $0x590] sm:$0xff]
      %v775 = vld [vmem:[%s595 + $0x598] sm:$0xff]
      %v776 = vld [vmem:[%s595 + $0x5a0] sm:$0xff]
      %v777 = vld [vmem:[%s595 + $0x5a8] sm:$0xff]
      %v778 = vld [vmem:[%s595 + $0x5b0] sm:$0xff]
      %v779 = vld [vmem:[%s595 + $0x5b8] sm:$0xff]
      %v780 = vld [vmem:[%s595 + $0x5c0] sm:$0xff]
      %v781 = vld [vmem:[%s595 + $0x5c8] sm:$0xff]
      %v782 = vld [vmem:[%s595 + $0x5d0] sm:$0xff]
      %v783 = vld [vmem:[%s595 + $0x5d8] sm:$0xff]
      %v784 = vld [vmem:[%s595 + $0x5e0] sm:$0xff]
      %v785 = vld [vmem:[%s595 + $0x5e8] sm:$0xff]
      %v786 = vld [vmem:[%s595 + $0x5f0] sm:$0xff]
      %v787 = vld [vmem:[%s595 + $0x5f8] sm:$0xff]
      %v788 = vld [vmem:[%s595 + $0x600] sm:$0xff]
      %v789 = vld [vmem:[%s595 + $0x608] sm:$0xff]
      %v790 = vld [vmem:[%s595 + $0x610] sm:$0xff]
      %v791 = vld [vmem:[%s595 + $0x618] sm:$0xff]
      %v792 = vld [vmem:[%s595 + $0x620] sm:$0xff]
      %v793 = vld [vmem:[%s595 + $0x628] sm:$0xff]
      %v794 = vld [vmem:[%s595 + $0x630] sm:$0xff]
      %v795 = vld [vmem:[%s595 + $0x638] sm:$0xff]
      %v796 = vld [vmem:[%s595 + $0x640] sm:$0xff]
      %v797 = vld [vmem:[%s595 + $0x648] sm:$0xff]
      %v798 = vld [vmem:[%s595 + $0x650] sm:$0xff]
      %v799 = vld [vmem:[%s595 + $0x658] sm:$0xff]
      %v800 = vld [vmem:[%s595 + $0x660] sm:$0xff]
      %v801 = vld [vmem:[%s595 + $0x668] sm:$0xff]
      %v802 = vld [vmem:[%s595 + $0x670] sm:$0xff]
      %v803 = vld [vmem:[%s595 + $0x678] sm:$0xff]
      %v804 = vld [vmem:[%s595 + $0x680] sm:$0xff]
      %v805 = vld [vmem:[%s595 + $0x688] sm:$0xff]
      %v806 = vld [vmem:[%s595 + $0x690] sm:$0xff]
      %v807 = vld [vmem:[%s595 + $0x698] sm:$0xff]
      %v808 = vld [vmem:[%s595 + $0x6a0] sm:$0xff]
      %v809 = vld [vmem:[%s595 + $0x6a8] sm:$0xff]
      %v810 = vld [vmem:[%s595 + $0x6b0] sm:$0xff]
      %v811 = vld [vmem:[%s595 + $0x6b8] sm:$0xff]
      %v812 = vld [vmem:[%s595 + $0x6c0] sm:$0xff]
      %v813 = vld [vmem:[%s595 + $0x6c8] sm:$0xff]
      %v814 = vld [vmem:[%s595 + $0x6d0] sm:$0xff]
      %v815 = vld [vmem:[%s595 + $0x6d8] sm:$0xff]
      %v816 = vld [vmem:[%s595 + $0x6e0] sm:$0xff]
      %v817 = vld [vmem:[%s595 + $0x6e8] sm:$0xff]
      %v818 = vld [vmem:[%s595 + $0x6f0] sm:$0xff]
      %v819 = vld [vmem:[%s595 + $0x6f8] sm:$0xff]
      %v820 = vld [vmem:[%s595 + $0x700] sm:$0xff]
      %v821 = vld [vmem:[%s595 + $0x708] sm:$0xff]
      %v822 = vld [vmem:[%s595 + $0x710] sm:$0xff]
      %v823 = vld [vmem:[%s595 + $0x718] sm:$0xff]
      %v824 = vld [vmem:[%s595 + $0x720] sm:$0xff]
      %v825 = vld [vmem:[%s595 + $0x728] sm:$0xff]
      %v826 = vld [vmem:[%s595 + $0x730] sm:$0xff]
      %v827 = vld [vmem:[%s595 + $0x738] sm:$0xff]
      %v828 = vld [vmem:[%s595 + $0x740] sm:$0xff]
      %v829 = vld [vmem:[%s595 + $0x748] sm:$0xff]
      %v830 = vld [vmem:[%s595 + $0x750] sm:$0xff]
      %v831 = vld [vmem:[%s595 + $0x758] sm:$0xff]
      %v832 = vld [vmem:[%s595 + $0x760] sm:$0xff]
      %v833 = vld [vmem:[%s595 + $0x768] sm:$0xff]
      %v834 = vld [vmem:[%s595 + $0x770] sm:$0xff]
      %v835 = vld [vmem:[%s595 + $0x778] sm:$0xff]
      %v836 = vld [vmem:[%s595 + $0x780] sm:$0xff]
      %v837 = vld [vmem:[%s595 + $0x788] sm:$0xff]
      %v838 = vld [vmem:[%s595 + $0x790] sm:$0xff]
      %v839 = vld [vmem:[%s595 + $0x798] sm:$0xff]
      %v840 = vld [vmem:[%s595 + $0x7a0] sm:$0xff]
      %v841 = vld [vmem:[%s595 + $0x7a8] sm:$0xff]
      %v842 = vld [vmem:[%s595 + $0x7b0] sm:$0xff]
      %v843 = vld [vmem:[%s595 + $0x7b8] sm:$0xff]
      %v844 = vld [vmem:[%s595 + $0x7c0] sm:$0xff]
      %v845 = vld [vmem:[%s595 + $0x7c8] sm:$0xff]
      %v846 = vld [vmem:[%s595 + $0x7d0] sm:$0xff]
      %v847 = vld [vmem:[%s595 + $0x7d8] sm:$0xff]
      %v848 = vld [vmem:[%s595 + $0x7e0] sm:$0xff]
      %v849 = vld [vmem:[%s595 + $0x7e8] sm:$0xff]
      %v850 = vld [vmem:[%s595 + $0x7f0] sm:$0xff]
      %v851 = vld [vmem:[%s595 + $0x7f8] sm:$0xff]
      %v852 = vld [vmem:[%s595 + $0x800] sm:$0xff]
      %v853 = vld [vmem:[%s595 + $0x808] sm:$0xff]
      %v854 = vld [vmem:[%s595 + $0x810] sm:$0xff]
      %v855 = vld [vmem:[%s595 + $0x818] sm:$0xff]
      %v856 = vld [vmem:[%s595 + $0x820] sm:$0xff]
      %v857 = vld [vmem:[%s595 + $0x828] sm:$0xff]
      %v858 = vld [vmem:[%s595 + $0x830] sm:$0xff]
      %v859 = vld [vmem:[%s595 + $0x838] sm:$0xff]
      %v860 = vld [vmem:[%s595 + $0x840] sm:$0xff]
      %v861 = vld [vmem:[%s595 + $0x848] sm:$0xff]
      %v862 = vld [vmem:[%s595 + $0x850] sm:$0xff]
      %v863 = vld [vmem:[%s595 + $0x858] sm:$0xff]
      %v864 = vld [vmem:[%s595 + $0x860] sm:$0xff]
      %v865 = vld [vmem:[%s595 + $0x868] sm:$0xff]
      %v866 = vld [vmem:[%s595 + $0x870] sm:$0xff]
      %v867 = vld [vmem:[%s595 + $0x878] sm:$0xff]
      %v868 = vld [vmem:[%s595 + $0x880] sm:$0xff]
      %v869 = vld [vmem:[%s595 + $0x888] sm:$0xff]
      %v870 = vld [vmem:[%s595 + $0x890] sm:$0xff]
      %v871 = vld [vmem:[%s595 + $0x898] sm:$0xff]
      %v872 = vld [vmem:[%s595 + $0x8a0] sm:$0xff]
      %v873 = vld [vmem:[%s595 + $0x8a8] sm:$0xff]
      %v874 = vld [vmem:[%s595 + $0x8b0] sm:$0xff]
      %v875 = vld [vmem:[%s595 + $0x8b8] sm:$0xff]
      %v876 = vld [vmem:[%s595 + $0x8c0] sm:$0xff]
      %v877 = vld [vmem:[%s595 + $0x8c8] sm:$0xff]
      %v878 = vld [vmem:[%s595 + $0x8d0] sm:$0xff]
      %v879 = vld [vmem:[%s595 + $0x8d8] sm:$0xff]
      %v880 = vld [vmem:[%s595 + $0x8e0] sm:$0xff]
      %v881 = vld [vmem:[%s595 + $0x8e8] sm:$0xff]
      %v882 = vld [vmem:[%s595 + $0x8f0] sm:$0xff]
      %v883 = vld [vmem:[%s595 + $0x8f8] sm:$0xff]
      %v884 = vld [vmem:[%s595 + $0x900] sm:$0xff]
      %v885 = vld [vmem:[%s595 + $0x908] sm:$0xff]
      %v886 = vld [vmem:[%s595 + $0x910] sm:$0xff]
      %v887 = vld [vmem:[%s595 + $0x918] sm:$0xff]
      %v888 = vld [vmem:[%s595 + $0x920] sm:$0xff]
      %v889 = vld [vmem:[%s595 + $0x928] sm:$0xff]
      %v890 = vld [vmem:[%s595 + $0x930] sm:$0xff]
      %v891 = vld [vmem:[%s595 + $0x938] sm:$0xff]
      %v892 = vld [vmem:[%s595 + $0x940] sm:$0xff]
      %v893 = vld [vmem:[%s595 + $0x948] sm:$0xff]
      %v894 = vld [vmem:[%s595 + $0x950] sm:$0xff]
      %v895 = vld [vmem:[%s595 + $0x958] sm:$0xff]
      %v896 = vld [vmem:[%s595 + $0x960] sm:$0xff]
      %v897 = vld [vmem:[%s595 + $0x968] sm:$0xff]
      %v898 = vld [vmem:[%s595 + $0x970] sm:$0xff]
      %v899 = vld [vmem:[%s595 + $0x978] sm:$0xff]
      %v900 = vld [vmem:[%s595 + $0x980] sm:$0xff]
      %v901 = vld [vmem:[%s595 + $0x988] sm:$0xff]
      %v902 = vld [vmem:[%s595 + $0x990] sm:$0xff]
      %v903 = vld [vmem:[%s595 + $0x998] sm:$0xff]
      %v904 = vld [vmem:[%s595 + $0x9a0] sm:$0xff]
      %v905 = vld [vmem:[%s595 + $0x9a8] sm:$0xff]
      %v906 = vld [vmem:[%s595 + $0x9b0] sm:$0xff]
      %v907 = vld [vmem:[%s595 + $0x9b8] sm:$0xff]
      %v908 = vld [vmem:[%s595 + $0x9c0] sm:$0xff]
      %v909 = vld [vmem:[%s595 + $0x9c8] sm:$0xff]
      %v910 = vld [vmem:[%s595 + $0x9d0] sm:$0xff]
      %v911 = vld [vmem:[%s595 + $0x9d8] sm:$0xff]
      %v912 = vld [vmem:[%s595 + $0x9e0] sm:$0xff]
      %v913 = vld [vmem:[%s595 + $0x9e8] sm:$0xff]
      %v914 = vld [vmem:[%s595 + $0x9f0] sm:$0xff]
      %v915 = vld [vmem:[%s595 + $0x9f8] sm:$0xff]
      %v916 = vld [vmem:[%s595 + $0xa00] sm:$0xff]
      %v917 = vld [vmem:[%s595 + $0xa08] sm:$0xff]
      %v918 = vld [vmem:[%s595 + $0xa10] sm:$0xff]
      %v919 = vld [vmem:[%s595 + $0xa18] sm:$0xff]
      %v920 = vld [vmem:[%s595 + $0xa20] sm:$0xff]
      %v921 = vld [vmem:[%s595 + $0xa28] sm:$0xff]
      %v922 = vld [vmem:[%s595 + $0xa30] sm:$0xff]
      %v923 = vld [vmem:[%s595 + $0xa38] sm:$0xff]
      %v924 = vld [vmem:[%s595 + $0xa40] sm:$0xff]
      %v925 = vld [vmem:[%s595 + $0xa48] sm:$0xff]
      %v926 = vld [vmem:[%s595 + $0xa50] sm:$0xff]
      %v927 = vld [vmem:[%s595 + $0xa58] sm:$0xff]
      %v928 = vld [vmem:[%s595 + $0xa60] sm:$0xff]
      %v929 = vld [vmem:[%s595 + $0xa68] sm:$0xff]
      %v930 = vld [vmem:[%s595 + $0xa70] sm:$0xff]
      %v931 = vld [vmem:[%s595 + $0xa78] sm:$0xff]
      %v932 = vld [vmem:[%s595 + $0xa80] sm:$0xff]
      %v933 = vld [vmem:[%s595 + $0xa88] sm:$0xff]
      %v934 = vld [vmem:[%s595 + $0xa90] sm:$0xff]
      %v935 = vld [vmem:[%s595 + $0xa98] sm:$0xff]
      %v936 = vld [vmem:[%s595 + $0xaa0] sm:$0xff]
      %v937 = vld [vmem:[%s595 + $0xaa8] sm:$0xff]
      %v938 = vld [vmem:[%s595 + $0xab0] sm:$0xff]
      %v939 = vld [vmem:[%s595 + $0xab8] sm:$0xff]
      %v940 = vld [vmem:[%s595 + $0xac0] sm:$0xff]
      %v941 = vld [vmem:[%s595 + $0xac8] sm:$0xff]
      %v942 = vld [vmem:[%s595 + $0xad0] sm:$0xff]
      %v943 = vld [vmem:[%s595 + $0xad8] sm:$0xff]
      %v944 = vld [vmem:[%s595 + $0xae0] sm:$0xff]
      %v945 = vld [vmem:[%s595 + $0xae8] sm:$0xff]
      %v946 = vld [vmem:[%s595 + $0xaf0] sm:$0xff]
      %v947 = vld [vmem:[%s595 + $0xaf8] sm:$0xff]
      %v948 = vld [vmem:[%s595 + $0xb00] sm:$0xff]
      %v949 = vld [vmem:[%s595 + $0xb08] sm:$0xff]
      %v950 = vld [vmem:[%s595 + $0xb10] sm:$0xff]
      %v951 = vld [vmem:[%s595 + $0xb18] sm:$0xff]
      %v952 = vld [vmem:[%s595 + $0xb20] sm:$0xff]
      %v953 = vld [vmem:[%s595 + $0xb28] sm:$0xff]
      %v954 = vld [vmem:[%s595 + $0xb30] sm:$0xff]
      %v955 = vld [vmem:[%s595 + $0xb38] sm:$0xff]
      %v956 = vld [vmem:[%s595 + $0xb40] sm:$0xff]
      %v957 = vld [vmem:[%s595 + $0xb48] sm:$0xff]
      %v958 = vld [vmem:[%s595 + $0xb50] sm:$0xff]
      %v959 = vld [vmem:[%s595 + $0xb58] sm:$0xff]
      %v960 = vld [vmem:[%s595 + $0xb60] sm:$0xff]
      %v961 = vld [vmem:[%s595 + $0xb68] sm:$0xff]
      %v962 = vld [vmem:[%s595 + $0xb70] sm:$0xff]
      %v963 = vld [vmem:[%s595 + $0xb78] sm:$0xff]
      %v964 = vld [vmem:[%s595 + $0xb80] sm:$0xff]
      %v965 = vld [vmem:[%s595 + $0xb88] sm:$0xff]
      %v966 = vld [vmem:[%s595 + $0xb90] sm:$0xff]
      %v967 = vld [vmem:[%s595 + $0xb98] sm:$0xff]
      %v968 = vld [vmem:[%s595 + $0xba0] sm:$0xff]
      %v969 = vld [vmem:[%s595 + $0xba8] sm:$0xff]
      %v970 = vld [vmem:[%s595 + $0xbb0] sm:$0xff]
      %v971 = vld [vmem:[%s595 + $0xbb8] sm:$0xff]
      %v972 = vld [vmem:[%s595 + $0xbc0] sm:$0xff]
      %v973 = vld [vmem:[%s595 + $0xbc8] sm:$0xff]
      %v974 = vld [vmem:[%s595 + $0xbd0] sm:$0xff]
      %v975 = vld [vmem:[%s595 + $0xbd8] sm:$0xff]
      %v976 = vld [vmem:[%s595 + $0xbe0] sm:$0xff]
      %v977 = vld [vmem:[%s595 + $0xbe8] sm:$0xff]
      %v978 = vld [vmem:[%s595 + $0xbf0] sm:$0xff]
      %v979 = vld [vmem:[%s595 + $0xbf8] sm:$0xff]
      %v980 = vld [vmem:[%s595 + $0xc00] sm:$0xff]
      %v981 = vld [vmem:[%s595 + $0xc08] sm:$0xff]
      %v982 = vld [vmem:[%s595 + $0xc10] sm:$0xff]
      %v983 = vld [vmem:[%s595 + $0xc18] sm:$0xff]
      %v984 = vld [vmem:[%s595 + $0xc20] sm:$0xff]
      %v985 = vld [vmem:[%s595 + $0xc28] sm:$0xff]
      %v986 = vld [vmem:[%s595 + $0xc30] sm:$0xff]
      %v987 = vld [vmem:[%s595 + $0xc38] sm:$0xff]
      %v988 = vld [vmem:[%s595 + $0xc40] sm:$0xf]
      %v989 = vld [vmem:[%s595 + $0xc48] sm:$0xf]
      %v990 = vld [vmem:[%s595 + $0xc50] sm:$0xf]
      %v991 = vld [vmem:[%s595 + $0xc58] sm:$0xf]
      %v992 = vld [vmem:[%s595 + $0xc60] sm:$0xf]
      %v993 = vld [vmem:[%s595 + $0xc68] sm:$0xf]
      %v994 = vld [vmem:[%s595 + $0xc70] sm:$0xf]
      %v995 = vld [vmem:[%s595 + $0xc78] sm:$0xf]
      %vm1016 = vcmask 1046528
      %v1017 = vrot.slane %v587, 1
      %v1018 = vrot.slane %v175, 1
      %v1019 = vsel %vm1016, %v1017, %v1018
      %v1020 = vrot.slane %v588, 1
      %v1021 = vrot.slane %v176, 1
      %v1022 = vsel %vm1016, %v1020, %v1021
      %v1023 = vrot.slane %v589, 1
      %v1024 = vrot.slane %v177, 1
      %v1025 = vsel %vm1016, %v1023, %v1024
      %v1026 = vrot.slane %v590, 1
      %v1027 = vrot.slane %v178, 1
      %v1028 = vsel %vm1016, %v1026, %v1027
      %v1029 = vrot.slane %v179, 1
      %v1030 = vsel %vm1016, %v1018, %v1029
      %v1031 = vrot.slane %v180, 1
      %v1032 = vsel %vm1016, %v1021, %v1031
      %v1033 = vrot.slane %v181, 1
      %v1034 = vsel %vm1016, %v1024, %v1033
      %v1035 = vrot.slane %v182, 1
      %v1036 = vsel %vm1016, %v1027, %v1035
      %v1037 = vrot.slane %v183, 1
      %v1038 = vsel %vm1016, %v1029, %v1037
      %v1039 = vrot.slane %v184, 1
      %v1040 = vsel %vm1016, %v1031, %v1039
      %v1041 = vrot.slane %v185, 1
      %v1042 = vsel %vm1016, %v1033, %v1041
      %v1043 = vrot.slane %v186, 1
      %v1044 = vsel %vm1016, %v1035, %v1043
      %v1045 = vrot.slane %v591, 1
      %v1046 = vsel %vm1016, %v1037, %v1045
      %v1047 = vrot.slane %v592, 1
      %v1048 = vsel %vm1016, %v1039, %v1047
      %v1049 = vrot.slane %v593, 1
      %v1050 = vsel %vm1016, %v1041, %v1049
      %v1051 = vrot.slane %v594, 1
      %v1052 = vsel %vm1016, %v1043, %v1051
      %vm1065 = vcmask 97280
      %v1066 = vsel %vm1065, %v1028, 0
      %v1068 = vsel %vm1065, %v1036, 0
      %v1070 = vsel %vm1065, %v1044, 0
      %v1072 = vsel %vm1065, %v1052, 0
      %vm1074 = vcmask 1043456
      %v1076 = vsel %vm1074, %v988, 0
      %v1079 = vsel %vm1074, %v989, 0
      %v1082 = vsel %vm1074, %v990, 0
      %v1085 = vsel %vm1074, %v991, 0
      %v1088 = vsel %vm1074, %v992, 0
      %v1091 = vsel %vm1074, %v993, 0
      %v1094 = vsel %vm1074, %v994, 0
      %v1097 = vsel %vm1074, %v995, 0
      %1099 = vmatprep.subr.mxu0 %v597
      %1100 = vmatpush1.msra.mxu0 %v596
      %1101 = vmatprep.subr.mxu0 %v605
      %1102 = vmatpush1.msra.mxu0 %v604
      %1103 = vmatprep.subr.mxu0 %v613
      %1104 = vmatpush1.msra.mxu0 %v612
      %1105 = vmatprep.subr.mxu0 %v621
      %1106 = vmatpush1.msra.mxu0 %v620
      %1107 = vmatprep.subr.mxu0 %v629
      %1108 = vmatpush1.msra.mxu0 %v628
      %1109 = vmatprep.subr.mxu0 %v637
      %1110 = vmatpush1.msra.mxu0 %v636
      %1111 = vmatprep.subr.mxu0 %v645
      %1112 = vmatpush1.msra.mxu0 %v644
      %1113 = vmatprep.subr.mxu0 %v653
      %1114 = vmatpush1.msra.mxu0 %v652
      %1115 = vmatprep.subr.mxu0 %v661
      %1116 = vmatpush1.msra.mxu0 %v660
      %1117 = vmatprep.subr.mxu0 %v669
      %1118 = vmatpush1.msra.mxu0 %v668
      %1119 = vmatprep.subr.mxu0 %v677
      %1120 = vmatpush1.msra.mxu0 %v676
      %1121 = vmatprep.subr.mxu0 %v685
      %1122 = vmatpush1.msra.mxu0 %v684
      %1123 = vmatprep.subr.mxu0 %v693
      %1124 = vmatpush1.msra.mxu0 %v692
      %1125 = vmatprep.subr.mxu0 %v701
      %1126 = vmatpush1.msra.mxu0 %v700
      %1127 = vmatprep.subr.mxu0 %v709
      %1128 = vmatpush1.msra.mxu0 %v708
      %1129 = vmatprep.subr.mxu0 %v717
      %1130 = vmatpush1.msra.mxu0 %v716
      %1131 = vmatprep.subr.mxu0 %v725
      %1132 = vmatpush1.msra.mxu0 %v724
      %1133 = vmatprep.subr.mxu0 %v733
      %1134 = vmatpush1.msra.mxu0 %v732
      %1135 = vmatprep.subr.mxu0 %v741
      %1136 = vmatpush1.msra.mxu0 %v740
      %1137 = vmatprep.subr.mxu0 %v749
      %1138 = vmatpush1.msra.mxu0 %v748
      %1139 = vmatprep.subr.mxu0 %v757
      %1140 = vmatpush1.msra.mxu0 %v756
      %1141 = vmatprep.subr.mxu0 %v765
      %1142 = vmatpush1.msra.mxu0 %v764
      %1143 = vmatprep.subr.mxu0 %v773
      %1144 = vmatpush1.msra.mxu0 %v772
      %1145 = vmatprep.subr.mxu0 %v781
      %1146 = vmatpush1.msra.mxu0 %v780
      %1147 = vmatprep.subr.mxu0 %v789
      %1148 = vmatpush1.msra.mxu0 %v788
      %1149 = vmatprep.subr.mxu0 %v797
      %1150 = vmatpush1.msra.mxu0 %v796
      %1151 = vmatprep.subr.mxu0 %v805
      %1152 = vmatpush1.msra.mxu0 %v804
      %1153 = vmatprep.subr.mxu0 %v813
      %1154 = vmatpush1.msra.mxu0 %v812
      %1155 = vmatprep.subr.mxu0 %v821
      %1156 = vmatpush1.msra.mxu0 %v820
      %1157 = vmatprep.subr.mxu0 %v829
      %1158 = vmatpush1.msra.mxu0 %v828
      %1159 = vmatprep.subr.mxu0 %v837
      %1160 = vmatpush1.msra.mxu0 %v836
      %1161 = vmatprep.subr.mxu0 %v845
      %1162 = vmatpush1.msra.mxu0 %v844
      %1163 = vmatprep.mubr.f32.mxu0 %v1022
      %1164 = vmatmul.mubr.f32.gmra.mrb[0].mxu0 %v1019
      %v1165 = vpop.f32.mrb[0].mxu0
      %v1166 = vadd.f32 0.0, %v1165
      %v1167 = vpop.f32.mrb[0].mxu0
      %v1168 = vadd.f32 0.0, %v1167
      %1169 = vmatprep.mubr.f32.mxu0 %v1032
      %1170 = vmatmul.mubr.f32.gmra.mrb[0].mxu0 %v1030
      %v1171 = vpop.f32.mrb[0].mxu0
      %v1172 = vadd.f32 0.0, %v1171
      %v1173 = vpop.f32.mrb[0].mxu0
      %v1174 = vadd.f32 0.0, %v1173
      %1175 = vmatprep.mubr.f32.mxu0 %v1040
      %1176 = vmatmul.mubr.f32.gmra.mrb[0].mxu0 %v1038
      %v1177 = vpop.f32.mrb[0].mxu0
      %v1178 = vadd.f32 0.0, %v1177
      %v1179 = vpop.f32.mrb[0].mxu0
      %v1180 = vadd.f32 0.0, %v1179
      %1181 = vmatprep.mubr.f32.mxu0 %v1048
      %1182 = vmatmul.mubr.f32.gmra.mrb[0].mxu0 %v1046
      %v1183 = vpop.f32.mrb[0].mxu0
      %v1184 = vadd.f32 0.0, %v1183
      %v1185 = vpop.f32.mrb[0].mxu0
      %v1186 = vadd.f32 0.0, %v1185
      %1187 = vdwg.mxu0
      %1188 = vmatprep.subr.mxu0 %v853
      %1189 = vmatpush1.msra.mxu0 %v852
      %1190 = vmatprep.subr.mxu0 %v861
      %1191 = vmatpush1.msra.mxu0 %v860
      %1192 = vmatprep.subr.mxu0 %v869
      %1193 = vmatpush1.msra.mxu0 %v868
      %1194 = vmatprep.subr.mxu0 %v877
      %1195 = vmatpush1.msra.mxu0 %v876
      %1196 = vmatprep.subr.mxu0 %v885
      %1197 = vmatpush1.msra.mxu0 %v884
      %1198 = vmatprep.subr.mxu0 %v893
      %1199 = vmatpush1.msra.mxu0 %v892
      %1200 = vmatprep.subr.mxu0 %v901
      %1201 = vmatpush1.msra.mxu0 %v900
      %1202 = vmatprep.subr.mxu0 %v909
      %1203 = vmatpush1.msra.mxu0 %v908
      %1204 = vmatprep.subr.mxu0 %v917
      %1205 = vmatpush1.msra.mxu0 %v916
      %1206 = vmatprep.subr.mxu0 %v925
      %1207 = vmatpush1.msra.mxu0 %v924
      %1208 = vmatprep.subr.mxu0 %v933
      %1209 = vmatpush1.msra.mxu0 %v932
      %1210 = vmatprep.subr.mxu0 %v941
      %1211 = vmatpush1.msra.mxu0 %v940
      %1212 = vmatprep.subr.mxu0 %v949
      %1213 = vmatpush1.msra.mxu0 %v948
      %1214 = vmatprep.subr.mxu0 %v957
      %1215 = vmatpush1.msra.mxu0 %v956
      %1216 = vmatprep.subr.mxu0 %v965
      %1217 = vmatpush1.msra.mxu0 %v964
      %1218 = vmatprep.subr.mxu0 %v973
      %1219 = vmatpush1.msra.mxu0 %v972
      %1220 = vmatprep.subr.mxu0 %v981
      %1221 = vmatpush1.msra.mxu0 %v980
      %1222 = vmatprep.subr.mxu0 %v1079
      %1223 = vmatpush1.msra.mxu0 %v1076
      %1224 = vmatprep.subr.mxu0 0.0
      %1225 = vmatpush1.msra.mxu0 0.0
      %1226 = vmatprep.subr.mxu0 0.0
      %1227 = vmatpush1.msra.mxu0 0.0
      %1228 = vmatprep.subr.mxu0 0.0
      %1229 = vmatpush1.msra.mxu0 0.0
      %1230 = vmatprep.subr.mxu0 0.0
      %1231 = vmatpush1.msra.mxu0 0.0
      %1232 = vmatprep.subr.mxu0 0.0
      %1233 = vmatpush1.msra.mxu0 0.0
      %1234 = vmatprep.subr.mxu0 0.0
      %1235 = vmatpush1.msra.mxu0 0.0
      %1236 = vmatprep.subr.mxu0 0.0
      %1237 = vmatpush1.msra.mxu0 0.0
      %1238 = vmatprep.subr.mxu0 0.0
      %1239 = vmatpush1.msra.mxu0 0.0
      %1240 = vmatprep.subr.mxu0 0.0
      %1241 = vmatpush1.msra.mxu0 0.0
      %1242 = vmatprep.subr.mxu0 0.0
      %1243 = vmatpush1.msra.mxu0 0.0
      %1244 = vmatprep.subr.mxu0 0.0
      %1245 = vmatpush1.msra.mxu0 0.0
      %1246 = vmatprep.subr.mxu0 0.0
      %1247 = vmatpush1.msra.mxu0 0.0
      %1248 = vmatprep.subr.mxu0 0.0
      %1249 = vmatpush1.msra.mxu0 0.0
      %1250 = vmatprep.subr.mxu0 0.0
      %1251 = vmatpush1.msra.mxu0 0.0
      %1252 = vmatprep.mubr.f32.mxu0 %v1066
      %1253 = vmatmul.mubr.f32.gmra.mrb[0].mxu0 %v1025
      %v1254 = vpop.f32.mrb[0].mxu0
      %v1255 = vadd.f32 %v1166, %v1254
      %v1256 = vpop.f32.mrb[0].mxu0
      %v1257 = vadd.f32 %v1168, %v1256
      %1258 = vmatprep.mubr.f32.mxu0 %v1068
      %1259 = vmatmul.mubr.f32.gmra.mrb[0].mxu0 %v1034
      %v1260 = vpop.f32.mrb[0].mxu0
      %v1261 = vadd.f32 %v1172, %v1260
      %v1262 = vpop.f32.mrb[0].mxu0
      %v1263 = vadd.f32 %v1174, %v1262
      %1264 = vmatprep.mubr.f32.mxu0 %v1070
      %1265 = vmatmul.mubr.f32.gmra.mrb[0].mxu0 %v1042
      %v1266 = vpop.f32.mrb[0].mxu0
      %v1267 = vadd.f32 %v1178, %v1266
      %v1268 = vpop.f32.mrb[0].mxu0
      %v1269 = vadd.f32 %v1180, %v1268
      %1270 = vmatprep.mubr.f32.mxu0 %v1072
      %1271 = vmatmul.mubr.f32.gmra.mrb[0].mxu0 %v1050
      %v1272 = vpop.f32.mrb[0].mxu0
      %v1273 = vadd.f32 %v1184, %v1272
      %v1274 = vpop.f32.mrb[0].mxu0
      %v1275 = vadd.f32 %v1186, %v1274
      %1276 = vdwg.mxu0
      %1277 = vmatprep.subr.mxu0 %v599
      %1278 = vmatpush1.msra.mxu0 %v598
      %1279 = vmatprep.subr.mxu0 %v607
      %1280 = vmatpush1.msra.mxu0 %v606
      %1281 = vmatprep.subr.mxu0 %v615
      %1282 = vmatpush1.msra.mxu0 %v614
      %1283 = vmatprep.subr.mxu0 %v623
      %1284 = vmatpush1.msra.mxu0 %v622
      %1285 = vmatprep.subr.mxu0 %v631
      %1286 = vmatpush1.msra.mxu0 %v630
      %1287 = vmatprep.subr.mxu0 %v639
      %1288 = vmatpush1.msra.mxu0 %v638
      %1289 = vmatprep.subr.mxu0 %v647
      %1290 = vmatpush1.msra.mxu0 %v646
      %1291 = vmatprep.subr.mxu0 %v655
      %1292 = vmatpush1.msra.mxu0 %v654
      %1293 = vmatprep.subr.mxu0 %v663
      %1294 = vmatpush1.msra.mxu0 %v662
      %1295 = vmatprep.subr.mxu0 %v671
      %1296 = vmatpush1.msra.mxu0 %v670
      %1297 = vmatprep.subr.mxu0 %v679
      %1298 = vmatpush1.msra.mxu0 %v678
      %1299 = vmatprep.subr.mxu0 %v687
      %1300 = vmatpush1.msra.mxu0 %v686
      %1301 = vmatprep.subr.mxu0 %v695
      %1302 = vmatpush1.msra.mxu0 %v694
      %1303 = vmatprep.subr.mxu0 %v703
      %1304 = vmatpush1.msra.mxu0 %v702
      %1305 = vmatprep.subr.mxu0 %v711
      %1306 = vmatpush1.msra.mxu0 %v710
      %1307 = vmatprep.subr.mxu0 %v719
      %1308 = vmatpush1.msra.mxu0 %v718
      %1309 = vmatprep.subr.mxu0 %v727
      %1310 = vmatpush1.msra.mxu0 %v726
      %1311 = vmatprep.subr.mxu0 %v735
      %1312 = vmatpush1.msra.mxu0 %v734
      %1313 = vmatprep.subr.mxu0 %v743
      %1314 = vmatpush1.msra.mxu0 %v742
      %1315 = vmatprep.subr.mxu0 %v751
      %1316 = vmatpush1.msra.mxu0 %v750
      %1317 = vmatprep.subr.mxu0 %v759
      %1318 = vmatpush1.msra.mxu0 %v758
      %1319 = vmatprep.subr.mxu0 %v767
      %1320 = vmatpush1.msra.mxu0 %v766
      %1321 = vmatprep.subr.mxu0 %v775
      %1322 = vmatpush1.msra.mxu0 %v774
      %1323 = vmatprep.subr.mxu0 %v783
      %1324 = vmatpush1.msra.mxu0 %v782
      %1325 = vmatprep.subr.mxu0 %v791
      %1326 = vmatpush1.msra.mxu0 %v790
      %1327 = vmatprep.subr.mxu0 %v799
      %1328 = vmatpush1.msra.mxu0 %v798
      %1329 = vmatprep.subr.mxu0 %v807
      %1330 = vmatpush1.msra.mxu0 %v806
      %1331 = vmatprep.subr.mxu0 %v815
      %1332 = vmatpush1.msra.mxu0 %v814
      %1333 = vmatprep.subr.mxu0 %v823
      %1334 = vmatpush1.msra.mxu0 %v822
      %1335 = vmatprep.subr.mxu0 %v831
      %1336 = vmatpush1.msra.mxu0 %v830
      %1337 = vmatprep.subr.mxu0 %v839
      %1338 = vmatpush1.msra.mxu0 %v838
      %1339 = vmatprep.subr.mxu0 %v847
      %1340 = vmatpush1.msra.mxu0 %v846
      %1341 = vmatprep.mubr.f32.mxu0 %v1022
      %1342 = vmatmul.mubr.f32.gmra.mrb[0].mxu0 %v1019
      %v1343 = vpop.f32.mrb[0].mxu0
      %v1344 = vadd.f32 0.0, %v1343
      %v1345 = vpop.f32.mrb[0].mxu0
      %v1346 = vadd.f32 0.0, %v1345
      %1347 = vmatprep.mubr.f32.mxu0 %v1032
      %1348 = vmatmul.mubr.f32.gmra.mrb[0].mxu0 %v1030
      %v1349 = vpop.f32.mrb[0].mxu0
      %v1350 = vadd.f32 0.0, %v1349
      %v1351 = vpop.f32.mrb[0].mxu0
      %v1352 = vadd.f32 0.0, %v1351
      %1353 = vmatprep.mubr.f32.mxu0 %v1040
      %1354 = vmatmul.mubr.f32.gmra.mrb[0].mxu0 %v1038
      %v1355 = vpop.f32.mrb[0].mxu0
      %v1356 = vadd.f32 0.0, %v1355
      %v1357 = vpop.f32.mrb[0].mxu0
      %v1358 = vadd.f32 0.0, %v1357
      %1359 = vmatprep.mubr.f32.mxu0 %v1048
      %1360 = vmatmul.mubr.f32.gmra.mrb[0].mxu0 %v1046
      %v1361 = vpop.f32.mrb[0].mxu0
      %v1362 = vadd.f32 0.0, %v1361
      %v1363 = vpop.f32.mrb[0].mxu0
      %v1364 = vadd.f32 0.0, %v1363
      %1365 = vdwg.mxu0
      %1366 = vmatprep.subr.mxu0 %v855
      %1367 = vmatpush1.msra.mxu0 %v854
      %1368 = vmatprep.subr.mxu0 %v863
      %1369 = vmatpush1.msra.mxu0 %v862
      %1370 = vmatprep.subr.mxu0 %v871
      %1371 = vmatpush1.msra.mxu0 %v870
      %1372 = vmatprep.subr.mxu0 %v879
      %1373 = vmatpush1.msra.mxu0 %v878
      %1374 = vmatprep.subr.mxu0 %v887
      %1375 = vmatpush1.msra.mxu0 %v886
      %1376 = vmatprep.subr.mxu0 %v895
      %1377 = vmatpush1.msra.mxu0 %v894
      %1378 = vmatprep.subr.mxu0 %v903
      %1379 = vmatpush1.msra.mxu0 %v902
      %1380 = vmatprep.subr.mxu0 %v911
      %1381 = vmatpush1.msra.mxu0 %v910
      %1382 = vmatprep.subr.mxu0 %v919
      %1383 = vmatpush1.msra.mxu0 %v918
      %1384 = vmatprep.subr.mxu0 %v927
      %1385 = vmatpush1.msra.mxu0 %v926
      %1386 = vmatprep.subr.mxu0 %v935
      %1387 = vmatpush1.msra.mxu0 %v934
      %1388 = vmatprep.subr.mxu0 %v943
      %1389 = vmatpush1.msra.mxu0 %v942
      %1390 = vmatprep.subr.mxu0 %v951
      %1391 = vmatpush1.msra.mxu0 %v950
      %1392 = vmatprep.subr.mxu0 %v959
      %1393 = vmatpush1.msra.mxu0 %v958
      %1394 = vmatprep.subr.mxu0 %v967
      %1395 = vmatpush1.msra.mxu0 %v966
      %1396 = vmatprep.subr.mxu0 %v975
      %1397 = vmatpush1.msra.mxu0 %v974
      %1398 = vmatprep.subr.mxu0 %v983
      %1399 = vmatpush1.msra.mxu0 %v982
      %1400 = vmatprep.subr.mxu0 %v1085
      %1401 = vmatpush1.msra.mxu0 %v1082
      %1402 = vmatprep.subr.mxu0 0.0
      %1403 = vmatpush1.msra.mxu0 0.0
      %1404 = vmatprep.subr.mxu0 0.0
      %1405 = vmatpush1.msra.mxu0 0.0
      %1406 = vmatprep.subr.mxu0 0.0
      %1407 = vmatpush1.msra.mxu0 0.0
      %1408 = vmatprep.subr.mxu0 0.0
      %1409 = vmatpush1.msra.mxu0 0.0
      %1410 = vmatprep.subr.mxu0 0.0
      %1411 = vmatpush1.msra.mxu0 0.0
      %1412 = vmatprep.subr.mxu0 0.0
      %1413 = vmatpush1.msra.mxu0 0.0
      %1414 = vmatprep.subr.mxu0 0.0
      %1415 = vmatpush1.msra.mxu0 0.0
      %1416 = vmatprep.subr.mxu0 0.0
      %1417 = vmatpush1.msra.mxu0 0.0
      %1418 = vmatprep.subr.mxu0 0.0
      %1419 = vmatpush1.msra.mxu0 0.0
      %1420 = vmatprep.subr.mxu0 0.0
      %1421 = vmatpush1.msra.mxu0 0.0
      %1422 = vmatprep.subr.mxu0 0.0
      %1423 = vmatpush1.msra.mxu0 0.0
      %1424 = vmatprep.subr.mxu0 0.0
      %1425 = vmatpush1.msra.mxu0 0.0
      %1426 = vmatprep.subr.mxu0 0.0
      %1427 = vmatpush1.msra.mxu0 0.0
      %1428 = vmatprep.subr.mxu0 0.0
      %1429 = vmatpush1.msra.mxu0 0.0
      %1430 = vmatprep.mubr.f32.mxu0 %v1066
      %1431 = vmatmul.mubr.f32.gmra.mrb[0].mxu0 %v1025
      %v1432 = vpop.f32.mrb[0].mxu0
      %v1433 = vadd.f32 %v1344, %v1432
      %v1434 = vpop.f32.mrb[0].mxu0
      %v1435 = vadd.f32 %v1346, %v1434
      %1436 = vmatprep.mubr.f32.mxu0 %v1068
      %1437 = vmatmul.mubr.f32.gmra.mrb[0].mxu0 %v1034
      %v1438 = vpop.f32.mrb[0].mxu0
      %v1439 = vadd.f32 %v1350, %v1438
      %v1440 = vpop.f32.mrb[0].mxu0
      %v1441 = vadd.f32 %v1352, %v1440
      %1442 = vmatprep.mubr.f32.mxu0 %v1070
      %1443 = vmatmul.mubr.f32.gmra.mrb[0].mxu0 %v1042
      %v1444 = vpop.f32.mrb[0].mxu0
      %v1445 = vadd.f32 %v1356, %v1444
      %v1446 = vpop.f32.mrb[0].mxu0
      %v1447 = vadd.f32 %v1358, %v1446
      %1448 = vmatprep.mubr.f32.mxu0 %v1072
      %1449 = vmatmul.mubr.f32.gmra.mrb[0].mxu0 %v1050
      %v1450 = vpop.f32.mrb[0].mxu0
      %v1451 = vadd.f32 %v1362, %v1450
      %v1452 = vpop.f32.mrb[0].mxu0
      %v1453 = vadd.f32 %v1364, %v1452
      %1454 = vdwg.mxu0
      %1455 = vmatprep.subr.mxu0 %v601
      %1456 = vmatpush1.msra.mxu0 %v600
      %1457 = vmatprep.subr.mxu0 %v609
      %1458 = vmatpush1.msra.mxu0 %v608
      %1459 = vmatprep.subr.mxu0 %v617
      %1460 = vmatpush1.msra.mxu0 %v616
      %1461 = vmatprep.subr.mxu0 %v625
      %1462 = vmatpush1.msra.mxu0 %v624
      %1463 = vmatprep.subr.mxu0 %v633
      %1464 = vmatpush1.msra.mxu0 %v632
      %1465 = vmatprep.subr.mxu0 %v641
      %1466 = vmatpush1.msra.mxu0 %v640
      %1467 = vmatprep.subr.mxu0 %v649
      %1468 = vmatpush1.msra.mxu0 %v648
      %1469 = vmatprep.subr.mxu0 %v657
      %1470 = vmatpush1.msra.mxu0 %v656
      %1471 = vmatprep.subr.mxu0 %v665
      %1472 = vmatpush1.msra.mxu0 %v664
      %1473 = vmatprep.subr.mxu0 %v673
      %1474 = vmatpush1.msra.mxu0 %v672
      %1475 = vmatprep.subr.mxu0 %v681
      %1476 = vmatpush1.msra.mxu0 %v680
      %1477 = vmatprep.subr.mxu0 %v689
      %1478 = vmatpush1.msra.mxu0 %v688
      %1479 = vmatprep.subr.mxu0 %v697
      %1480 = vmatpush1.msra.mxu0 %v696
      %1481 = vmatprep.subr.mxu0 %v705
      %1482 = vmatpush1.msra.mxu0 %v704
      %1483 = vmatprep.subr.mxu0 %v713
      %1484 = vmatpush1.msra.mxu0 %v712
      %1485 = vmatprep.subr.mxu0 %v721
      %1486 = vmatpush1.msra.mxu0 %v720
      %1487 = vmatprep.subr.mxu0 %v729
      %1488 = vmatpush1.msra.mxu0 %v728
      %1489 = vmatprep.subr.mxu0 %v737
      %1490 = vmatpush1.msra.mxu0 %v736
      %1491 = vmatprep.subr.mxu0 %v745
      %1492 = vmatpush1.msra.mxu0 %v744
      %1493 = vmatprep.subr.mxu0 %v753
      %1494 = vmatpush1.msra.mxu0 %v752
      %1495 = vmatprep.subr.mxu0 %v761
      %1496 = vmatpush1.msra.mxu0 %v760
      %1497 = vmatprep.subr.mxu0 %v769
      %1498 = vmatpush1.msra.mxu0 %v768
      %1499 = vmatprep.subr.mxu0 %v777
      %1500 = vmatpush1.msra.mxu0 %v776
      %1501 = vmatprep.subr.mxu0 %v785
      %1502 = vmatpush1.msra.mxu0 %v784
      %1503 = vmatprep.subr.mxu0 %v793
      %1504 = vmatpush1.msra.mxu0 %v792
      %1505 = vmatprep.subr.mxu0 %v801
      %1506 = vmatpush1.msra.mxu0 %v800
      %1507 = vmatprep.subr.mxu0 %v809
      %1508 = vmatpush1.msra.mxu0 %v808
      %1509 = vmatprep.subr.mxu0 %v817
      %1510 = vmatpush1.msra.mxu0 %v816
      %1511 = vmatprep.subr.mxu0 %v825
      %1512 = vmatpush1.msra.mxu0 %v824
      %1513 = vmatprep.subr.mxu0 %v833
      %1514 = vmatpush1.msra.mxu0 %v832
      %1515 = vmatprep.subr.mxu0 %v841
      %1516 = vmatpush1.msra.mxu0 %v840
      %1517 = vmatprep.subr.mxu0 %v849
      %1518 = vmatpush1.msra.mxu0 %v848
      %1519 = vmatprep.mubr.f32.mxu0 %v1022
      %1520 = vmatmul.mubr.f32.gmra.mrb[0].mxu0 %v1019
      %v1521 = vpop.f32.mrb[0].mxu0
      %v1522 = vadd.f32 0.0, %v1521
      %v1523 = vpop.f32.mrb[0].mxu0
      %v1524 = vadd.f32 0.0, %v1523
      %1525 = vmatprep.mubr.f32.mxu0 %v1032
      %1526 = vmatmul.mubr.f32.gmra.mrb[0].mxu0 %v1030
      %v1527 = vpop.f32.mrb[0].mxu0
      %v1528 = vadd.f32 0.0, %v1527
      %v1529 = vpop.f32.mrb[0].mxu0
      %v1530 = vadd.f32 0.0, %v1529
      %1531 = vmatprep.mubr.f32.mxu0 %v1040
      %1532 = vmatmul.mubr.f32.gmra.mrb[0].mxu0 %v1038
      %v1533 = vpop.f32.mrb[0].mxu0
      %v1534 = vadd.f32 0.0, %v1533
      %v1535 = vpop.f32.mrb[0].mxu0
      %v1536 = vadd.f32 0.0, %v1535
      %1537 = vmatprep.mubr.f32.mxu0 %v1048
      %1538 = vmatmul.mubr.f32.gmra.mrb[0].mxu0 %v1046
      %v1539 = vpop.f32.mrb[0].mxu0
      %v1540 = vadd.f32 0.0, %v1539
      %v1541 = vpop.f32.mrb[0].mxu0
      %v1542 = vadd.f32 0.0, %v1541
      %1543 = vdwg.mxu0
      %1544 = vmatprep.subr.mxu0 %v857
      %1545 = vmatpush1.msra.mxu0 %v856
      %1546 = vmatprep.subr.mxu0 %v865
      %1547 = vmatpush1.msra.mxu0 %v864
      %1548 = vmatprep.subr.mxu0 %v873
      %1549 = vmatpush1.msra.mxu0 %v872
      %1550 = vmatprep.subr.mxu0 %v881
      %1551 = vmatpush1.msra.mxu0 %v880
      %1552 = vmatprep.subr.mxu0 %v889
      %1553 = vmatpush1.msra.mxu0 %v888
      %1554 = vmatprep.subr.mxu0 %v897
      %1555 = vmatpush1.msra.mxu0 %v896
      %1556 = vmatprep.subr.mxu0 %v905
      %1557 = vmatpush1.msra.mxu0 %v904
      %1558 = vmatprep.subr.mxu0 %v913
      %1559 = vmatpush1.msra.mxu0 %v912
      %1560 = vmatprep.subr.mxu0 %v921
      %1561 = vmatpush1.msra.mxu0 %v920
      %1562 = vmatprep.subr.mxu0 %v929
      %1563 = vmatpush1.msra.mxu0 %v928
      %1564 = vmatprep.subr.mxu0 %v937
      %1565 = vmatpush1.msra.mxu0 %v936
      %1566 = vmatprep.subr.mxu0 %v945
      %1567 = vmatpush1.msra.mxu0 %v944
      %1568 = vmatprep.subr.mxu0 %v953
      %1569 = vmatpush1.msra.mxu0 %v952
      %1570 = vmatprep.subr.mxu0 %v961
      %1571 = vmatpush1.msra.mxu0 %v960
      %1572 = vmatprep.subr.mxu0 %v969
      %1573 = vmatpush1.msra.mxu0 %v968
      %1574 = vmatprep.subr.mxu0 %v977
      %1575 = vmatpush1.msra.mxu0 %v976
      %1576 = vmatprep.subr.mxu0 %v985
      %1577 = vmatpush1.msra.mxu0 %v984
      %1578 = vmatprep.subr.mxu0 %v1091
      %1579 = vmatpush1.msra.mxu0 %v1088
      %1580 = vmatprep.subr.mxu0 0.0
      %1581 = vmatpush1.msra.mxu0 0.0
      %1582 = vmatprep.subr.mxu0 0.0
      %1583 = vmatpush1.msra.mxu0 0.0
      %1584 = vmatprep.subr.mxu0 0.0
      %1585 = vmatpush1.msra.mxu0 0.0
      %1586 = vmatprep.subr.mxu0 0.0
      %1587 = vmatpush1.msra.mxu0 0.0
      %1588 = vmatprep.subr.mxu0 0.0
      %1589 = vmatpush1.msra.mxu0 0.0
      %1590 = vmatprep.subr.mxu0 0.0
      %1591 = vmatpush1.msra.mxu0 0.0
      %1592 = vmatprep.subr.mxu0 0.0
      %1593 = vmatpush1.msra.mxu0 0.0
      %1594 = vmatprep.subr.mxu0 0.0
      %1595 = vmatpush1.msra.mxu0 0.0
      %1596 = vmatprep.subr.mxu0 0.0
      %1597 = vmatpush1.msra.mxu0 0.0
      %1598 = vmatprep.subr.mxu0 0.0
      %1599 = vmatpush1.msra.mxu0 0.0
      %1600 = vmatprep.subr.mxu0 0.0
      %1601 = vmatpush1.msra.mxu0 0.0
      %1602 = vmatprep.subr.mxu0 0.0
      %1603 = vmatpush1.msra.mxu0 0.0
      %1604 = vmatprep.subr.mxu0 0.0
      %1605 = vmatpush1.msra.mxu0 0.0
      %1606 = vmatprep.subr.mxu0 0.0
      %1607 = vmatpush1.msra.mxu0 0.0
      %1608 = vmatprep.mubr.f32.mxu0 %v1066
      %1609 = vmatmul.mubr.f32.gmra.mrb[0].mxu0 %v1025
      %v1610 = vpop.f32.mrb[0].mxu0
      %v1611 = vadd.f32 %v1522, %v1610
      %v1612 = vpop.f32.mrb[0].mxu0
      %v1613 = vadd.f32 %v1524, %v1612
      %1614 = vmatprep.mubr.f32.mxu0 %v1068
      %1615 = vmatmul.mubr.f32.gmra.mrb[0].mxu0 %v1034
      %v1616 = vpop.f32.mrb[0].mxu0
      %v1617 = vadd.f32 %v1528, %v1616
      %v1618 = vpop.f32.mrb[0].mxu0
      %v1619 = vadd.f32 %v1530, %v1618
      %1620 = vmatprep.mubr.f32.mxu0 %v1070
      %1621 = vmatmul.mubr.f32.gmra.mrb[0].mxu0 %v1042
      %v1622 = vpop.f32.mrb[0].mxu0
      %v1623 = vadd.f32 %v1534, %v1622
      %v1624 = vpop.f32.mrb[0].mxu0
      %v1625 = vadd.f32 %v1536, %v1624
      %1626 = vmatprep.mubr.f32.mxu0 %v1072
      %1627 = vmatmul.mubr.f32.gmra.mrb[0].mxu0 %v1050
      %v1628 = vpop.f32.mrb[0].mxu0
      %v1629 = vadd.f32 %v1540, %v1628
      %v1630 = vpop.f32.mrb[0].mxu0
      %v1631 = vadd.f32 %v1542, %v1630
      %1632 = vdwg.mxu0
      %1633 = vmatprep.subr.mxu0 %v603
      %1634 = vmatpush1.msra.mxu0 %v602
      %1635 = vmatprep.subr.mxu0 %v611
      %1636 = vmatpush1.msra.mxu0 %v610
      %1637 = vmatprep.subr.mxu0 %v619
      %1638 = vmatpush1.msra.mxu0 %v618
      %1639 = vmatprep.subr.mxu0 %v627
      %1640 = vmatpush1.msra.mxu0 %v626
      %1641 = vmatprep.subr.mxu0 %v635
      %1642 = vmatpush1.msra.mxu0 %v634
      %1643 = vmatprep.subr.mxu0 %v643
      %1644 = vmatpush1.msra.mxu0 %v642
      %1645 = vmatprep.subr.mxu0 %v651
      %1646 = vmatpush1.msra.mxu0 %v650
      %1647 = vmatprep.subr.mxu0 %v659
      %1648 = vmatpush1.msra.mxu0 %v658
      %1649 = vmatprep.subr.mxu0 %v667
      %1650 = vmatpush1.msra.mxu0 %v666
      %1651 = vmatprep.subr.mxu0 %v675
      %1652 = vmatpush1.msra.mxu0 %v674
      %1653 = vmatprep.subr.mxu0 %v683
      %1654 = vmatpush1.msra.mxu0 %v682
      %1655 = vmatprep.subr.mxu0 %v691
      %1656 = vmatpush1.msra.mxu0 %v690
      %1657 = vmatprep.subr.mxu0 %v699
      %1658 = vmatpush1.msra.mxu0 %v698
      %1659 = vmatprep.subr.mxu0 %v707
      %1660 = vmatpush1.msra.mxu0 %v706
      %1661 = vmatprep.subr.mxu0 %v715
      %1662 = vmatpush1.msra.mxu0 %v714
      %1663 = vmatprep.subr.mxu0 %v723
      %1664 = vmatpush1.msra.mxu0 %v722
      %1665 = vmatprep.subr.mxu0 %v731
      %1666 = vmatpush1.msra.mxu0 %v730
      %1667 = vmatprep.subr.mxu0 %v739
      %1668 = vmatpush1.msra.mxu0 %v738
      %1669 = vmatprep.subr.mxu0 %v747
      %1670 = vmatpush1.msra.mxu0 %v746
      %1671 = vmatprep.subr.mxu0 %v755
      %1672 = vmatpush1.msra.mxu0 %v754
      %1673 = vmatprep.subr.mxu0 %v763
      %1674 = vmatpush1.msra.mxu0 %v762
      %1675 = vmatprep.subr.mxu0 %v771
      %1676 = vmatpush1.msra.mxu0 %v770
      %1677 = vmatprep.subr.mxu0 %v779
      %1678 = vmatpush1.msra.mxu0 %v778
      %1679 = vmatprep.subr.mxu0 %v787
      %1680 = vmatpush1.msra.mxu0 %v786
      %1681 = vmatprep.subr.mxu0 %v795
      %1682 = vmatpush1.msra.mxu0 %v794
      %1683 = vmatprep.subr.mxu0 %v803
      %1684 = vmatpush1.msra.mxu0 %v802
      %1685 = vmatprep.subr.mxu0 %v811
      %1686 = vmatpush1.msra.mxu0 %v810
      %1687 = vmatprep.subr.mxu0 %v819
      %1688 = vmatpush1.msra.mxu0 %v818
      %1689 = vmatprep.subr.mxu0 %v827
      %1690 = vmatpush1.msra.mxu0 %v826
      %1691 = vmatprep.subr.mxu0 %v835
      %1692 = vmatpush1.msra.mxu0 %v834
      %1693 = vmatprep.subr.mxu0 %v843
      %1694 = vmatpush1.msra.mxu0 %v842
      %1695 = vmatprep.subr.mxu0 %v851
      %1696 = vmatpush1.msra.mxu0 %v850
      %1697 = vmatprep.mubr.f32.mxu0 %v1022
      %1698 = vmatmul.mubr.f32.gmra.mrb[0].mxu0 %v1019
      %v1699 = vpop.f32.mrb[0].mxu0
      %v1700 = vadd.f32 0.0, %v1699
      %v1701 = vpop.f32.mrb[0].mxu0
      %v1702 = vadd.f32 0.0, %v1701
      %1703 = vmatprep.mubr.f32.mxu0 %v1032
      %1704 = vmatmul.mubr.f32.gmra.mrb[0].mxu0 %v1030
      %v1705 = vpop.f32.mrb[0].mxu0
      %v1706 = vadd.f32 0.0, %v1705
      %v1707 = vpop.f32.mrb[0].mxu0
      %v1708 = vadd.f32 0.0, %v1707
      %1709 = vmatprep.mubr.f32.mxu0 %v1040
      %1710 = vmatmul.mubr.f32.gmra.mrb[0].mxu0 %v1038
      %v1711 = vpop.f32.mrb[0].mxu0
      %v1712 = vadd.f32 0.0, %v1711
      %v1713 = vpop.f32.mrb[0].mxu0
      %v1714 = vadd.f32 0.0, %v1713
      %1715 = vmatprep.mubr.f32.mxu0 %v1048
      %1716 = vmatmul.mubr.f32.gmra.mrb[0].mxu0 %v1046
      %v1717 = vpop.f32.mrb[0].mxu0
      %v1718 = vadd.f32 0.0, %v1717
      %v1719 = vpop.f32.mrb[0].mxu0
      %v1720 = vadd.f32 0.0, %v1719
      %1721 = vdwg.mxu0
      %1722 = vmatprep.subr.mxu0 %v859
      %1723 = vmatpush1.msra.mxu0 %v858
      %1724 = vmatprep.subr.mxu0 %v867
      %1725 = vmatpush1.msra.mxu0 %v866
      %1726 = vmatprep.subr.mxu0 %v875
      %1727 = vmatpush1.msra.mxu0 %v874
      %1728 = vmatprep.subr.mxu0 %v883
      %1729 = vmatpush1.msra.mxu0 %v882
      %1730 = vmatprep.subr.mxu0 %v891
      %1731 = vmatpush1.msra.mxu0 %v890
      %1732 = vmatprep.subr.mxu0 %v899
      %1733 = vmatpush1.msra.mxu0 %v898
      %1734 = vmatprep.subr.mxu0 %v907
      %1735 = vmatpush1.msra.mxu0 %v906
      %1736 = vmatprep.subr.mxu0 %v915
      %1737 = vmatpush1.msra.mxu0 %v914
      %1738 = vmatprep.subr.mxu0 %v923
      %1739 = vmatpush1.msra.mxu0 %v922
      %1740 = vmatprep.subr.mxu0 %v931
      %1741 = vmatpush1.msra.mxu0 %v930
      %1742 = vmatprep.subr.mxu0 %v939
      %1743 = vmatpush1.msra.mxu0 %v938
      %1744 = vmatprep.subr.mxu0 %v947
      %1745 = vmatpush1.msra.mxu0 %v946
      %1746 = vmatprep.subr.mxu0 %v955
      %1747 = vmatpush1.msra.mxu0 %v954
      %1748 = vmatprep.subr.mxu0 %v963
      %1749 = vmatpush1.msra.mxu0 %v962
      %1750 = vmatprep.subr.mxu0 %v971
      %1751 = vmatpush1.msra.mxu0 %v970
      %1752 = vmatprep.subr.mxu0 %v979
      %1753 = vmatpush1.msra.mxu0 %v978
      %1754 = vmatprep.subr.mxu0 %v987
      %1755 = vmatpush1.msra.mxu0 %v986
      %1756 = vmatprep.subr.mxu0 %v1097
      %1757 = vmatpush1.msra.mxu0 %v1094
      %1758 = vmatprep.subr.mxu0 0.0
      %1759 = vmatpush1.msra.mxu0 0.0
      %1760 = vmatprep.subr.mxu0 0.0
      %1761 = vmatpush1.msra.mxu0 0.0
      %1762 = vmatprep.subr.mxu0 0.0
      %1763 = vmatpush1.msra.mxu0 0.0
      %1764 = vmatprep.subr.mxu0 0.0
      %1765 = vmatpush1.msra.mxu0 0.0
      %1766 = vmatprep.subr.mxu0 0.0
      %1767 = vmatpush1.msra.mxu0 0.0
      %1768 = vmatprep.subr.mxu0 0.0
      %1769 = vmatpush1.msra.mxu0 0.0
      %1770 = vmatprep.subr.mxu0 0.0
      %1771 = vmatpush1.msra.mxu0 0.0
      %1772 = vmatprep.subr.mxu0 0.0
      %1773 = vmatpush1.msra.mxu0 0.0
      %1774 = vmatprep.subr.mxu0 0.0
      %1775 = vmatpush1.msra.mxu0 0.0
      %1776 = vmatprep.subr.mxu0 0.0
      %1777 = vmatpush1.msra.mxu0 0.0
      %1778 = vmatprep.subr.mxu0 0.0
      %1779 = vmatpush1.msra.mxu0 0.0
      %1780 = vmatprep.subr.mxu0 0.0
      %1781 = vmatpush1.msra.mxu0 0.0
      %1782 = vmatprep.subr.mxu0 0.0
      %1783 = vmatpush1.msra.mxu0 0.0
      %1784 = vmatprep.subr.mxu0 0.0
      %1785 = vmatpush1.msra.mxu0 0.0
      %1786 = vmatprep.mubr.f32.mxu0 %v1066
      %1787 = vmatmul.mubr.f32.gmra.mrb[0].mxu0 %v1025
      %v1788 = vpop.f32.mrb[0].mxu0
      %v1789 = vadd.f32 %v1700, %v1788
      %v1790 = vpop.f32.mrb[0].mxu0
      %v1791 = vadd.f32 %v1702, %v1790
      %1792 = vmatprep.mubr.f32.mxu0 %v1068
      %1793 = vmatmul.mubr.f32.gmra.mrb[0].mxu0 %v1034
      %v1794 = vpop.f32.mrb[0].mxu0
      %v1795 = vadd.f32 %v1706, %v1794
      %v1796 = vpop.f32.mrb[0].mxu0
      %v1797 = vadd.f32 %v1708, %v1796
      %1798 = vmatprep.mubr.f32.mxu0 %v1070
      %1799 = vmatmul.mubr.f32.gmra.mrb[0].mxu0 %v1042
      %v1800 = vpop.f32.mrb[0].mxu0
      %v1801 = vadd.f32 %v1712, %v1800
      %v1802 = vpop.f32.mrb[0].mxu0
      %v1803 = vadd.f32 %v1714, %v1802
      %1804 = vmatprep.mubr.f32.mxu0 %v1072
      %1805 = vmatmul.mubr.f32.gmra.mrb[0].mxu0 %v1050
      %v1806 = vpop.f32.mrb[0].mxu0
      %v1807 = vadd.f32 %v1718, %v1806
      %v1808 = vpop.f32.mrb[0].mxu0
      %v1809 = vadd.f32 %v1720, %v1808
      %1810 = vdwg.mxu0
      %v1812 = vsel %vm1065, %v174, 0
      %v1814 = vsel %vm1065, %v178, 0
      %v1816 = vsel %vm1065, %v182, 0
      %v1818 = vsel %vm1065, %v186, 0
      %v1821 = vsel %vm1074, %v579, 0
      %v1824 = vsel %vm1074, %v580, 0
      %v1827 = vsel %vm1074, %v581, 0
      %v1830 = vsel %vm1074, %v582, 0
      %v1833 = vsel %vm1074, %v583, 0
      %v1836 = vsel %vm1074, %v584, 0
      %v1839 = vsel %vm1074, %v585, 0
      %v1842 = vsel %vm1074, %v586, 0
      %1844 = vmatprep.subr.mxu0 %v188
      %1845 = vmatpush1.msra.mxu0 %v187
      %1846 = vmatprep.subr.mxu0 %v196
      %1847 = vmatpush1.msra.mxu0 %v195
      %1848 = vmatprep.subr.mxu0 %v204
      %1849 = vmatpush1.msra.mxu0 %v203
      %1850 = vmatprep.subr.mxu0 %v212
      %1851 = vmatpush1.msra.mxu0 %v211
      %1852 = vmatprep.subr.mxu0 %v220
      %1853 = vmatpush1.msra.mxu0 %v219
      %1854 = vmatprep.subr.mxu0 %v228
      %1855 = vmatpush1.msra.mxu0 %v227
      %1856 = vmatprep.subr.mxu0 %v236
      %1857 = vmatpush1.msra.mxu0 %v235
      %1858 = vmatprep.subr.mxu0 %v244
      %1859 = vmatpush1.msra.mxu0 %v243
      %1860 = vmatprep.subr.mxu0 %v252
      %1861 = vmatpush1.msra.mxu0 %v251
      %1862 = vmatprep.subr.mxu0 %v260
      %1863 = vmatpush1.msra.mxu0 %v259
      %1864 = vmatprep.subr.mxu0 %v268
      %1865 = vmatpush1.msra.mxu0 %v267
      %1866 = vmatprep.subr.mxu0 %v276
      %1867 = vmatpush1.msra.mxu0 %v275
      %1868 = vmatprep.subr.mxu0 %v284
      %1869 = vmatpush1.msra.mxu0 %v283
      %1870 = vmatprep.subr.mxu0 %v292
      %1871 = vmatpush1.msra.mxu0 %v291
      %1872 = vmatprep.subr.mxu0 %v300
      %1873 = vmatpush1.msra.mxu0 %v299
      %1874 = vmatprep.subr.mxu0 %v308
      %1875 = vmatpush1.msra.mxu0 %v307
      %1876 = vmatprep.subr.mxu0 %v316
      %1877 = vmatpush1.msra.mxu0 %v315
      %1878 = vmatprep.subr.mxu0 %v324
      %1879 = vmatpush1.msra.mxu0 %v323
      %1880 = vmatprep.subr.mxu0 %v332
      %1881 = vmatpush1.msra.mxu0 %v331
      %1882 = vmatprep.subr.mxu0 %v340
      %1883 = vmatpush1.msra.mxu0 %v339
      %1884 = vmatprep.subr.mxu0 %v348
      %1885 = vmatpush1.msra.mxu0 %v347
      %1886 = vmatprep.subr.mxu0 %v356
      %1887 = vmatpush1.msra.mxu0 %v355
      %1888 = vmatprep.subr.mxu0 %v364
      %1889 = vmatpush1.msra.mxu0 %v363
      %1890 = vmatprep.subr.mxu0 %v372
      %1891 = vmatpush1.msra.mxu0 %v371
      %1892 = vmatprep.subr.mxu0 %v380
      %1893 = vmatpush1.msra.mxu0 %v379
      %1894 = vmatprep.subr.mxu0 %v388
      %1895 = vmatpush1.msra.mxu0 %v387
      %1896 = vmatprep.subr.mxu0 %v396
      %1897 = vmatpush1.msra.mxu0 %v395
      %1898 = vmatprep.subr.mxu0 %v404
      %1899 = vmatpush1.msra.mxu0 %v403
      %1900 = vmatprep.subr.mxu0 %v412
      %1901 = vmatpush1.msra.mxu0 %v411
      %1902 = vmatprep.subr.mxu0 %v420
      %1903 = vmatpush1.msra.mxu0 %v419
      %1904 = vmatprep.subr.mxu0 %v428
      %1905 = vmatpush1.msra.mxu0 %v427
      %1906 = vmatprep.subr.mxu0 %v436
      %1907 = vmatpush1.msra.mxu0 %v435
      %1908 = vmatprep.mubr.f32.mxu0 %v172
      %1909 = vmatmul.mubr.f32.gmra.mrb[0].mxu0 %v171
      %v1910 = vpop.f32.mrb[0].mxu0
      %v1911 = vadd.f32 %v1255, %v1910
      %v1912 = vpop.f32.mrb[0].mxu0
      %v1913 = vadd.f32 %v1257, %v1912
      %1914 = vmatprep.mubr.f32.mxu0 %v176
      %1915 = vmatmul.mubr.f32.gmra.mrb[0].mxu0 %v175
      %v1916 = vpop.f32.mrb[0].mxu0
      %v1917 = vadd.f32 %v1261, %v1916
      %v1918 = vpop.f32.mrb[0].mxu0
      %v1919 = vadd.f32 %v1263, %v1918
      %1920 = vmatprep.mubr.f32.mxu0 %v180
      %1921 = vmatmul.mubr.f32.gmra.mrb[0].mxu0 %v179
      %v1922 = vpop.f32.mrb[0].mxu0
      %v1923 = vadd.f32 %v1267, %v1922
      %v1924 = vpop.f32.mrb[0].mxu0
      %v1925 = vadd.f32 %v1269, %v1924
      %1926 = vmatprep.mubr.f32.mxu0 %v184
      %1927 = vmatmul.mubr.f32.gmra.mrb[0].mxu0 %v183
      %v1928 = vpop.f32.mrb[0].mxu0
      %v1929 = vadd.f32 %v1273, %v1928
      %v1930 = vpop.f32.mrb[0].mxu0
      %v1931 = vadd.f32 %v1275, %v1930
      %1932 = vdwg.mxu0
      %1933 = vmatprep.subr.mxu0 %v444
      %1934 = vmatpush1.msra.mxu0 %v443
      %1935 = vmatprep.subr.mxu0 %v452
      %1936 = vmatpush1.msra.mxu0 %v451
      %1937 = vmatprep.subr.mxu0 %v460
      %1938 = vmatpush1.msra.mxu0 %v459
      %1939 = vmatprep.subr.mxu0 %v468
      %1940 = vmatpush1.msra.mxu0 %v467
      %1941 = vmatprep.subr.mxu0 %v476
      %1942 = vmatpush1.msra.mxu0 %v475
      %1943 = vmatprep.subr.mxu0 %v484
      %1944 = vmatpush1.msra.mxu0 %v483
      %1945 = vmatprep.subr.mxu0 %v492
      %1946 = vmatpush1.msra.mxu0 %v491
      %1947 = vmatprep.subr.mxu0 %v500
      %1948 = vmatpush1.msra.mxu0 %v499
      %1949 = vmatprep.subr.mxu0 %v508
      %1950 = vmatpush1.msra.mxu0 %v507
      %1951 = vmatprep.subr.mxu0 %v516
      %1952 = vmatpush1.msra.mxu0 %v515
      %1953 = vmatprep.subr.mxu0 %v524
      %1954 = vmatpush1.msra.mxu0 %v523
      %1955 = vmatprep.subr.mxu0 %v532
      %1956 = vmatpush1.msra.mxu0 %v531
      %1957 = vmatprep.subr.mxu0 %v540
      %1958 = vmatpush1.msra.mxu0 %v539
      %1959 = vmatprep.subr.mxu0 %v548
      %1960 = vmatpush1.msra.mxu0 %v547
      %1961 = vmatprep.subr.mxu0 %v556
      %1962 = vmatpush1.msra.mxu0 %v555
      %1963 = vmatprep.subr.mxu0 %v564
      %1964 = vmatpush1.msra.mxu0 %v563
      %1965 = vmatprep.subr.mxu0 %v572
      %1966 = vmatpush1.msra.mxu0 %v571
      %1967 = vmatprep.subr.mxu0 %v1824
      %1968 = vmatpush1.msra.mxu0 %v1821
      %1969 = vmatprep.subr.mxu0 0.0
      %1970 = vmatpush1.msra.mxu0 0.0
      %1971 = vmatprep.subr.mxu0 0.0
      %1972 = vmatpush1.msra.mxu0 0.0
      %1973 = vmatprep.subr.mxu0 0.0
      %1974 = vmatpush1.msra.mxu0 0.0
      %1975 = vmatprep.subr.mxu0 0.0
      %1976 = vmatpush1.msra.mxu0 0.0
      %1977 = vmatprep.subr.mxu0 0.0
      %1978 = vmatpush1.msra.mxu0 0.0
      %1979 = vmatprep.subr.mxu0 0.0
      %1980 = vmatpush1.msra.mxu0 0.0
      %1981 = vmatprep.subr.mxu0 0.0
      %1982 = vmatpush1.msra.mxu0 0.0
      %1983 = vmatprep.subr.mxu0 0.0
      %1984 = vmatpush1.msra.mxu0 0.0
      %1985 = vmatprep.subr.mxu0 0.0
      %1986 = vmatpush1.msra.mxu0 0.0
      %1987 = vmatprep.subr.mxu0 0.0
      %1988 = vmatpush1.msra.mxu0 0.0
      %1989 = vmatprep.subr.mxu0 0.0
      %1990 = vmatpush1.msra.mxu0 0.0
      %1991 = vmatprep.subr.mxu0 0.0
      %1992 = vmatpush1.msra.mxu0 0.0
      %1993 = vmatprep.subr.mxu0 0.0
      %1994 = vmatpush1.msra.mxu0 0.0
      %1995 = vmatprep.subr.mxu0 0.0
      %1996 = vmatpush1.msra.mxu0 0.0
      %1997 = vmatprep.mubr.f32.mxu0 %v1812
      %1998 = vmatmul.mubr.f32.gmra.mrb[0].mxu0 %v173
      %v1999 = vpop.f32.mrb[0].mxu0
      %v2000 = vadd.f32 %v1911, %v1999
      %v2001 = vpop.f32.mrb[0].mxu0
      %v2002 = vadd.f32 %v1913, %v2001
      %2003 = vmatprep.mubr.f32.mxu0 %v1814
      %2004 = vmatmul.mubr.f32.gmra.mrb[0].mxu0 %v177
      %v2005 = vpop.f32.mrb[0].mxu0
      %v2006 = vadd.f32 %v1917, %v2005
      %v2007 = vpop.f32.mrb[0].mxu0
      %v2008 = vadd.f32 %v1919, %v2007
      %2009 = vmatprep.mubr.f32.mxu0 %v1816
      %2010 = vmatmul.mubr.f32.gmra.mrb[0].mxu0 %v181
      %v2011 = vpop.f32.mrb[0].mxu0
      %v2012 = vadd.f32 %v1923, %v2011
      %v2013 = vpop.f32.mrb[0].mxu0
      %v2014 = vadd.f32 %v1925, %v2013
      %2015 = vmatprep.mubr.f32.mxu0 %v1818
      %2016 = vmatmul.mubr.f32.gmra.mrb[0].mxu0 %v185
      %v2017 = vpop.f32.mrb[0].mxu0
      %v2018 = vadd.f32 %v1929, %v2017
      %v2019 = vpop.f32.mrb[0].mxu0
      %v2020 = vadd.f32 %v1931, %v2019
      %2021 = vdwg.mxu0
      %2022 = vmatprep.subr.mxu0 %v190
      %2023 = vmatpush1.msra.mxu0 %v189
      %2024 = vmatprep.subr.mxu0 %v198
      %2025 = vmatpush1.msra.mxu0 %v197
      %2026 = vmatprep.subr.mxu0 %v206
      %2027 = vmatpush1.msra.mxu0 %v205
      %2028 = vmatprep.subr.mxu0 %v214
      %2029 = vmatpush1.msra.mxu0 %v213
      %2030 = vmatprep.subr.mxu0 %v222
      %2031 = vmatpush1.msra.mxu0 %v221
      %2032 = vmatprep.subr.mxu0 %v230
      %2033 = vmatpush1.msra.mxu0 %v229
      %2034 = vmatprep.subr.mxu0 %v238
      %2035 = vmatpush1.msra.mxu0 %v237
      %2036 = vmatprep.subr.mxu0 %v246
      %2037 = vmatpush1.msra.mxu0 %v245
      %2038 = vmatprep.subr.mxu0 %v254
      %2039 = vmatpush1.msra.mxu0 %v253
      %2040 = vmatprep.subr.mxu0 %v262
      %2041 = vmatpush1.msra.mxu0 %v261
      %2042 = vmatprep.subr.mxu0 %v270
      %2043 = vmatpush1.msra.mxu0 %v269
      %2044 = vmatprep.subr.mxu0 %v278
      %2045 = vmatpush1.msra.mxu0 %v277
      %2046 = vmatprep.subr.mxu0 %v286
      %2047 = vmatpush1.msra.mxu0 %v285
      %2048 = vmatprep.subr.mxu0 %v294
      %2049 = vmatpush1.msra.mxu0 %v293
      %2050 = vmatprep.subr.mxu0 %v302
      %2051 = vmatpush1.msra.mxu0 %v301
      %2052 = vmatprep.subr.mxu0 %v310
      %2053 = vmatpush1.msra.mxu0 %v309
      %2054 = vmatprep.subr.mxu0 %v318
      %2055 = vmatpush1.msra.mxu0 %v317
      %2056 = vmatprep.subr.mxu0 %v326
      %2057 = vmatpush1.msra.mxu0 %v325
      %2058 = vmatprep.subr.mxu0 %v334
      %2059 = vmatpush1.msra.mxu0 %v333
      %2060 = vmatprep.subr.mxu0 %v342
      %2061 = vmatpush1.msra.mxu0 %v341
      %2062 = vmatprep.subr.mxu0 %v350
      %2063 = vmatpush1.msra.mxu0 %v349
      %2064 = vmatprep.subr.mxu0 %v358
      %2065 = vmatpush1.msra.mxu0 %v357
      %2066 = vmatprep.subr.mxu0 %v366
      %2067 = vmatpush1.msra.mxu0 %v365
      %2068 = vmatprep.subr.mxu0 %v374
      %2069 = vmatpush1.msra.mxu0 %v373
      %2070 = vmatprep.subr.mxu0 %v382
      %2071 = vmatpush1.msra.mxu0 %v381
      %2072 = vmatprep.subr.mxu0 %v390
      %2073 = vmatpush1.msra.mxu0 %v389
      %2074 = vmatprep.subr.mxu0 %v398
      %2075 = vmatpush1.msra.mxu0 %v397
      %2076 = vmatprep.subr.mxu0 %v406
      %2077 = vmatpush1.msra.mxu0 %v405
      %2078 = vmatprep.subr.mxu0 %v414
      %2079 = vmatpush1.msra.mxu0 %v413
      %2080 = vmatprep.subr.mxu0 %v422
      %2081 = vmatpush1.msra.mxu0 %v421
      %2082 = vmatprep.subr.mxu0 %v430
      %2083 = vmatpush1.msra.mxu0 %v429
      %2084 = vmatprep.subr.mxu0 %v438
      %2085 = vmatpush1.msra.mxu0 %v437
      %2086 = vmatprep.mubr.f32.mxu0 %v172
      %2087 = vmatmul.mubr.f32.gmra.mrb[0].mxu0 %v171
      %v2088 = vpop.f32.mrb[0].mxu0
      %v2089 = vadd.f32 %v1433, %v2088
      %v2090 = vpop.f32.mrb[0].mxu0
      %v2091 = vadd.f32 %v1435, %v2090
      %2092 = vmatprep.mubr.f32.mxu0 %v176
      %2093 = vmatmul.mubr.f32.gmra.mrb[0].mxu0 %v175
      %v2094 = vpop.f32.mrb[0].mxu0
      %v2095 = vadd.f32 %v1439, %v2094
      %v2096 = vpop.f32.mrb[0].mxu0
      %v2097 = vadd.f32 %v1441, %v2096
      %2098 = vmatprep.mubr.f32.mxu0 %v180
      %2099 = vmatmul.mubr.f32.gmra.mrb[0].mxu0 %v179
      %v2100 = vpop.f32.mrb[0].mxu0
      %v2101 = vadd.f32 %v1445, %v2100
      %v2102 = vpop.f32.mrb[0].mxu0
      %v2103 = vadd.f32 %v1447, %v2102
      %2104 = vmatprep.mubr.f32.mxu0 %v184
      %2105 = vmatmul.mubr.f32.gmra.mrb[0].mxu0 %v183
      %v2106 = vpop.f32.mrb[0].mxu0
      %v2107 = vadd.f32 %v1451, %v2106
      %v2108 = vpop.f32.mrb[0].mxu0
      %v2109 = vadd.f32 %v1453, %v2108
      %2110 = vdwg.mxu0
      %2111 = vmatprep.subr.mxu0 %v446
      %2112 = vmatpush1.msra.mxu0 %v445
      %2113 = vmatprep.subr.mxu0 %v454
      %2114 = vmatpush1.msra.mxu0 %v453
      %2115 = vmatprep.subr.mxu0 %v462
      %2116 = vmatpush1.msra.mxu0 %v461
      %2117 = vmatprep.subr.mxu0 %v470
      %2118 = vmatpush1.msra.mxu0 %v469
      %2119 = vmatprep.subr.mxu0 %v478
      %2120 = vmatpush1.msra.mxu0 %v477
      %2121 = vmatprep.subr.mxu0 %v486
      %2122 = vmatpush1.msra.mxu0 %v485
      %2123 = vmatprep.subr.mxu0 %v494
      %2124 = vmatpush1.msra.mxu0 %v493
      %2125 = vmatprep.subr.mxu0 %v502
      %2126 = vmatpush1.msra.mxu0 %v501
      %2127 = vmatprep.subr.mxu0 %v510
      %2128 = vmatpush1.msra.mxu0 %v509
      %2129 = vmatprep.subr.mxu0 %v518
      %2130 = vmatpush1.msra.mxu0 %v517
      %2131 = vmatprep.subr.mxu0 %v526
      %2132 = vmatpush1.msra.mxu0 %v525
      %2133 = vmatprep.subr.mxu0 %v534
      %2134 = vmatpush1.msra.mxu0 %v533
      %2135 = vmatprep.subr.mxu0 %v542
      %2136 = vmatpush1.msra.mxu0 %v541
      %2137 = vmatprep.subr.mxu0 %v550
      %2138 = vmatpush1.msra.mxu0 %v549
      %2139 = vmatprep.subr.mxu0 %v558
      %2140 = vmatpush1.msra.mxu0 %v557
      %2141 = vmatprep.subr.mxu0 %v566
      %2142 = vmatpush1.msra.mxu0 %v565
      %2143 = vmatprep.subr.mxu0 %v574
      %2144 = vmatpush1.msra.mxu0 %v573
      %2145 = vmatprep.subr.mxu0 %v1830
      %2146 = vmatpush1.msra.mxu0 %v1827
      %2147 = vmatprep.subr.mxu0 0.0
      %2148 = vmatpush1.msra.mxu0 0.0
      %2149 = vmatprep.subr.mxu0 0.0
      %2150 = vmatpush1.msra.mxu0 0.0
      %2151 = vmatprep.subr.mxu0 0.0
      %2152 = vmatpush1.msra.mxu0 0.0
      %2153 = vmatprep.subr.mxu0 0.0
      %2154 = vmatpush1.msra.mxu0 0.0
      %2155 = vmatprep.subr.mxu0 0.0
      %2156 = vmatpush1.msra.mxu0 0.0
      %2157 = vmatprep.subr.mxu0 0.0
      %2158 = vmatpush1.msra.mxu0 0.0
      %2159 = vmatprep.subr.mxu0 0.0
      %2160 = vmatpush1.msra.mxu0 0.0
      %2161 = vmatprep.subr.mxu0 0.0
      %2162 = vmatpush1.msra.mxu0 0.0
      %2163 = vmatprep.subr.mxu0 0.0
      %2164 = vmatpush1.msra.mxu0 0.0
      %2165 = vmatprep.subr.mxu0 0.0
      %2166 = vmatpush1.msra.mxu0 0.0
      %2167 = vmatprep.subr.mxu0 0.0
      %2168 = vmatpush1.msra.mxu0 0.0
      %2169 = vmatprep.subr.mxu0 0.0
      %2170 = vmatpush1.msra.mxu0 0.0
      %2171 = vmatprep.subr.mxu0 0.0
      %2172 = vmatpush1.msra.mxu0 0.0
      %2173 = vmatprep.subr.mxu0 0.0
      %2174 = vmatpush1.msra.mxu0 0.0
      %2175 = vmatprep.mubr.f32.mxu0 %v1812
      %2176 = vmatmul.mubr.f32.gmra.mrb[0].mxu0 %v173
      %v2177 = vpop.f32.mrb[0].mxu0
      %v2178 = vadd.f32 %v2089, %v2177
      %v2179 = vpop.f32.mrb[0].mxu0
      %v2180 = vadd.f32 %v2091, %v2179
      %2181 = vmatprep.mubr.f32.mxu0 %v1814
      %2182 = vmatmul.mubr.f32.gmra.mrb[0].mxu0 %v177
      %v2183 = vpop.f32.mrb[0].mxu0
      %v2184 = vadd.f32 %v2095, %v2183
      %v2185 = vpop.f32.mrb[0].mxu0
      %v2186 = vadd.f32 %v2097, %v2185
      %2187 = vmatprep.mubr.f32.mxu0 %v1816
      %2188 = vmatmul.mubr.f32.gmra.mrb[0].mxu0 %v181
      %v2189 = vpop.f32.mrb[0].mxu0
      %v2190 = vadd.f32 %v2101, %v2189
      %v2191 = vpop.f32.mrb[0].mxu0
      %v2192 = vadd.f32 %v2103, %v2191
      %2193 = vmatprep.mubr.f32.mxu0 %v1818
      %2194 = vmatmul.mubr.f32.gmra.mrb[0].mxu0 %v185
      %v2195 = vpop.f32.mrb[0].mxu0
      %v2196 = vadd.f32 %v2107, %v2195
      %v2197 = vpop.f32.mrb[0].mxu0
      %v2198 = vadd.f32 %v2109, %v2197
      %2199 = vdwg.mxu0
      %2200 = vmatprep.subr.mxu0 %v192
      %2201 = vmatpush1.msra.mxu0 %v191
      %2202 = vmatprep.subr.mxu0 %v200
      %2203 = vmatpush1.msra.mxu0 %v199
      %2204 = vmatprep.subr.mxu0 %v208
      %2205 = vmatpush1.msra.mxu0 %v207
      %2206 = vmatprep.subr.mxu0 %v216
      %2207 = vmatpush1.msra.mxu0 %v215
      %2208 = vmatprep.subr.mxu0 %v224
      %2209 = vmatpush1.msra.mxu0 %v223
      %2210 = vmatprep.subr.mxu0 %v232
      %2211 = vmatpush1.msra.mxu0 %v231
      %2212 = vmatprep.subr.mxu0 %v240
      %2213 = vmatpush1.msra.mxu0 %v239
      %2214 = vmatprep.subr.mxu0 %v248
      %2215 = vmatpush1.msra.mxu0 %v247
      %2216 = vmatprep.subr.mxu0 %v256
      %2217 = vmatpush1.msra.mxu0 %v255
      %2218 = vmatprep.subr.mxu0 %v264
      %2219 = vmatpush1.msra.mxu0 %v263
      %2220 = vmatprep.subr.mxu0 %v272
      %2221 = vmatpush1.msra.mxu0 %v271
      %2222 = vmatprep.subr.mxu0 %v280
      %2223 = vmatpush1.msra.mxu0 %v279
      %2224 = vmatprep.subr.mxu0 %v288
      %2225 = vmatpush1.msra.mxu0 %v287
      %2226 = vmatprep.subr.mxu0 %v296
      %2227 = vmatpush1.msra.mxu0 %v295
      %2228 = vmatprep.subr.mxu0 %v304
      %2229 = vmatpush1.msra.mxu0 %v303
      %2230 = vmatprep.subr.mxu0 %v312
      %2231 = vmatpush1.msra.mxu0 %v311
      %2232 = vmatprep.subr.mxu0 %v320
      %2233 = vmatpush1.msra.mxu0 %v319
      %2234 = vmatprep.subr.mxu0 %v328
      %2235 = vmatpush1.msra.mxu0 %v327
      %2236 = vmatprep.subr.mxu0 %v336
      %2237 = vmatpush1.msra.mxu0 %v335
      %2238 = vmatprep.subr.mxu0 %v344
      %2239 = vmatpush1.msra.mxu0 %v343
      %2240 = vmatprep.subr.mxu0 %v352
      %2241 = vmatpush1.msra.mxu0 %v351
      %2242 = vmatprep.subr.mxu0 %v360
      %2243 = vmatpush1.msra.mxu0 %v359
      %2244 = vmatprep.subr.mxu0 %v368
      %2245 = vmatpush1.msra.mxu0 %v367
      %2246 = vmatprep.subr.mxu0 %v376
      %2247 = vmatpush1.msra.mxu0 %v375
      %2248 = vmatprep.subr.mxu0 %v384
      %2249 = vmatpush1.msra.mxu0 %v383
      %2250 = vmatprep.subr.mxu0 %v392
      %2251 = vmatpush1.msra.mxu0 %v391
      %2252 = vmatprep.subr.mxu0 %v400
      %2253 = vmatpush1.msra.mxu0 %v399
      %2254 = vmatprep.subr.mxu0 %v408
      %2255 = vmatpush1.msra.mxu0 %v407
      %2256 = vmatprep.subr.mxu0 %v416
      %2257 = vmatpush1.msra.mxu0 %v415
      %2258 = vmatprep.subr.mxu0 %v424
      %2259 = vmatpush1.msra.mxu0 %v423
      %2260 = vmatprep.subr.mxu0 %v432
      %2261 = vmatpush1.msra.mxu0 %v431
      %2262 = vmatprep.subr.mxu0 %v440
      %2263 = vmatpush1.msra.mxu0 %v439
      %2264 = vmatprep.mubr.f32.mxu0 %v172
      %2265 = vmatmul.mubr.f32.gmra.mrb[0].mxu0 %v171
      %v2266 = vpop.f32.mrb[0].mxu0
      %v2267 = vadd.f32 %v1611, %v2266
      %v2268 = vpop.f32.mrb[0].mxu0
      %v2269 = vadd.f32 %v1613, %v2268
      %2270 = vmatprep.mubr.f32.mxu0 %v176
      %2271 = vmatmul.mubr.f32.gmra.mrb[0].mxu0 %v175
      %v2272 = vpop.f32.mrb[0].mxu0
      %v2273 = vadd.f32 %v1617, %v2272
      %v2274 = vpop.f32.mrb[0].mxu0
      %v2275 = vadd.f32 %v1619, %v2274
      %2276 = vmatprep.mubr.f32.mxu0 %v180
      %2277 = vmatmul.mubr.f32.gmra.mrb[0].mxu0 %v179
      %v2278 = vpop.f32.mrb[0].mxu0
      %v2279 = vadd.f32 %v1623, %v2278
      %v2280 = vpop.f32.mrb[0].mxu0
      %v2281 = vadd.f32 %v1625, %v2280
      %2282 = vmatprep.mubr.f32.mxu0 %v184
      %2283 = vmatmul.mubr.f32.gmra.mrb[0].mxu0 %v183
      %v2284 = vpop.f32.mrb[0].mxu0
      %v2285 = vadd.f32 %v1629, %v2284
      %v2286 = vpop.f32.mrb[0].mxu0
      %v2287 = vadd.f32 %v1631, %v2286
      %2288 = vdwg.mxu0
      %2289 = vmatprep.subr.mxu0 %v448
      %2290 = vmatpush1.msra.mxu0 %v447
      %2291 = vmatprep.subr.mxu0 %v456
      %2292 = vmatpush1.msra.mxu0 %v455
      %2293 = vmatprep.subr.mxu0 %v464
      %2294 = vmatpush1.msra.mxu0 %v463
      %2295 = vmatprep.subr.mxu0 %v472
      %2296 = vmatpush1.msra.mxu0 %v471
      %2297 = vmatprep.subr.mxu0 %v480
      %2298 = vmatpush1.msra.mxu0 %v479
      %2299 = vmatprep.subr.mxu0 %v488
      %2300 = vmatpush1.msra.mxu0 %v487
      %2301 = vmatprep.subr.mxu0 %v496
      %2302 = vmatpush1.msra.mxu0 %v495
      %2303 = vmatprep.subr.mxu0 %v504
      %2304 = vmatpush1.msra.mxu0 %v503
      %2305 = vmatprep.subr.mxu0 %v512
      %2306 = vmatpush1.msra.mxu0 %v511
      %2307 = vmatprep.subr.mxu0 %v520
      %2308 = vmatpush1.msra.mxu0 %v519
      %2309 = vmatprep.subr.mxu0 %v528
      %2310 = vmatpush1.msra.mxu0 %v527
      %2311 = vmatprep.subr.mxu0 %v536
      %2312 = vmatpush1.msra.mxu0 %v535
      %2313 = vmatprep.subr.mxu0 %v544
      %2314 = vmatpush1.msra.mxu0 %v543
      %2315 = vmatprep.subr.mxu0 %v552
      %2316 = vmatpush1.msra.mxu0 %v551
      %2317 = vmatprep.subr.mxu0 %v560
      %2318 = vmatpush1.msra.mxu0 %v559
      %2319 = vmatprep.subr.mxu0 %v568
      %2320 = vmatpush1.msra.mxu0 %v567
      %2321 = vmatprep.subr.mxu0 %v576
      %2322 = vmatpush1.msra.mxu0 %v575
      %2323 = vmatprep.subr.mxu0 %v1836
      %2324 = vmatpush1.msra.mxu0 %v1833
      %2325 = vmatprep.subr.mxu0 0.0
      %2326 = vmatpush1.msra.mxu0 0.0
      %2327 = vmatprep.subr.mxu0 0.0
      %2328 = vmatpush1.msra.mxu0 0.0
      %2329 = vmatprep.subr.mxu0 0.0
      %2330 = vmatpush1.msra.mxu0 0.0
      %2331 = vmatprep.subr.mxu0 0.0
      %2332 = vmatpush1.msra.mxu0 0.0
      %2333 = vmatprep.subr.mxu0 0.0
      %2334 = vmatpush1.msra.mxu0 0.0
      %2335 = vmatprep.subr.mxu0 0.0
      %2336 = vmatpush1.msra.mxu0 0.0
      %2337 = vmatprep.subr.mxu0 0.0
      %2338 = vmatpush1.msra.mxu0 0.0
      %2339 = vmatprep.subr.mxu0 0.0
      %2340 = vmatpush1.msra.mxu0 0.0
      %2341 = vmatprep.subr.mxu0 0.0
      %2342 = vmatpush1.msra.mxu0 0.0
      %2343 = vmatprep.subr.mxu0 0.0
      %2344 = vmatpush1.msra.mxu0 0.0
      %2345 = vmatprep.subr.mxu0 0.0
      %2346 = vmatpush1.msra.mxu0 0.0
      %2347 = vmatprep.subr.mxu0 0.0
      %2348 = vmatpush1.msra.mxu0 0.0
      %2349 = vmatprep.subr.mxu0 0.0
      %2350 = vmatpush1.msra.mxu0 0.0
      %2351 = vmatprep.subr.mxu0 0.0
      %2352 = vmatpush1.msra.mxu0 0.0
      %2353 = vmatprep.mubr.f32.mxu0 %v1812
      %2354 = vmatmul.mubr.f32.gmra.mrb[0].mxu0 %v173
      %v2355 = vpop.f32.mrb[0].mxu0
      %v2356 = vadd.f32 %v2267, %v2355
      %v2357 = vpop.f32.mrb[0].mxu0
      %v2358 = vadd.f32 %v2269, %v2357
      %2359 = vmatprep.mubr.f32.mxu0 %v1814
      %2360 = vmatmul.mubr.f32.gmra.mrb[0].mxu0 %v177
      %v2361 = vpop.f32.mrb[0].mxu0
      %v2362 = vadd.f32 %v2273, %v2361
      %v2363 = vpop.f32.mrb[0].mxu0
      %v2364 = vadd.f32 %v2275, %v2363
      %2365 = vmatprep.mubr.f32.mxu0 %v1816
      %2366 = vmatmul.mubr.f32.gmra.mrb[0].mxu0 %v181
      %v2367 = vpop.f32.mrb[0].mxu0
      %v2368 = vadd.f32 %v2279, %v2367
      %v2369 = vpop.f32.mrb[0].mxu0
      %v2370 = vadd.f32 %v2281, %v2369
      %2371 = vmatprep.mubr.f32.mxu0 %v1818
      %2372 = vmatmul.mubr.f32.gmra.mrb[0].mxu0 %v185
      %v2373 = vpop.f32.mrb[0].mxu0
      %v2374 = vadd.f32 %v2285, %v2373
      %v2375 = vpop.f32.mrb[0].mxu0
      %v2376 = vadd.f32 %v2287, %v2375
      %2377 = vdwg.mxu0
      %2378 = vmatprep.subr.mxu0 %v194
      %2379 = vmatpush1.msra.mxu0 %v193
      %2380 = vmatprep.subr.mxu0 %v202
      %2381 = vmatpush1.msra.mxu0 %v201
      %2382 = vmatprep.subr.mxu0 %v210
      %2383 = vmatpush1.msra.mxu0 %v209
      %2384 = vmatprep.subr.mxu0 %v218
      %2385 = vmatpush1.msra.mxu0 %v217
      %2386 = vmatprep.subr.mxu0 %v226
      %2387 = vmatpush1.msra.mxu0 %v225
      %2388 = vmatprep.subr.mxu0 %v234
      %2389 = vmatpush1.msra.mxu0 %v233
      %2390 = vmatprep.subr.mxu0 %v242
      %2391 = vmatpush1.msra.mxu0 %v241
      %2392 = vmatprep.subr.mxu0 %v250
      %2393 = vmatpush1.msra.mxu0 %v249
      %2394 = vmatprep.subr.mxu0 %v258
      %2395 = vmatpush1.msra.mxu0 %v257
      %2396 = vmatprep.subr.mxu0 %v266
      %2397 = vmatpush1.msra.mxu0 %v265
      %2398 = vmatprep.subr.mxu0 %v274
      %2399 = vmatpush1.msra.mxu0 %v273
      %2400 = vmatprep.subr.mxu0 %v282
      %2401 = vmatpush1.msra.mxu0 %v281
      %2402 = vmatprep.subr.mxu0 %v290
      %2403 = vmatpush1.msra.mxu0 %v289
      %2404 = vmatprep.subr.mxu0 %v298
      %2405 = vmatpush1.msra.mxu0 %v297
      %2406 = vmatprep.subr.mxu0 %v306
      %2407 = vmatpush1.msra.mxu0 %v305
      %2408 = vmatprep.subr.mxu0 %v314
      %2409 = vmatpush1.msra.mxu0 %v313
      %2410 = vmatprep.subr.mxu0 %v322
      %2411 = vmatpush1.msra.mxu0 %v321
      %2412 = vmatprep.subr.mxu0 %v330
      %2413 = vmatpush1.msra.mxu0 %v329
      %2414 = vmatprep.subr.mxu0 %v338
      %2415 = vmatpush1.msra.mxu0 %v337
      %2416 = vmatprep.subr.mxu0 %v346
      %2417 = vmatpush1.msra.mxu0 %v345
      %2418 = vmatprep.subr.mxu0 %v354
      %2419 = vmatpush1.msra.mxu0 %v353
      %2420 = vmatprep.subr.mxu0 %v362
      %2421 = vmatpush1.msra.mxu0 %v361
      %2422 = vmatprep.subr.mxu0 %v370
      %2423 = vmatpush1.msra.mxu0 %v369
      %2424 = vmatprep.subr.mxu0 %v378
      %2425 = vmatpush1.msra.mxu0 %v377
      %2426 = vmatprep.subr.mxu0 %v386
      %2427 = vmatpush1.msra.mxu0 %v385
      %2428 = vmatprep.subr.mxu0 %v394
      %2429 = vmatpush1.msra.mxu0 %v393
      %2430 = vmatprep.subr.mxu0 %v402
      %2431 = vmatpush1.msra.mxu0 %v401
      %2432 = vmatprep.subr.mxu0 %v410
      %2433 = vmatpush1.msra.mxu0 %v409
      %2434 = vmatprep.subr.mxu0 %v418
      %2435 = vmatpush1.msra.mxu0 %v417
      %2436 = vmatprep.subr.mxu0 %v426
      %2437 = vmatpush1.msra.mxu0 %v425
      %2438 = vmatprep.subr.mxu0 %v434
      %2439 = vmatpush1.msra.mxu0 %v433
      %2440 = vmatprep.subr.mxu0 %v442
      %2441 = vmatpush1.msra.mxu0 %v441
      %2442 = vmatprep.mubr.f32.mxu0 %v172
      %2443 = vmatmul.mubr.f32.gmra.mrb[0].mxu0 %v171
      %v2444 = vpop.f32.mrb[0].mxu0
      %v2445 = vadd.f32 %v1789, %v2444
      %v2446 = vpop.f32.mrb[0].mxu0
      %v2447 = vadd.f32 %v1791, %v2446
      %2448 = vmatprep.mubr.f32.mxu0 %v176
      %2449 = vmatmul.mubr.f32.gmra.mrb[0].mxu0 %v175
      %v2450 = vpop.f32.mrb[0].mxu0
      %v2451 = vadd.f32 %v1795, %v2450
      %v2452 = vpop.f32.mrb[0].mxu0
      %v2453 = vadd.f32 %v1797, %v2452
      %2454 = vmatprep.mubr.f32.mxu0 %v180
      %2455 = vmatmul.mubr.f32.gmra.mrb[0].mxu0 %v179
      %v2456 = vpop.f32.mrb[0].mxu0
      %v2457 = vadd.f32 %v1801, %v2456
      %v2458 = vpop.f32.mrb[0].mxu0
      %v2459 = vadd.f32 %v1803, %v2458
      %2460 = vmatprep.mubr.f32.mxu0 %v184
      %2461 = vmatmul.mubr.f32.gmra.mrb[0].mxu0 %v183
      %v2462 = vpop.f32.mrb[0].mxu0
      %v2463 = vadd.f32 %v1807, %v2462
      %v2464 = vpop.f32.mrb[0].mxu0
      %v2465 = vadd.f32 %v1809, %v2464
      %2466 = vdwg.mxu0
      %2467 = vmatprep.subr.mxu0 %v450
      %2468 = vmatpush1.msra.mxu0 %v449
      %2469 = vmatprep.subr.mxu0 %v458
      %2470 = vmatpush1.msra.mxu0 %v457
      %2471 = vmatprep.subr.mxu0 %v466
      %2472 = vmatpush1.msra.mxu0 %v465
      %2473 = vmatprep.subr.mxu0 %v474
      %2474 = vmatpush1.msra.mxu0 %v473
      %2475 = vmatprep.subr.mxu0 %v482
      %2476 = vmatpush1.msra.mxu0 %v481
      %2477 = vmatprep.subr.mxu0 %v490
      %2478 = vmatpush1.msra.mxu0 %v489
      %2479 = vmatprep.subr.mxu0 %v498
      %2480 = vmatpush1.msra.mxu0 %v497
      %2481 = vmatprep.subr.mxu0 %v506
      %2482 = vmatpush1.msra.mxu0 %v505
      %2483 = vmatprep.subr.mxu0 %v514
      %2484 = vmatpush1.msra.mxu0 %v513
      %2485 = vmatprep.subr.mxu0 %v522
      %2486 = vmatpush1.msra.mxu0 %v521
      %2487 = vmatprep.subr.mxu0 %v530
      %2488 = vmatpush1.msra.mxu0 %v529
      %2489 = vmatprep.subr.mxu0 %v538
      %2490 = vmatpush1.msra.mxu0 %v537
      %2491 = vmatprep.subr.mxu0 %v546
      %2492 = vmatpush1.msra.mxu0 %v545
      %2493 = vmatprep.subr.mxu0 %v554
      %2494 = vmatpush1.msra.mxu0 %v553
      %2495 = vmatprep.subr.mxu0 %v562
      %2496 = vmatpush1.msra.mxu0 %v561
      %2497 = vmatprep.subr.mxu0 %v570
      %2498 = vmatpush1.msra.mxu0 %v569
      %2499 = vmatprep.subr.mxu0 %v578
      %2500 = vmatpush1.msra.mxu0 %v577
      %2501 = vmatprep.subr.mxu0 %v1842
      %2502 = vmatpush1.msra.mxu0 %v1839
      %2503 = vmatprep.subr.mxu0 0.0
      %2504 = vmatpush1.msra.mxu0 0.0
      %2505 = vmatprep.subr.mxu0 0.0
      %2506 = vmatpush1.msra.mxu0 0.0
      %2507 = vmatprep.subr.mxu0 0.0
      %2508 = vmatpush1.msra.mxu0 0.0
      %2509 = vmatprep.subr.mxu0 0.0
      %2510 = vmatpush1.msra.mxu0 0.0
      %2511 = vmatprep.subr.mxu0 0.0
      %2512 = vmatpush1.msra.mxu0 0.0
      %2513 = vmatprep.subr.mxu0 0.0
      %2514 = vmatpush1.msra.mxu0 0.0
      %2515 = vmatprep.subr.mxu0 0.0
      %2516 = vmatpush1.msra.mxu0 0.0
      %2517 = vmatprep.subr.mxu0 0.0
      %2518 = vmatpush1.msra.mxu0 0.0
      %2519 = vmatprep.subr.mxu0 0.0
      %2520 = vmatpush1.msra.mxu0 0.0
      %2521 = vmatprep.subr.mxu0 0.0
      %2522 = vmatpush1.msra.mxu0 0.0
      %2523 = vmatprep.subr.mxu0 0.0
      %2524 = vmatpush1.msra.mxu0 0.0
      %2525 = vmatprep.subr.mxu0 0.0
      %2526 = vmatpush1.msra.mxu0 0.0
      %2527 = vmatprep.subr.mxu0 0.0
      %2528 = vmatpush1.msra.mxu0 0.0
      %2529 = vmatprep.subr.mxu0 0.0
      %2530 = vmatpush1.msra.mxu0 0.0
      %2531 = vmatprep.mubr.f32.mxu0 %v1812
      %2532 = vmatmul.mubr.f32.gmra.mrb[0].mxu0 %v173
      %v2533 = vpop.f32.mrb[0].mxu0
      %v2534 = vadd.f32 %v2445, %v2533
      %v2535 = vpop.f32.mrb[0].mxu0
      %v2536 = vadd.f32 %v2447, %v2535
      %2537 = vmatprep.mubr.f32.mxu0 %v1814
      %2538 = vmatmul.mubr.f32.gmra.mrb[0].mxu0 %v177
      %v2539 = vpop.f32.mrb[0].mxu0
      %v2540 = vadd.f32 %v2451, %v2539
      %v2541 = vpop.f32.mrb[0].mxu0
      %v2542 = vadd.f32 %v2453, %v2541
      %2543 = vmatprep.mubr.f32.mxu0 %v1816
      %2544 = vmatmul.mubr.f32.gmra.mrb[0].mxu0 %v181
      %v2545 = vpop.f32.mrb[0].mxu0
      %v2546 = vadd.f32 %v2457, %v2545
      %v2547 = vpop.f32.mrb[0].mxu0
      %v2548 = vadd.f32 %v2459, %v2547
      %2549 = vmatprep.mubr.f32.mxu0 %v1818
      %2550 = vmatmul.mubr.f32.gmra.mrb[0].mxu0 %v185
      %v2551 = vpop.f32.mrb[0].mxu0
      %v2552 = vadd.f32 %v2463, %v2551
      %v2553 = vpop.f32.mrb[0].mxu0
      %v2554 = vadd.f32 %v2465, %v2553
      %2555 = vdwg.mxu0
      %v2556 = vmax.f32 %v2000, %v2356
      %v2557 = vmax.f32 %v2002, %v2358
      %v2558 = vmax.f32 %v2178, %v2534
      %v2559 = vmax.f32 %v2180, %v2536
      %v2560 = vmax.f32 %v2006, %v2362
      %v2561 = vmax.f32 %v2008, %v2364
      %v2562 = vmax.f32 %v2184, %v2540
      %v2563 = vmax.f32 %v2186, %v2542
      %v2564 = vmax.f32 %v2012, %v2368
      %v2565 = vmax.f32 %v2014, %v2370
      %v2566 = vmax.f32 %v2190, %v2546
      %v2567 = vmax.f32 %v2192, %v2548
      %v2568 = vmax.f32 %v2018, %v2374
      %v2569 = vmax.f32 %v2020, %v2376
      %v2570 = vmax.f32 %v2196, %v2552
      %v2571 = vmax.f32 %v2198, %v2554
      %v2572 = vld [vmem:[%s2] sm:$0xf]
      %v2574 = vlaneseq
      %v2575 = vshrl.u32 %v2574, 7
      %v2576 = vsub.s32 0, %v2575
      %v2577 = vrot.slane %v2572, %v2576
      %v2578 = vlaneseq
      %v2579 = vshrl.u32 %v2578, 7
      %v2580 = vsub.s32 1, %v2579
      %v2581 = vrot.slane %v2572, %v2580
      %v2582 = vlaneseq
      %v2583 = vshrl.u32 %v2582, 7
      %v2584 = vsub.s32 2, %v2583
      %v2585 = vrot.slane %v2572, %v2584
      %v2586 = vlaneseq
      %v2587 = vshrl.u32 %v2586, 7
      %v2588 = vsub.s32 3, %v2587
      %v2589 = vrot.slane %v2572, %v2588
      %v2594 = vadd.f32 %v2556, %v2577
      %v2595 = vadd.f32 %v2557, %v2581
      %v2596 = vadd.f32 %v2558, %v2585
      %v2597 = vadd.f32 %v2559, %v2589
      %v2598 = vadd.f32 %v2560, %v2577
      %v2599 = vadd.f32 %v2561, %v2581
      %v2600 = vadd.f32 %v2562, %v2585
      %v2601 = vadd.f32 %v2563, %v2589
      %v2602 = vadd.f32 %v2564, %v2577
      %v2603 = vadd.f32 %v2565, %v2581
      %v2604 = vadd.f32 %v2566, %v2585
      %v2605 = vadd.f32 %v2567, %v2589
      %v2606 = vadd.f32 %v2568, %v2577
      %v2607 = vadd.f32 %v2569, %v2581
      %v2608 = vadd.f32 %v2570, %v2585
      %v2609 = vadd.f32 %v2571, %v2589
      %v2610 = vmax.f32 %v2594, 0.0
      %v2611 = vmax.f32 %v2595, 0.0
      %v2612 = vmax.f32 %v2596, 0.0
      %v2613 = vmax.f32 %v2597, 0.0
      %v2614 = vmax.f32 %v2598, 0.0
      %v2615 = vmax.f32 %v2599, 0.0
      %v2616 = vmax.f32 %v2600, 0.0
      %v2617 = vmax.f32 %v2601, 0.0
      %v2618 = vmax.f32 %v2602, 0.0
      %v2619 = vmax.f32 %v2603, 0.0
      %v2620 = vmax.f32 %v2604, 0.0
      %v2621 = vmax.f32 %v2605, 0.0
      %v2622 = vmax.f32 %v2606, 0.0
      %v2623 = vmax.f32 %v2607, 0.0
      %v2624 = vmax.f32 %v2608, 0.0
      %v2625 = vmax.f32 %v2609, 0.0
      %v2626 = vmax.f32 %v2610, %v2612
      %v2627 = vmax.f32 %v2611, %v2613
      %v2628 = vmax.f32 %v2614, %v2616
      %v2629 = vmax.f32 %v2615, %v2617
      %v2630 = vmax.f32 %v2618, %v2620
      %v2631 = vmax.f32 %v2619, %v2621
      %v2632 = vmax.f32 %v2622, %v2624
      %v2633 = vmax.f32 %v2623, %v2625
      %2634 = vst [vmem:[%s170] sm:$0xff] %v2626
      %2635 = vst [vmem:[%s170 + $0x8] sm:$0xff] %v2627
      %2636 = vst [vmem:[%s170 + $0x10] sm:$0xff] %v2628
      %2637 = vst [vmem:[%s170 + $0x18] sm:$0xff] %v2629
      %2638 = vst [vmem:[%s170 + $0x20] sm:$0xff] %v2630
      %2639 = vst [vmem:[%s170 + $0x28] sm:$0xff] %v2631
      %2640 = vst [vmem:[%s170 + $0x30] sm:$0xff] %v2632
      %2641 = vst [vmem:[%s170 + $0x38] sm:$0xff] %v2633
      %p2642 = scmp.lt.s32.totalorder %s14, 1
      %s2643 = scalar_select %p2642, %s14, 1
      %s2644 = smul.addr %s2643, 8
      %s2645 = smul.addr %s2644, 8
      %s2646 = scalar_lea.vmem %s3, %s2645
      // Predicated region
      $region33: #{shapes_cbm_forward.4} parent=31 // pred_check
        %p2647 = pneg %p100
      $region34: #{shapes_cbm_forward.4} parent=31 // pred_check_branch
        %2649 = sbr.rel (%p2647) target = $region36
      $region35: #{shapes_cbm_forward.4} parent=31 // pred_region
        _
      $region36: #{shapes_cbm_forward.4} parent=31 // pred_fallthru
        _
    $region32: #{shapes_cbm_forward.4} parent=5 // pred_fallthru
      _
    %p2650 = scmp.le.s32.totalorder 2, %s9
    // Predicated region
    $region37: #{shapes_cbm_forward.4} parent=5 // pred_check
      %p2651 = pneg %p2650
    $region38: #{shapes_cbm_forward.4} parent=5 // pred_check_branch
      %2653 = sbr.rel (%p2651) target = $region40
    $region39: #{shapes_cbm_forward.4} parent=5 // pred_region
      %s2654 = ssub.s32 %s9, 2
      // Predicated region
      $region41: #{shapes_cbm_forward.4} parent=39 // pred_check
        %p2655 = pneg %p106
      $region42: #{shapes_cbm_forward.4} parent=39 // pred_check_branch
        %2657 = sbr.rel (%p2655) target = $region44
      $region43: #{shapes_cbm_forward.4} parent=39 // pred_region
        %p2658 = scmp.lt.s32.totalorder %s15, 1
        %s2659 = scalar_select %p2658, %s15, 1
        %s2660 = smul.addr %s2659, 8
        %s2661 = smul.addr %s2660, 8
        %s2662 = scalar_lea.vmem %s3, %s2661
      $region44: #{shapes_cbm_forward.4} parent=39 // pred_fallthru
        _
    $region40: #{shapes_cbm_forward.4} parent=5 // pred_fallthru
      _
  $region6: #{shapes_cbm_forward.4} parent=0 // loop_footer
    %s13 = sadd.s32 1, %s9
  $region7: #{shapes_cbm_forward.4} parent=0 // loop_footer_branch
    %8 = sbr.rel target = $region3
  $region8: #{shapes_cbm_forward.4} parent=0 // loop_exit
    _

// kernel: shapes_cbm_forward.5
$region0: #{shapes_cbm_forward.5}
  #allocation0 [shape = 'u32[]', space=smem, size = 0x4, offset = 0x4, fixed_abs, tag = 'smem constant byte address 0x4 - core index']
  #allocation1 [shape = 'u32[144,128]{1,0:T(1,128)}', space=vmem, size = 0x12000, scoped, tag = 'internal scratch']
  %s0 = inlined_call_operand.vmem [shape: f32[2,17,544], index: 0, kind: input, shape index: {}]
  %s1 = inlined_call_operand.vmem [shape: f32[2,544,1024], index: 1, kind: input, shape index: {}]
  %s2 = inlined_call_operand.vmem [shape: f32[1,512], index: 2, kind: input, shape index: {}]
  %s3 = inlined_call_operand.vmem [shape: f32[2,16,256], index: 3, kind: output, shape index: {}]
  %s4 = sld [smem:[#allocation0]]
  $region45: #{shapes_cbm_forward.5} parent=0
    _
  %s6 = ssub.s32 1, %s4
  %s7 = scalar_select 0, %s6, %s4
  loop: start=0, step=1, limit=4
  $region2: #{shapes_cbm_forward.5} parent=0 // loop_pre_header
    _
  $region3: #{shapes_cbm_forward.5} parent=0 // loop_header
    %s9 = sphi 0, %s13
    %p10 = scmp.ge.s32.totalorder %s9, 4
    %s19 = sphi 0, %s21
    %s22 = sphi 0, %s19
    %s23 = sphi 0, %s22
    %s39 = sphi 0, %s23
    %s43 = sphi 0, %s43
    %s45 = sphi 0, %s43
    %s46 = sphi 0, %s45
    %s60 = sphi 0, %s46
    %s64 = sphi 0, %s64
    %s66 = sphi 0, %s64
    %s67 = sphi 0, %s66
    %s81 = sphi 0, %s67
    %s87 = sphi 0, %s89
    %s90 = sphi 0, %s87
    %s91 = sphi 0, %s90
    %s107 = sphi 0, %s91
  $region4: #{shapes_cbm_forward.5} parent=0 // loop_header_branch
    %12 = sbr.rel (%p10) target = $region8
  $region5: #{shapes_cbm_forward.5} parent=0 // loop_body
    %s14 = ssub.s32 %s9, 1
    %s15 = ssub.s32 %s9, 2
    %s16 = sadd.s32 %s9, 1
    %s17 = ssub.s32 %s9, %s16
    %p18 = scmp.eq.s32.totalorder %s17, 0
    %s20 = sadd.s32 %s19, 1
    %s21 = scalar_select %p18, %s19, %s20
    %p24 = pneg %p18
    %p25 = scmp.eq.s32.totalorder %s9, 1
    %p26 = por %p24, %p25
    %p27 = scmp.ne.s32.totalorder %s19, %s22
    %p28 = scmp.eq.s32.totalorder %s9, 0
    %p29 = por %p27, %p28
    %p30 = scmp.ne.s32.totalorder %s19, %s22
    %p31 = scmp.eq.s32.totalorder %s14, 1
    %p32 = por %p30, %p31
    %p33 = scmp.ne.s32.totalorder %s22, %s23
    %p34 = scmp.eq.s32.totalorder %s14, 0
    %p35 = por %p33, %p34
    %p36 = scmp.ne.s32.totalorder %s22, %s23
    %p37 = scmp.eq.s32.totalorder %s15, 1
    %p38 = por %p36, %p37
    %p40 = scmp.ne.s32.totalorder %s23, %s39
    %p41 = scmp.eq.s32.totalorder %s15, 0
    %p42 = por %p40, %p41
    %s44 = sadd.s32 %s43, 1
    %p47 = scmp.eq.s32.totalorder %s9, 1
    %p48 = scmp.ne.s32.totalorder %s43, %s45
    %p49 = scmp.eq.s32.totalorder %s9, 0
    %p50 = por %p48, %p49
    %p51 = scmp.ne.s32.totalorder %s43, %s45
    %p52 = scmp.eq.s32.totalorder %s14, 1
    %p53 = por %p51, %p52
    %p54 = scmp.ne.s32.totalorder %s45, %s46
    %p55 = scmp.eq.s32.totalorder %s14, 0
    %p56 = por %p54, %p55
    %p57 = scmp.ne.s32.totalorder %s45, %s46
    %p58 = scmp.eq.s32.totalorder %s15, 1
    %p59 = por %p57, %p58
    %p61 = scmp.ne.s32.totalorder %s46, %s60
    %p62 = scmp.eq.s32.totalorder %s15, 0
    %p63 = por %p61, %p62
    %s65 = sadd.s32 %s64, 1
    %p68 = scmp.eq.s32.totalorder %s9, 1
    %p69 = scmp.ne.s32.totalorder %s64, %s66
    %p70 = scmp.eq.s32.totalorder %s9, 0
    %p71 = por %p69, %p70
    %p72 = scmp.ne.s32.totalorder %s64, %s66
    %p73 = scmp.eq.s32.totalorder %s14, 1
    %p74 = por %p72, %p73
    %p75 = scmp.ne.s32.totalorder %s66, %s67
    %p76 = scmp.eq.s32.totalorder %s14, 0
    %p77 = por %p75, %p76
    %p78 = scmp.ne.s32.totalorder %s66, %s67
    %p79 = scmp.eq.s32.totalorder %s15, 1
    %p80 = por %p78, %p79
    %p82 = scmp.ne.s32.totalorder %s67, %s81
    %p83 = scmp.eq.s32.totalorder %s15, 0
    %p84 = por %p82, %p83
    %s85 = ssub.s32 %s9, %s16
    %p86 = scmp.eq.s32.totalorder %s85, 0
    %s88 = sadd.s32 %s87, 1
    %s89 = scalar_select %p86, %s87, %s88
    %p92 = pneg %p86
    %p93 = scmp.eq.s32.totalorder %s9, 1
    %p94 = por %p92, %p93
    %p95 = scmp.ne.s32.totalorder %s87, %s90
    %p96 = scmp.eq.s32.totalorder %s9, 0
    %p97 = por %p95, %p96
    %p98 = scmp.ne.s32.totalorder %s87, %s90
    %p99 = scmp.eq.s32.totalorder %s14, 1
    %p100 = por %p98, %p99
    %p101 = scmp.ne.s32.totalorder %s90, %s91
    %p102 = scmp.eq.s32.totalorder %s14, 0
    %p103 = por %p101, %p102
    %p104 = scmp.ne.s32.totalorder %s90, %s91
    %p105 = scmp.eq.s32.totalorder %s15, 1
    %p106 = por %p104, %p105
    %p108 = scmp.ne.s32.totalorder %s91, %s107
    %p109 = scmp.eq.s32.totalorder %s15, 0
    %p110 = por %p108, %p109
    %p111 = scmp.le.s32.totalorder 1, %s9
    %p112 = scmp.lt.s32.totalorder %s9, 3
    %p113 = pnand %p111, %p112
    %p114 = pneg %p113
    // Predicated region
    $region9: #{shapes_cbm_forward.5} parent=5 // pred_check
      _
    $region10: #{shapes_cbm_forward.5} parent=5 // pred_check_branch
      %116 = sbr.rel (%p113) target = $region12
    $region11: #{shapes_cbm_forward.5} parent=5 // pred_region
      %s117 = ssub.s32 %s9, 1
      // Predicated region
      $region13: #{shapes_cbm_forward.5} parent=11 // pred_check
        %p118 = pneg %p56
      $region14: #{shapes_cbm_forward.5} parent=11 // pred_check_branch
        %120 = sbr.rel (%p118) target = $region16
      $region15: #{shapes_cbm_forward.5} parent=11 // pred_region
        _
      $region16: #{shapes_cbm_forward.5} parent=11 // pred_fallthru
        _
      // Predicated region
      $region17: #{shapes_cbm_forward.5} parent=11 // pred_check
        %p121 = pneg %p77
      $region18: #{shapes_cbm_forward.5} parent=11 // pred_check_branch
        %123 = sbr.rel (%p121) target = $region20
      $region19: #{shapes_cbm_forward.5} parent=11 // pred_region
        _
      $region20: #{shapes_cbm_forward.5} parent=11 // pred_fallthru
        _
    $region12: #{shapes_cbm_forward.5} parent=5 // pred_fallthru
      _
    %p124 = scmp.lt.s32.totalorder %s9, 2
    // Predicated region
    $region21: #{shapes_cbm_forward.5} parent=5 // pred_check
      %p125 = pneg %p124
    $region22: #{shapes_cbm_forward.5} parent=5 // pred_check_branch
      %127 = sbr.rel (%p125) target = $region24
    $region23: #{shapes_cbm_forward.5} parent=5 // pred_region
      // Predicated region
      $region25: #{shapes_cbm_forward.5} parent=23 // pred_check
        %p128 = pneg %p29
      $region26: #{shapes_cbm_forward.5} parent=23 // pred_check_branch
        %130 = sbr.rel (%p128) target = $region28
      $region27: #{shapes_cbm_forward.5} parent=23 // pred_region
        %p131 = scmp.lt.s32.totalorder %s9, 1
        %s132 = scalar_select %p131, %s9, 1
        %s133 = smul.addr %s132, 15
        %s134 = smul.addr %s133, 8
        %s135 = scalar_lea.vmem %s0, %s134
      $region28: #{shapes_cbm_forward.5} parent=23 // pred_fallthru
        _
    $region24: #{shapes_cbm_forward.5} parent=5 // pred_fallthru
      _
    %p136 = scmp.le.s32.totalorder 1, %s9
    %p137 = scmp.lt.s32.totalorder %s9, 3
    %p138 = pnand %p136, %p137
    %p139 = pneg %p138
    // Predicated region
    $region29: #{shapes_cbm_forward.5} parent=5 // pred_check
      _
    $region30: #{shapes_cbm_forward.5} parent=5 // pred_check_branch
      %141 = sbr.rel (%p138) target = $region32
    $region31: #{shapes_cbm_forward.5} parent=5 // pred_region
      %s142 = ssub.s32 %s9, 1
      %p143 = scmp.lt.s32.totalorder %s14, 1
      %s144 = scalar_select %p143, %s14, 1
      %s145 = smul.addr %s144, 15
      %s146 = smul.addr %s145, 8
      %s147 = scalar_lea.vmem %s0, %s146
      %p148 = pneg %p35
      %p149 = pneg %p32
      %p150 = pneg %p56
      %p151 = pneg %p53
      %p152 = pneg %p77
      %p153 = pneg %p74
      %p154 = pneg %p103
      %p155 = pneg %p100
      %p156 = scmp.lt.s32.totalorder %s14, 1
      %s157 = scalar_select %p156, %s14, 1
      %s158 = smul.addr %s157, 4
      %s159 = smul.addr %s158, 8
      %s160 = scalar_lea.vmem %s3, %s159
      %p161 = scmp.lt.s32.totalorder %s14, 1
      %s162 = scalar_select %p161, %s14, 1
      %s163 = smul.addr %s162, 15
      %s164 = smul.addr %s163, 8
      %s165 = scalar_lea.vmem %s0, %s164
      %p166 = scmp.lt.s32.totalorder %s14, 1
      %s167 = scalar_select %p166, %s14, 1
      %s168 = smul.addr %s167, 4
      %s169 = smul.addr %s168, 8
      %s170 = scalar_lea.vmem %s3, %s169
      %v171 = vld [vmem:[%s165] sm:$0xff]
      %v172 = vld [vmem:[%s165 + $0x8] sm:$0xff]
      %v173 = vld [vmem:[%s165 + $0x10] sm:$0xff]
      %v174 = vld [vmem:[%s165 + $0x18] sm:$0xff]
      %v175 = vld [vmem:[%s165 + $0x20] sm:$0xff]
      %v176 = vld [vmem:[%s165 + $0x28] sm:$0xff]
      %v177 = vld [vmem:[%s165 + $0x30] sm:$0xff]
      %v178 = vld [vmem:[%s165 + $0x38] sm:$0xff]
      %v179 = vld [vmem:[%s165 + $0x40] sm:$0xff]
      %v180 = vld [vmem:[%s165 + $0x48] sm:$0xff]
      %v181 = vld [vmem:[%s1] sm:$0xff]
      %v182 = vld [vmem:[%s1 + $0x8] sm:$0xff]
      %v183 = vld [vmem:[%s1 + $0x10] sm:$0xff]
      %v184 = vld [vmem:[%s1 + $0x18] sm:$0xff]
      %v185 = vld [vmem:[%s1 + $0x20] sm:$0xff]
      %v186 = vld [vmem:[%s1 + $0x28] sm:$0xff]
      %v187 = vld [vmem:[%s1 + $0x30] sm:$0xff]
      %v188 = vld [vmem:[%s1 + $0x38] sm:$0xff]
      %v189 = vld [vmem:[%s1 + $0x40] sm:$0xff]
      %v190 = vld [vmem:[%s1 + $0x48] sm:$0xff]
      %v191 = vld [vmem:[%s1 + $0x50] sm:$0xff]
      %v192 = vld [vmem:[%s1 + $0x58] sm:$0xff]
      %v193 = vld [vmem:[%s1 + $0x60] sm:$0xff]
      %v194 = vld [vmem:[%s1 + $0x68] sm:$0xff]
      %v195 = vld [vmem:[%s1 + $0x70] sm:$0xff]
      %v196 = vld [vmem:[%s1 + $0x78] sm:$0xff]
      %v197 = vld [vmem:[%s1 + $0x80] sm:$0xff]
      %v198 = vld [vmem:[%s1 + $0x88] sm:$0xff]
      %v199 = vld [vmem:[%s1 + $0x90] sm:$0xff]
      %v200 = vld [vmem:[%s1 + $0x98] sm:$0xff]
      %v201 = vld [vmem:[%s1 + $0xa0] sm:$0xff]
      %v202 = vld [vmem:[%s1 + $0xa8] sm:$0xff]
      %v203 = vld [vmem:[%s1 + $0xb0] sm:$0xff]
      %v204 = vld [vmem:[%s1 + $0xb8] sm:$0xff]
      %v205 = vld [vmem:[%s1 + $0xc0] sm:$0xff]
      %v206 = vld [vmem:[%s1 + $0xc8] sm:$0xff]
      %v207 = vld [vmem:[%s1 + $0xd0] sm:$0xff]
      %v208 = vld [vmem:[%s1 + $0xd8] sm:$0xff]
      %v209 = vld [vmem:[%s1 + $0xe0] sm:$0xff]
      %v210 = vld [vmem:[%s1 + $0xe8] sm:$0xff]
      %v211 = vld [vmem:[%s1 + $0xf0] sm:$0xff]
      %v212 = vld [vmem:[%s1 + $0xf8] sm:$0xff]
      %v213 = vld [vmem:[%s1 + $0x100] sm:$0xff]
      %v214 = vld [vmem:[%s1 + $0x108] sm:$0xff]
      %v215 = vld [vmem:[%s1 + $0x110] sm:$0xff]
      %v216 = vld [vmem:[%s1 + $0x118] sm:$0xff]
      %v217 = vld [vmem:[%s1 + $0x120] sm:$0xff]
      %v218 = vld [vmem:[%s1 + $0x128] sm:$0xff]
      %v219 = vld [vmem:[%s1 + $0x130] sm:$0xff]
      %v220 = vld [vmem:[%s1 + $0x138] sm:$0xff]
      %v221 = vld [vmem:[%s1 + $0x140] sm:$0xff]
      %v222 = vld [vmem:[%s1 + $0x148] sm:$0xff]
      %v223 = vld [vmem:[%s1 + $0x150] sm:$0xff]
      %v224 = vld [vmem:[%s1 + $0x158] sm:$0xff]
      %v225 = vld [vmem:[%s1 + $0x160] sm:$0xff]
      %v226 = vld [vmem:[%s1 + $0x168] sm:$0xff]
      %v227 = vld [vmem:[%s1 + $0x170] sm:$0xff]
      %v228 = vld [vmem:[%s1 + $0x178] sm:$0xff]
      %v229 = vld [vmem:[%s1 + $0x180] sm:$0xff]
      %v230 = vld [vmem:[%s1 + $0x188] sm:$0xff]
      %v231 = vld [vmem:[%s1 + $0x190] sm:$0xff]
      %v232 = vld [vmem:[%s1 + $0x198] sm:$0xff]
      %v233 = vld [vmem:[%s1 + $0x1a0] sm:$0xff]
      %v234 = vld [vmem:[%s1 + $0x1a8] sm:$0xff]
      %v235 = vld [vmem:[%s1 + $0x1b0] sm:$0xff]
      %v236 = vld [vmem:[%s1 + $0x1b8] sm:$0xff]
      %v237 = vld [vmem:[%s1 + $0x1c0] sm:$0xff]
      %v238 = vld [vmem:[%s1 + $0x1c8] sm:$0xff]
      %v239 = vld [vmem:[%s1 + $0x1d0] sm:$0xff]
      %v240 = vld [vmem:[%s1 + $0x1d8] sm:$0xff]
      %v241 = vld [vmem:[%s1 + $0x1e0] sm:$0xff]
      %v242 = vld [vmem:[%s1 + $0x1e8] sm:$0xff]
      %v243 = vld [vmem:[%s1 + $0x1f0] sm:$0xff]
      %v244 = vld [vmem:[%s1 + $0x1f8] sm:$0xff]
      %v245 = vld [vmem:[%s1 + $0x200] sm:$0xff]
      %v246 = vld [vmem:[%s1 + $0x208] sm:$0xff]
      %v247 = vld [vmem:[%s1 + $0x210] sm:$0xff]
      %v248 = vld [vmem:[%s1 + $0x218] sm:$0xff]
      %v249 = vld [vmem:[%s1 + $0x220] sm:$0xff]
      %v250 = vld [vmem:[%s1 + $0x228] sm:$0xff]
      %v251 = vld [vmem:[%s1 + $0x230] sm:$0xff]
      %v252 = vld [vmem:[%s1 + $0x238] sm:$0xff]
      %v253 = vld [vmem:[%s1 + $0x240] sm:$0xff]
      %v254 = vld [vmem:[%s1 + $0x248] sm:$0xff]
      %v255 = vld [vmem:[%s1 + $0x250] sm:$0xff]
      %v256 = vld [vmem:[%s1 + $0x258] sm:$0xff]
      %v257 = vld [vmem:[%s1 + $0x260] sm:$0xff]
      %v258 = vld [vmem:[%s1 + $0x268] sm:$0xff]
      %v259 = vld [vmem:[%s1 + $0x270] sm:$0xff]
      %v260 = vld [vmem:[%s1 + $0x278] sm:$0xff]
      %v261 = vld [vmem:[%s1 + $0x280] sm:$0xff]
      %v262 = vld [vmem:[%s1 + $0x288] sm:$0xff]
      %v263 = vld [vmem:[%s1 + $0x290] sm:$0xff]
      %v264 = vld [vmem:[%s1 + $0x298] sm:$0xff]
      %v265 = vld [vmem:[%s1 + $0x2a0] sm:$0xff]
      %v266 = vld [vmem:[%s1 + $0x2a8] sm:$0xff]
      %v267 = vld [vmem:[%s1 + $0x2b0] sm:$0xff]
      %v268 = vld [vmem:[%s1 + $0x2b8] sm:$0xff]
      %v269 = vld [vmem:[%s1 + $0x2c0] sm:$0xff]
      %v270 = vld [vmem:[%s1 + $0x2c8] sm:$0xff]
      %v271 = vld [vmem:[%s1 + $0x2d0] sm:$0xff]
      %v272 = vld [vmem:[%s1 + $0x2d8] sm:$0xff]
      %v273 = vld [vmem:[%s1 + $0x2e0] sm:$0xff]
      %v274 = vld [vmem:[%s1 + $0x2e8] sm:$0xff]
      %v275 = vld [vmem:[%s1 + $0x2f0] sm:$0xff]
      %v276 = vld [vmem:[%s1 + $0x2f8] sm:$0xff]
      %v277 = vld [vmem:[%s1 + $0x300] sm:$0xff]
      %v278 = vld [vmem:[%s1 + $0x308] sm:$0xff]
      %v279 = vld [vmem:[%s1 + $0x310] sm:$0xff]
      %v280 = vld [vmem:[%s1 + $0x318] sm:$0xff]
      %v281 = vld [vmem:[%s1 + $0x320] sm:$0xff]
      %v282 = vld [vmem:[%s1 + $0x328] sm:$0xff]
      %v283 = vld [vmem:[%s1 + $0x330] sm:$0xff]
      %v284 = vld [vmem:[%s1 + $0x338] sm:$0xff]
      %v285 = vld [vmem:[%s1 + $0x340] sm:$0xff]
      %v286 = vld [vmem:[%s1 + $0x348] sm:$0xff]
      %v287 = vld [vmem:[%s1 + $0x350] sm:$0xff]
      %v288 = vld [vmem:[%s1 + $0x358] sm:$0xff]
      %v289 = vld [vmem:[%s1 + $0x360] sm:$0xff]
      %v290 = vld [vmem:[%s1 + $0x368] sm:$0xff]
      %v291 = vld [vmem:[%s1 + $0x370] sm:$0xff]
      %v292 = vld [vmem:[%s1 + $0x378] sm:$0xff]
      %v293 = vld [vmem:[%s1 + $0x380] sm:$0xff]
      %v294 = vld [vmem:[%s1 + $0x388] sm:$0xff]
      %v295 = vld [vmem:[%s1 + $0x390] sm:$0xff]
      %v296 = vld [vmem:[%s1 + $0x398] sm:$0xff]
      %v297 = vld [vmem:[%s1 + $0x3a0] sm:$0xff]
      %v298 = vld [vmem:[%s1 + $0x3a8] sm:$0xff]
      %v299 = vld [vmem:[%s1 + $0x3b0] sm:$0xff]
      %v300 = vld [vmem:[%s1 + $0x3b8] sm:$0xff]
      %v301 = vld [vmem:[%s1 + $0x3c0] sm:$0xff]
      %v302 = vld [vmem:[%s1 + $0x3c8] sm:$0xff]
      %v303 = vld [vmem:[%s1 + $0x3d0] sm:$0xff]
      %v304 = vld [vmem:[%s1 + $0x3d8] sm:$0xff]
      %v305 = vld [vmem:[%s1 + $0x3e0] sm:$0xff]
      %v306 = vld [vmem:[%s1 + $0x3e8] sm:$0xff]
      %v307 = vld [vmem:[%s1 + $0x3f0] sm:$0xff]
      %v308 = vld [vmem:[%s1 + $0x3f8] sm:$0xff]
      %v309 = vld [vmem:[%s1 + $0x400] sm:$0xff]
      %v310 = vld [vmem:[%s1 + $0x408] sm:$0xff]
      %v311 = vld [vmem:[%s1 + $0x410] sm:$0xff]
      %v312 = vld [vmem:[%s1 + $0x418] sm:$0xff]
      %v313 = vld [vmem:[%s1 + $0x420] sm:$0xff]
      %v314 = vld [vmem:[%s1 + $0x428] sm:$0xff]
      %v315 = vld [vmem:[%s1 + $0x430] sm:$0xff]
      %v316 = vld [vmem:[%s1 + $0x438] sm:$0xff]
      %v317 = vld [vmem:[%s1 + $0x440] sm:$0xff]
      %v318 = vld [vmem:[%s1 + $0x448] sm:$0xff]
      %v319 = vld [vmem:[%s1 + $0x450] sm:$0xff]
      %v320 = vld [vmem:[%s1 + $0x458] sm:$0xff]
      %v321 = vld [vmem:[%s1 + $0x460] sm:$0xff]
      %v322 = vld [vmem:[%s1 + $0x468] sm:$0xff]
      %v323 = vld [vmem:[%s1 + $0x470] sm:$0xff]
      %v324 = vld [vmem:[%s1 + $0x478] sm:$0xff]
      %v325 = vld [vmem:[%s1 + $0x480] sm:$0xff]
      %v326 = vld [vmem:[%s1 + $0x488] sm:$0xff]
      %v327 = vld [vmem:[%s1 + $0x490] sm:$0xff]
      %v328 = vld [vmem:[%s1 + $0x498] sm:$0xff]
      %v329 = vld [vmem:[%s1 + $0x4a0] sm:$0xff]
      %v330 = vld [vmem:[%s1 + $0x4a8] sm:$0xff]
      %v331 = vld [vmem:[%s1 + $0x4b0] sm:$0xff]
      %v332 = vld [vmem:[%s1 + $0x4b8] sm:$0xff]
      %v333 = vld [vmem:[%s1 + $0x4c0] sm:$0xff]
      %v334 = vld [vmem:[%s1 + $0x4c8] sm:$0xff]
      %v335 = vld [vmem:[%s1 + $0x4d0] sm:$0xff]
      %v336 = vld [vmem:[%s1 + $0x4d8] sm:$0xff]
      %v337 = vld [vmem:[%s1 + $0x4e0] sm:$0xff]
      %v338 = vld [vmem:[%s1 + $0x4e8] sm:$0xff]
      %v339 = vld [vmem:[%s1 + $0x4f0] sm:$0xff]
      %v340 = vld [vmem:[%s1 + $0x4f8] sm:$0xff]
      %v341 = vld [vmem:[%s1 + $0x500] sm:$0xff]
      %v342 = vld [vmem:[%s1 + $0x508] sm:$0xff]
      %v343 = vld [vmem:[%s1 + $0x510] sm:$0xff]
      %v344 = vld [vmem:[%s1 + $0x518] sm:$0xff]
      %v345 = vld [vmem:[%s1 + $0x520] sm:$0xff]
      %v346 = vld [vmem:[%s1 + $0x528] sm:$0xff]
      %v347 = vld [vmem:[%s1 + $0x530] sm:$0xff]
      %v348 = vld [vmem:[%s1 + $0x538] sm:$0xff]
      %v349 = vld [vmem:[%s1 + $0x540] sm:$0xff]
      %v350 = vld [vmem:[%s1 + $0x548] sm:$0xff]
      %v351 = vld [vmem:[%s1 + $0x550] sm:$0xff]
      %v352 = vld [vmem:[%s1 + $0x558] sm:$0xff]
      %v353 = vld [vmem:[%s1 + $0x560] sm:$0xff]
      %v354 = vld [vmem:[%s1 + $0x568] sm:$0xff]
      %v355 = vld [vmem:[%s1 + $0x570] sm:$0xff]
      %v356 = vld [vmem:[%s1 + $0x578] sm:$0xff]
      %v357 = vld [vmem:[%s1 + $0x580] sm:$0xff]
      %v358 = vld [vmem:[%s1 + $0x588] sm:$0xff]
      %v359 = vld [vmem:[%s1 + $0x590] sm:$0xff]
      %v360 = vld [vmem:[%s1 + $0x598] sm:$0xff]
      %v361 = vld [vmem:[%s1 + $0x5a0] sm:$0xff]
      %v362 = vld [vmem:[%s1 + $0x5a8] sm:$0xff]
      %v363 = vld [vmem:[%s1 + $0x5b0] sm:$0xff]
      %v364 = vld [vmem:[%s1 + $0x5b8] sm:$0xff]
      %v365 = vld [vmem:[%s1 + $0x5c0] sm:$0xff]
      %v366 = vld [vmem:[%s1 + $0x5c8] sm:$0xff]
      %v367 = vld [vmem:[%s1 + $0x5d0] sm:$0xff]
      %v368 = vld [vmem:[%s1 + $0x5d8] sm:$0xff]
      %v369 = vld [vmem:[%s1 + $0x5e0] sm:$0xff]
      %v370 = vld [vmem:[%s1 + $0x5e8] sm:$0xff]
      %v371 = vld [vmem:[%s1 + $0x5f0] sm:$0xff]
      %v372 = vld [vmem:[%s1 + $0x5f8] sm:$0xff]
      %v373 = vld [vmem:[%s1 + $0x600] sm:$0xff]
      %v374 = vld [vmem:[%s1 + $0x608] sm:$0xff]
      %v375 = vld [vmem:[%s1 + $0x610] sm:$0xff]
      %v376 = vld [vmem:[%s1 + $0x618] sm:$0xff]
      %v377 = vld [vmem:[%s1 + $0x620] sm:$0xff]
      %v378 = vld [vmem:[%s1 + $0x628] sm:$0xff]
      %v379 = vld [vmem:[%s1 + $0x630] sm:$0xff]
      %v380 = vld [vmem:[%s1 + $0x638] sm:$0xff]
      %v381 = vld [vmem:[%s1 + $0x640] sm:$0xff]
      %v382 = vld [vmem:[%s1 + $0x648] sm:$0xff]
      %v383 = vld [vmem:[%s1 + $0x650] sm:$0xff]
      %v384 = vld [vmem:[%s1 + $0x658] sm:$0xff]
      %v385 = vld [vmem:[%s1 + $0x660] sm:$0xff]
      %v386 = vld [vmem:[%s1 + $0x668] sm:$0xff]
      %v387 = vld [vmem:[%s1 + $0x670] sm:$0xff]
      %v388 = vld [vmem:[%s1 + $0x678] sm:$0xff]
      %v389 = vld [vmem:[%s1 + $0x680] sm:$0xff]
      %v390 = vld [vmem:[%s1 + $0x688] sm:$0xff]
      %v391 = vld [vmem:[%s1 + $0x690] sm:$0xff]
      %v392 = vld [vmem:[%s1 + $0x698] sm:$0xff]
      %v393 = vld [vmem:[%s1 + $0x6a0] sm:$0xff]
      %v394 = vld [vmem:[%s1 + $0x6a8] sm:$0xff]
      %v395 = vld [vmem:[%s1 + $0x6b0] sm:$0xff]
      %v396 = vld [vmem:[%s1 + $0x6b8] sm:$0xff]
      %v397 = vld [vmem:[%s1 + $0x6c0] sm:$0xff]
      %v398 = vld [vmem:[%s1 + $0x6c8] sm:$0xff]
      %v399 = vld [vmem:[%s1 + $0x6d0] sm:$0xff]
      %v400 = vld [vmem:[%s1 + $0x6d8] sm:$0xff]
      %v401 = vld [vmem:[%s1 + $0x6e0] sm:$0xff]
      %v402 = vld [vmem:[%s1 + $0x6e8] sm:$0xff]
      %v403 = vld [vmem:[%s1 + $0x6f0] sm:$0xff]
      %v404 = vld [vmem:[%s1 + $0x6f8] sm:$0xff]
      %v405 = vld [vmem:[%s1 + $0x700] sm:$0xff]
      %v406 = vld [vmem:[%s1 + $0x708] sm:$0xff]
      %v407 = vld [vmem:[%s1 + $0x710] sm:$0xff]
      %v408 = vld [vmem:[%s1 + $0x718] sm:$0xff]
      %v409 = vld [vmem:[%s1 + $0x720] sm:$0xff]
      %v410 = vld [vmem:[%s1 + $0x728] sm:$0xff]
      %v411 = vld [vmem:[%s1 + $0x730] sm:$0xff]
      %v412 = vld [vmem:[%s1 + $0x738] sm:$0xff]
      %v413 = vld [vmem:[%s1 + $0x740] sm:$0xff]
      %v414 = vld [vmem:[%s1 + $0x748] sm:$0xff]
      %v415 = vld [vmem:[%s1 + $0x750] sm:$0xff]
      %v416 = vld [vmem:[%s1 + $0x758] sm:$0xff]
      %v417 = vld [vmem:[%s1 + $0x760] sm:$0xff]
      %v418 = vld [vmem:[%s1 + $0x768] sm:$0xff]
      %v419 = vld [vmem:[%s1 + $0x770] sm:$0xff]
      %v420 = vld [vmem:[%s1 + $0x778] sm:$0xff]
      %v421 = vld [vmem:[%s1 + $0x780] sm:$0xff]
      %v422 = vld [vmem:[%s1 + $0x788] sm:$0xff]
      %v423 = vld [vmem:[%s1 + $0x790] sm:$0xff]
      %v424 = vld [vmem:[%s1 + $0x798] sm:$0xff]
      %v425 = vld [vmem:[%s1 + $0x7a0] sm:$0xff]
      %v426 = vld [vmem:[%s1 + $0x7a8] sm:$0xff]
      %v427 = vld [vmem:[%s1 + $0x7b0] sm:$0xff]
      %v428 = vld [vmem:[%s1 + $0x7b8] sm:$0xff]
      %v429 = vld [vmem:[%s1 + $0x7c0] sm:$0xff]
      %v430 = vld [vmem:[%s1 + $0x7c8] sm:$0xff]
      %v431 = vld [vmem:[%s1 + $0x7d0] sm:$0xff]
      %v432 = vld [vmem:[%s1 + $0x7d8] sm:$0xff]
      %v433 = vld [vmem:[%s1 + $0x7e0] sm:$0xff]
      %v434 = vld [vmem:[%s1 + $0x7e8] sm:$0xff]
      %v435 = vld [vmem:[%s1 + $0x7f0] sm:$0xff]
      %v436 = vld [vmem:[%s1 + $0x7f8] sm:$0xff]
      %v437 = vld [vmem:[%s1 + $0x800] sm:$0xff]
      %v438 = vld [vmem:[%s1 + $0x808] sm:$0xff]
      %v439 = vld [vmem:[%s1 + $0x810] sm:$0xff]
      %v440 = vld [vmem:[%s1 + $0x818] sm:$0xff]
      %v441 = vld [vmem:[%s1 + $0x820] sm:$0xff]
      %v442 = vld [vmem:[%s1 + $0x828] sm:$0xff]
      %v443 = vld [vmem:[%s1 + $0x830] sm:$0xff]
      %v444 = vld [vmem:[%s1 + $0x838] sm:$0xff]
      %v445 = vld [vmem:[%s1 + $0x840] sm:$0xff]
      %v446 = vld [vmem:[%s1 + $0x848] sm:$0xff]
      %v447 = vld [vmem:[%s1 + $0x850] sm:$0xff]
      %v448 = vld [vmem:[%s1 + $0x858] sm:$0xff]
      %v449 = vld [vmem:[%s1 + $0x860] sm:$0xff]
      %v450 = vld [vmem:[%s1 + $0x868] sm:$0xff]
      %v451 = vld [vmem:[%s1 + $0x870] sm:$0xff]
      %v452 = vld [vmem:[%s1 + $0x878] sm:$0xff]
      %v453 = vld [vmem:[%s1 + $0x880] sm:$0xff]
      %v454 = vld [vmem:[%s1 + $0x888] sm:$0xff]
      %v455 = vld [vmem:[%s1 + $0x890] sm:$0xff]
      %v456 = vld [vmem:[%s1 + $0x898] sm:$0xff]
      %v457 = vld [vmem:[%s1 + $0x8a0] sm:$0xff]
      %v458 = vld [vmem:[%s1 + $0x8a8] sm:$0xff]
      %v459 = vld [vmem:[%s1 + $0x8b0] sm:$0xff]
      %v460 = vld [vmem:[%s1 + $0x8b8] sm:$0xff]
      %v461 = vld [vmem:[%s1 + $0x8c0] sm:$0xff]
      %v462 = vld [vmem:[%s1 + $0x8c8] sm:$0xff]
      %v463 = vld [vmem:[%s1 + $0x8d0] sm:$0xff]
      %v464 = vld [vmem:[%s1 + $0x8d8] sm:$0xff]
      %v465 = vld [vmem:[%s1 + $0x8e0] sm:$0xff]
      %v466 = vld [vmem:[%s1 + $0x8e8] sm:$0xff]
      %v467 = vld [vmem:[%s1 + $0x8f0] sm:$0xff]
      %v468 = vld [vmem:[%s1 + $0x8f8] sm:$0xff]
      %v469 = vld [vmem:[%s1 + $0x900] sm:$0xff]
      %v470 = vld [vmem:[%s1 + $0x908] sm:$0xff]
      %v471 = vld [vmem:[%s1 + $0x910] sm:$0xff]
      %v472 = vld [vmem:[%s1 + $0x918] sm:$0xff]
      %v473 = vld [vmem:[%s1 + $0x920] sm:$0xff]
      %v474 = vld [vmem:[%s1 + $0x928] sm:$0xff]
      %v475 = vld [vmem:[%s1 + $0x930] sm:$0xff]
      %v476 = vld [vmem:[%s1 + $0x938] sm:$0xff]
      %v477 = vld [vmem:[%s1 + $0x940] sm:$0xff]
      %v478 = vld [vmem:[%s1 + $0x948] sm:$0xff]
      %v479 = vld [vmem:[%s1 + $0x950] sm:$0xff]
      %v480 = vld [vmem:[%s1 + $0x958] sm:$0xff]
      %v481 = vld [vmem:[%s1 + $0x960] sm:$0xff]
      %v482 = vld [vmem:[%s1 + $0x968] sm:$0xff]
      %v483 = vld [vmem:[%s1 + $0x970] sm:$0xff]
      %v484 = vld [vmem:[%s1 + $0x978] sm:$0xff]
      %v485 = vld [vmem:[%s1 + $0x980] sm:$0xff]
      %v486 = vld [vmem:[%s1 + $0x988] sm:$0xff]
      %v487 = vld [vmem:[%s1 + $0x990] sm:$0xff]
      %v488 = vld [vmem:[%s1 + $0x998] sm:$0xff]
      %v489 = vld [vmem:[%s1 + $0x9a0] sm:$0xff]
      %v490 = vld [vmem:[%s1 + $0x9a8] sm:$0xff]
      %v491 = vld [vmem:[%s1 + $0x9b0] sm:$0xff]
      %v492 = vld [vmem:[%s1 + $0x9b8] sm:$0xff]
      %v493 = vld [vmem:[%s1 + $0x9c0] sm:$0xff]
      %v494 = vld [vmem:[%s1 + $0x9c8] sm:$0xff]
      %v495 = vld [vmem:[%s1 + $0x9d0] sm:$0xff]
      %v496 = vld [vmem:[%s1 + $0x9d8] sm:$0xff]
      %v497 = vld [vmem:[%s1 + $0x9e0] sm:$0xff]
      %v498 = vld [vmem:[%s1 + $0x9e8] sm:$0xff]
      %v499 = vld [vmem:[%s1 + $0x9f0] sm:$0xff]
      %v500 = vld [vmem:[%s1 + $0x9f8] sm:$0xff]
      %v501 = vld [vmem:[%s1 + $0xa00] sm:$0xff]
      %v502 = vld [vmem:[%s1 + $0xa08] sm:$0xff]
      %v503 = vld [vmem:[%s1 + $0xa10] sm:$0xff]
      %v504 = vld [vmem:[%s1 + $0xa18] sm:$0xff]
      %v505 = vld [vmem:[%s1 + $0xa20] sm:$0xff]
      %v506 = vld [vmem:[%s1 + $0xa28] sm:$0xff]
      %v507 = vld [vmem:[%s1 + $0xa30] sm:$0xff]
      %v508 = vld [vmem:[%s1 + $0xa38] sm:$0xff]
      %v509 = vld [vmem:[%s1 + $0xa40] sm:$0xff]
      %v510 = vld [vmem:[%s1 + $0xa48] sm:$0xff]
      %v511 = vld [vmem:[%s1 + $0xa50] sm:$0xff]
      %v512 = vld [vmem:[%s1 + $0xa58] sm:$0xff]
      %v513 = vld [vmem:[%s1 + $0xa60] sm:$0xff]
      %v514 = vld [vmem:[%s1 + $0xa68] sm:$0xff]
      %v515 = vld [vmem:[%s1 + $0xa70] sm:$0xff]
      %v516 = vld [vmem:[%s1 + $0xa78] sm:$0xff]
      %v517 = vld [vmem:[%s1 + $0xa80] sm:$0xff]
      %v518 = vld [vmem:[%s1 + $0xa88] sm:$0xff]
      %v519 = vld [vmem:[%s1 + $0xa90] sm:$0xff]
      %v520 = vld [vmem:[%s1 + $0xa98] sm:$0xff]
      %v521 = vld [vmem:[%s1 + $0xaa0] sm:$0xff]
      %v522 = vld [vmem:[%s1 + $0xaa8] sm:$0xff]
      %v523 = vld [vmem:[%s1 + $0xab0] sm:$0xff]
      %v524 = vld [vmem:[%s1 + $0xab8] sm:$0xff]
      %v525 = vld [vmem:[%s1 + $0xac0] sm:$0xff]
      %v526 = vld [vmem:[%s1 + $0xac8] sm:$0xff]
      %v527 = vld [vmem:[%s1 + $0xad0] sm:$0xff]
      %v528 = vld [vmem:[%s1 + $0xad8] sm:$0xff]
      %v529 = vld [vmem:[%s1 + $0xae0] sm:$0xff]
      %v530 = vld [vmem:[%s1 + $0xae8] sm:$0xff]
      %v531 = vld [vmem:[%s1 + $0xaf0] sm:$0xff]
      %v532 = vld [vmem:[%s1 + $0xaf8] sm:$0xff]
      %v533 = vld [vmem:[%s1 + $0xb00] sm:$0xff]
      %v534 = vld [vmem:[%s1 + $0xb08] sm:$0xff]
      %v535 = vld [vmem:[%s1 + $0xb10] sm:$0xff]
      %v536 = vld [vmem:[%s1 + $0xb18] sm:$0xff]
      %v537 = vld [vmem:[%s1 + $0xb20] sm:$0xff]
      %v538 = vld [vmem:[%s1 + $0xb28] sm:$0xff]
      %v539 = vld [vmem:[%s1 + $0xb30] sm:$0xff]
      %v540 = vld [vmem:[%s1 + $0xb38] sm:$0xff]
      %v541 = vld [vmem:[%s1 + $0xb40] sm:$0xff]
      %v542 = vld [vmem:[%s1 + $0xb48] sm:$0xff]
      %v543 = vld [vmem:[%s1 + $0xb50] sm:$0xff]
      %v544 = vld [vmem:[%s1 + $0xb58] sm:$0xff]
      %v545 = vld [vmem:[%s1 + $0xb60] sm:$0xff]
      %v546 = vld [vmem:[%s1 + $0xb68] sm:$0xff]
      %v547 = vld [vmem:[%s1 + $0xb70] sm:$0xff]
      %v548 = vld [vmem:[%s1 + $0xb78] sm:$0xff]
      %v549 = vld [vmem:[%s1 + $0xb80] sm:$0xff]
      %v550 = vld [vmem:[%s1 + $0xb88] sm:$0xff]
      %v551 = vld [vmem:[%s1 + $0xb90] sm:$0xff]
      %v552 = vld [vmem:[%s1 + $0xb98] sm:$0xff]
      %v553 = vld [vmem:[%s1 + $0xba0] sm:$0xff]
      %v554 = vld [vmem:[%s1 + $0xba8] sm:$0xff]
      %v555 = vld [vmem:[%s1 + $0xbb0] sm:$0xff]
      %v556 = vld [vmem:[%s1 + $0xbb8] sm:$0xff]
      %v557 = vld [vmem:[%s1 + $0xbc0] sm:$0xff]
      %v558 = vld [vmem:[%s1 + $0xbc8] sm:$0xff]
      %v559 = vld [vmem:[%s1 + $0xbd0] sm:$0xff]
      %v560 = vld [vmem:[%s1 + $0xbd8] sm:$0xff]
      %v561 = vld [vmem:[%s1 + $0xbe0] sm:$0xff]
      %v562 = vld [vmem:[%s1 + $0xbe8] sm:$0xff]
      %v563 = vld [vmem:[%s1 + $0xbf0] sm:$0xff]
      %v564 = vld [vmem:[%s1 + $0xbf8] sm:$0xff]
      %v565 = vld [vmem:[%s1 + $0xc00] sm:$0xff]
      %v566 = vld [vmem:[%s1 + $0xc08] sm:$0xff]
      %v567 = vld [vmem:[%s1 + $0xc10] sm:$0xff]
      %v568 = vld [vmem:[%s1 + $0xc18] sm:$0xff]
      %v569 = vld [vmem:[%s1 + $0xc20] sm:$0xff]
      %v570 = vld [vmem:[%s1 + $0xc28] sm:$0xff]
      %v571 = vld [vmem:[%s1 + $0xc30] sm:$0xff]
      %v572 = vld [vmem:[%s1 + $0xc38] sm:$0xff]
      %v573 = vld [vmem:[%s1 + $0xc40] sm:$0xff]
      %v574 = vld [vmem:[%s1 + $0xc48] sm:$0xff]
      %v575 = vld [vmem:[%s1 + $0xc50] sm:$0xff]
      %v576 = vld [vmem:[%s1 + $0xc58] sm:$0xff]
      %v577 = vld [vmem:[%s1 + $0xc60] sm:$0xff]
      %v578 = vld [vmem:[%s1 + $0xc68] sm:$0xff]
      %v579 = vld [vmem:[%s1 + $0xc70] sm:$0xff]
      %v580 = vld [vmem:[%s1 + $0xc78] sm:$0xff]
      %v581 = vld [vmem:[%s1 + $0xc80] sm:$0xff]
      %v582 = vld [vmem:[%s1 + $0xc88] sm:$0xff]
      %v583 = vld [vmem:[%s1 + $0xc90] sm:$0xff]
      %v584 = vld [vmem:[%s1 + $0xc98] sm:$0xff]
      %v585 = vld [vmem:[%s1 + $0xca0] sm:$0xff]
      %v586 = vld [vmem:[%s1 + $0xca8] sm:$0xff]
      %v587 = vld [vmem:[%s1 + $0xcb0] sm:$0xff]
      %v588 = vld [vmem:[%s1 + $0xcb8] sm:$0xff]
      %v589 = vld [vmem:[%s1 + $0xcc0] sm:$0xff]
      %v590 = vld [vmem:[%s1 + $0xcc8] sm:$0xff]
      %v591 = vld [vmem:[%s1 + $0xcd0] sm:$0xff]
      %v592 = vld [vmem:[%s1 + $0xcd8] sm:$0xff]
      %v593 = vld [vmem:[%s1 + $0xce0] sm:$0xff]
      %v594 = vld [vmem:[%s1 + $0xce8] sm:$0xff]
      %v595 = vld [vmem:[%s1 + $0xcf0] sm:$0xff]
      %v596 = vld [vmem:[%s1 + $0xcf8] sm:$0xff]
      %v597 = vld [vmem:[%s1 + $0xd00] sm:$0xff]
      %v598 = vld [vmem:[%s1 + $0xd08] sm:$0xff]
      %v599 = vld [vmem:[%s1 + $0xd10] sm:$0xff]
      %v600 = vld [vmem:[%s1 + $0xd18] sm:$0xff]
      %v601 = vld [vmem:[%s1 + $0xd20] sm:$0xff]
      %v602 = vld [vmem:[%s1 + $0xd28] sm:$0xff]
      %v603 = vld [vmem:[%s1 + $0xd30] sm:$0xff]
      %v604 = vld [vmem:[%s1 + $0xd38] sm:$0xff]
      %v605 = vld [vmem:[%s1 + $0xd40] sm:$0xff]
      %v606 = vld [vmem:[%s1 + $0xd48] sm:$0xff]
      %v607 = vld [vmem:[%s1 + $0xd50] sm:$0xff]
      %v608 = vld [vmem:[%s1 + $0xd58] sm:$0xff]
      %v609 = vld [vmem:[%s1 + $0xd60] sm:$0xff]
      %v610 = vld [vmem:[%s1 + $0xd68] sm:$0xff]
      %v611 = vld [vmem:[%s1 + $0xd70] sm:$0xff]
      %v612 = vld [vmem:[%s1 + $0xd78] sm:$0xff]
      %v613 = vld [vmem:[%s1 + $0xd80] sm:$0xff]
      %v614 = vld [vmem:[%s1 + $0xd88] sm:$0xff]
      %v615 = vld [vmem:[%s1 + $0xd90] sm:$0xff]
      %v616 = vld [vmem:[%s1 + $0xd98] sm:$0xff]
      %v617 = vld [vmem:[%s1 + $0xda0] sm:$0xff]
      %v618 = vld [vmem:[%s1 + $0xda8] sm:$0xff]
      %v619 = vld [vmem:[%s1 + $0xdb0] sm:$0xff]
      %v620 = vld [vmem:[%s1 + $0xdb8] sm:$0xff]
      %v621 = vld [vmem:[%s1 + $0xdc0] sm:$0xff]
      %v622 = vld [vmem:[%s1 + $0xdc8] sm:$0xff]
      %v623 = vld [vmem:[%s1 + $0xdd0] sm:$0xff]
      %v624 = vld [vmem:[%s1 + $0xdd8] sm:$0xff]
      %v625 = vld [vmem:[%s1 + $0xde0] sm:$0xff]
      %v626 = vld [vmem:[%s1 + $0xde8] sm:$0xff]
      %v627 = vld [vmem:[%s1 + $0xdf0] sm:$0xff]
      %v628 = vld [vmem:[%s1 + $0xdf8] sm:$0xff]
      %v629 = vld [vmem:[%s1 + $0xe00] sm:$0xff]
      %v630 = vld [vmem:[%s1 + $0xe08] sm:$0xff]
      %v631 = vld [vmem:[%s1 + $0xe10] sm:$0xff]
      %v632 = vld [vmem:[%s1 + $0xe18] sm:$0xff]
      %v633 = vld [vmem:[%s1 + $0xe20] sm:$0xff]
      %v634 = vld [vmem:[%s1 + $0xe28] sm:$0xff]
      %v635 = vld [vmem:[%s1 + $0xe30] sm:$0xff]
      %v636 = vld [vmem:[%s1 + $0xe38] sm:$0xff]
      %v637 = vld [vmem:[%s1 + $0xe40] sm:$0xff]
      %v638 = vld [vmem:[%s1 + $0xe48] sm:$0xff]
      %v639 = vld [vmem:[%s1 + $0xe50] sm:$0xff]
      %v640 = vld [vmem:[%s1 + $0xe58] sm:$0xff]
      %v641 = vld [vmem:[%s1 + $0xe60] sm:$0xff]
      %v642 = vld [vmem:[%s1 + $0xe68] sm:$0xff]
      %v643 = vld [vmem:[%s1 + $0xe70] sm:$0xff]
      %v644 = vld [vmem:[%s1 + $0xe78] sm:$0xff]
      %v645 = vld [vmem:[%s1 + $0xe80] sm:$0xff]
      %v646 = vld [vmem:[%s1 + $0xe88] sm:$0xff]
      %v647 = vld [vmem:[%s1 + $0xe90] sm:$0xff]
      %v648 = vld [vmem:[%s1 + $0xe98] sm:$0xff]
      %v649 = vld [vmem:[%s1 + $0xea0] sm:$0xff]
      %v650 = vld [vmem:[%s1 + $0xea8] sm:$0xff]
      %v651 = vld [vmem:[%s1 + $0xeb0] sm:$0xff]
      %v652 = vld [vmem:[%s1 + $0xeb8] sm:$0xff]
      %v653 = vld [vmem:[%s1 + $0xec0] sm:$0xff]
      %v654 = vld [vmem:[%s1 + $0xec8] sm:$0xff]
      %v655 = vld [vmem:[%s1 + $0xed0] sm:$0xff]
      %v656 = vld [vmem:[%s1 + $0xed8] sm:$0xff]
      %v657 = vld [vmem:[%s1 + $0xee0] sm:$0xff]
      %v658 = vld [vmem:[%s1 + $0xee8] sm:$0xff]
      %v659 = vld [vmem:[%s1 + $0xef0] sm:$0xff]
      %v660 = vld [vmem:[%s1 + $0xef8] sm:$0xff]
      %v661 = vld [vmem:[%s1 + $0xf00] sm:$0xff]
      %v662 = vld [vmem:[%s1 + $0xf08] sm:$0xff]
      %v663 = vld [vmem:[%s1 + $0xf10] sm:$0xff]
      %v664 = vld [vmem:[%s1 + $0xf18] sm:$0xff]
      %v665 = vld [vmem:[%s1 + $0xf20] sm:$0xff]
      %v666 = vld [vmem:[%s1 + $0xf28] sm:$0xff]
      %v667 = vld [vmem:[%s1 + $0xf30] sm:$0xff]
      %v668 = vld [vmem:[%s1 + $0xf38] sm:$0xff]
      %v669 = vld [vmem:[%s1 + $0xf40] sm:$0xff]
      %v670 = vld [vmem:[%s1 + $0xf48] sm:$0xff]
      %v671 = vld [vmem:[%s1 + $0xf50] sm:$0xff]
      %v672 = vld [vmem:[%s1 + $0xf58] sm:$0xff]
      %v673 = vld [vmem:[%s1 + $0xf60] sm:$0xff]
      %v674 = vld [vmem:[%s1 + $0xf68] sm:$0xff]
      %v675 = vld [vmem:[%s1 + $0xf70] sm:$0xff]
      %v676 = vld [vmem:[%s1 + $0xf78] sm:$0xff]
      %v677 = vld [vmem:[%s1 + $0xf80] sm:$0xff]
      %v678 = vld [vmem:[%s1 + $0xf88] sm:$0xff]
      %v679 = vld [vmem:[%s1 + $0xf90] sm:$0xff]
      %v680 = vld [vmem:[%s1 + $0xf98] sm:$0xff]
      %v681 = vld [vmem:[%s1 + $0xfa0] sm:$0xff]
      %v682 = vld [vmem:[%s1 + $0xfa8] sm:$0xff]
      %v683 = vld [vmem:[%s1 + $0xfb0] sm:$0xff]
      %v684 = vld [vmem:[%s1 + $0xfb8] sm:$0xff]
      %v685 = vld [vmem:[%s1 + $0xfc0] sm:$0xff]
      %v686 = vld [vmem:[%s1 + $0xfc8] sm:$0xff]
      %v687 = vld [vmem:[%s1 + $0xfd0] sm:$0xff]
      %v688 = vld [vmem:[%s1 + $0xfd8] sm:$0xff]
      %v689 = vld [vmem:[%s1 + $0xfe0] sm:$0xff]
      %v690 = vld [vmem:[%s1 + $0xfe8] sm:$0xff]
      %v691 = vld [vmem:[%s1 + $0xff0] sm:$0xff]
      %v692 = vld [vmem:[%s1 + $0xff8] sm:$0xff]
      %v693 = vld [vmem:[%s1 + $0x1000] sm:$0xff]
      %v694 = vld [vmem:[%s1 + $0x1008] sm:$0xff]
      %v695 = vld [vmem:[%s1 + $0x1010] sm:$0xff]
      %v696 = vld [vmem:[%s1 + $0x1018] sm:$0xff]
      %v697 = vld [vmem:[%s1 + $0x1020] sm:$0xff]
      %v698 = vld [vmem:[%s1 + $0x1028] sm:$0xff]
      %v699 = vld [vmem:[%s1 + $0x1030] sm:$0xff]
      %v700 = vld [vmem:[%s1 + $0x1038] sm:$0xff]
      %v701 = vld [vmem:[%s1 + $0x1040] sm:$0xff]
      %v702 = vld [vmem:[%s1 + $0x1048] sm:$0xff]
      %v703 = vld [vmem:[%s1 + $0x1050] sm:$0xff]
      %v704 = vld [vmem:[%s1 + $0x1058] sm:$0xff]
      %v705 = vld [vmem:[%s1 + $0x1060] sm:$0xff]
      %v706 = vld [vmem:[%s1 + $0x1068] sm:$0xff]
      %v707 = vld [vmem:[%s1 + $0x1070] sm:$0xff]
      %v708 = vld [vmem:[%s1 + $0x1078] sm:$0xff]
      %v709 = vld [vmem:[%s1 + $0x1080] sm:$0xff]
      %v710 = vld [vmem:[%s1 + $0x1088] sm:$0xff]
      %v711 = vld [vmem:[%s1 + $0x1090] sm:$0xff]
      %v712 = vld [vmem:[%s1 + $0x1098] sm:$0xff]
      %v713 = vld [vmem:[%s1 + $0x10a0] sm:$0xff]
      %v714 = vld [vmem:[%s1 + $0x10a8] sm:$0xff]
      %v715 = vld [vmem:[%s1 + $0x10b0] sm:$0xff]
      %v716 = vld [vmem:[%s1 + $0x10b8] sm:$0xff]
      %v717 = vld [vmem:[%s1 + $0x10c0] sm:$0xff]
      %v718 = vld [vmem:[%s1 + $0x10c8] sm:$0xff]
      %v719 = vld [vmem:[%s1 + $0x10d0] sm:$0xff]
      %v720 = vld [vmem:[%s1 + $0x10d8] sm:$0xff]
      %v721 = vld [vmem:[%s1 + $0x10e0] sm:$0xff]
      %v722 = vld [vmem:[%s1 + $0x10e8] sm:$0xff]
      %v723 = vld [vmem:[%s1 + $0x10f0] sm:$0xff]
      %v724 = vld [vmem:[%s1 + $0x10f8] sm:$0xff]
      %v725 = vld [vmem:[%s165] sm:$0xfe]
      %v726 = vld [vmem:[%s165 + $0x8] sm:$0xfe]
      %v727 = vld [vmem:[%s165 + $0x10] sm:$0xfe]
      %v728 = vld [vmem:[%s165 + $0x18] sm:$0xfe]
      %v729 = vld [vmem:[%s165 + $0x20] sm:$0xfe]
      %v730 = vld [vmem:[%s165 + $0x50] sm:$0x1]
      %v731 = vld [vmem:[%s165 + $0x58] sm:$0x1]
      %v732 = vld [vmem:[%s165 + $0x60] sm:$0x1]
      %v733 = vld [vmem:[%s165 + $0x68] sm:$0x1]
      %v734 = vld [vmem:[%s165 + $0x70] sm:$0x1]
      %s735 = scalar_lea.vmem %s1, 4352
      %v736 = vld [vmem:[%s735] sm:$0xff]
      %v737 = vld [vmem:[%s735 + $0x8] sm:$0xff]
      %v738 = vld [vmem:[%s735 + $0x10] sm:$0xff]
      %v739 = vld [vmem:[%s735 + $0x18] sm:$0xff]
      %v740 = vld [vmem:[%s735 + $0x20] sm:$0xff]
      %v741 = vld [vmem:[%s735 + $0x28] sm:$0xff]
      %v742 = vld [vmem:[%s735 + $0x30] sm:$0xff]
      %v743 = vld [vmem:[%s735 + $0x38] sm:$0xff]
      %v744 = vld [vmem:[%s735 + $0x40] sm:$0xff]
      %v745 = vld [vmem:[%s735 + $0x48] sm:$0xff]
      %v746 = vld [vmem:[%s735 + $0x50] sm:$0xff]
      %v747 = vld [vmem:[%s735 + $0x58] sm:$0xff]
      %v748 = vld [vmem:[%s735 + $0x60] sm:$0xff]
      %v749 = vld [vmem:[%s735 + $0x68] sm:$0xff]
      %v750 = vld [vmem:[%s735 + $0x70] sm:$0xff]
      %v751 = vld [vmem:[%s735 + $0x78] sm:$0xff]
      %v752 = vld [vmem:[%s735 + $0x80] sm:$0xff]
      %v753 = vld [vmem:[%s735 + $0x88] sm:$0xff]
      %v754 = vld [vmem:[%s735 + $0x90] sm:$0xff]
      %v755 = vld [vmem:[%s735 + $0x98] sm:$0xff]
      %v756 = vld [vmem:[%s735 + $0xa0] sm:$0xff]
      %v757 = vld [vmem:[%s735 + $0xa8] sm:$0xff]
      %v758 = vld [vmem:[%s735 + $0xb0] sm:$0xff]
      %v759 = vld [vmem:[%s735 + $0xb8] sm:$0xff]
      %v760 = vld [vmem:[%s735 + $0xc0] sm:$0xff]
      %v761 = vld [vmem:[%s735 + $0xc8] sm:$0xff]
      %v762 = vld [vmem:[%s735 + $0xd0] sm:$0xff]
      %v763 = vld [vmem:[%s735 + $0xd8] sm:$0xff]
      %v764 = vld [vmem:[%s735 + $0xe0] sm:$0xff]
      %v765 = vld [vmem:[%s735 + $0xe8] sm:$0xff]
      %v766 = vld [vmem:[%s735 + $0xf0] sm:$0xff]
      %v767 = vld [vmem:[%s735 + $0xf8] sm:$0xff]
      %v768 = vld [vmem:[%s735 + $0x100] sm:$0xff]
      %v769 = vld [vmem:[%s735 + $0x108] sm:$0xff]
      %v770 = vld [vmem:[%s735 + $0x110] sm:$0xff]
      %v771 = vld [vmem:[%s735 + $0x118] sm:$0xff]
      %v772 = vld [vmem:[%s735 + $0x120] sm:$0xff]
      %v773 = vld [vmem:[%s735 + $0x128] sm:$0xff]
      %v774 = vld [vmem:[%s735 + $0x130] sm:$0xff]
      %v775 = vld [vmem:[%s735 + $0x138] sm:$0xff]
      %v776 = vld [vmem:[%s735 + $0x140] sm:$0xff]
      %v777 = vld [vmem:[%s735 + $0x148] sm:$0xff]
      %v778 = vld [vmem:[%s735 + $0x150] sm:$0xff]
      %v779 = vld [vmem:[%s735 + $0x158] sm:$0xff]
      %v780 = vld [vmem:[%s735 + $0x160] sm:$0xff]
      %v781 = vld [vmem:[%s735 + $0x168] sm:$0xff]
      %v782 = vld [vmem:[%s735 + $0x170] sm:$0xff]
      %v783 = vld [vmem:[%s735 + $0x178] sm:$0xff]
      %v784 = vld [vmem:[%s735 + $0x180] sm:$0xff]
      %v785 = vld [vmem:[%s735 + $0x188] sm:$0xff]
      %v786 = vld [vmem:[%s735 + $0x190] sm:$0xff]
      %v787 = vld [vmem:[%s735 + $0x198] sm:$0xff]
      %v788 = vld [vmem:[%s735 + $0x1a0] sm:$0xff]
      %v789 = vld [vmem:[%s735 + $0x1a8] sm:$0xff]
      %v790 = vld [vmem:[%s735 + $0x1b0] sm:$0xff]
      %v791 = vld [vmem:[%s735 + $0x1b8] sm:$0xff]
      %v792 = vld [vmem:[%s735 + $0x1c0] sm:$0xff]
      %v793 = vld [vmem:[%s735 + $0x1c8] sm:$0xff]
      %v794 = vld [vmem:[%s735 + $0x1d0] sm:$0xff]
      %v795 = vld [vmem:[%s735 + $0x1d8] sm:$0xff]
      %v796 = vld [vmem:[%s735 + $0x1e0] sm:$0xff]
      %v797 = vld [vmem:[%s735 + $0x1e8] sm:$0xff]
      %v798 = vld [vmem:[%s735 + $0x1f0] sm:$0xff]
      %v799 = vld [vmem:[%s735 + $0x1f8] sm:$0xff]
      %v800 = vld [vmem:[%s735 + $0x200] sm:$0xff]
      %v801 = vld [vmem:[%s735 + $0x208] sm:$0xff]
      %v802 = vld [vmem:[%s735 + $0x210] sm:$0xff]
      %v803 = vld [vmem:[%s735 + $0x218] sm:$0xff]
      %v804 = vld [vmem:[%s735 + $0x220] sm:$0xff]
      %v805 = vld [vmem:[%s735 + $0x228] sm:$0xff]
      %v806 = vld [vmem:[%s735 + $0x230] sm:$0xff]
      %v807 = vld [vmem:[%s735 + $0x238] sm:$0xff]
      %v808 = vld [vmem:[%s735 + $0x240] sm:$0xff]
      %v809 = vld [vmem:[%s735 + $0x248] sm:$0xff]
      %v810 = vld [vmem:[%s735 + $0x250] sm:$0xff]
      %v811 = vld [vmem:[%s735 + $0x258] sm:$0xff]
      %v812 = vld [vmem:[%s735 + $0x260] sm:$0xff]
      %v813 = vld [vmem:[%s735 + $0x268] sm:$0xff]
      %v814 = vld [vmem:[%s735 + $0x270] sm:$0xff]
      %v815 = vld [vmem:[%s735 + $0x278] sm:$0xff]
      %v816 = vld [vmem:[%s735 + $0x280] sm:$0xff]
      %v817 = vld [vmem:[%s735 + $0x288] sm:$0xff]
      %v818 = vld [vmem:[%s735 + $0x290] sm:$0xff]
      %v819 = vld [vmem:[%s735 + $0x298] sm:$0xff]
      %v820 = vld [vmem:[%s735 + $0x2a0] sm:$0xff]
      %v821 = vld [vmem:[%s735 + $0x2a8] sm:$0xff]
      %v822 = vld [vmem:[%s735 + $0x2b0] sm:$0xff]
      %v823 = vld [vmem:[%s735 + $0x2b8] sm:$0xff]
      %v824 = vld [vmem:[%s735 + $0x2c0] sm:$0xff]
      %v825 = vld [vmem:[%s735 + $0x2c8] sm:$0xff]
      %v826 = vld [vmem:[%s735 + $0x2d0] sm:$0xff]
      %v827 = vld [vmem:[%s735 + $0x2d8] sm:$0xff]
      %v828 = vld [vmem:[%s735 + $0x2e0] sm:$0xff]
      %v829 = vld [vmem:[%s735 + $0x2e8] sm:$0xff]
      %v830 = vld [vmem:[%s735 + $0x2f0] sm:$0xff]
      %v831 = vld [vmem:[%s735 + $0x2f8] sm:$0xff]
      %v832 = vld [vmem:[%s735 + $0x300] sm:$0xff]
      %v833 = vld [vmem:[%s735 + $0x308] sm:$0xff]
      %v834 = vld [vmem:[%s735 + $0x310] sm:$0xff]
      %v835 = vld [vmem:[%s735 + $0x318] sm:$0xff]
      %v836 = vld [vmem:[%s735 + $0x320] sm:$0xff]
      %v837 = vld [vmem:[%s735 + $0x328] sm:$0xff]
      %v838 = vld [vmem:[%s735 + $0x330] sm:$0xff]
      %v839 = vld [vmem:[%s735 + $0x338] sm:$0xff]
      %v840 = vld [vmem:[%s735 + $0x340] sm:$0xff]
      %v841 = vld [vmem:[%s735 + $0x348] sm:$0xff]
      %v842 = vld [vmem:[%s735 + $0x350] sm:$0xff]
      %v843 = vld [vmem:[%s735 + $0x358] sm:$0xff]
      %v844 = vld [vmem:[%s735 + $0x360] sm:$0xff]
      %v845 = vld [vmem:[%s735 + $0x368] sm:$0xff]
      %v846 = vld [vmem:[%s735 + $0x370] sm:$0xff]
      %v847 = vld [vmem:[%s735 + $0x378] sm:$0xff]
      %v848 = vld [vmem:[%s735 + $0x380] sm:$0xff]
      %v849 = vld [vmem:[%s735 + $0x388] sm:$0xff]
      %v850 = vld [vmem:[%s735 + $0x390] sm:$0xff]
      %v851 = vld [vmem:[%s735 + $0x398] sm:$0xff]
      %v852 = vld [vmem:[%s735 + $0x3a0] sm:$0xff]
      %v853 = vld [vmem:[%s735 + $0x3a8] sm:$0xff]
      %v854 = vld [vmem:[%s735 + $0x3b0] sm:$0xff]
      %v855 = vld [vmem:[%s735 + $0x3b8] sm:$0xff]
      %v856 = vld [vmem:[%s735 + $0x3c0] sm:$0xff]
      %v857 = vld [vmem:[%s735 + $0x3c8] sm:$0xff]
      %v858 = vld [vmem:[%s735 + $0x3d0] sm:$0xff]
      %v859 = vld [vmem:[%s735 + $0x3d8] sm:$0xff]
      %v860 = vld [vmem:[%s735 + $0x3e0] sm:$0xff]
      %v861 = vld [vmem:[%s735 + $0x3e8] sm:$0xff]
      %v862 = vld [vmem:[%s735 + $0x3f0] sm:$0xff]
      %v863 = vld [vmem:[%s735 + $0x3f8] sm:$0xff]
      %v864 = vld [vmem:[%s735 + $0x400] sm:$0xff]
      %v865 = vld [vmem:[%s735 + $0x408] sm:$0xff]
      %v866 = vld [vmem:[%s735 + $0x410] sm:$0xff]
      %v867 = vld [vmem:[%s735 + $0x418] sm:$0xff]
      %v868 = vld [vmem:[%s735 + $0x420] sm:$0xff]
      %v869 = vld [vmem:[%s735 + $0x428] sm:$0xff]
      %v870 = vld [vmem:[%s735 + $0x430] sm:$0xff]
      %v871 = vld [vmem:[%s735 + $0x438] sm:$0xff]
      %v872 = vld [vmem:[%s735 + $0x440] sm:$0xff]
      %v873 = vld [vmem:[%s735 + $0x448] sm:$0xff]
      %v874 = vld [vmem:[%s735 + $0x450] sm:$0xff]
      %v875 = vld [vmem:[%s735 + $0x458] sm:$0xff]
      %v876 = vld [vmem:[%s735 + $0x460] sm:$0xff]
      %v877 = vld [vmem:[%s735 + $0x468] sm:$0xff]
      %v878 = vld [vmem:[%s735 + $0x470] sm:$0xff]
      %v879 = vld [vmem:[%s735 + $0x478] sm:$0xff]
      %v880 = vld [vmem:[%s735 + $0x480] sm:$0xff]
      %v881 = vld [vmem:[%s735 + $0x488] sm:$0xff]
      %v882 = vld [vmem:[%s735 + $0x490] sm:$0xff]
      %v883 = vld [vmem:[%s735 + $0x498] sm:$0xff]
      %v884 = vld [vmem:[%s735 + $0x4a0] sm:$0xff]
      %v885 = vld [vmem:[%s735 + $0x4a8] sm:$0xff]
      %v886 = vld [vmem:[%s735 + $0x4b0] sm:$0xff]
      %v887 = vld [vmem:[%s735 + $0x4b8] sm:$0xff]
      %v888 = vld [vmem:[%s735 + $0x4c0] sm:$0xff]
      %v889 = vld [vmem:[%s735 + $0x4c8] sm:$0xff]
      %v890 = vld [vmem:[%s735 + $0x4d0] sm:$0xff]
      %v891 = vld [vmem:[%s735 + $0x4d8] sm:$0xff]
      %v892 = vld [vmem:[%s735 + $0x4e0] sm:$0xff]
      %v893 = vld [vmem:[%s735 + $0x4e8] sm:$0xff]
      %v894 = vld [vmem:[%s735 + $0x4f0] sm:$0xff]
      %v895 = vld [vmem:[%s735 + $0x4f8] sm:$0xff]
      %v896 = vld [vmem:[%s735 + $0x500] sm:$0xff]
      %v897 = vld [vmem:[%s735 + $0x508] sm:$0xff]
      %v898 = vld [vmem:[%s735 + $0x510] sm:$0xff]
      %v899 = vld [vmem:[%s735 + $0x518] sm:$0xff]
      %v900 = vld [vmem:[%s735 + $0x520] sm:$0xff]
      %v901 = vld [vmem:[%s735 + $0x528] sm:$0xff]
      %v902 = vld [vmem:[%s735 + $0x530] sm:$0xff]
      %v903 = vld [vmem:[%s735 + $0x538] sm:$0xff]
      %v904 = vld [vmem:[%s735 + $0x540] sm:$0xff]
      %v905 = vld [vmem:[%s735 + $0x548] sm:$0xff]
      %v906 = vld [vmem:[%s735 + $0x550] sm:$0xff]
      %v907 = vld [vmem:[%s735 + $0x558] sm:$0xff]
      %v908 = vld [vmem:[%s735 + $0x560] sm:$0xff]
      %v909 = vld [vmem:[%s735 + $0x568] sm:$0xff]
      %v910 = vld [vmem:[%s735 + $0x570] sm:$0xff]
      %v911 = vld [vmem:[%s735 + $0x578] sm:$0xff]
      %v912 = vld [vmem:[%s735 + $0x580] sm:$0xff]
      %v913 = vld [vmem:[%s735 + $0x588] sm:$0xff]
      %v914 = vld [vmem:[%s735 + $0x590] sm:$0xff]
      %v915 = vld [vmem:[%s735 + $0x598] sm:$0xff]
      %v916 = vld [vmem:[%s735 + $0x5a0] sm:$0xff]
      %v917 = vld [vmem:[%s735 + $0x5a8] sm:$0xff]
      %v918 = vld [vmem:[%s735 + $0x5b0] sm:$0xff]
      %v919 = vld [vmem:[%s735 + $0x5b8] sm:$0xff]
      %v920 = vld [vmem:[%s735 + $0x5c0] sm:$0xff]
      %v921 = vld [vmem:[%s735 + $0x5c8] sm:$0xff]
      %v922 = vld [vmem:[%s735 + $0x5d0] sm:$0xff]
      %v923 = vld [vmem:[%s735 + $0x5d8] sm:$0xff]
      %v924 = vld [vmem:[%s735 + $0x5e0] sm:$0xff]
      %v925 = vld [vmem:[%s735 + $0x5e8] sm:$0xff]
      %v926 = vld [vmem:[%s735 + $0x5f0] sm:$0xff]
      %v927 = vld [vmem:[%s735 + $0x5f8] sm:$0xff]
      %v928 = vld [vmem:[%s735 + $0x600] sm:$0xff]
      %v929 = vld [vmem:[%s735 + $0x608] sm:$0xff]
      %v930 = vld [vmem:[%s735 + $0x610] sm:$0xff]
      %v931 = vld [vmem:[%s735 + $0x618] sm:$0xff]
      %v932 = vld [vmem:[%s735 + $0x620] sm:$0xff]
      %v933 = vld [vmem:[%s735 + $0x628] sm:$0xff]
      %v934 = vld [vmem:[%s735 + $0x630] sm:$0xff]
      %v935 = vld [vmem:[%s735 + $0x638] sm:$0xff]
      %v936 = vld [vmem:[%s735 + $0x640] sm:$0xff]
      %v937 = vld [vmem:[%s735 + $0x648] sm:$0xff]
      %v938 = vld [vmem:[%s735 + $0x650] sm:$0xff]
      %v939 = vld [vmem:[%s735 + $0x658] sm:$0xff]
      %v940 = vld [vmem:[%s735 + $0x660] sm:$0xff]
      %v941 = vld [vmem:[%s735 + $0x668] sm:$0xff]
      %v942 = vld [vmem:[%s735 + $0x670] sm:$0xff]
      %v943 = vld [vmem:[%s735 + $0x678] sm:$0xff]
      %v944 = vld [vmem:[%s735 + $0x680] sm:$0xff]
      %v945 = vld [vmem:[%s735 + $0x688] sm:$0xff]
      %v946 = vld [vmem:[%s735 + $0x690] sm:$0xff]
      %v947 = vld [vmem:[%s735 + $0x698] sm:$0xff]
      %v948 = vld [vmem:[%s735 + $0x6a0] sm:$0xff]
      %v949 = vld [vmem:[%s735 + $0x6a8] sm:$0xff]
      %v950 = vld [vmem:[%s735 + $0x6b0] sm:$0xff]
      %v951 = vld [vmem:[%s735 + $0x6b8] sm:$0xff]
      %v952 = vld [vmem:[%s735 + $0x6c0] sm:$0xff]
      %v953 = vld [vmem:[%s735 + $0x6c8] sm:$0xff]
      %v954 = vld [vmem:[%s735 + $0x6d0] sm:$0xff]
      %v955 = vld [vmem:[%s735 + $0x6d8] sm:$0xff]
      %v956 = vld [vmem:[%s735 + $0x6e0] sm:$0xff]
      %v957 = vld [vmem:[%s735 + $0x6e8] sm:$0xff]
      %v958 = vld [vmem:[%s735 + $0x6f0] sm:$0xff]
      %v959 = vld [vmem:[%s735 + $0x6f8] sm:$0xff]
      %v960 = vld [vmem:[%s735 + $0x700] sm:$0xff]
      %v961 = vld [vmem:[%s735 + $0x708] sm:$0xff]
      %v962 = vld [vmem:[%s735 + $0x710] sm:$0xff]
      %v963 = vld [vmem:[%s735 + $0x718] sm:$0xff]
      %v964 = vld [vmem:[%s735 + $0x720] sm:$0xff]
      %v965 = vld [vmem:[%s735 + $0x728] sm:$0xff]
      %v966 = vld [vmem:[%s735 + $0x730] sm:$0xff]
      %v967 = vld [vmem:[%s735 + $0x738] sm:$0xff]
      %v968 = vld [vmem:[%s735 + $0x740] sm:$0xff]
      %v969 = vld [vmem:[%s735 + $0x748] sm:$0xff]
      %v970 = vld [vmem:[%s735 + $0x750] sm:$0xff]
      %v971 = vld [vmem:[%s735 + $0x758] sm:$0xff]
      %v972 = vld [vmem:[%s735 + $0x760] sm:$0xff]
      %v973 = vld [vmem:[%s735 + $0x768] sm:$0xff]
      %v974 = vld [vmem:[%s735 + $0x770] sm:$0xff]
      %v975 = vld [vmem:[%s735 + $0x778] sm:$0xff]
      %v976 = vld [vmem:[%s735 + $0x780] sm:$0xff]
      %v977 = vld [vmem:[%s735 + $0x788] sm:$0xff]
      %v978 = vld [vmem:[%s735 + $0x790] sm:$0xff]
      %v979 = vld [vmem:[%s735 + $0x798] sm:$0xff]
      %v980 = vld [vmem:[%s735 + $0x7a0] sm:$0xff]
      %v981 = vld [vmem:[%s735 + $0x7a8] sm:$0xff]
      %v982 = vld [vmem:[%s735 + $0x7b0] sm:$0xff]
      %v983 = vld [vmem:[%s735 + $0x7b8] sm:$0xff]
      %v984 = vld [vmem:[%s735 + $0x7c0] sm:$0xff]
      %v985 = vld [vmem:[%s735 + $0x7c8] sm:$0xff]
      %v986 = vld [vmem:[%s735 + $0x7d0] sm:$0xff]
      %v987 = vld [vmem:[%s735 + $0x7d8] sm:$0xff]
      %v988 = vld [vmem:[%s735 + $0x7e0] sm:$0xff]
      %v989 = vld [vmem:[%s735 + $0x7e8] sm:$0xff]
      %v990 = vld [vmem:[%s735 + $0x7f0] sm:$0xff]
      %v991 = vld [vmem:[%s735 + $0x7f8] sm:$0xff]
      %v992 = vld [vmem:[%s735 + $0x800] sm:$0xff]
      %v993 = vld [vmem:[%s735 + $0x808] sm:$0xff]
      %v994 = vld [vmem:[%s735 + $0x810] sm:$0xff]
      %v995 = vld [vmem:[%s735 + $0x818] sm:$0xff]
      %v996 = vld [vmem:[%s735 + $0x820] sm:$0xff]
      %v997 = vld [vmem:[%s735 + $0x828] sm:$0xff]
      %v998 = vld [vmem:[%s735 + $0x830] sm:$0xff]
      %v999 = vld [vmem:[%s735 + $0x838] sm:$0xff]
      %v1000 = vld [vmem:[%s735 + $0x840] sm:$0xff]
      %v1001 = vld [vmem:[%s735 + $0x848] sm:$0xff]
      %v1002 = vld [vmem:[%s735 + $0x850] sm:$0xff]
      %v1003 = vld [vmem:[%s735 + $0x858] sm:$0xff]
      %v1004 = vld [vmem:[%s735 + $0x860] sm:$0xff]
      %v1005 = vld [vmem:[%s735 + $0x868] sm:$0xff]
      %v1006 = vld [vmem:[%s735 + $0x870] sm:$0xff]
      %v1007 = vld [vmem:[%s735 + $0x878] sm:$0xff]
      %v1008 = vld [vmem:[%s735 + $0x880] sm:$0xff]
      %v1009 = vld [vmem:[%s735 + $0x888] sm:$0xff]
      %v1010 = vld [vmem:[%s735 + $0x890] sm:$0xff]
      %v1011 = vld [vmem:[%s735 + $0x898] sm:$0xff]
      %v1012 = vld [vmem:[%s735 + $0x8a0] sm:$0xff]
      %v1013 = vld [vmem:[%s735 + $0x8a8] sm:$0xff]
      %v1014 = vld [vmem:[%s735 + $0x8b0] sm:$0xff]
      %v1015 = vld [vmem:[%s735 + $0x8b8] sm:$0xff]
      %v1016 = vld [vmem:[%s735 + $0x8c0] sm:$0xff]
      %v1017 = vld [vmem:[%s735 + $0x8c8] sm:$0xff]
      %v1018 = vld [vmem:[%s735 + $0x8d0] sm:$0xff]
      %v1019 = vld [vmem:[%s735 + $0x8d8] sm:$0xff]
      %v1020 = vld [vmem:[%s735 + $0x8e0] sm:$0xff]
      %v1021 = vld [vmem:[%s735 + $0x8e8] sm:$0xff]
      %v1022 = vld [vmem:[%s735 + $0x8f0] sm:$0xff]
      %v1023 = vld [vmem:[%s735 + $0x8f8] sm:$0xff]
      %v1024 = vld [vmem:[%s735 + $0x900] sm:$0xff]
      %v1025 = vld [vmem:[%s735 + $0x908] sm:$0xff]
      %v1026 = vld [vmem:[%s735 + $0x910] sm:$0xff]
      %v1027 = vld [vmem:[%s735 + $0x918] sm:$0xff]
      %v1028 = vld [vmem:[%s735 + $0x920] sm:$0xff]
      %v1029 = vld [vmem:[%s735 + $0x928] sm:$0xff]
      %v1030 = vld [vmem:[%s735 + $0x930] sm:$0xff]
      %v1031 = vld [vmem:[%s735 + $0x938] sm:$0xff]
      %v1032 = vld [vmem:[%s735 + $0x940] sm:$0xff]
      %v1033 = vld [vmem:[%s735 + $0x948] sm:$0xff]
      %v1034 = vld [vmem:[%s735 + $0x950] sm:$0xff]
      %v1035 = vld [vmem:[%s735 + $0x958] sm:$0xff]
      %v1036 = vld [vmem:[%s735 + $0x960] sm:$0xff]
      %v1037 = vld [vmem:[%s735 + $0x968] sm:$0xff]
      %v1038 = vld [vmem:[%s735 + $0x970] sm:$0xff]
      %v1039 = vld [vmem:[%s735 + $0x978] sm:$0xff]
      %v1040 = vld [vmem:[%s735 + $0x980] sm:$0xff]
      %v1041 = vld [vmem:[%s735 + $0x988] sm:$0xff]
      %v1042 = vld [vmem:[%s735 + $0x990] sm:$0xff]
      %v1043 = vld [vmem:[%s735 + $0x998] sm:$0xff]
      %v1044 = vld [vmem:[%s735 + $0x9a0] sm:$0xff]
      %v1045 = vld [vmem:[%s735 + $0x9a8] sm:$0xff]
      %v1046 = vld [vmem:[%s735 + $0x9b0] sm:$0xff]
      %v1047 = vld [vmem:[%s735 + $0x9b8] sm:$0xff]
      %v1048 = vld [vmem:[%s735 + $0x9c0] sm:$0xff]
      %v1049 = vld [vmem:[%s735 + $0x9c8] sm:$0xff]
      %v1050 = vld [vmem:[%s735 + $0x9d0] sm:$0xff]
      %v1051 = vld [vmem:[%s735 + $0x9d8] sm:$0xff]
      %v1052 = vld [vmem:[%s735 + $0x9e0] sm:$0xff]
      %v1053 = vld [vmem:[%s735 + $0x9e8] sm:$0xff]
      %v1054 = vld [vmem:[%s735 + $0x9f0] sm:$0xff]
      %v1055 = vld [vmem:[%s735 + $0x9f8] sm:$0xff]
      %v1056 = vld [vmem:[%s735 + $0xa00] sm:$0xff]
      %v1057 = vld [vmem:[%s735 + $0xa08] sm:$0xff]
      %v1058 = vld [vmem:[%s735 + $0xa10] sm:$0xff]
      %v1059 = vld [vmem:[%s735 + $0xa18] sm:$0xff]
      %v1060 = vld [vmem:[%s735 + $0xa20] sm:$0xff]
      %v1061 = vld [vmem:[%s735 + $0xa28] sm:$0xff]
      %v1062 = vld [vmem:[%s735 + $0xa30] sm:$0xff]
      %v1063 = vld [vmem:[%s735 + $0xa38] sm:$0xff]
      %v1064 = vld [vmem:[%s735 + $0xa40] sm:$0xff]
      %v1065 = vld [vmem:[%s735 + $0xa48] sm:$0xff]
      %v1066 = vld [vmem:[%s735 + $0xa50] sm:$0xff]
      %v1067 = vld [vmem:[%s735 + $0xa58] sm:$0xff]
      %v1068 = vld [vmem:[%s735 + $0xa60] sm:$0xff]
      %v1069 = vld [vmem:[%s735 + $0xa68] sm:$0xff]
      %v1070 = vld [vmem:[%s735 + $0xa70] sm:$0xff]
      %v1071 = vld [vmem:[%s735 + $0xa78] sm:$0xff]
      %v1072 = vld [vmem:[%s735 + $0xa80] sm:$0xff]
      %v1073 = vld [vmem:[%s735 + $0xa88] sm:$0xff]
      %v1074 = vld [vmem:[%s735 + $0xa90] sm:$0xff]
      %v1075 = vld [vmem:[%s735 + $0xa98] sm:$0xff]
      %v1076 = vld [vmem:[%s735 + $0xaa0] sm:$0xff]
      %v1077 = vld [vmem:[%s735 + $0xaa8] sm:$0xff]
      %v1078 = vld [vmem:[%s735 + $0xab0] sm:$0xff]
      %v1079 = vld [vmem:[%s735 + $0xab8] sm:$0xff]
      %v1080 = vld [vmem:[%s735 + $0xac0] sm:$0xff]
      %v1081 = vld [vmem:[%s735 + $0xac8] sm:$0xff]
      %v1082 = vld [vmem:[%s735 + $0xad0] sm:$0xff]
      %v1083 = vld [vmem:[%s735 + $0xad8] sm:$0xff]
      %v1084 = vld [vmem:[%s735 + $0xae0] sm:$0xff]
      %v1085 = vld [vmem:[%s735 + $0xae8] sm:$0xff]
      %v1086 = vld [vmem:[%s735 + $0xaf0] sm:$0xff]
      %v1087 = vld [vmem:[%s735 + $0xaf8] sm:$0xff]
      %v1088 = vld [vmem:[%s735 + $0xb00] sm:$0xff]
      %v1089 = vld [vmem:[%s735 + $0xb08] sm:$0xff]
      %v1090 = vld [vmem:[%s735 + $0xb10] sm:$0xff]
      %v1091 = vld [vmem:[%s735 + $0xb18] sm:$0xff]
      %v1092 = vld [vmem:[%s735 + $0xb20] sm:$0xff]
      %v1093 = vld [vmem:[%s735 + $0xb28] sm:$0xff]
      %v1094 = vld [vmem:[%s735 + $0xb30] sm:$0xff]
      %v1095 = vld [vmem:[%s735 + $0xb38] sm:$0xff]
      %v1096 = vld [vmem:[%s735 + $0xb40] sm:$0xff]
      %v1097 = vld [vmem:[%s735 + $0xb48] sm:$0xff]
      %v1098 = vld [vmem:[%s735 + $0xb50] sm:$0xff]
      %v1099 = vld [vmem:[%s735 + $0xb58] sm:$0xff]
      %v1100 = vld [vmem:[%s735 + $0xb60] sm:$0xff]
      %v1101 = vld [vmem:[%s735 + $0xb68] sm:$0xff]
      %v1102 = vld [vmem:[%s735 + $0xb70] sm:$0xff]
      %v1103 = vld [vmem:[%s735 + $0xb78] sm:$0xff]
      %v1104 = vld [vmem:[%s735 + $0xb80] sm:$0xff]
      %v1105 = vld [vmem:[%s735 + $0xb88] sm:$0xff]
      %v1106 = vld [vmem:[%s735 + $0xb90] sm:$0xff]
      %v1107 = vld [vmem:[%s735 + $0xb98] sm:$0xff]
      %v1108 = vld [vmem:[%s735 + $0xba0] sm:$0xff]
      %v1109 = vld [vmem:[%s735 + $0xba8] sm:$0xff]
      %v1110 = vld [vmem:[%s735 + $0xbb0] sm:$0xff]
      %v1111 = vld [vmem:[%s735 + $0xbb8] sm:$0xff]
      %v1112 = vld [vmem:[%s735 + $0xbc0] sm:$0xff]
      %v1113 = vld [vmem:[%s735 + $0xbc8] sm:$0xff]
      %v1114 = vld [vmem:[%s735 + $0xbd0] sm:$0xff]
      %v1115 = vld [vmem:[%s735 + $0xbd8] sm:$0xff]
      %v1116 = vld [vmem:[%s735 + $0xbe0] sm:$0xff]
      %v1117 = vld [vmem:[%s735 + $0xbe8] sm:$0xff]
      %v1118 = vld [vmem:[%s735 + $0xbf0] sm:$0xff]
      %v1119 = vld [vmem:[%s735 + $0xbf8] sm:$0xff]
      %v1120 = vld [vmem:[%s735 + $0xc00] sm:$0xff]
      %v1121 = vld [vmem:[%s735 + $0xc08] sm:$0xff]
      %v1122 = vld [vmem:[%s735 + $0xc10] sm:$0xff]
      %v1123 = vld [vmem:[%s735 + $0xc18] sm:$0xff]
      %v1124 = vld [vmem:[%s735 + $0xc20] sm:$0xff]
      %v1125 = vld [vmem:[%s735 + $0xc28] sm:$0xff]
      %v1126 = vld [vmem:[%s735 + $0xc30] sm:$0xff]
      %v1127 = vld [vmem:[%s735 + $0xc38] sm:$0xff]
      %v1128 = vld [vmem:[%s735 + $0xc40] sm:$0xff]
      %v1129 = vld [vmem:[%s735 + $0xc48] sm:$0xff]
      %v1130 = vld [vmem:[%s735 + $0xc50] sm:$0xff]
      %v1131 = vld [vmem:[%s735 + $0xc58] sm:$0xff]
      %v1132 = vld [vmem:[%s735 + $0xc60] sm:$0xff]
      %v1133 = vld [vmem:[%s735 + $0xc68] sm:$0xff]
      %v1134 = vld [vmem:[%s735 + $0xc70] sm:$0xff]
      %v1135 = vld [vmem:[%s735 + $0xc78] sm:$0xff]
      %v1136 = vld [vmem:[%s735 + $0xc80] sm:$0xff]
      %v1137 = vld [vmem:[%s735 + $0xc88] sm:$0xff]
      %v1138 = vld [vmem:[%s735 + $0xc90] sm:$0xff]
      %v1139 = vld [vmem:[%s735 + $0xc98] sm:$0xff]
      %v1140 = vld [vmem:[%s735 + $0xca0] sm:$0xff]
      %v1141 = vld [vmem:[%s735 + $0xca8] sm:$0xff]
      %v1142 = vld [vmem:[%s735 + $0xcb0] sm:$0xff]
      %v1143 = vld [vmem:[%s735 + $0xcb8] sm:$0xff]
      %v1144 = vld [vmem:[%s735 + $0xcc0] sm:$0xff]
      %v1145 = vld [vmem:[%s735 + $0xcc8] sm:$0xff]
      %v1146 = vld [vmem:[%s735 + $0xcd0] sm:$0xff]
      %v1147 = vld [vmem:[%s735 + $0xcd8] sm:$0xff]
      %v1148 = vld [vmem:[%s735 + $0xce0] sm:$0xff]
      %v1149 = vld [vmem:[%s735 + $0xce8] sm:$0xff]
      %v1150 = vld [vmem:[%s735 + $0xcf0] sm:$0xff]
      %v1151 = vld [vmem:[%s735 + $0xcf8] sm:$0xff]
      %v1152 = vld [vmem:[%s735 + $0xd00] sm:$0xff]
      %v1153 = vld [vmem:[%s735 + $0xd08] sm:$0xff]
      %v1154 = vld [vmem:[%s735 + $0xd10] sm:$0xff]
      %v1155 = vld [vmem:[%s735 + $0xd18] sm:$0xff]
      %v1156 = vld [vmem:[%s735 + $0xd20] sm:$0xff]
      %v1157 = vld [vmem:[%s735 + $0xd28] sm:$0xff]
      %v1158 = vld [vmem:[%s735 + $0xd30] sm:$0xff]
      %v1159 = vld [vmem:[%s735 + $0xd38] sm:$0xff]
      %v1160 = vld [vmem:[%s735 + $0xd40] sm:$0xff]
      %v1161 = vld [vmem:[%s735 + $0xd48] sm:$0xff]
      %v1162 = vld [vmem:[%s735 + $0xd50] sm:$0xff]
      %v1163 = vld [vmem:[%s735 + $0xd58] sm:$0xff]
      %v1164 = vld [vmem:[%s735 + $0xd60] sm:$0xff]
      %v1165 = vld [vmem:[%s735 + $0xd68] sm:$0xff]
      %v1166 = vld [vmem:[%s735 + $0xd70] sm:$0xff]
      %v1167 = vld [vmem:[%s735 + $0xd78] sm:$0xff]
      %v1168 = vld [vmem:[%s735 + $0xd80] sm:$0xff]
      %v1169 = vld [vmem:[%s735 + $0xd88] sm:$0xff]
      %v1170 = vld [vmem:[%s735 + $0xd90] sm:$0xff]
      %v1171 = vld [vmem:[%s735 + $0xd98] sm:$0xff]
      %v1172 = vld [vmem:[%s735 + $0xda0] sm:$0xff]
      %v1173 = vld [vmem:[%s735 + $0xda8] sm:$0xff]
      %v1174 = vld [vmem:[%s735 + $0xdb0] sm:$0xff]
      %v1175 = vld [vmem:[%s735 + $0xdb8] sm:$0xff]
      %v1176 = vld [vmem:[%s735 + $0xdc0] sm:$0xff]
      %v1177 = vld [vmem:[%s735 + $0xdc8] sm:$0xff]
      %v1178 = vld [vmem:[%s735 + $0xdd0] sm:$0xff]
      %v1179 = vld [vmem:[%s735 + $0xdd8] sm:$0xff]
      %v1180 = vld [vmem:[%s735 + $0xde0] sm:$0xff]
      %v1181 = vld [vmem:[%s735 + $0xde8] sm:$0xff]
      %v1182 = vld [vmem:[%s735 + $0xdf0] sm:$0xff]
      %v1183 = vld [vmem:[%s735 + $0xdf8] sm:$0xff]
      %v1184 = vld [vmem:[%s735 + $0xe00] sm:$0xff]
      %v1185 = vld [vmem:[%s735 + $0xe08] sm:$0xff]
      %v1186 = vld [vmem:[%s735 + $0xe10] sm:$0xff]
      %v1187 = vld [vmem:[%s735 + $0xe18] sm:$0xff]
      %v1188 = vld [vmem:[%s735 + $0xe20] sm:$0xff]
      %v1189 = vld [vmem:[%s735 + $0xe28] sm:$0xff]
      %v1190 = vld [vmem:[%s735 + $0xe30] sm:$0xff]
      %v1191 = vld [vmem:[%s735 + $0xe38] sm:$0xff]
      %v1192 = vld [vmem:[%s735 + $0xe40] sm:$0xff]
      %v1193 = vld [vmem:[%s735 + $0xe48] sm:$0xff]
      %v1194 = vld [vmem:[%s735 + $0xe50] sm:$0xff]
      %v1195 = vld [vmem:[%s735 + $0xe58] sm:$0xff]
      %v1196 = vld [vmem:[%s735 + $0xe60] sm:$0xff]
      %v1197 = vld [vmem:[%s735 + $0xe68] sm:$0xff]
      %v1198 = vld [vmem:[%s735 + $0xe70] sm:$0xff]
      %v1199 = vld [vmem:[%s735 + $0xe78] sm:$0xff]
      %v1200 = vld [vmem:[%s735 + $0xe80] sm:$0xff]
      %v1201 = vld [vmem:[%s735 + $0xe88] sm:$0xff]
      %v1202 = vld [vmem:[%s735 + $0xe90] sm:$0xff]
      %v1203 = vld [vmem:[%s735 + $0xe98] sm:$0xff]
      %v1204 = vld [vmem:[%s735 + $0xea0] sm:$0xff]
      %v1205 = vld [vmem:[%s735 + $0xea8] sm:$0xff]
      %v1206 = vld [vmem:[%s735 + $0xeb0] sm:$0xff]
      %v1207 = vld [vmem:[%s735 + $0xeb8] sm:$0xff]
      %v1208 = vld [vmem:[%s735 + $0xec0] sm:$0xff]
      %v1209 = vld [vmem:[%s735 + $0xec8] sm:$0xff]
      %v1210 = vld [vmem:[%s735 + $0xed0] sm:$0xff]
      %v1211 = vld [vmem:[%s735 + $0xed8] sm:$0xff]
      %v1212 = vld [vmem:[%s735 + $0xee0] sm:$0xff]
      %v1213 = vld [vmem:[%s735 + $0xee8] sm:$0xff]
      %v1214 = vld [vmem:[%s735 + $0xef0] sm:$0xff]
      %v1215 = vld [vmem:[%s735 + $0xef8] sm:$0xff]
      %v1216 = vld [vmem:[%s735 + $0xf00] sm:$0xff]
      %v1217 = vld [vmem:[%s735 + $0xf08] sm:$0xff]
      %v1218 = vld [vmem:[%s735 + $0xf10] sm:$0xff]
      %v1219 = vld [vmem:[%s735 + $0xf18] sm:$0xff]
      %v1220 = vld [vmem:[%s735 + $0xf20] sm:$0xff]
      %v1221 = vld [vmem:[%s735 + $0xf28] sm:$0xff]
      %v1222 = vld [vmem:[%s735 + $0xf30] sm:$0xff]
      %v1223 = vld [vmem:[%s735 + $0xf38] sm:$0xff]
      %v1224 = vld [vmem:[%s735 + $0xf40] sm:$0xff]
      %v1225 = vld [vmem:[%s735 + $0xf48] sm:$0xff]
      %v1226 = vld [vmem:[%s735 + $0xf50] sm:$0xff]
      %v1227 = vld [vmem:[%s735 + $0xf58] sm:$0xff]
      %v1228 = vld [vmem:[%s735 + $0xf60] sm:$0xff]
      %v1229 = vld [vmem:[%s735 + $0xf68] sm:$0xff]
      %v1230 = vld [vmem:[%s735 + $0xf70] sm:$0xff]
      %v1231 = vld [vmem:[%s735 + $0xf78] sm:$0xff]
      %v1232 = vld [vmem:[%s735 + $0xf80] sm:$0xff]
      %v1233 = vld [vmem:[%s735 + $0xf88] sm:$0xff]
      %v1234 = vld [vmem:[%s735 + $0xf90] sm:$0xff]
      %v1235 = vld [vmem:[%s735 + $0xf98] sm:$0xff]
      %v1236 = vld [vmem:[%s735 + $0xfa0] sm:$0xff]
      %v1237 = vld [vmem:[%s735 + $0xfa8] sm:$0xff]
      %v1238 = vld [vmem:[%s735 + $0xfb0] sm:$0xff]
      %v1239 = vld [vmem:[%s735 + $0xfb8] sm:$0xff]
      %v1240 = vld [vmem:[%s735 + $0xfc0] sm:$0xff]
      %v1241 = vld [vmem:[%s735 + $0xfc8] sm:$0xff]
      %v1242 = vld [vmem:[%s735 + $0xfd0] sm:$0xff]
      %v1243 = vld [vmem:[%s735 + $0xfd8] sm:$0xff]
      %v1244 = vld [vmem:[%s735 + $0xfe0] sm:$0xff]
      %v1245 = vld [vmem:[%s735 + $0xfe8] sm:$0xff]
      %v1246 = vld [vmem:[%s735 + $0xff0] sm:$0xff]
      %v1247 = vld [vmem:[%s735 + $0xff8] sm:$0xff]
      %v1248 = vld [vmem:[%s735 + $0x1000] sm:$0xff]
      %v1249 = vld [vmem:[%s735 + $0x1008] sm:$0xff]
      %v1250 = vld [vmem:[%s735 + $0x1010] sm:$0xff]
      %v1251 = vld [vmem:[%s735 + $0x1018] sm:$0xff]
      %v1252 = vld [vmem:[%s735 + $0x1020] sm:$0xff]
      %v1253 = vld [vmem:[%s735 + $0x1028] sm:$0xff]
      %v1254 = vld [vmem:[%s735 + $0x1030] sm:$0xff]
      %v1255 = vld [vmem:[%s735 + $0x1038] sm:$0xff]
      %v1256 = vld [vmem:[%s735 + $0x1040] sm:$0xff]
      %v1257 = vld [vmem:[%s735 + $0x1048] sm:$0xff]
      %v1258 = vld [vmem:[%s735 + $0x1050] sm:$0xff]
      %v1259 = vld [vmem:[%s735 + $0x1058] sm:$0xff]
      %v1260 = vld [vmem:[%s735 + $0x1060] sm:$0xff]
      %v1261 = vld [vmem:[%s735 + $0x1068] sm:$0xff]
      %v1262 = vld [vmem:[%s735 + $0x1070] sm:$0xff]
      %v1263 = vld [vmem:[%s735 + $0x1078] sm:$0xff]
      %v1264 = vld [vmem:[%s735 + $0x1080] sm:$0xff]
      %v1265 = vld [vmem:[%s735 + $0x1088] sm:$0xff]
      %v1266 = vld [vmem:[%s735 + $0x1090] sm:$0xff]
      %v1267 = vld [vmem:[%s735 + $0x1098] sm:$0xff]
      %v1268 = vld [vmem:[%s735 + $0x10a0] sm:$0xff]
      %v1269 = vld [vmem:[%s735 + $0x10a8] sm:$0xff]
      %v1270 = vld [vmem:[%s735 + $0x10b0] sm:$0xff]
      %v1271 = vld [vmem:[%s735 + $0x10b8] sm:$0xff]
      %v1272 = vld [vmem:[%s735 + $0x10c0] sm:$0xff]
      %v1273 = vld [vmem:[%s735 + $0x10c8] sm:$0xff]
      %v1274 = vld [vmem:[%s735 + $0x10d0] sm:$0xff]
      %v1275 = vld [vmem:[%s735 + $0x10d8] sm:$0xff]
      %v1276 = vld [vmem:[%s735 + $0x10e0] sm:$0xff]
      %v1277 = vld [vmem:[%s735 + $0x10e8] sm:$0xff]
      %v1278 = vld [vmem:[%s735 + $0x10f0] sm:$0xff]
      %v1279 = vld [vmem:[%s735 + $0x10f8] sm:$0xff]
      %vm1295 = vcmask 1046528
      %v1296 = vrot.slane %v725, 1
      %v1297 = vrot.slane %v176, 1
      %v1298 = vsel %vm1295, %v1296, %v1297
      %v1299 = vrot.slane %v726, 1
      %v1300 = vrot.slane %v177, 1
      %v1301 = vsel %vm1295, %v1299, %v1300
      %v1302 = vrot.slane %v727, 1
      %v1303 = vrot.slane %v178, 1
      %v1304 = vsel %vm1295, %v1302, %v1303
      %v1305 = vrot.slane %v728, 1
      %v1306 = vrot.slane %v179, 1
      %v1307 = vsel %vm1295, %v1305, %v1306
      %v1308 = vrot.slane %v729, 1
      %v1309 = vrot.slane %v180, 1
      %v1310 = vsel %vm1295, %v1308, %v1309
      %v1311 = vrot.slane %v730, 1
      %v1312 = vsel %vm1295, %v1297, %v1311
      %v1313 = vrot.slane %v731, 1
      %v1314 = vsel %vm1295, %v1300, %v1313
      %v1315 = vrot.slane %v732, 1
      %v1316 = vsel %vm1295, %v1303, %v1315
      %v1317 = vrot.slane %v733, 1
      %v1318 = vsel %vm1295, %v1306, %v1317
      %v1319 = vrot.slane %v734, 1
      %v1320 = vsel %vm1295, %v1309, %v1319
      %vm1329 = vcmask 261120
      %v1330 = vsel %vm1329, %v1310, 0
      %v1332 = vsel %vm1329, %v1320, 0
      %1334 = vmatprep.subr.mxu0 %v737
      %1335 = vmatpush1.msra.mxu0 %v736
      %1336 = vmatprep.subr.mxu0 %v745
      %1337 = vmatpush1.msra.mxu0 %v744
      %1338 = vmatprep.subr.mxu0 %v753
      %1339 = vmatpush1.msra.mxu0 %v752
      %1340 = vmatprep.subr.mxu0 %v761
      %1341 = vmatpush1.msra.mxu0 %v760
      %1342 = vmatprep.subr.mxu0 %v769
      %1343 = vmatpush1.msra.mxu0 %v768
      %1344 = vmatprep.subr.mxu0 %v777
      %1345 = vmatpush1.msra.mxu0 %v776
      %1346 = vmatprep.subr.mxu0 %v785
      %1347 = vmatpush1.msra.mxu0 %v784
      %1348 = vmatprep.subr.mxu0 %v793
      %1349 = vmatpush1.msra.mxu0 %v792
      %1350 = vmatprep.subr.mxu0 %v801
      %1351 = vmatpush1.msra.mxu0 %v800
      %1352 = vmatprep.subr.mxu0 %v809
      %1353 = vmatpush1.msra.mxu0 %v808
      %1354 = vmatprep.subr.mxu0 %v817
      %1355 = vmatpush1.msra.mxu0 %v816
      %1356 = vmatprep.subr.mxu0 %v825
      %1357 = vmatpush1.msra.mxu0 %v824
      %1358 = vmatprep.subr.mxu0 %v833
      %1359 = vmatpush1.msra.mxu0 %v832
      %1360 = vmatprep.subr.mxu0 %v841
      %1361 = vmatpush1.msra.mxu0 %v840
      %1362 = vmatprep.subr.mxu0 %v849
      %1363 = vmatpush1.msra.mxu0 %v848
      %1364 = vmatprep.subr.mxu0 %v857
      %1365 = vmatpush1.msra.mxu0 %v856
      %1366 = vmatprep.subr.mxu0 %v865
      %1367 = vmatpush1.msra.mxu0 %v864
      %1368 = vmatprep.subr.mxu0 %v873
      %1369 = vmatpush1.msra.mxu0 %v872
      %1370 = vmatprep.subr.mxu0 %v881
      %1371 = vmatpush1.msra.mxu0 %v880
      %1372 = vmatprep.subr.mxu0 %v889
      %1373 = vmatpush1.msra.mxu0 %v888
      %1374 = vmatprep.subr.mxu0 %v897
      %1375 = vmatpush1.msra.mxu0 %v896
      %1376 = vmatprep.subr.mxu0 %v905
      %1377 = vmatpush1.msra.mxu0 %v904
      %1378 = vmatprep.subr.mxu0 %v913
      %1379 = vmatpush1.msra.mxu0 %v912
      %1380 = vmatprep.subr.mxu0 %v921
      %1381 = vmatpush1.msra.mxu0 %v920
      %1382 = vmatprep.subr.mxu0 %v929
      %1383 = vmatpush1.msra.mxu0 %v928
      %1384 = vmatprep.subr.mxu0 %v937
      %1385 = vmatpush1.msra.mxu0 %v936
      %1386 = vmatprep.subr.mxu0 %v945
      %1387 = vmatpush1.msra.mxu0 %v944
      %1388 = vmatprep.subr.mxu0 %v953
      %1389 = vmatpush1.msra.mxu0 %v952
      %1390 = vmatprep.subr.mxu0 %v961
      %1391 = vmatpush1.msra.mxu0 %v960
      %1392 = vmatprep.subr.mxu0 %v969
      %1393 = vmatpush1.msra.mxu0 %v968
      %1394 = vmatprep.subr.mxu0 %v977
      %1395 = vmatpush1.msra.mxu0 %v976
      %1396 = vmatprep.subr.mxu0 %v985
      %1397 = vmatpush1.msra.mxu0 %v984
      %1398 = vmatprep.mubr.f32.mxu0 %v1301
      %1399 = vmatmul.mubr.f32.gmra.mrb[0].mxu0 %v1298
      %v1400 = vpop.f32.mrb[0].mxu0
      %v1401 = vadd.f32 0.0, %v1400
      %v1402 = vpop.f32.mrb[0].mxu0
      %v1403 = vadd.f32 0.0, %v1402
      %1404 = vmatprep.mubr.f32.mxu0 %v1314
      %1405 = vmatmul.mubr.f32.gmra.mrb[0].mxu0 %v1312
      %v1406 = vpop.f32.mrb[0].mxu0
      %v1407 = vadd.f32 0.0, %v1406
      %v1408 = vpop.f32.mrb[0].mxu0
      %v1409 = vadd.f32 0.0, %v1408
      %1410 = vdwg.mxu0
      %1411 = vmatprep.subr.mxu0 %v993
      %1412 = vmatpush1.msra.mxu0 %v992
      %1413 = vmatprep.subr.mxu0 %v1001
      %1414 = vmatpush1.msra.mxu0 %v1000
      %1415 = vmatprep.subr.mxu0 %v1009
      %1416 = vmatpush1.msra.mxu0 %v1008
      %1417 = vmatprep.subr.mxu0 %v1017
      %1418 = vmatpush1.msra.mxu0 %v1016
      %1419 = vmatprep.subr.mxu0 %v1025
      %1420 = vmatpush1.msra.mxu0 %v1024
      %1421 = vmatprep.subr.mxu0 %v1033
      %1422 = vmatpush1.msra.mxu0 %v1032
      %1423 = vmatprep.subr.mxu0 %v1041
      %1424 = vmatpush1.msra.mxu0 %v1040
      %1425 = vmatprep.subr.mxu0 %v1049
      %1426 = vmatpush1.msra.mxu0 %v1048
      %1427 = vmatprep.subr.mxu0 %v1057
      %1428 = vmatpush1.msra.mxu0 %v1056
      %1429 = vmatprep.subr.mxu0 %v1065
      %1430 = vmatpush1.msra.mxu0 %v1064
      %1431 = vmatprep.subr.mxu0 %v1073
      %1432 = vmatpush1.msra.mxu0 %v1072
      %1433 = vmatprep.subr.mxu0 %v1081
      %1434 = vmatpush1.msra.mxu0 %v1080
      %1435 = vmatprep.subr.mxu0 %v1089
      %1436 = vmatpush1.msra.mxu0 %v1088
      %1437 = vmatprep.subr.mxu0 %v1097
      %1438 = vmatpush1.msra.mxu0 %v1096
      %1439 = vmatprep.subr.mxu0 %v1105
      %1440 = vmatpush1.msra.mxu0 %v1104
      %1441 = vmatprep.subr.mxu0 %v1113
      %1442 = vmatpush1.msra.mxu0 %v1112
      %1443 = vmatprep.subr.mxu0 %v1121
      %1444 = vmatpush1.msra.mxu0 %v1120
      %1445 = vmatprep.subr.mxu0 %v1129
      %1446 = vmatpush1.msra.mxu0 %v1128
      %1447 = vmatprep.subr.mxu0 %v1137
      %1448 = vmatpush1.msra.mxu0 %v1136
      %1449 = vmatprep.subr.mxu0 %v1145
      %1450 = vmatpush1.msra.mxu0 %v1144
      %1451 = vmatprep.subr.mxu0 %v1153
      %1452 = vmatpush1.msra.mxu0 %v1152
      %1453 = vmatprep.subr.mxu0 %v1161
      %1454 = vmatpush1.msra.mxu0 %v1160
      %1455 = vmatprep.subr.mxu0 %v1169
      %1456 = vmatpush1.msra.mxu0 %v1168
      %1457 = vmatprep.subr.mxu0 %v1177
      %1458 = vmatpush1.msra.mxu0 %v1176
      %1459 = vmatprep.subr.mxu0 %v1185
      %1460 = vmatpush1.msra.mxu0 %v1184
      %1461 = vmatprep.subr.mxu0 %v1193
      %1462 = vmatpush1.msra.mxu0 %v1192
      %1463 = vmatprep.subr.mxu0 %v1201
      %1464 = vmatpush1.msra.mxu0 %v1200
      %1465 = vmatprep.subr.mxu0 %v1209
      %1466 = vmatpush1.msra.mxu0 %v1208
      %1467 = vmatprep.subr.mxu0 %v1217
      %1468 = vmatpush1.msra.mxu0 %v1216
      %1469 = vmatprep.subr.mxu0 %v1225
      %1470 = vmatpush1.msra.mxu0 %v1224
      %1471 = vmatprep.subr.mxu0 %v1233
      %1472 = vmatpush1.msra.mxu0 %v1232
      %1473 = vmatprep.subr.mxu0 %v1241
      %1474 = vmatpush1.msra.mxu0 %v1240
      %1475 = vmatprep.mubr.f32.mxu0 %v1307
      %1476 = vmatmul.mubr.f32.gmra.mrb[0].mxu0 %v1304
      %v1477 = vpop.f32.mrb[0].mxu0
      %v1478 = vadd.f32 %v1401, %v1477
      %v1479 = vpop.f32.mrb[0].mxu0
      %v1480 = vadd.f32 %v1403, %v1479
      %1481 = vmatprep.mubr.f32.mxu0 %v1318
      %1482 = vmatmul.mubr.f32.gmra.mrb[0].mxu0 %v1316
      %v1483 = vpop.f32.mrb[0].mxu0
      %v1484 = vadd.f32 %v1407, %v1483
      %v1485 = vpop.f32.mrb[0].mxu0
      %v1486 = vadd.f32 %v1409, %v1485
      %1487 = vdwg.mxu0
      %1488 = vmatprep.subr.mxu0 %v1249
      %1489 = vmatpush1.msra.mxu0 %v1248
      %1490 = vmatprep.subr.mxu0 %v1257
      %1491 = vmatpush1.msra.mxu0 %v1256
      %1492 = vmatprep.subr.mxu0 %v1265
      %1493 = vmatpush1.msra.mxu0 %v1264
      %1494 = vmatprep.subr.mxu0 %v1273
      %1495 = vmatpush1.msra.mxu0 %v1272
      %1496 = vmatprep.subr.mxu0 0.0
      %1497 = vmatpush1.msra.mxu0 0.0
      %1498 = vmatprep.subr.mxu0 0.0
      %1499 = vmatpush1.msra.mxu0 0.0
      %1500 = vmatprep.subr.mxu0 0.0
      %1501 = vmatpush1.msra.mxu0 0.0
      %1502 = vmatprep.subr.mxu0 0.0
      %1503 = vmatpush1.msra.mxu0 0.0
      %1504 = vmatprep.subr.mxu0 0.0
      %1505 = vmatpush1.msra.mxu0 0.0
      %1506 = vmatprep.subr.mxu0 0.0
      %1507 = vmatpush1.msra.mxu0 0.0
      %1508 = vmatprep.subr.mxu0 0.0
      %1509 = vmatpush1.msra.mxu0 0.0
      %1510 = vmatprep.subr.mxu0 0.0
      %1511 = vmatpush1.msra.mxu0 0.0
      %1512 = vmatprep.subr.mxu0 0.0
      %1513 = vmatpush1.msra.mxu0 0.0
      %1514 = vmatprep.subr.mxu0 0.0
      %1515 = vmatpush1.msra.mxu0 0.0
      %1516 = vmatprep.subr.mxu0 0.0
      %1517 = vmatpush1.msra.mxu0 0.0
      %1518 = vmatprep.subr.mxu0 0.0
      %1519 = vmatpush1.msra.mxu0 0.0
      %1520 = vmatprep.subr.mxu0 0.0
      %1521 = vmatpush1.msra.mxu0 0.0
      %1522 = vmatprep.subr.mxu0 0.0
      %1523 = vmatpush1.msra.mxu0 0.0
      %1524 = vmatprep.subr.mxu0 0.0
      %1525 = vmatpush1.msra.mxu0 0.0
      %1526 = vmatprep.subr.mxu0 0.0
      %1527 = vmatpush1.msra.mxu0 0.0
      %1528 = vmatprep.subr.mxu0 0.0
      %1529 = vmatpush1.msra.mxu0 0.0
      %1530 = vmatprep.subr.mxu0 0.0
      %1531 = vmatpush1.msra.mxu0 0.0
      %1532 = vmatprep.subr.mxu0 0.0
      %1533 = vmatpush1.msra.mxu0 0.0
      %1534 = vmatprep.subr.mxu0 0.0
      %1535 = vmatpush1.msra.mxu0 0.0
      %1536 = vmatprep.subr.mxu0 0.0
      %1537 = vmatpush1.msra.mxu0 0.0
      %1538 = vmatprep.subr.mxu0 0.0
      %1539 = vmatpush1.msra.mxu0 0.0
      %1540 = vmatprep.subr.mxu0 0.0
      %1541 = vmatpush1.msra.mxu0 0.0
      %1542 = vmatprep.subr.mxu0 0.0
      %1543 = vmatpush1.msra.mxu0 0.0
      %1544 = vmatprep.subr.mxu0 0.0
      %1545 = vmatpush1.msra.mxu0 0.0
      %1546 = vmatprep.subr.mxu0 0.0
      %1547 = vmatpush1.msra.mxu0 0.0
      %1548 = vmatprep.subr.mxu0 0.0
      %1549 = vmatpush1.msra.mxu0 0.0
      %1550 = vmatprep.subr.mxu0 0.0
      %1551 = vmatpush1.msra.mxu0 0.0
      %1552 = vmatprep.mubr.f32.mxu0 0.0
      %1553 = vmatmul.mubr.f32.gmra.mrb[0].mxu0 %v1330
      %v1554 = vpop.f32.mrb[0].mxu0
      %v1555 = vadd.f32 %v1478, %v1554
      %v1556 = vpop.f32.mrb[0].mxu0
      %v1557 = vadd.f32 %v1480, %v1556
      %1558 = vmatprep.mubr.f32.mxu0 0.0
      %1559 = vmatmul.mubr.f32.gmra.mrb[0].mxu0 %v1332
      %v1560 = vpop.f32.mrb[0].mxu0
      %v1561 = vadd.f32 %v1484, %v1560
      %v1562 = vpop.f32.mrb[0].mxu0
      %v1563 = vadd.f32 %v1486, %v1562
      %1564 = vdwg.mxu0
      %1565 = vmatprep.subr.mxu0 %v739
      %1566 = vmatpush1.msra.mxu0 %v738
      %1567 = vmatprep.subr.mxu0 %v747
      %1568 = vmatpush1.msra.mxu0 %v746
      %1569 = vmatprep.subr.mxu0 %v755
      %1570 = vmatpush1.msra.mxu0 %v754
      %1571 = vmatprep.subr.mxu0 %v763
      %1572 = vmatpush1.msra.mxu0 %v762
      %1573 = vmatprep.subr.mxu0 %v771
      %1574 = vmatpush1.msra.mxu0 %v770
      %1575 = vmatprep.subr.mxu0 %v779
      %1576 = vmatpush1.msra.mxu0 %v778
      %1577 = vmatprep.subr.mxu0 %v787
      %1578 = vmatpush1.msra.mxu0 %v786
      %1579 = vmatprep.subr.mxu0 %v795
      %1580 = vmatpush1.msra.mxu0 %v794
      %1581 = vmatprep.subr.mxu0 %v803
      %1582 = vmatpush1.msra.mxu0 %v802
      %1583 = vmatprep.subr.mxu0 %v811
      %1584 = vmatpush1.msra.mxu0 %v810
      %1585 = vmatprep.subr.mxu0 %v819
      %1586 = vmatpush1.msra.mxu0 %v818
      %1587 = vmatprep.subr.mxu0 %v827
      %1588 = vmatpush1.msra.mxu0 %v826
      %1589 = vmatprep.subr.mxu0 %v835
      %1590 = vmatpush1.msra.mxu0 %v834
      %1591 = vmatprep.subr.mxu0 %v843
      %1592 = vmatpush1.msra.mxu0 %v842
      %1593 = vmatprep.subr.mxu0 %v851
      %1594 = vmatpush1.msra.mxu0 %v850
      %1595 = vmatprep.subr.mxu0 %v859
      %1596 = vmatpush1.msra.mxu0 %v858
      %1597 = vmatprep.subr.mxu0 %v867
      %1598 = vmatpush1.msra.mxu0 %v866
      %1599 = vmatprep.subr.mxu0 %v875
      %1600 = vmatpush1.msra.mxu0 %v874
      %1601 = vmatprep.subr.mxu0 %v883
      %1602 = vmatpush1.msra.mxu0 %v882
      %1603 = vmatprep.subr.mxu0 %v891
      %1604 = vmatpush1.msra.mxu0 %v890
      %1605 = vmatprep.subr.mxu0 %v899
      %1606 = vmatpush1.msra.mxu0 %v898
      %1607 = vmatprep.subr.mxu0 %v907
      %1608 = vmatpush1.msra.mxu0 %v906
      %1609 = vmatprep.subr.mxu0 %v915
      %1610 = vmatpush1.msra.mxu0 %v914
      %1611 = vmatprep.subr.mxu0 %v923
      %1612 = vmatpush1.msra.mxu0 %v922
      %1613 = vmatprep.subr.mxu0 %v931
      %1614 = vmatpush1.msra.mxu0 %v930
      %1615 = vmatprep.subr.mxu0 %v939
      %1616 = vmatpush1.msra.mxu0 %v938
      %1617 = vmatprep.subr.mxu0 %v947
      %1618 = vmatpush1.msra.mxu0 %v946
      %1619 = vmatprep.subr.mxu0 %v955
      %1620 = vmatpush1.msra.mxu0 %v954
      %1621 = vmatprep.subr.mxu0 %v963
      %1622 = vmatpush1.msra.mxu0 %v962
      %1623 = vmatprep.subr.mxu0 %v971
      %1624 = vmatpush1.msra.mxu0 %v970
      %1625 = vmatprep.subr.mxu0 %v979
      %1626 = vmatpush1.msra.mxu0 %v978
      %1627 = vmatprep.subr.mxu0 %v987
      %1628 = vmatpush1.msra.mxu0 %v986
      %1629 = vmatprep.mubr.f32.mxu0 %v1301
      %1630 = vmatmul.mubr.f32.gmra.mrb[0].mxu0 %v1298
      %v1631 = vpop.f32.mrb[0].mxu0
      %v1632 = vadd.f32 0.0, %v1631
      %v1633 = vpop.f32.mrb[0].mxu0
      %v1634 = vadd.f32 0.0, %v1633
      %1635 = vmatprep.mubr.f32.mxu0 %v1314
      %1636 = vmatmul.mubr.f32.gmra.mrb[0].mxu0 %v1312
      %v1637 = vpop.f32.mrb[0].mxu0
      %v1638 = vadd.f32 0.0, %v1637
      %v1639 = vpop.f32.mrb[0].mxu0
      %v1640 = vadd.f32 0.0, %v1639
      %1641 = vdwg.mxu0
      %1642 = vmatprep.subr.mxu0 %v995
      %1643 = vmatpush1.msra.mxu0 %v994
      %1644 = vmatprep.subr.mxu0 %v1003
      %1645 = vmatpush1.msra.mxu0 %v1002
      %1646 = vmatprep.subr.mxu0 %v1011
      %1647 = vmatpush1.msra.mxu0 %v1010
      %1648 = vmatprep.subr.mxu0 %v1019
      %1649 = vmatpush1.msra.mxu0 %v1018
      %1650 = vmatprep.subr.mxu0 %v1027
      %1651 = vmatpush1.msra.mxu0 %v1026
      %1652 = vmatprep.subr.mxu0 %v1035
      %1653 = vmatpush1.msra.mxu0 %v1034
      %1654 = vmatprep.subr.mxu0 %v1043
      %1655 = vmatpush1.msra.mxu0 %v1042
      %1656 = vmatprep.subr.mxu0 %v1051
      %1657 = vmatpush1.msra.mxu0 %v1050
      %1658 = vmatprep.subr.mxu0 %v1059
      %1659 = vmatpush1.msra.mxu0 %v1058
      %1660 = vmatprep.subr.mxu0 %v1067
      %1661 = vmatpush1.msra.mxu0 %v1066
      %1662 = vmatprep.subr.mxu0 %v1075
      %1663 = vmatpush1.msra.mxu0 %v1074
      %1664 = vmatprep.subr.mxu0 %v1083
      %1665 = vmatpush1.msra.mxu0 %v1082
      %1666 = vmatprep.subr.mxu0 %v1091
      %1667 = vmatpush1.msra.mxu0 %v1090
      %1668 = vmatprep.subr.mxu0 %v1099
      %1669 = vmatpush1.msra.mxu0 %v1098
      %1670 = vmatprep.subr.mxu0 %v1107
      %1671 = vmatpush1.msra.mxu0 %v1106
      %1672 = vmatprep.subr.mxu0 %v1115
      %1673 = vmatpush1.msra.mxu0 %v1114
      %1674 = vmatprep.subr.mxu0 %v1123
      %1675 = vmatpush1.msra.mxu0 %v1122
      %1676 = vmatprep.subr.mxu0 %v1131
      %1677 = vmatpush1.msra.mxu0 %v1130
      %1678 = vmatprep.subr.mxu0 %v1139
      %1679 = vmatpush1.msra.mxu0 %v1138
      %1680 = vmatprep.subr.mxu0 %v1147
      %1681 = vmatpush1.msra.mxu0 %v1146
      %1682 = vmatprep.subr.mxu0 %v1155
      %1683 = vmatpush1.msra.mxu0 %v1154
      %1684 = vmatprep.subr.mxu0 %v1163
      %1685 = vmatpush1.msra.mxu0 %v1162
      %1686 = vmatprep.subr.mxu0 %v1171
      %1687 = vmatpush1.msra.mxu0 %v1170
      %1688 = vmatprep.subr.mxu0 %v1179
      %1689 = vmatpush1.msra.mxu0 %v1178
      %1690 = vmatprep.subr.mxu0 %v1187
      %1691 = vmatpush1.msra.mxu0 %v1186
      %1692 = vmatprep.subr.mxu0 %v1195
      %1693 = vmatpush1.msra.mxu0 %v1194
      %1694 = vmatprep.subr.mxu0 %v1203
      %1695 = vmatpush1.msra.mxu0 %v1202
      %1696 = vmatprep.subr.mxu0 %v1211
      %1697 = vmatpush1.msra.mxu0 %v1210
      %1698 = vmatprep.subr.mxu0 %v1219
      %1699 = vmatpush1.msra.mxu0 %v1218
      %1700 = vmatprep.subr.mxu0 %v1227
      %1701 = vmatpush1.msra.mxu0 %v1226
      %1702 = vmatprep.subr.mxu0 %v1235
      %1703 = vmatpush1.msra.mxu0 %v1234
      %1704 = vmatprep.subr.mxu0 %v1243
      %1705 = vmatpush1.msra.mxu0 %v1242
      %1706 = vmatprep.mubr.f32.mxu0 %v1307
      %1707 = vmatmul.mubr.f32.gmra.mrb[0].mxu0 %v1304
      %v1708 = vpop.f32.mrb[0].mxu0
      %v1709 = vadd.f32 %v1632, %v1708
      %v1710 = vpop.f32.mrb[0].mxu0
      %v1711 = vadd.f32 %v1634, %v1710
      %1712 = vmatprep.mubr.f32.mxu0 %v1318
      %1713 = vmatmul.mubr.f32.gmra.mrb[0].mxu0 %v1316
      %v1714 = vpop.f32.mrb[0].mxu0
      %v1715 = vadd.f32 %v1638, %v1714
      %v1716 = vpop.f32.mrb[0].mxu0
      %v1717 = vadd.f32 %v1640, %v1716
      %1718 = vdwg.mxu0
      %1719 = vmatprep.subr.mxu0 %v1251
      %1720 = vmatpush1.msra.mxu0 %v1250
      %1721 = vmatprep.subr.mxu0 %v1259
      %1722 = vmatpush1.msra.mxu0 %v1258
      %1723 = vmatprep.subr.mxu0 %v1267
      %1724 = vmatpush1.msra.mxu0 %v1266
      %1725 = vmatprep.subr.mxu0 %v1275
      %1726 = vmatpush1.msra.mxu0 %v1274
      %1727 = vmatprep.subr.mxu0 0.0
      %1728 = vmatpush1.msra.mxu0 0.0
      %1729 = vmatprep.subr.mxu0 0.0
      %1730 = vmatpush1.msra.mxu0 0.0
      %1731 = vmatprep.subr.mxu0 0.0
      %1732 = vmatpush1.msra.mxu0 0.0
      %1733 = vmatprep.subr.mxu0 0.0
      %1734 = vmatpush1.msra.mxu0 0.0
      %1735 = vmatprep.subr.mxu0 0.0
      %1736 = vmatpush1.msra.mxu0 0.0
      %1737 = vmatprep.subr.mxu0 0.0
      %1738 = vmatpush1.msra.mxu0 0.0
      %1739 = vmatprep.subr.mxu0 0.0
      %1740 = vmatpush1.msra.mxu0 0.0
      %1741 = vmatprep.subr.mxu0 0.0
      %1742 = vmatpush1.msra.mxu0 0.0
      %1743 = vmatprep.subr.mxu0 0.0
      %1744 = vmatpush1.msra.mxu0 0.0
      %1745 = vmatprep.subr.mxu0 0.0
      %1746 = vmatpush1.msra.mxu0 0.0
      %1747 = vmatprep.subr.mxu0 0.0
      %1748 = vmatpush1.msra.mxu0 0.0
      %1749 = vmatprep.subr.mxu0 0.0
      %1750 = vmatpush1.msra.mxu0 0.0
      %1751 = vmatprep.subr.mxu0 0.0
      %1752 = vmatpush1.msra.mxu0 0.0
      %1753 = vmatprep.subr.mxu0 0.0
      %1754 = vmatpush1.msra.mxu0 0.0
      %1755 = vmatprep.subr.mxu0 0.0
      %1756 = vmatpush1.msra.mxu0 0.0
      %1757 = vmatprep.subr.mxu0 0.0
      %1758 = vmatpush1.msra.mxu0 0.0
      %1759 = vmatprep.subr.mxu0 0.0
      %1760 = vmatpush1.msra.mxu0 0.0
      %1761 = vmatprep.subr.mxu0 0.0
      %1762 = vmatpush1.msra.mxu0 0.0
      %1763 = vmatprep.subr.mxu0 0.0
      %1764 = vmatpush1.msra.mxu0 0.0
      %1765 = vmatprep.subr.mxu0 0.0
      %1766 = vmatpush1.msra.mxu0 0.0
      %1767 = vmatprep.subr.mxu0 0.0
      %1768 = vmatpush1.msra.mxu0 0.0
      %1769 = vmatprep.subr.mxu0 0.0
      %1770 = vmatpush1.msra.mxu0 0.0
      %1771 = vmatprep.subr.mxu0 0.0
      %1772 = vmatpush1.msra.mxu0 0.0
      %1773 = vmatprep.subr.mxu0 0.0
      %1774 = vmatpush1.msra.mxu0 0.0
      %1775 = vmatprep.subr.mxu0 0.0
      %1776 = vmatpush1.msra.mxu0 0.0
      %1777 = vmatprep.subr.mxu0 0.0
      %1778 = vmatpush1.msra.mxu0 0.0
      %1779 = vmatprep.subr.mxu0 0.0
      %1780 = vmatpush1.msra.mxu0 0.0
      %1781 = vmatprep.subr.mxu0 0.0
      %1782 = vmatpush1.msra.mxu0 0.0
      %1783 = vmatprep.mubr.f32.mxu0 0.0
      %1784 = vmatmul.mubr.f32.gmra.mrb[0].mxu0 %v1330
      %v1785 = vpop.f32.mrb[0].mxu0
      %v1786 = vadd.f32 %v1709, %v1785
      %v1787 = vpop.f32.mrb[0].mxu0
      %v1788 = vadd.f32 %v1711, %v1787
      %1789 = vmatprep.mubr.f32.mxu0 0.0
      %1790 = vmatmul.mubr.f32.gmra.mrb[0].mxu0 %v1332
      %v1791 = vpop.f32.mrb[0].mxu0
      %v1792 = vadd.f32 %v1715, %v1791
      %v1793 = vpop.f32.mrb[0].mxu0
      %v1794 = vadd.f32 %v1717, %v1793
      %1795 = vdwg.mxu0
      %1796 = vmatprep.subr.mxu0 %v741
      %1797 = vmatpush1.msra.mxu0 %v740
      %1798 = vmatprep.subr.mxu0 %v749
      %1799 = vmatpush1.msra.mxu0 %v748
      %1800 = vmatprep.subr.mxu0 %v757
      %1801 = vmatpush1.msra.mxu0 %v756
      %1802 = vmatprep.subr.mxu0 %v765
      %1803 = vmatpush1.msra.mxu0 %v764
      %1804 = vmatprep.subr.mxu0 %v773
      %1805 = vmatpush1.msra.mxu0 %v772
      %1806 = vmatprep.subr.mxu0 %v781
      %1807 = vmatpush1.msra.mxu0 %v780
      %1808 = vmatprep.subr.mxu0 %v789
      %1809 = vmatpush1.msra.mxu0 %v788
      %1810 = vmatprep.subr.mxu0 %v797
      %1811 = vmatpush1.msra.mxu0 %v796
      %1812 = vmatprep.subr.mxu0 %v805
      %1813 = vmatpush1.msra.mxu0 %v804
      %1814 = vmatprep.subr.mxu0 %v813
      %1815 = vmatpush1.msra.mxu0 %v812
      %1816 = vmatprep.subr.mxu0 %v821
      %1817 = vmatpush1.msra.mxu0 %v820
      %1818 = vmatprep.subr.mxu0 %v829
      %1819 = vmatpush1.msra.mxu0 %v828
      %1820 = vmatprep.subr.mxu0 %v837
      %1821 = vmatpush1.msra.mxu0 %v836
      %1822 = vmatprep.subr.mxu0 %v845
      %1823 = vmatpush1.msra.mxu0 %v844
      %1824 = vmatprep.subr.mxu0 %v853
      %1825 = vmatpush1.msra.mxu0 %v852
      %1826 = vmatprep.subr.mxu0 %v861
      %1827 = vmatpush1.msra.mxu0 %v860
      %1828 = vmatprep.subr.mxu0 %v869
      %1829 = vmatpush1.msra.mxu0 %v868
      %1830 = vmatprep.subr.mxu0 %v877
      %1831 = vmatpush1.msra.mxu0 %v876
      %1832 = vmatprep.subr.mxu0 %v885
      %1833 = vmatpush1.msra.mxu0 %v884
      %1834 = vmatprep.subr.mxu0 %v893
      %1835 = vmatpush1.msra.mxu0 %v892
      %1836 = vmatprep.subr.mxu0 %v901
      %1837 = vmatpush1.msra.mxu0 %v900
      %1838 = vmatprep.subr.mxu0 %v909
      %1839 = vmatpush1.msra.mxu0 %v908
      %1840 = vmatprep.subr.mxu0 %v917
      %1841 = vmatpush1.msra.mxu0 %v916
      %1842 = vmatprep.subr.mxu0 %v925
      %1843 = vmatpush1.msra.mxu0 %v924
      %1844 = vmatprep.subr.mxu0 %v933
      %1845 = vmatpush1.msra.mxu0 %v932
      %1846 = vmatprep.subr.mxu0 %v941
      %1847 = vmatpush1.msra.mxu0 %v940
      %1848 = vmatprep.subr.mxu0 %v949
      %1849 = vmatpush1.msra.mxu0 %v948
      %1850 = vmatprep.subr.mxu0 %v957
      %1851 = vmatpush1.msra.mxu0 %v956
      %1852 = vmatprep.subr.mxu0 %v965
      %1853 = vmatpush1.msra.mxu0 %v964
      %1854 = vmatprep.subr.mxu0 %v973
      %1855 = vmatpush1.msra.mxu0 %v972
      %1856 = vmatprep.subr.mxu0 %v981
      %1857 = vmatpush1.msra.mxu0 %v980
      %1858 = vmatprep.subr.mxu0 %v989
      %1859 = vmatpush1.msra.mxu0 %v988
      %1860 = vmatprep.mubr.f32.mxu0 %v1301
      %1861 = vmatmul.mubr.f32.gmra.mrb[0].mxu0 %v1298
      %v1862 = vpop.f32.mrb[0].mxu0
      %v1863 = vadd.f32 0.0, %v1862
      %v1864 = vpop.f32.mrb[0].mxu0
      %v1865 = vadd.f32 0.0, %v1864
      %1866 = vmatprep.mubr.f32.mxu0 %v1314
      %1867 = vmatmul.mubr.f32.gmra.mrb[0].mxu0 %v1312
      %v1868 = vpop.f32.mrb[0].mxu0
      %v1869 = vadd.f32 0.0, %v1868
      %v1870 = vpop.f32.mrb[0].mxu0
      %v1871 = vadd.f32 0.0, %v1870
      %1872 = vdwg.mxu0
      %1873 = vmatprep.subr.mxu0 %v997
      %1874 = vmatpush1.msra.mxu0 %v996
      %1875 = vmatprep.subr.mxu0 %v1005
      %1876 = vmatpush1.msra.mxu0 %v1004
      %1877 = vmatprep.subr.mxu0 %v1013
      %1878 = vmatpush1.msra.mxu0 %v1012
      %1879 = vmatprep.subr.mxu0 %v1021
      %1880 = vmatpush1.msra.mxu0 %v1020
      %1881 = vmatprep.subr.mxu0 %v1029
      %1882 = vmatpush1.msra.mxu0 %v1028
      %1883 = vmatprep.subr.mxu0 %v1037
      %1884 = vmatpush1.msra.mxu0 %v1036
      %1885 = vmatprep.subr.mxu0 %v1045
      %1886 = vmatpush1.msra.mxu0 %v1044
      %1887 = vmatprep.subr.mxu0 %v1053
      %1888 = vmatpush1.msra.mxu0 %v1052
      %1889 = vmatprep.subr.mxu0 %v1061
      %1890 = vmatpush1.msra.mxu0 %v1060
      %1891 = vmatprep.subr.mxu0 %v1069
      %1892 = vmatpush1.msra.mxu0 %v1068
      %1893 = vmatprep.subr.mxu0 %v1077
      %1894 = vmatpush1.msra.mxu0 %v1076
      %1895 = vmatprep.subr.mxu0 %v1085
      %1896 = vmatpush1.msra.mxu0 %v1084
      %1897 = vmatprep.subr.mxu0 %v1093
      %1898 = vmatpush1.msra.mxu0 %v1092
      %1899 = vmatprep.subr.mxu0 %v1101
      %1900 = vmatpush1.msra.mxu0 %v1100
      %1901 = vmatprep.subr.mxu0 %v1109
      %1902 = vmatpush1.msra.mxu0 %v1108
      %1903 = vmatprep.subr.mxu0 %v1117
      %1904 = vmatpush1.msra.mxu0 %v1116
      %1905 = vmatprep.subr.mxu0 %v1125
      %1906 = vmatpush1.msra.mxu0 %v1124
      %1907 = vmatprep.subr.mxu0 %v1133
      %1908 = vmatpush1.msra.mxu0 %v1132
      %1909 = vmatprep.subr.mxu0 %v1141
      %1910 = vmatpush1.msra.mxu0 %v1140
      %1911 = vmatprep.subr.mxu0 %v1149
      %1912 = vmatpush1.msra.mxu0 %v1148
      %1913 = vmatprep.subr.mxu0 %v1157
      %1914 = vmatpush1.msra.mxu0 %v1156
      %1915 = vmatprep.subr.mxu0 %v1165
      %1916 = vmatpush1.msra.mxu0 %v1164
      %1917 = vmatprep.subr.mxu0 %v1173
      %1918 = vmatpush1.msra.mxu0 %v1172
      %1919 = vmatprep.subr.mxu0 %v1181
      %1920 = vmatpush1.msra.mxu0 %v1180
      %1921 = vmatprep.subr.mxu0 %v1189
      %1922 = vmatpush1.msra.mxu0 %v1188
      %1923 = vmatprep.subr.mxu0 %v1197
      %1924 = vmatpush1.msra.mxu0 %v1196
      %1925 = vmatprep.subr.mxu0 %v1205
      %1926 = vmatpush1.msra.mxu0 %v1204
      %1927 = vmatprep.subr.mxu0 %v1213
      %1928 = vmatpush1.msra.mxu0 %v1212
      %1929 = vmatprep.subr.mxu0 %v1221
      %1930 = vmatpush1.msra.mxu0 %v1220
      %1931 = vmatprep.subr.mxu0 %v1229
      %1932 = vmatpush1.msra.mxu0 %v1228
      %1933 = vmatprep.subr.mxu0 %v1237
      %1934 = vmatpush1.msra.mxu0 %v1236
      %1935 = vmatprep.subr.mxu0 %v1245
      %1936 = vmatpush1.msra.mxu0 %v1244
      %1937 = vmatprep.mubr.f32.mxu0 %v1307
      %1938 = vmatmul.mubr.f32.gmra.mrb[0].mxu0 %v1304
      %v1939 = vpop.f32.mrb[0].mxu0
      %v1940 = vadd.f32 %v1863, %v1939
      %v1941 = vpop.f32.mrb[0].mxu0
      %v1942 = vadd.f32 %v1865, %v1941
      %1943 = vmatprep.mubr.f32.mxu0 %v1318
      %1944 = vmatmul.mubr.f32.gmra.mrb[0].mxu0 %v1316
      %v1945 = vpop.f32.mrb[0].mxu0
      %v1946 = vadd.f32 %v1869, %v1945
      %v1947 = vpop.f32.mrb[0].mxu0
      %v1948 = vadd.f32 %v1871, %v1947
      %1949 = vdwg.mxu0
      %1950 = vmatprep.subr.mxu0 %v1253
      %1951 = vmatpush1.msra.mxu0 %v1252
      %1952 = vmatprep.subr.mxu0 %v1261
      %1953 = vmatpush1.msra.mxu0 %v1260
      %1954 = vmatprep.subr.mxu0 %v1269
      %1955 = vmatpush1.msra.mxu0 %v1268
      %1956 = vmatprep.subr.mxu0 %v1277
      %1957 = vmatpush1.msra.mxu0 %v1276
      %1958 = vmatprep.subr.mxu0 0.0
      %1959 = vmatpush1.msra.mxu0 0.0
      %1960 = vmatprep.subr.mxu0 0.0
      %1961 = vmatpush1.msra.mxu0 0.0
      %1962 = vmatprep.subr.mxu0 0.0
      %1963 = vmatpush1.msra.mxu0 0.0
      %1964 = vmatprep.subr.mxu0 0.0
      %1965 = vmatpush1.msra.mxu0 0.0
      %1966 = vmatprep.subr.mxu0 0.0
      %1967 = vmatpush1.msra.mxu0 0.0
      %1968 = vmatprep.subr.mxu0 0.0
      %1969 = vmatpush1.msra.mxu0 0.0
      %1970 = vmatprep.subr.mxu0 0.0
      %1971 = vmatpush1.msra.mxu0 0.0
      %1972 = vmatprep.subr.mxu0 0.0
      %1973 = vmatpush1.msra.mxu0 0.0
      %1974 = vmatprep.subr.mxu0 0.0
      %1975 = vmatpush1.msra.mxu0 0.0
      %1976 = vmatprep.subr.mxu0 0.0
      %1977 = vmatpush1.msra.mxu0 0.0
      %1978 = vmatprep.subr.mxu0 0.0
      %1979 = vmatpush1.msra.mxu0 0.0
      %1980 = vmatprep.subr.mxu0 0.0
      %1981 = vmatpush1.msra.mxu0 0.0
      %1982 = vmatprep.subr.mxu0 0.0
      %1983 = vmatpush1.msra.mxu0 0.0
      %1984 = vmatprep.subr.mxu0 0.0
      %1985 = vmatpush1.msra.mxu0 0.0
      %1986 = vmatprep.subr.mxu0 0.0
      %1987 = vmatpush1.msra.mxu0 0.0
      %1988 = vmatprep.subr.mxu0 0.0
      %1989 = vmatpush1.msra.mxu0 0.0
      %1990 = vmatprep.subr.mxu0 0.0
      %1991 = vmatpush1.msra.mxu0 0.0
      %1992 = vmatprep.subr.mxu0 0.0
      %1993 = vmatpush1.msra.mxu0 0.0
      %1994 = vmatprep.subr.mxu0 0.0
      %1995 = vmatpush1.msra.mxu0 0.0
      %1996 = vmatprep.subr.mxu0 0.0
      %1997 = vmatpush1.msra.mxu0 0.0
      %1998 = vmatprep.subr.mxu0 0.0
      %1999 = vmatpush1.msra.mxu0 0.0
      %2000 = vmatprep.subr.mxu0 0.0
      %2001 = vmatpush1.msra.mxu0 0.0
      %2002 = vmatprep.subr.mxu0 0.0
      %2003 = vmatpush1.msra.mxu0 0.0
      %2004 = vmatprep.subr.mxu0 0.0
      %2005 = vmatpush1.msra.mxu0 0.0
      %2006 = vmatprep.subr.mxu0 0.0
      %2007 = vmatpush1.msra.mxu0 0.0
      %2008 = vmatprep.subr.mxu0 0.0
      %2009 = vmatpush1.msra.mxu0 0.0
      %2010 = vmatprep.subr.mxu0 0.0
      %2011 = vmatpush1.msra.mxu0 0.0
      %2012 = vmatprep.subr.mxu0 0.0
      %2013 = vmatpush1.msra.mxu0 0.0
      %2014 = vmatprep.mubr.f32.mxu0 0.0
      %2015 = vmatmul.mubr.f32.gmra.mrb[0].mxu0 %v1330
      %v2016 = vpop.f32.mrb[0].mxu0
      %v2017 = vadd.f32 %v1940, %v2016
      %v2018 = vpop.f32.mrb[0].mxu0
      %v2019 = vadd.f32 %v1942, %v2018
      %2020 = vmatprep.mubr.f32.mxu0 0.0
      %2021 = vmatmul.mubr.f32.gmra.mrb[0].mxu0 %v1332
      %v2022 = vpop.f32.mrb[0].mxu0
      %v2023 = vadd.f32 %v1946, %v2022
      %v2024 = vpop.f32.mrb[0].mxu0
      %v2025 = vadd.f32 %v1948, %v2024
      %2026 = vdwg.mxu0
      %2027 = vmatprep.subr.mxu0 %v743
      %2028 = vmatpush1.msra.mxu0 %v742
      %2029 = vmatprep.subr.mxu0 %v751
      %2030 = vmatpush1.msra.mxu0 %v750
      %2031 = vmatprep.subr.mxu0 %v759
      %2032 = vmatpush1.msra.mxu0 %v758
      %2033 = vmatprep.subr.mxu0 %v767
      %2034 = vmatpush1.msra.mxu0 %v766
      %2035 = vmatprep.subr.mxu0 %v775
      %2036 = vmatpush1.msra.mxu0 %v774
      %2037 = vmatprep.subr.mxu0 %v783
      %2038 = vmatpush1.msra.mxu0 %v782
      %2039 = vmatprep.subr.mxu0 %v791
      %2040 = vmatpush1.msra.mxu0 %v790
      %2041 = vmatprep.subr.mxu0 %v799
      %2042 = vmatpush1.msra.mxu0 %v798
      %2043 = vmatprep.subr.mxu0 %v807
      %2044 = vmatpush1.msra.mxu0 %v806
      %2045 = vmatprep.subr.mxu0 %v815
      %2046 = vmatpush1.msra.mxu0 %v814
      %2047 = vmatprep.subr.mxu0 %v823
      %2048 = vmatpush1.msra.mxu0 %v822
      %2049 = vmatprep.subr.mxu0 %v831
      %2050 = vmatpush1.msra.mxu0 %v830
      %2051 = vmatprep.subr.mxu0 %v839
      %2052 = vmatpush1.msra.mxu0 %v838
      %2053 = vmatprep.subr.mxu0 %v847
      %2054 = vmatpush1.msra.mxu0 %v846
      %2055 = vmatprep.subr.mxu0 %v855
      %2056 = vmatpush1.msra.mxu0 %v854
      %2057 = vmatprep.subr.mxu0 %v863
      %2058 = vmatpush1.msra.mxu0 %v862
      %2059 = vmatprep.subr.mxu0 %v871
      %2060 = vmatpush1.msra.mxu0 %v870
      %2061 = vmatprep.subr.mxu0 %v879
      %2062 = vmatpush1.msra.mxu0 %v878
      %2063 = vmatprep.subr.mxu0 %v887
      %2064 = vmatpush1.msra.mxu0 %v886
      %2065 = vmatprep.subr.mxu0 %v895
      %2066 = vmatpush1.msra.mxu0 %v894
      %2067 = vmatprep.subr.mxu0 %v903
      %2068 = vmatpush1.msra.mxu0 %v902
      %2069 = vmatprep.subr.mxu0 %v911
      %2070 = vmatpush1.msra.mxu0 %v910
      %2071 = vmatprep.subr.mxu0 %v919
      %2072 = vmatpush1.msra.mxu0 %v918
      %2073 = vmatprep.subr.mxu0 %v927
      %2074 = vmatpush1.msra.mxu0 %v926
      %2075 = vmatprep.subr.mxu0 %v935
      %2076 = vmatpush1.msra.mxu0 %v934
      %2077 = vmatprep.subr.mxu0 %v943
      %2078 = vmatpush1.msra.mxu0 %v942
      %2079 = vmatprep.subr.mxu0 %v951
      %2080 = vmatpush1.msra.mxu0 %v950
      %2081 = vmatprep.subr.mxu0 %v959
      %2082 = vmatpush1.msra.mxu0 %v958
      %2083 = vmatprep.subr.mxu0 %v967
      %2084 = vmatpush1.msra.mxu0 %v966
      %2085 = vmatprep.subr.mxu0 %v975
      %2086 = vmatpush1.msra.mxu0 %v974
      %2087 = vmatprep.subr.mxu0 %v983
      %2088 = vmatpush1.msra.mxu0 %v982
      %2089 = vmatprep.subr.mxu0 %v991
      %2090 = vmatpush1.msra.mxu0 %v990
      %2091 = vmatprep.mubr.f32.mxu0 %v1301
      %2092 = vmatmul.mubr.f32.gmra.mrb[0].mxu0 %v1298
      %v2093 = vpop.f32.mrb[0].mxu0
      %v2094 = vadd.f32 0.0, %v2093
      %v2095 = vpop.f32.mrb[0].mxu0
      %v2096 = vadd.f32 0.0, %v2095
      %2097 = vmatprep.mubr.f32.mxu0 %v1314
      %2098 = vmatmul.mubr.f32.gmra.mrb[0].mxu0 %v1312
      %v2099 = vpop.f32.mrb[0].mxu0
      %v2100 = vadd.f32 0.0, %v2099
      %v2101 = vpop.f32.mrb[0].mxu0
      %v2102 = vadd.f32 0.0, %v2101
      %2103 = vdwg.mxu0
      %2104 = vmatprep.subr.mxu0 %v999
      %2105 = vmatpush1.msra.mxu0 %v998
      %2106 = vmatprep.subr.mxu0 %v1007
      %2107 = vmatpush1.msra.mxu0 %v1006
      %2108 = vmatprep.subr.mxu0 %v1015
      %2109 = vmatpush1.msra.mxu0 %v1014
      %2110 = vmatprep.subr.mxu0 %v1023
      %2111 = vmatpush1.msra.mxu0 %v1022
      %2112 = vmatprep.subr.mxu0 %v1031
      %2113 = vmatpush1.msra.mxu0 %v1030
      %2114 = vmatprep.subr.mxu0 %v1039
      %2115 = vmatpush1.msra.mxu0 %v1038
      %2116 = vmatprep.subr.mxu0 %v1047
      %2117 = vmatpush1.msra.mxu0 %v1046
      %2118 = vmatprep.subr.mxu0 %v1055
      %2119 = vmatpush1.msra.mxu0 %v1054
      %2120 = vmatprep.subr.mxu0 %v1063
      %2121 = vmatpush1.msra.mxu0 %v1062
      %2122 = vmatprep.subr.mxu0 %v1071
      %2123 = vmatpush1.msra.mxu0 %v1070
      %2124 = vmatprep.subr.mxu0 %v1079
      %2125 = vmatpush1.msra.mxu0 %v1078
      %2126 = vmatprep.subr.mxu0 %v1087
      %2127 = vmatpush1.msra.mxu0 %v1086
      %2128 = vmatprep.subr.mxu0 %v1095
      %2129 = vmatpush1.msra.mxu0 %v1094
      %2130 = vmatprep.subr.mxu0 %v1103
      %2131 = vmatpush1.msra.mxu0 %v1102
      %2132 = vmatprep.subr.mxu0 %v1111
      %2133 = vmatpush1.msra.mxu0 %v1110
      %2134 = vmatprep.subr.mxu0 %v1119
      %2135 = vmatpush1.msra.mxu0 %v1118
      %2136 = vmatprep.subr.mxu0 %v1127
      %2137 = vmatpush1.msra.mxu0 %v1126
      %2138 = vmatprep.subr.mxu0 %v1135
      %2139 = vmatpush1.msra.mxu0 %v1134
      %2140 = vmatprep.subr.mxu0 %v1143
      %2141 = vmatpush1.msra.mxu0 %v1142
      %2142 = vmatprep.subr.mxu0 %v1151
      %2143 = vmatpush1.msra.mxu0 %v1150
      %2144 = vmatprep.subr.mxu0 %v1159
      %2145 = vmatpush1.msra.mxu0 %v1158
      %2146 = vmatprep.subr.mxu0 %v1167
      %2147 = vmatpush1.msra.mxu0 %v1166
      %2148 = vmatprep.subr.mxu0 %v1175
      %2149 = vmatpush1.msra.mxu0 %v1174
      %2150 = vmatprep.subr.mxu0 %v1183
      %2151 = vmatpush1.msra.mxu0 %v1182
      %2152 = vmatprep.subr.mxu0 %v1191
      %2153 = vmatpush1.msra.mxu0 %v1190
      %2154 = vmatprep.subr.mxu0 %v1199
      %2155 = vmatpush1.msra.mxu0 %v1198
      %2156 = vmatprep.subr.mxu0 %v1207
      %2157 = vmatpush1.msra.mxu0 %v1206
      %2158 = vmatprep.subr.mxu0 %v1215
      %2159 = vmatpush1.msra.mxu0 %v1214
      %2160 = vmatprep.subr.mxu0 %v1223
      %2161 = vmatpush1.msra.mxu0 %v1222
      %2162 = vmatprep.subr.mxu0 %v1231
      %2163 = vmatpush1.msra.mxu0 %v1230
      %2164 = vmatprep.subr.mxu0 %v1239
      %2165 = vmatpush1.msra.mxu0 %v1238
      %2166 = vmatprep.subr.mxu0 %v1247
      %2167 = vmatpush1.msra.mxu0 %v1246
      %2168 = vmatprep.mubr.f32.mxu0 %v1307
      %2169 = vmatmul.mubr.f32.gmra.mrb[0].mxu0 %v1304
      %v2170 = vpop.f32.mrb[0].mxu0
      %v2171 = vadd.f32 %v2094, %v2170
      %v2172 = vpop.f32.mrb[0].mxu0
      %v2173 = vadd.f32 %v2096, %v2172
      %2174 = vmatprep.mubr.f32.mxu0 %v1318
      %2175 = vmatmul.mubr.f32.gmra.mrb[0].mxu0 %v1316
      %v2176 = vpop.f32.mrb[0].mxu0
      %v2177 = vadd.f32 %v2100, %v2176
      %v2178 = vpop.f32.mrb[0].mxu0
      %v2179 = vadd.f32 %v2102, %v2178
      %2180 = vdwg.mxu0
      %2181 = vmatprep.subr.mxu0 %v1255
      %2182 = vmatpush1.msra.mxu0 %v1254
      %2183 = vmatprep.subr.mxu0 %v1263
      %2184 = vmatpush1.msra.mxu0 %v1262
      %2185 = vmatprep.subr.mxu0 %v1271
      %2186 = vmatpush1.msra.mxu0 %v1270
      %2187 = vmatprep.subr.mxu0 %v1279
      %2188 = vmatpush1.msra.mxu0 %v1278
      %2189 = vmatprep.subr.mxu0 0.0
      %2190 = vmatpush1.msra.mxu0 0.0
      %2191 = vmatprep.subr.mxu0 0.0
      %2192 = vmatpush1.msra.mxu0 0.0
      %2193 = vmatprep.subr.mxu0 0.0
      %2194 = vmatpush1.msra.mxu0 0.0
      %2195 = vmatprep.subr.mxu0 0.0
      %2196 = vmatpush1.msra.mxu0 0.0
      %2197 = vmatprep.subr.mxu0 0.0
      %2198 = vmatpush1.msra.mxu0 0.0
      %2199 = vmatprep.subr.mxu0 0.0
      %2200 = vmatpush1.msra.mxu0 0.0
      %2201 = vmatprep.subr.mxu0 0.0
      %2202 = vmatpush1.msra.mxu0 0.0
      %2203 = vmatprep.subr.mxu0 0.0
      %2204 = vmatpush1.msra.mxu0 0.0
      %2205 = vmatprep.subr.mxu0 0.0
      %2206 = vmatpush1.msra.mxu0 0.0
      %2207 = vmatprep.subr.mxu0 0.0
      %2208 = vmatpush1.msra.mxu0 0.0
      %2209 = vmatprep.subr.mxu0 0.0
      %2210 = vmatpush1.msra.mxu0 0.0
      %2211 = vmatprep.subr.mxu0 0.0
      %2212 = vmatpush1.msra.mxu0 0.0
      %2213 = vmatprep.subr.mxu0 0.0
      %2214 = vmatpush1.msra.mxu0 0.0
      %2215 = vmatprep.subr.mxu0 0.0
      %2216 = vmatpush1.msra.mxu0 0.0
      %2217 = vmatprep.subr.mxu0 0.0
      %2218 = vmatpush1.msra.mxu0 0.0
      %2219 = vmatprep.subr.mxu0 0.0
      %2220 = vmatpush1.msra.mxu0 0.0
      %2221 = vmatprep.subr.mxu0 0.0
      %2222 = vmatpush1.msra.mxu0 0.0
      %2223 = vmatprep.subr.mxu0 0.0
      %2224 = vmatpush1.msra.mxu0 0.0
      %2225 = vmatprep.subr.mxu0 0.0
      %2226 = vmatpush1.msra.mxu0 0.0
      %2227 = vmatprep.subr.mxu0 0.0
      %2228 = vmatpush1.msra.mxu0 0.0
      %2229 = vmatprep.subr.mxu0 0.0
      %2230 = vmatpush1.msra.mxu0 0.0
      %2231 = vmatprep.subr.mxu0 0.0
      %2232 = vmatpush1.msra.mxu0 0.0
      %2233 = vmatprep.subr.mxu0 0.0
      %2234 = vmatpush1.msra.mxu0 0.0
      %2235 = vmatprep.subr.mxu0 0.0
      %2236 = vmatpush1.msra.mxu0 0.0
      %2237 = vmatprep.subr.mxu0 0.0
      %2238 = vmatpush1.msra.mxu0 0.0
      %2239 = vmatprep.subr.mxu0 0.0
      %2240 = vmatpush1.msra.mxu0 0.0
      %2241 = vmatprep.subr.mxu0 0.0
      %2242 = vmatpush1.msra.mxu0 0.0
      %2243 = vmatprep.subr.mxu0 0.0
      %2244 = vmatpush1.msra.mxu0 0.0
      %2245 = vmatprep.mubr.f32.mxu0 0.0
      %2246 = vmatmul.mubr.f32.gmra.mrb[0].mxu0 %v1330
      %v2247 = vpop.f32.mrb[0].mxu0
      %v2248 = vadd.f32 %v2171, %v2247
      %v2249 = vpop.f32.mrb[0].mxu0
      %v2250 = vadd.f32 %v2173, %v2249
      %2251 = vmatprep.mubr.f32.mxu0 0.0
      %2252 = vmatmul.mubr.f32.gmra.mrb[0].mxu0 %v1332
      %v2253 = vpop.f32.mrb[0].mxu0
      %v2254 = vadd.f32 %v2177, %v2253
      %v2255 = vpop.f32.mrb[0].mxu0
      %v2256 = vadd.f32 %v2179, %v2255
      %2257 = vdwg.mxu0
      %v2259 = vsel %vm1329, %v175, 0
      %v2261 = vsel %vm1329, %v180, 0
      %2263 = vmatprep.subr.mxu0 %v182
      %2264 = vmatpush1.msra.mxu0 %v181
      %2265 = vmatprep.subr.mxu0 %v190
      %2266 = vmatpush1.msra.mxu0 %v189
      %2267 = vmatprep.subr.mxu0 %v198
      %2268 = vmatpush1.msra.mxu0 %v197
      %2269 = vmatprep.subr.mxu0 %v206
      %2270 = vmatpush1.msra.mxu0 %v205
      %2271 = vmatprep.subr.mxu0 %v214
      %2272 = vmatpush1.msra.mxu0 %v213
      %2273 = vmatprep.subr.mxu0 %v222
      %2274 = vmatpush1.msra.mxu0 %v221
      %2275 = vmatprep.subr.mxu0 %v230
      %2276 = vmatpush1.msra.mxu0 %v229
      %2277 = vmatprep.subr.mxu0 %v238
      %2278 = vmatpush1.msra.mxu0 %v237
      %2279 = vmatprep.subr.mxu0 %v246
      %2280 = vmatpush1.msra.mxu0 %v245
      %2281 = vmatprep.subr.mxu0 %v254
      %2282 = vmatpush1.msra.mxu0 %v253
      %2283 = vmatprep.subr.mxu0 %v262
      %2284 = vmatpush1.msra.mxu0 %v261
      %2285 = vmatprep.subr.mxu0 %v270
      %2286 = vmatpush1.msra.mxu0 %v269
      %2287 = vmatprep.subr.mxu0 %v278
      %2288 = vmatpush1.msra.mxu0 %v277
      %2289 = vmatprep.subr.mxu0 %v286
      %2290 = vmatpush1.msra.mxu0 %v285
      %2291 = vmatprep.subr.mxu0 %v294
      %2292 = vmatpush1.msra.mxu0 %v293
      %2293 = vmatprep.subr.mxu0 %v302
      %2294 = vmatpush1.msra.mxu0 %v301
      %2295 = vmatprep.subr.mxu0 %v310
      %2296 = vmatpush1.msra.mxu0 %v309
      %2297 = vmatprep.subr.mxu0 %v318
      %2298 = vmatpush1.msra.mxu0 %v317
      %2299 = vmatprep.subr.mxu0 %v326
      %2300 = vmatpush1.msra.mxu0 %v325
      %2301 = vmatprep.subr.mxu0 %v334
      %2302 = vmatpush1.msra.mxu0 %v333
      %2303 = vmatprep.subr.mxu0 %v342
      %2304 = vmatpush1.msra.mxu0 %v341
      %2305 = vmatprep.subr.mxu0 %v350
      %2306 = vmatpush1.msra.mxu0 %v349
      %2307 = vmatprep.subr.mxu0 %v358
      %2308 = vmatpush1.msra.mxu0 %v357
      %2309 = vmatprep.subr.mxu0 %v366
      %2310 = vmatpush1.msra.mxu0 %v365
      %2311 = vmatprep.subr.mxu0 %v374
      %2312 = vmatpush1.msra.mxu0 %v373
      %2313 = vmatprep.subr.mxu0 %v382
      %2314 = vmatpush1.msra.mxu0 %v381
      %2315 = vmatprep.subr.mxu0 %v390
      %2316 = vmatpush1.msra.mxu0 %v389
      %2317 = vmatprep.subr.mxu0 %v398
      %2318 = vmatpush1.msra.mxu0 %v397
      %2319 = vmatprep.subr.mxu0 %v406
      %2320 = vmatpush1.msra.mxu0 %v405
      %2321 = vmatprep.subr.mxu0 %v414
      %2322 = vmatpush1.msra.mxu0 %v413
      %2323 = vmatprep.subr.mxu0 %v422
      %2324 = vmatpush1.msra.mxu0 %v421
      %2325 = vmatprep.subr.mxu0 %v430
      %2326 = vmatpush1.msra.mxu0 %v429
      %2327 = vmatprep.mubr.f32.mxu0 %v172
      %2328 = vmatmul.mubr.f32.gmra.mrb[0].mxu0 %v171
      %v2329 = vpop.f32.mrb[0].mxu0
      %v2330 = vadd.f32 %v1555, %v2329
      %v2331 = vpop.f32.mrb[0].mxu0
      %v2332 = vadd.f32 %v1557, %v2331
      %2333 = vmatprep.mubr.f32.mxu0 %v177
      %2334 = vmatmul.mubr.f32.gmra.mrb[0].mxu0 %v176
      %v2335 = vpop.f32.mrb[0].mxu0
      %v2336 = vadd.f32 %v1561, %v2335
      %v2337 = vpop.f32.mrb[0].mxu0
      %v2338 = vadd.f32 %v1563, %v2337
      %2339 = vdwg.mxu0
      %2340 = vmatprep.subr.mxu0 %v438
      %2341 = vmatpush1.msra.mxu0 %v437
      %2342 = vmatprep.subr.mxu0 %v446
      %2343 = vmatpush1.msra.mxu0 %v445
      %2344 = vmatprep.subr.mxu0 %v454
      %2345 = vmatpush1.msra.mxu0 %v453
      %2346 = vmatprep.subr.mxu0 %v462
      %2347 = vmatpush1.msra.mxu0 %v461
      %2348 = vmatprep.subr.mxu0 %v470
      %2349 = vmatpush1.msra.mxu0 %v469
      %2350 = vmatprep.subr.mxu0 %v478
      %2351 = vmatpush1.msra.mxu0 %v477
      %2352 = vmatprep.subr.mxu0 %v486
      %2353 = vmatpush1.msra.mxu0 %v485
      %2354 = vmatprep.subr.mxu0 %v494
      %2355 = vmatpush1.msra.mxu0 %v493
      %2356 = vmatprep.subr.mxu0 %v502
      %2357 = vmatpush1.msra.mxu0 %v501
      %2358 = vmatprep.subr.mxu0 %v510
      %2359 = vmatpush1.msra.mxu0 %v509
      %2360 = vmatprep.subr.mxu0 %v518
      %2361 = vmatpush1.msra.mxu0 %v517
      %2362 = vmatprep.subr.mxu0 %v526
      %2363 = vmatpush1.msra.mxu0 %v525
      %2364 = vmatprep.subr.mxu0 %v534
      %2365 = vmatpush1.msra.mxu0 %v533
      %2366 = vmatprep.subr.mxu0 %v542
      %2367 = vmatpush1.msra.mxu0 %v541
      %2368 = vmatprep.subr.mxu0 %v550
      %2369 = vmatpush1.msra.mxu0 %v549
      %2370 = vmatprep.subr.mxu0 %v558
      %2371 = vmatpush1.msra.mxu0 %v557
      %2372 = vmatprep.subr.mxu0 %v566
      %2373 = vmatpush1.msra.mxu0 %v565
      %2374 = vmatprep.subr.mxu0 %v574
      %2375 = vmatpush1.msra.mxu0 %v573
      %2376 = vmatprep.subr.mxu0 %v582
      %2377 = vmatpush1.msra.mxu0 %v581
      %2378 = vmatprep.subr.mxu0 %v590
      %2379 = vmatpush1.msra.mxu0 %v589
      %2380 = vmatprep.subr.mxu0 %v598
      %2381 = vmatpush1.msra.mxu0 %v597
      %2382 = vmatprep.subr.mxu0 %v606
      %2383 = vmatpush1.msra.mxu0 %v605
      %2384 = vmatprep.subr.mxu0 %v614
      %2385 = vmatpush1.msra.mxu0 %v613
      %2386 = vmatprep.subr.mxu0 %v622
      %2387 = vmatpush1.msra.mxu0 %v621
      %2388 = vmatprep.subr.mxu0 %v630
      %2389 = vmatpush1.msra.mxu0 %v629
      %2390 = vmatprep.subr.mxu0 %v638
      %2391 = vmatpush1.msra.mxu0 %v637
      %2392 = vmatprep.subr.mxu0 %v646
      %2393 = vmatpush1.msra.mxu0 %v645
      %2394 = vmatprep.subr.mxu0 %v654
      %2395 = vmatpush1.msra.mxu0 %v653
      %2396 = vmatprep.subr.mxu0 %v662
      %2397 = vmatpush1.msra.mxu0 %v661
      %2398 = vmatprep.subr.mxu0 %v670
      %2399 = vmatpush1.msra.mxu0 %v669
      %2400 = vmatprep.subr.mxu0 %v678
      %2401 = vmatpush1.msra.mxu0 %v677
      %2402 = vmatprep.subr.mxu0 %v686
      %2403 = vmatpush1.msra.mxu0 %v685
      %2404 = vmatprep.mubr.f32.mxu0 %v174
      %2405 = vmatmul.mubr.f32.gmra.mrb[0].mxu0 %v173
      %v2406 = vpop.f32.mrb[0].mxu0
      %v2407 = vadd.f32 %v2330, %v2406
      %v2408 = vpop.f32.mrb[0].mxu0
      %v2409 = vadd.f32 %v2332, %v2408
      %2410 = vmatprep.mubr.f32.mxu0 %v179
      %2411 = vmatmul.mubr.f32.gmra.mrb[0].mxu0 %v178
      %v2412 = vpop.f32.mrb[0].mxu0
      %v2413 = vadd.f32 %v2336, %v2412
      %v2414 = vpop.f32.mrb[0].mxu0
      %v2415 = vadd.f32 %v2338, %v2414
      %2416 = vdwg.mxu0
      %2417 = vmatprep.subr.mxu0 %v694
      %2418 = vmatpush1.msra.mxu0 %v693
      %2419 = vmatprep.subr.mxu0 %v702
      %2420 = vmatpush1.msra.mxu0 %v701
      %2421 = vmatprep.subr.mxu0 %v710
      %2422 = vmatpush1.msra.mxu0 %v709
      %2423 = vmatprep.subr.mxu0 %v718
      %2424 = vmatpush1.msra.mxu0 %v717
      %2425 = vmatprep.subr.mxu0 0.0
      %2426 = vmatpush1.msra.mxu0 0.0
      %2427 = vmatprep.subr.mxu0 0.0
      %2428 = vmatpush1.msra.mxu0 0.0
      %2429 = vmatprep.subr.mxu0 0.0
      %2430 = vmatpush1.msra.mxu0 0.0
      %2431 = vmatprep.subr.mxu0 0.0
      %2432 = vmatpush1.msra.mxu0 0.0
      %2433 = vmatprep.subr.mxu0 0.0
      %2434 = vmatpush1.msra.mxu0 0.0
      %2435 = vmatprep.subr.mxu0 0.0
      %2436 = vmatpush1.msra.mxu0 0.0
      %2437 = vmatprep.subr.mxu0 0.0
      %2438 = vmatpush1.msra.mxu0 0.0
      %2439 = vmatprep.subr.mxu0 0.0
      %2440 = vmatpush1.msra.mxu0 0.0
      %2441 = vmatprep.subr.mxu0 0.0
      %2442 = vmatpush1.msra.mxu0 0.0
      %2443 = vmatprep.subr.mxu0 0.0
      %2444 = vmatpush1.msra.mxu0 0.0
      %2445 = vmatprep.subr.mxu0 0.0
      %2446 = vmatpush1.msra.mxu0 0.0
      %2447 = vmatprep.subr.mxu0 0.0
      %2448 = vmatpush1.msra.mxu0 0.0
      %2449 = vmatprep.subr.mxu0 0.0
      %2450 = vmatpush1.msra.mxu0 0.0
      %2451 = vmatprep.subr.mxu0 0.0
      %2452 = vmatpush1.msra.mxu0 0.0
      %2453 = vmatprep.subr.mxu0 0.0
      %2454 = vmatpush1.msra.mxu0 0.0
      %2455 = vmatprep.subr.mxu0 0.0
      %2456 = vmatpush1.msra.mxu0 0.0
      %2457 = vmatprep.subr.mxu0 0.0
      %2458 = vmatpush1.msra.mxu0 0.0
      %2459 = vmatprep.subr.mxu0 0.0
      %2460 = vmatpush1.msra.mxu0 0.0
      %2461 = vmatprep.subr.mxu0 0.0
      %2462 = vmatpush1.msra.mxu0 0.0
      %2463 = vmatprep.subr.mxu0 0.0
      %2464 = vmatpush1.msra.mxu0 0.0
      %2465 = vmatprep.subr.mxu0 0.0
      %2466 = vmatpush1.msra.mxu0 0.0
      %2467 = vmatprep.subr.mxu0 0.0
      %2468 = vmatpush1.msra.mxu0 0.0
      %2469 = vmatprep.subr.mxu0 0.0
      %2470 = vmatpush1.msra.mxu0 0.0
      %2471 = vmatprep.subr.mxu0 0.0
      %2472 = vmatpush1.msra.mxu0 0.0
      %2473 = vmatprep.subr.mxu0 0.0
      %2474 = vmatpush1.msra.mxu0 0.0
      %2475 = vmatprep.subr.mxu0 0.0
      %2476 = vmatpush1.msra.mxu0 0.0
      %2477 = vmatprep.subr.mxu0 0.0
      %2478 = vmatpush1.msra.mxu0 0.0
      %2479 = vmatprep.subr.mxu0 0.0
      %2480 = vmatpush1.msra.mxu0 0.0
      %2481 = vmatprep.mubr.f32.mxu0 0.0
      %2482 = vmatmul.mubr.f32.gmra.mrb[0].mxu0 %v2259
      %v2483 = vpop.f32.mrb[0].mxu0
      %v2484 = vadd.f32 %v2407, %v2483
      %v2485 = vpop.f32.mrb[0].mxu0
      %v2486 = vadd.f32 %v2409, %v2485
      %2487 = vmatprep.mubr.f32.mxu0 0.0
      %2488 = vmatmul.mubr.f32.gmra.mrb[0].mxu0 %v2261
      %v2489 = vpop.f32.mrb[0].mxu0
      %v2490 = vadd.f32 %v2413, %v2489
      %v2491 = vpop.f32.mrb[0].mxu0
      %v2492 = vadd.f32 %v2415, %v2491
      %2493 = vdwg.mxu0
      %2494 = vmatprep.subr.mxu0 %v184
      %2495 = vmatpush1.msra.mxu0 %v183
      %2496 = vmatprep.subr.mxu0 %v192
      %2497 = vmatpush1.msra.mxu0 %v191
      %2498 = vmatprep.subr.mxu0 %v200
      %2499 = vmatpush1.msra.mxu0 %v199
      %2500 = vmatprep.subr.mxu0 %v208
      %2501 = vmatpush1.msra.mxu0 %v207
      %2502 = vmatprep.subr.mxu0 %v216
      %2503 = vmatpush1.msra.mxu0 %v215
      %2504 = vmatprep.subr.mxu0 %v224
      %2505 = vmatpush1.msra.mxu0 %v223
      %2506 = vmatprep.subr.mxu0 %v232
      %2507 = vmatpush1.msra.mxu0 %v231
      %2508 = vmatprep.subr.mxu0 %v240
      %2509 = vmatpush1.msra.mxu0 %v239
      %2510 = vmatprep.subr.mxu0 %v248
      %2511 = vmatpush1.msra.mxu0 %v247
      %2512 = vmatprep.subr.mxu0 %v256
      %2513 = vmatpush1.msra.mxu0 %v255
      %2514 = vmatprep.subr.mxu0 %v264
      %2515 = vmatpush1.msra.mxu0 %v263
      %2516 = vmatprep.subr.mxu0 %v272
      %2517 = vmatpush1.msra.mxu0 %v271
      %2518 = vmatprep.subr.mxu0 %v280
      %2519 = vmatpush1.msra.mxu0 %v279
      %2520 = vmatprep.subr.mxu0 %v288
      %2521 = vmatpush1.msra.mxu0 %v287
      %2522 = vmatprep.subr.mxu0 %v296
      %2523 = vmatpush1.msra.mxu0 %v295
      %2524 = vmatprep.subr.mxu0 %v304
      %2525 = vmatpush1.msra.mxu0 %v303
      %2526 = vmatprep.subr.mxu0 %v312
      %2527 = vmatpush1.msra.mxu0 %v311
      %2528 = vmatprep.subr.mxu0 %v320
      %2529 = vmatpush1.msra.mxu0 %v319
      %2530 = vmatprep.subr.mxu0 %v328
      %2531 = vmatpush1.msra.mxu0 %v327
      %2532 = vmatprep.subr.mxu0 %v336
      %2533 = vmatpush1.msra.mxu0 %v335
      %2534 = vmatprep.subr.mxu0 %v344
      %2535 = vmatpush1.msra.mxu0 %v343
      %2536 = vmatprep.subr.mxu0 %v352
      %2537 = vmatpush1.msra.mxu0 %v351
      %2538 = vmatprep.subr.mxu0 %v360
      %2539 = vmatpush1.msra.mxu0 %v359
      %2540 = vmatprep.subr.mxu0 %v368
      %2541 = vmatpush1.msra.mxu0 %v367
      %2542 = vmatprep.subr.mxu0 %v376
      %2543 = vmatpush1.msra.mxu0 %v375
      %2544 = vmatprep.subr.mxu0 %v384
      %2545 = vmatpush1.msra.mxu0 %v383
      %2546 = vmatprep.subr.mxu0 %v392
      %2547 = vmatpush1.msra.mxu0 %v391
      %2548 = vmatprep.subr.mxu0 %v400
      %2549 = vmatpush1.msra.mxu0 %v399
      %2550 = vmatprep.subr.mxu0 %v408
      %2551 = vmatpush1.msra.mxu0 %v407
      %2552 = vmatprep.subr.mxu0 %v416
      %2553 = vmatpush1.msra.mxu0 %v415
      %2554 = vmatprep.subr.mxu0 %v424
      %2555 = vmatpush1.msra.mxu0 %v423
      %2556 = vmatprep.subr.mxu0 %v432
      %2557 = vmatpush1.msra.mxu0 %v431
      %2558 = vmatprep.mubr.f32.mxu0 %v172
      %2559 = vmatmul.mubr.f32.gmra.mrb[0].mxu0 %v171
      %v2560 = vpop.f32.mrb[0].mxu0
      %v2561 = vadd.f32 %v1786, %v2560
      %v2562 = vpop.f32.mrb[0].mxu0
      %v2563 = vadd.f32 %v1788, %v2562
      %2564 = vmatprep.mubr.f32.mxu0 %v177
      %2565 = vmatmul.mubr.f32.gmra.mrb[0].mxu0 %v176
      %v2566 = vpop.f32.mrb[0].mxu0
      %v2567 = vadd.f32 %v1792, %v2566
      %v2568 = vpop.f32.mrb[0].mxu0
      %v2569 = vadd.f32 %v1794, %v2568
      %2570 = vdwg.mxu0
      %2571 = vmatprep.subr.mxu0 %v440
      %2572 = vmatpush1.msra.mxu0 %v439
      %2573 = vmatprep.subr.mxu0 %v448
      %2574 = vmatpush1.msra.mxu0 %v447
      %2575 = vmatprep.subr.mxu0 %v456
      %2576 = vmatpush1.msra.mxu0 %v455
      %2577 = vmatprep.subr.mxu0 %v464
      %2578 = vmatpush1.msra.mxu0 %v463
      %2579 = vmatprep.subr.mxu0 %v472
      %2580 = vmatpush1.msra.mxu0 %v471
      %2581 = vmatprep.subr.mxu0 %v480
      %2582 = vmatpush1.msra.mxu0 %v479
      %2583 = vmatprep.subr.mxu0 %v488
      %2584 = vmatpush1.msra.mxu0 %v487
      %2585 = vmatprep.subr.mxu0 %v496
      %2586 = vmatpush1.msra.mxu0 %v495
      %2587 = vmatprep.subr.mxu0 %v504
      %2588 = vmatpush1.msra.mxu0 %v503
      %2589 = vmatprep.subr.mxu0 %v512
      %2590 = vmatpush1.msra.mxu0 %v511
      %2591 = vmatprep.subr.mxu0 %v520
      %2592 = vmatpush1.msra.mxu0 %v519
      %2593 = vmatprep.subr.mxu0 %v528
      %2594 = vmatpush1.msra.mxu0 %v527
      %2595 = vmatprep.subr.mxu0 %v536
      %2596 = vmatpush1.msra.mxu0 %v535
      %2597 = vmatprep.subr.mxu0 %v544
      %2598 = vmatpush1.msra.mxu0 %v543
      %2599 = vmatprep.subr.mxu0 %v552
      %2600 = vmatpush1.msra.mxu0 %v551
      %2601 = vmatprep.subr.mxu0 %v560
      %2602 = vmatpush1.msra.mxu0 %v559
      %2603 = vmatprep.subr.mxu0 %v568
      %2604 = vmatpush1.msra.mxu0 %v567
      %2605 = vmatprep.subr.mxu0 %v576
      %2606 = vmatpush1.msra.mxu0 %v575
      %2607 = vmatprep.subr.mxu0 %v584
      %2608 = vmatpush1.msra.mxu0 %v583
      %2609 = vmatprep.subr.mxu0 %v592
      %2610 = vmatpush1.msra.mxu0 %v591
      %2611 = vmatprep.subr.mxu0 %v600
      %2612 = vmatpush1.msra.mxu0 %v599
      %2613 = vmatprep.subr.mxu0 %v608
      %2614 = vmatpush1.msra.mxu0 %v607
      %2615 = vmatprep.subr.mxu0 %v616
      %2616 = vmatpush1.msra.mxu0 %v615
      %2617 = vmatprep.subr.mxu0 %v624
      %2618 = vmatpush1.msra.mxu0 %v623
      %2619 = vmatprep.subr.mxu0 %v632
      %2620 = vmatpush1.msra.mxu0 %v631
      %2621 = vmatprep.subr.mxu0 %v640
      %2622 = vmatpush1.msra.mxu0 %v639
      %2623 = vmatprep.subr.mxu0 %v648
      %2624 = vmatpush1.msra.mxu0 %v647
      %2625 = vmatprep.subr.mxu0 %v656
      %2626 = vmatpush1.msra.mxu0 %v655
      %2627 = vmatprep.subr.mxu0 %v664
      %2628 = vmatpush1.msra.mxu0 %v663
      %2629 = vmatprep.subr.mxu0 %v672
      %2630 = vmatpush1.msra.mxu0 %v671
      %2631 = vmatprep.subr.mxu0 %v680
      %2632 = vmatpush1.msra.mxu0 %v679
      %2633 = vmatprep.subr.mxu0 %v688
      %2634 = vmatpush1.msra.mxu0 %v687
      %2635 = vmatprep.mubr.f32.mxu0 %v174
      %2636 = vmatmul.mubr.f32.gmra.mrb[0].mxu0 %v173
      %v2637 = vpop.f32.mrb[0].mxu0
      %v2638 = vadd.f32 %v2561, %v2637
      %v2639 = vpop.f32.mrb[0].mxu0
      %v2640 = vadd.f32 %v2563, %v2639
      %2641 = vmatprep.mubr.f32.mxu0 %v179
      %2642 = vmatmul.mubr.f32.gmra.mrb[0].mxu0 %v178
      %v2643 = vpop.f32.mrb[0].mxu0
      %v2644 = vadd.f32 %v2567, %v2643
      %v2645 = vpop.f32.mrb[0].mxu0
      %v2646 = vadd.f32 %v2569, %v2645
      %2647 = vdwg.mxu0
      %2648 = vmatprep.subr.mxu0 %v696
      %2649 = vmatpush1.msra.mxu0 %v695
      %2650 = vmatprep.subr.mxu0 %v704
      %2651 = vmatpush1.msra.mxu0 %v703
      %2652 = vmatprep.subr.mxu0 %v712
      %2653 = vmatpush1.msra.mxu0 %v711
      %2654 = vmatprep.subr.mxu0 %v720
      %2655 = vmatpush1.msra.mxu0 %v719
      %2656 = vmatprep.subr.mxu0 0.0
      %2657 = vmatpush1.msra.mxu0 0.0
      %2658 = vmatprep.subr.mxu0 0.0
      %2659 = vmatpush1.msra.mxu0 0.0
      %2660 = vmatprep.subr.mxu0 0.0
      %2661 = vmatpush1.msra.mxu0 0.0
      %2662 = vmatprep.subr.mxu0 0.0
      %2663 = vmatpush1.msra.mxu0 0.0
      %2664 = vmatprep.subr.mxu0 0.0
      %2665 = vmatpush1.msra.mxu0 0.0
      %2666 = vmatprep.subr.mxu0 0.0
      %2667 = vmatpush1.msra.mxu0 0.0
      %2668 = vmatprep.subr.mxu0 0.0
      %2669 = vmatpush1.msra.mxu0 0.0
      %2670 = vmatprep.subr.mxu0 0.0
      %2671 = vmatpush1.msra.mxu0 0.0
      %2672 = vmatprep.subr.mxu0 0.0
      %2673 = vmatpush1.msra.mxu0 0.0
      %2674 = vmatprep.subr.mxu0 0.0
      %2675 = vmatpush1.msra.mxu0 0.0
      %2676 = vmatprep.subr.mxu0 0.0
      %2677 = vmatpush1.msra.mxu0 0.0
      %2678 = vmatprep.subr.mxu0 0.0
      %2679 = vmatpush1.msra.mxu0 0.0
      %2680 = vmatprep.subr.mxu0 0.0
      %2681 = vmatpush1.msra.mxu0 0.0
      %2682 = vmatprep.subr.mxu0 0.0
      %2683 = vmatpush1.msra.mxu0 0.0
      %2684 = vmatprep.subr.mxu0 0.0
      %2685 = vmatpush1.msra.mxu0 0.0
      %2686 = vmatprep.subr.mxu0 0.0
      %2687 = vmatpush1.msra.mxu0 0.0
      %2688 = vmatprep.subr.mxu0 0.0
      %2689 = vmatpush1.msra.mxu0 0.0
      %2690 = vmatprep.subr.mxu0 0.0
      %2691 = vmatpush1.msra.mxu0 0.0
      %2692 = vmatprep.subr.mxu0 0.0
      %2693 = vmatpush1.msra.mxu0 0.0
      %2694 = vmatprep.subr.mxu0 0.0
      %2695 = vmatpush1.msra.mxu0 0.0
      %2696 = vmatprep.subr.mxu0 0.0
      %2697 = vmatpush1.msra.mxu0 0.0
      %2698 = vmatprep.subr.mxu0 0.0
      %2699 = vmatpush1.msra.mxu0 0.0
      %2700 = vmatprep.subr.mxu0 0.0
      %2701 = vmatpush1.msra.mxu0 0.0
      %2702 = vmatprep.subr.mxu0 0.0
      %2703 = vmatpush1.msra.mxu0 0.0
      %2704 = vmatprep.subr.mxu0 0.0
      %2705 = vmatpush1.msra.mxu0 0.0
      %2706 = vmatprep.subr.mxu0 0.0
      %2707 = vmatpush1.msra.mxu0 0.0
      %2708 = vmatprep.subr.mxu0 0.0
      %2709 = vmatpush1.msra.mxu0 0.0
      %2710 = vmatprep.subr.mxu0 0.0
      %2711 = vmatpush1.msra.mxu0 0.0
      %2712 = vmatprep.mubr.f32.mxu0 0.0
      %2713 = vmatmul.mubr.f32.gmra.mrb[0].mxu0 %v2259
      %v2714 = vpop.f32.mrb[0].mxu0
      %v2715 = vadd.f32 %v2638, %v2714
      %v2716 = vpop.f32.mrb[0].mxu0
      %v2717 = vadd.f32 %v2640, %v2716
      %2718 = vmatprep.mubr.f32.mxu0 0.0
      %2719 = vmatmul.mubr.f32.gmra.mrb[0].mxu0 %v2261
      %v2720 = vpop.f32.mrb[0].mxu0
      %v2721 = vadd.f32 %v2644, %v2720
      %v2722 = vpop.f32.mrb[0].mxu0
      %v2723 = vadd.f32 %v2646, %v2722
      %2724 = vdwg.mxu0
      %2725 = vmatprep.subr.mxu0 %v186
      %2726 = vmatpush1.msra.mxu0 %v185
      %2727 = vmatprep.subr.mxu0 %v194
      %2728 = vmatpush1.msra.mxu0 %v193
      %2729 = vmatprep.subr.mxu0 %v202
      %2730 = vmatpush1.msra.mxu0 %v201
      %2731 = vmatprep.subr.mxu0 %v210
      %2732 = vmatpush1.msra.mxu0 %v209
      %2733 = vmatprep.subr.mxu0 %v218
      %2734 = vmatpush1.msra.mxu0 %v217
      %2735 = vmatprep.subr.mxu0 %v226
      %2736 = vmatpush1.msra.mxu0 %v225
      %2737 = vmatprep.subr.mxu0 %v234
      %2738 = vmatpush1.msra.mxu0 %v233
      %2739 = vmatprep.subr.mxu0 %v242
      %2740 = vmatpush1.msra.mxu0 %v241
      %2741 = vmatprep.subr.mxu0 %v250
      %2742 = vmatpush1.msra.mxu0 %v249
      %2743 = vmatprep.subr.mxu0 %v258
      %2744 = vmatpush1.msra.mxu0 %v257
      %2745 = vmatprep.subr.mxu0 %v266
      %2746 = vmatpush1.msra.mxu0 %v265
      %2747 = vmatprep.subr.mxu0 %v274
      %2748 = vmatpush1.msra.mxu0 %v273
      %2749 = vmatprep.subr.mxu0 %v282
      %2750 = vmatpush1.msra.mxu0 %v281
      %2751 = vmatprep.subr.mxu0 %v290
      %2752 = vmatpush1.msra.mxu0 %v289
      %2753 = vmatprep.subr.mxu0 %v298
      %2754 = vmatpush1.msra.mxu0 %v297
      %2755 = vmatprep.subr.mxu0 %v306
      %2756 = vmatpush1.msra.mxu0 %v305
      %2757 = vmatprep.subr.mxu0 %v314
      %2758 = vmatpush1.msra.mxu0 %v313
      %2759 = vmatprep.subr.mxu0 %v322
      %2760 = vmatpush1.msra.mxu0 %v321
      %2761 = vmatprep.subr.mxu0 %v330
      %2762 = vmatpush1.msra.mxu0 %v329
      %2763 = vmatprep.subr.mxu0 %v338
      %2764 = vmatpush1.msra.mxu0 %v337
      %2765 = vmatprep.subr.mxu0 %v346
      %2766 = vmatpush1.msra.mxu0 %v345
      %2767 = vmatprep.subr.mxu0 %v354
      %2768 = vmatpush1.msra.mxu0 %v353
      %2769 = vmatprep.subr.mxu0 %v362
      %2770 = vmatpush1.msra.mxu0 %v361
      %2771 = vmatprep.subr.mxu0 %v370
      %2772 = vmatpush1.msra.mxu0 %v369
      %2773 = vmatprep.subr.mxu0 %v378
      %2774 = vmatpush1.msra.mxu0 %v377
      %2775 = vmatprep.subr.mxu0 %v386
      %2776 = vmatpush1.msra.mxu0 %v385
      %2777 = vmatprep.subr.mxu0 %v394
      %2778 = vmatpush1.msra.mxu0 %v393
      %2779 = vmatprep.subr.mxu0 %v402
      %2780 = vmatpush1.msra.mxu0 %v401
      %2781 = vmatprep.subr.mxu0 %v410
      %2782 = vmatpush1.msra.mxu0 %v409
      %2783 = vmatprep.subr.mxu0 %v418
      %2784 = vmatpush1.msra.mxu0 %v417
      %2785 = vmatprep.subr.mxu0 %v426
      %2786 = vmatpush1.msra.mxu0 %v425
      %2787 = vmatprep.subr.mxu0 %v434
      %2788 = vmatpush1.msra.mxu0 %v433
      %2789 = vmatprep.mubr.f32.mxu0 %v172
      %2790 = vmatmul.mubr.f32.gmra.mrb[0].mxu0 %v171
      %v2791 = vpop.f32.mrb[0].mxu0
      %v2792 = vadd.f32 %v2017, %v2791
      %v2793 = vpop.f32.mrb[0].mxu0
      %v2794 = vadd.f32 %v2019, %v2793
      %2795 = vmatprep.mubr.f32.mxu0 %v177
      %2796 = vmatmul.mubr.f32.gmra.mrb[0].mxu0 %v176
      %v2797 = vpop.f32.mrb[0].mxu0
      %v2798 = vadd.f32 %v2023, %v2797
      %v2799 = vpop.f32.mrb[0].mxu0
      %v2800 = vadd.f32 %v2025, %v2799
      %2801 = vdwg.mxu0
      %2802 = vmatprep.subr.mxu0 %v442
      %2803 = vmatpush1.msra.mxu0 %v441
      %2804 = vmatprep.subr.mxu0 %v450
      %2805 = vmatpush1.msra.mxu0 %v449
      %2806 = vmatprep.subr.mxu0 %v458
      %2807 = vmatpush1.msra.mxu0 %v457
      %2808 = vmatprep.subr.mxu0 %v466
      %2809 = vmatpush1.msra.mxu0 %v465
      %2810 = vmatprep.subr.mxu0 %v474
      %2811 = vmatpush1.msra.mxu0 %v473
      %2812 = vmatprep.subr.mxu0 %v482
      %2813 = vmatpush1.msra.mxu0 %v481
      %2814 = vmatprep.subr.mxu0 %v490
      %2815 = vmatpush1.msra.mxu0 %v489
      %2816 = vmatprep.subr.mxu0 %v498
      %2817 = vmatpush1.msra.mxu0 %v497
      %2818 = vmatprep.subr.mxu0 %v506
      %2819 = vmatpush1.msra.mxu0 %v505
      %2820 = vmatprep.subr.mxu0 %v514
      %2821 = vmatpush1.msra.mxu0 %v513
      %2822 = vmatprep.subr.mxu0 %v522
      %2823 = vmatpush1.msra.mxu0 %v521
      %2824 = vmatprep.subr.mxu0 %v530
      %2825 = vmatpush1.msra.mxu0 %v529
      %2826 = vmatprep.subr.mxu0 %v538
      %2827 = vmatpush1.msra.mxu0 %v537
      %2828 = vmatprep.subr.mxu0 %v546
      %2829 = vmatpush1.msra.mxu0 %v545
      %2830 = vmatprep.subr.mxu0 %v554
      %2831 = vmatpush1.msra.mxu0 %v553
      %2832 = vmatprep.subr.mxu0 %v562
      %2833 = vmatpush1.msra.mxu0 %v561
      %2834 = vmatprep.subr.mxu0 %v570
      %2835 = vmatpush1.msra.mxu0 %v569
      %2836 = vmatprep.subr.mxu0 %v578
      %2837 = vmatpush1.msra.mxu0 %v577
      %2838 = vmatprep.subr.mxu0 %v586
      %2839 = vmatpush1.msra.mxu0 %v585
      %2840 = vmatprep.subr.mxu0 %v594
      %2841 = vmatpush1.msra.mxu0 %v593
      %2842 = vmatprep.subr.mxu0 %v602
      %2843 = vmatpush1.msra.mxu0 %v601
      %2844 = vmatprep.subr.mxu0 %v610
      %2845 = vmatpush1.msra.mxu0 %v609
      %2846 = vmatprep.subr.mxu0 %v618
      %2847 = vmatpush1.msra.mxu0 %v617
      %2848 = vmatprep.subr.mxu0 %v626
      %2849 = vmatpush1.msra.mxu0 %v625
      %2850 = vmatprep.subr.mxu0 %v634
      %2851 = vmatpush1.msra.mxu0 %v633
      %2852 = vmatprep.subr.mxu0 %v642
      %2853 = vmatpush1.msra.mxu0 %v641
      %2854 = vmatprep.subr.mxu0 %v650
      %2855 = vmatpush1.msra.mxu0 %v649
      %2856 = vmatprep.subr.mxu0 %v658
      %2857 = vmatpush1.msra.mxu0 %v657
      %2858 = vmatprep.subr.mxu0 %v666
      %2859 = vmatpush1.msra.mxu0 %v665
      %2860 = vmatprep.subr.mxu0 %v674
      %2861 = vmatpush1.msra.mxu0 %v673
      %2862 = vmatprep.subr.mxu0 %v682
      %2863 = vmatpush1.msra.mxu0 %v681
      %2864 = vmatprep.subr.mxu0 %v690
      %2865 = vmatpush1.msra.mxu0 %v689
      %2866 = vmatprep.mubr.f32.mxu0 %v174
      %2867 = vmatmul.mubr.f32.gmra.mrb[0].mxu0 %v173
      %v2868 = vpop.f32.mrb[0].mxu0
      %v2869 = vadd.f32 %v2792, %v2868
      %v2870 = vpop.f32.mrb[0].mxu0
      %v2871 = vadd.f32 %v2794, %v2870
      %2872 = vmatprep.mubr.f32.mxu0 %v179
      %2873 = vmatmul.mubr.f32.gmra.mrb[0].mxu0 %v178
      %v2874 = vpop.f32.mrb[0].mxu0
      %v2875 = vadd.f32 %v2798, %v2874
      %v2876 = vpop.f32.mrb[0].mxu0
      %v2877 = vadd.f32 %v2800, %v2876
      %2878 = vdwg.mxu0
      %2879 = vmatprep.subr.mxu0 %v698
      %2880 = vmatpush1.msra.mxu0 %v697
      %2881 = vmatprep.subr.mxu0 %v706
      %2882 = vmatpush1.msra.mxu0 %v705
      %2883 = vmatprep.subr.mxu0 %v714
      %2884 = vmatpush1.msra.mxu0 %v713
      %2885 = vmatprep.subr.mxu0 %v722
      %2886 = vmatpush1.msra.mxu0 %v721
      %2887 = vmatprep.subr.mxu0 0.0
      %2888 = vmatpush1.msra.mxu0 0.0
      %2889 = vmatprep.subr.mxu0 0.0
      %2890 = vmatpush1.msra.mxu0 0.0
      %2891 = vmatprep.subr.mxu0 0.0
      %2892 = vmatpush1.msra.mxu0 0.0
      %2893 = vmatprep.subr.mxu0 0.0
      %2894 = vmatpush1.msra.mxu0 0.0
      %2895 = vmatprep.subr.mxu0 0.0
      %2896 = vmatpush1.msra.mxu0 0.0
      %2897 = vmatprep.subr.mxu0 0.0
      %2898 = vmatpush1.msra.mxu0 0.0
      %2899 = vmatprep.subr.mxu0 0.0
      %2900 = vmatpush1.msra.mxu0 0.0
      %2901 = vmatprep.subr.mxu0 0.0
      %2902 = vmatpush1.msra.mxu0 0.0
      %2903 = vmatprep.subr.mxu0 0.0
      %2904 = vmatpush1.msra.mxu0 0.0
      %2905 = vmatprep.subr.mxu0 0.0
      %2906 = vmatpush1.msra.mxu0 0.0
      %2907 = vmatprep.subr.mxu0 0.0
      %2908 = vmatpush1.msra.mxu0 0.0
      %2909 = vmatprep.subr.mxu0 0.0
      %2910 = vmatpush1.msra.mxu0 0.0
      %2911 = vmatprep.subr.mxu0 0.0
      %2912 = vmatpush1.msra.mxu0 0.0
      %2913 = vmatprep.subr.mxu0 0.0
      %2914 = vmatpush1.msra.mxu0 0.0
      %2915 = vmatprep.subr.mxu0 0.0
      %2916 = vmatpush1.msra.mxu0 0.0
      %2917 = vmatprep.subr.mxu0 0.0
      %2918 = vmatpush1.msra.mxu0 0.0
      %2919 = vmatprep.subr.mxu0 0.0
      %2920 = vmatpush1.msra.mxu0 0.0
      %2921 = vmatprep.subr.mxu0 0.0
      %2922 = vmatpush1.msra.mxu0 0.0
      %2923 = vmatprep.subr.mxu0 0.0
      %2924 = vmatpush1.msra.mxu0 0.0
      %2925 = vmatprep.subr.mxu0 0.0
      %2926 = vmatpush1.msra.mxu0 0.0
      %2927 = vmatprep.subr.mxu0 0.0
      %2928 = vmatpush1.msra.mxu0 0.0
      %2929 = vmatprep.subr.mxu0 0.0
      %2930 = vmatpush1.msra.mxu0 0.0
      %2931 = vmatprep.subr.mxu0 0.0
      %2932 = vmatpush1.msra.mxu0 0.0
      %2933 = vmatprep.subr.mxu0 0.0
      %2934 = vmatpush1.msra.mxu0 0.0
      %2935 = vmatprep.subr.mxu0 0.0
      %2936 = vmatpush1.msra.mxu0 0.0
      %2937 = vmatprep.subr.mxu0 0.0
      %2938 = vmatpush1.msra.mxu0 0.0
      %2939 = vmatprep.subr.mxu0 0.0
      %2940 = vmatpush1.msra.mxu0 0.0
      %2941 = vmatprep.subr.mxu0 0.0
      %2942 = vmatpush1.msra.mxu0 0.0
      %2943 = vmatprep.mubr.f32.mxu0 0.0
      %2944 = vmatmul.mubr.f32.gmra.mrb[0].mxu0 %v2259
      %v2945 = vpop.f32.mrb[0].mxu0
      %v2946 = vadd.f32 %v2869, %v2945
      %v2947 = vpop.f32.mrb[0].mxu0
      %v2948 = vadd.f32 %v2871, %v2947
      %2949 = vmatprep.mubr.f32.mxu0 0.0
      %2950 = vmatmul.mubr.f32.gmra.mrb[0].mxu0 %v2261
      %v2951 = vpop.f32.mrb[0].mxu0
      %v2952 = vadd.f32 %v2875, %v2951
      %v2953 = vpop.f32.mrb[0].mxu0
      %v2954 = vadd.f32 %v2877, %v2953
      %2955 = vdwg.mxu0
      %2956 = vmatprep.subr.mxu0 %v188
      %2957 = vmatpush1.msra.mxu0 %v187
      %2958 = vmatprep.subr.mxu0 %v196
      %2959 = vmatpush1.msra.mxu0 %v195
      %2960 = vmatprep.subr.mxu0 %v204
      %2961 = vmatpush1.msra.mxu0 %v203
      %2962 = vmatprep.subr.mxu0 %v212
      %2963 = vmatpush1.msra.mxu0 %v211
      %2964 = vmatprep.subr.mxu0 %v220
      %2965 = vmatpush1.msra.mxu0 %v219
      %2966 = vmatprep.subr.mxu0 %v228
      %2967 = vmatpush1.msra.mxu0 %v227
      %2968 = vmatprep.subr.mxu0 %v236
      %2969 = vmatpush1.msra.mxu0 %v235
      %2970 = vmatprep.subr.mxu0 %v244
      %2971 = vmatpush1.msra.mxu0 %v243
      %2972 = vmatprep.subr.mxu0 %v252
      %2973 = vmatpush1.msra.mxu0 %v251
      %2974 = vmatprep.subr.mxu0 %v260
      %2975 = vmatpush1.msra.mxu0 %v259
      %2976 = vmatprep.subr.mxu0 %v268
      %2977 = vmatpush1.msra.mxu0 %v267
      %2978 = vmatprep.subr.mxu0 %v276
      %2979 = vmatpush1.msra.mxu0 %v275
      %2980 = vmatprep.subr.mxu0 %v284
      %2981 = vmatpush1.msra.mxu0 %v283
      %2982 = vmatprep.subr.mxu0 %v292
      %2983 = vmatpush1.msra.mxu0 %v291
      %2984 = vmatprep.subr.mxu0 %v300
      %2985 = vmatpush1.msra.mxu0 %v299
      %2986 = vmatprep.subr.mxu0 %v308
      %2987 = vmatpush1.msra.mxu0 %v307
      %2988 = vmatprep.subr.mxu0 %v316
      %2989 = vmatpush1.msra.mxu0 %v315
      %2990 = vmatprep.subr.mxu0 %v324
      %2991 = vmatpush1.msra.mxu0 %v323
      %2992 = vmatprep.subr.mxu0 %v332
      %2993 = vmatpush1.msra.mxu0 %v331
      %2994 = vmatprep.subr.mxu0 %v340
      %2995 = vmatpush1.msra.mxu0 %v339
      %2996 = vmatprep.subr.mxu0 %v348
      %2997 = vmatpush1.msra.mxu0 %v347
      %2998 = vmatprep.subr.mxu0 %v356
      %2999 = vmatpush1.msra.mxu0 %v355
      %3000 = vmatprep.subr.mxu0 %v364
      %3001 = vmatpush1.msra.mxu0 %v363
      %3002 = vmatprep.subr.mxu0 %v372
      %3003 = vmatpush1.msra.mxu0 %v371
      %3004 = vmatprep.subr.mxu0 %v380
      %3005 = vmatpush1.msra.mxu0 %v379
      %3006 = vmatprep.subr.mxu0 %v388
      %3007 = vmatpush1.msra.mxu0 %v387
      %3008 = vmatprep.subr.mxu0 %v396
      %3009 = vmatpush1.msra.mxu0 %v395
      %3010 = vmatprep.subr.mxu0 %v404
      %3011 = vmatpush1.msra.mxu0 %v403
      %3012 = vmatprep.subr.mxu0 %v412
      %3013 = vmatpush1.msra.mxu0 %v411
      %3014 = vmatprep.subr.mxu0 %v420
      %3015 = vmatpush1.msra.mxu0 %v419
      %3016 = vmatprep.subr.mxu0 %v428
      %3017 = vmatpush1.msra.mxu0 %v427
      %3018 = vmatprep.subr.mxu0 %v436
      %3019 = vmatpush1.msra.mxu0 %v435
      %3020 = vmatprep.mubr.f32.mxu0 %v172
      %3021 = vmatmul.mubr.f32.gmra.mrb[0].mxu0 %v171
      %v3022 = vpop.f32.mrb[0].mxu0
      %v3023 = vadd.f32 %v2248, %v3022
      %v3024 = vpop.f32.mrb[0].mxu0
      %v3025 = vadd.f32 %v2250, %v3024
      %3026 = vmatprep.mubr.f32.mxu0 %v177
      %3027 = vmatmul.mubr.f32.gmra.mrb[0].mxu0 %v176
      %v3028 = vpop.f32.mrb[0].mxu0
      %v3029 = vadd.f32 %v2254, %v3028
      %v3030 = vpop.f32.mrb[0].mxu0
      %v3031 = vadd.f32 %v2256, %v3030
      %3032 = vdwg.mxu0
      %3033 = vmatprep.subr.mxu0 %v444
      %3034 = vmatpush1.msra.mxu0 %v443
      %3035 = vmatprep.subr.mxu0 %v452
      %3036 = vmatpush1.msra.mxu0 %v451
      %3037 = vmatprep.subr.mxu0 %v460
      %3038 = vmatpush1.msra.mxu0 %v459
      %3039 = vmatprep.subr.mxu0 %v468
      %3040 = vmatpush1.msra.mxu0 %v467
      %3041 = vmatprep.subr.mxu0 %v476
      %3042 = vmatpush1.msra.mxu0 %v475
      %3043 = vmatprep.subr.mxu0 %v484
      %3044 = vmatpush1.msra.mxu0 %v483
      %3045 = vmatprep.subr.mxu0 %v492
      %3046 = vmatpush1.msra.mxu0 %v491
      %3047 = vmatprep.subr.mxu0 %v500
      %3048 = vmatpush1.msra.mxu0 %v499
      %3049 = vmatprep.subr.mxu0 %v508
      %3050 = vmatpush1.msra.mxu0 %v507
      %3051 = vmatprep.subr.mxu0 %v516
      %3052 = vmatpush1.msra.mxu0 %v515
      %3053 = vmatprep.subr.mxu0 %v524
      %3054 = vmatpush1.msra.mxu0 %v523
      %3055 = vmatprep.subr.mxu0 %v532
      %3056 = vmatpush1.msra.mxu0 %v531
      %3057 = vmatprep.subr.mxu0 %v540
      %3058 = vmatpush1.msra.mxu0 %v539
      %3059 = vmatprep.subr.mxu0 %v548
      %3060 = vmatpush1.msra.mxu0 %v547
      %3061 = vmatprep.subr.mxu0 %v556
      %3062 = vmatpush1.msra.mxu0 %v555
      %3063 = vmatprep.subr.mxu0 %v564
      %3064 = vmatpush1.msra.mxu0 %v563
      %3065 = vmatprep.subr.mxu0 %v572
      %3066 = vmatpush1.msra.mxu0 %v571
      %3067 = vmatprep.subr.mxu0 %v580
      %3068 = vmatpush1.msra.mxu0 %v579
      %3069 = vmatprep.subr.mxu0 %v588
      %3070 = vmatpush1.msra.mxu0 %v587
      %3071 = vmatprep.subr.mxu0 %v596
      %3072 = vmatpush1.msra.mxu0 %v595
      %3073 = vmatprep.subr.mxu0 %v604
      %3074 = vmatpush1.msra.mxu0 %v603
      %3075 = vmatprep.subr.mxu0 %v612
      %3076 = vmatpush1.msra.mxu0 %v611
      %3077 = vmatprep.subr.mxu0 %v620
      %3078 = vmatpush1.msra.mxu0 %v619
      %3079 = vmatprep.subr.mxu0 %v628
      %3080 = vmatpush1.msra.mxu0 %v627
      %3081 = vmatprep.subr.mxu0 %v636
      %3082 = vmatpush1.msra.mxu0 %v635
      %3083 = vmatprep.subr.mxu0 %v644
      %3084 = vmatpush1.msra.mxu0 %v643
      %3085 = vmatprep.subr.mxu0 %v652
      %3086 = vmatpush1.msra.mxu0 %v651
      %3087 = vmatprep.subr.mxu0 %v660
      %3088 = vmatpush1.msra.mxu0 %v659
      %3089 = vmatprep.subr.mxu0 %v668
      %3090 = vmatpush1.msra.mxu0 %v667
      %3091 = vmatprep.subr.mxu0 %v676
      %3092 = vmatpush1.msra.mxu0 %v675
      %3093 = vmatprep.subr.mxu0 %v684
      %3094 = vmatpush1.msra.mxu0 %v683
      %3095 = vmatprep.subr.mxu0 %v692
      %3096 = vmatpush1.msra.mxu0 %v691
      %3097 = vmatprep.mubr.f32.mxu0 %v174
      %3098 = vmatmul.mubr.f32.gmra.mrb[0].mxu0 %v173
      %v3099 = vpop.f32.mrb[0].mxu0
      %v3100 = vadd.f32 %v3023, %v3099
      %v3101 = vpop.f32.mrb[0].mxu0
      %v3102 = vadd.f32 %v3025, %v3101
      %3103 = vmatprep.mubr.f32.mxu0 %v179
      %3104 = vmatmul.mubr.f32.gmra.mrb[0].mxu0 %v178
      %v3105 = vpop.f32.mrb[0].mxu0
      %v3106 = vadd.f32 %v3029, %v3105
      %v3107 = vpop.f32.mrb[0].mxu0
      %v3108 = vadd.f32 %v3031, %v3107
      %3109 = vdwg.mxu0
      %3110 = vmatprep.subr.mxu0 %v700
      %3111 = vmatpush1.msra.mxu0 %v699
      %3112 = vmatprep.subr.mxu0 %v708
      %3113 = vmatpush1.msra.mxu0 %v707
      %3114 = vmatprep.subr.mxu0 %v716
      %3115 = vmatpush1.msra.mxu0 %v715
      %3116 = vmatprep.subr.mxu0 %v724
      %3117 = vmatpush1.msra.mxu0 %v723
      %3118 = vmatprep.subr.mxu0 0.0
      %3119 = vmatpush1.msra.mxu0 0.0
      %3120 = vmatprep.subr.mxu0 0.0
      %3121 = vmatpush1.msra.mxu0 0.0
      %3122 = vmatprep.subr.mxu0 0.0
      %3123 = vmatpush1.msra.mxu0 0.0
      %3124 = vmatprep.subr.mxu0 0.0
      %3125 = vmatpush1.msra.mxu0 0.0
      %3126 = vmatprep.subr.mxu0 0.0
      %3127 = vmatpush1.msra.mxu0 0.0
      %3128 = vmatprep.subr.mxu0 0.0
      %3129 = vmatpush1.msra.mxu0 0.0
      %3130 = vmatprep.subr.mxu0 0.0
      %3131 = vmatpush1.msra.mxu0 0.0
      %3132 = vmatprep.subr.mxu0 0.0
      %3133 = vmatpush1.msra.mxu0 0.0
      %3134 = vmatprep.subr.mxu0 0.0
      %3135 = vmatpush1.msra.mxu0 0.0
      %3136 = vmatprep.subr.mxu0 0.0
      %3137 = vmatpush1.msra.mxu0 0.0
      %3138 = vmatprep.subr.mxu0 0.0
      %3139 = vmatpush1.msra.mxu0 0.0
      %3140 = vmatprep.subr.mxu0 0.0
      %3141 = vmatpush1.msra.mxu0 0.0
      %3142 = vmatprep.subr.mxu0 0.0
      %3143 = vmatpush1.msra.mxu0 0.0
      %3144 = vmatprep.subr.mxu0 0.0
      %3145 = vmatpush1.msra.mxu0 0.0
      %3146 = vmatprep.subr.mxu0 0.0
      %3147 = vmatpush1.msra.mxu0 0.0
      %3148 = vmatprep.subr.mxu0 0.0
      %3149 = vmatpush1.msra.mxu0 0.0
      %3150 = vmatprep.subr.mxu0 0.0
      %3151 = vmatpush1.msra.mxu0 0.0
      %3152 = vmatprep.subr.mxu0 0.0
      %3153 = vmatpush1.msra.mxu0 0.0
      %3154 = vmatprep.subr.mxu0 0.0
      %3155 = vmatpush1.msra.mxu0 0.0
      %3156 = vmatprep.subr.mxu0 0.0
      %3157 = vmatpush1.msra.mxu0 0.0
      %3158 = vmatprep.subr.mxu0 0.0
      %3159 = vmatpush1.msra.mxu0 0.0
      %3160 = vmatprep.subr.mxu0 0.0
      %3161 = vmatpush1.msra.mxu0 0.0
      %3162 = vmatprep.subr.mxu0 0.0
      %3163 = vmatpush1.msra.mxu0 0.0
      %3164 = vmatprep.subr.mxu0 0.0
      %3165 = vmatpush1.msra.mxu0 0.0
      %3166 = vmatprep.subr.mxu0 0.0
      %3167 = vmatpush1.msra.mxu0 0.0
      %3168 = vmatprep.subr.mxu0 0.0
      %3169 = vmatpush1.msra.mxu0 0.0
      %3170 = vmatprep.subr.mxu0 0.0
      %3171 = vmatpush1.msra.mxu0 0.0
      %3172 = vmatprep.subr.mxu0 0.0
      %3173 = vmatpush1.msra.mxu0 0.0
      %3174 = vmatprep.mubr.f32.mxu0 0.0
      %3175 = vmatmul.mubr.f32.gmra.mrb[0].mxu0 %v2259
      %v3176 = vpop.f32.mrb[0].mxu0
      %v3177 = vadd.f32 %v3100, %v3176
      %v3178 = vpop.f32.mrb[0].mxu0
      %v3179 = vadd.f32 %v3102, %v3178
      %3180 = vmatprep.mubr.f32.mxu0 0.0
      %3181 = vmatmul.mubr.f32.gmra.mrb[0].mxu0 %v2261
      %v3182 = vpop.f32.mrb[0].mxu0
      %v3183 = vadd.f32 %v3106, %v3182
      %v3184 = vpop.f32.mrb[0].mxu0
      %v3185 = vadd.f32 %v3108, %v3184
      %3186 = vdwg.mxu0
      %v3187 = vmax.f32 %v2484, %v2946
      %v3188 = vmax.f32 %v2486, %v2948
      %v3189 = vmax.f32 %v2715, %v3177
      %v3190 = vmax.f32 %v2717, %v3179
      %v3191 = vmax.f32 %v2490, %v2952
      %v3192 = vmax.f32 %v2492, %v2954
      %v3193 = vmax.f32 %v2721, %v3183
      %v3194 = vmax.f32 %v2723, %v3185
      %v3195 = vld [vmem:[%s2] sm:$0xf]
      %v3197 = vlaneseq
      %v3198 = vshrl.u32 %v3197, 7
      %v3199 = vsub.s32 0, %v3198
      %v3200 = vrot.slane %v3195, %v3199
      %v3201 = vlaneseq
      %v3202 = vshrl.u32 %v3201, 7
      %v3203 = vsub.s32 1, %v3202
      %v3204 = vrot.slane %v3195, %v3203
      %v3205 = vlaneseq
      %v3206 = vshrl.u32 %v3205, 7
      %v3207 = vsub.s32 2, %v3206
      %v3208 = vrot.slane %v3195, %v3207
      %v3209 = vlaneseq
      %v3210 = vshrl.u32 %v3209, 7
      %v3211 = vsub.s32 3, %v3210
      %v3212 = vrot.slane %v3195, %v3211
      %v3217 = vadd.f32 %v3187, %v3200
      %v3218 = vadd.f32 %v3188, %v3204
      %v3219 = vadd.f32 %v3189, %v3208
      %v3220 = vadd.f32 %v3190, %v3212
      %v3221 = vadd.f32 %v3191, %v3200
      %v3222 = vadd.f32 %v3192, %v3204
      %v3223 = vadd.f32 %v3193, %v3208
      %v3224 = vadd.f32 %v3194, %v3212
      %v3225 = vmax.f32 %v3217, 0.0
      %v3226 = vmax.f32 %v3218, 0.0
      %v3227 = vmax.f32 %v3219, 0.0
      %v3228 = vmax.f32 %v3220, 0.0
      %v3229 = vmax.f32 %v3221, 0.0
      %v3230 = vmax.f32 %v3222, 0.0
      %v3231 = vmax.f32 %v3223, 0.0
      %v3232 = vmax.f32 %v3224, 0.0
      %v3233 = vmax.f32 %v3225, %v3227
      %v3234 = vmax.f32 %v3226, %v3228
      %v3235 = vmax.f32 %v3229, %v3231
      %v3236 = vmax.f32 %v3230, %v3232
      %3237 = vst [vmem:[%s170] sm:$0xff] %v3233
      %3238 = vst [vmem:[%s170 + $0x8] sm:$0xff] %v3234
      %3239 = vst [vmem:[%s170 + $0x10] sm:$0xff] %v3235
      %3240 = vst [vmem:[%s170 + $0x18] sm:$0xff] %v3236
      %p3241 = scmp.lt.s32.totalorder %s14, 1
      %s3242 = scalar_select %p3241, %s14, 1
      %s3243 = smul.addr %s3242, 4
      %s3244 = smul.addr %s3243, 8
      %s3245 = scalar_lea.vmem %s3, %s3244
      // Predicated region
      $region33: #{shapes_cbm_forward.5} parent=31 // pred_check
        %p3246 = pneg %p100
      $region34: #{shapes_cbm_forward.5} parent=31 // pred_check_branch
        %3248 = sbr.rel (%p3246) target = $region36
      $region35: #{shapes_cbm_forward.5} parent=31 // pred_region
        _
      $region36: #{shapes_cbm_forward.5} parent=31 // pred_fallthru
        _
    $region32: #{shapes_cbm_forward.5} parent=5 // pred_fallthru
      _
    %p3249 = scmp.le.s32.totalorder 2, %s9
    // Predicated region
    $region37: #{shapes_cbm_forward.5} parent=5 // pred_check
      %p3250 = pneg %p3249
    $region38: #{shapes_cbm_forward.5} parent=5 // pred_check_branch
      %3252 = sbr.rel (%p3250) target = $region40
    $region39: #{shapes_cbm_forward.5} parent=5 // pred_region
      %s3253 = ssub.s32 %s9, 2
      // Predicated region
      $region41: #{shapes_cbm_forward.5} parent=39 // pred_check
        %p3254 = pneg %p106
      $region42: #{shapes_cbm_forward.5} parent=39 // pred_check_branch
        %3256 = sbr.rel (%p3254) target = $region44
      $region43: #{shapes_cbm_forward.5} parent=39 // pred_region
        %p3257 = scmp.lt.s32.totalorder %s15, 1
        %s3258 = scalar_select %p3257, %s15, 1
        %s3259 = smul.addr %s3258, 4
        %s3260 = smul.addr %s3259, 8
        %s3261 = scalar_lea.vmem %s3, %s3260
      $region44: #{shapes_cbm_forward.5} parent=39 // pred_fallthru
        _
    $region40: #{shapes_cbm_forward.5} parent=5 // pred_fallthru
      _
  $region6: #{shapes_cbm_forward.5} parent=0 // loop_footer
    %s13 = sadd.s32 1, %s9
  $region7: #{shapes_cbm_forward.5} parent=0 // loop_footer_branch
    %8 = sbr.rel target = $region3
  $region8: #{shapes_cbm_forward.5} parent=0 // loop_exit
    _

// kernel: shapes_cbm_forward.6
$region0: #{shapes_cbm_forward.6}
  #allocation0 [shape = 'u32[]', space=smem, size = 0x4, offset = 0x4, fixed_abs, tag = 'smem constant byte address 0x4 - core index']
  #allocation1 [shape = 'u32[144,128]{1,0:T(1,128)}', space=vmem, size = 0x12000, scoped, tag = 'internal scratch']
  %s0 = inlined_call_operand.vmem [shape: f32[2,9,576], index: 0, kind: input, shape index: {}]
  %s1 = inlined_call_operand.vmem [shape: f32[2,576,1024], index: 1, kind: input, shape index: {}]
  %s2 = inlined_call_operand.vmem [shape: f32[1,512], index: 2, kind: input, shape index: {}]
  %s3 = inlined_call_operand.vmem [shape: f32[2,8,256], index: 3, kind: output, shape index: {}]
  %s4 = sld [smem:[#allocation0]]
  $region45: #{shapes_cbm_forward.6} parent=0
    _
  %s6 = ssub.s32 1, %s4
  %s7 = scalar_select 0, %s6, %s4
  loop: start=0, step=1, limit=4
  $region2: #{shapes_cbm_forward.6} parent=0 // loop_pre_header
    _
  $region3: #{shapes_cbm_forward.6} parent=0 // loop_header
    %s9 = sphi 0, %s13
    %p10 = scmp.ge.s32.totalorder %s9, 4
    %s19 = sphi 0, %s21
    %s22 = sphi 0, %s19
    %s23 = sphi 0, %s22
    %s39 = sphi 0, %s23
    %s43 = sphi 0, %s43
    %s45 = sphi 0, %s43
    %s46 = sphi 0, %s45
    %s60 = sphi 0, %s46
    %s64 = sphi 0, %s64
    %s66 = sphi 0, %s64
    %s67 = sphi 0, %s66
    %s81 = sphi 0, %s67
    %s87 = sphi 0, %s89
    %s90 = sphi 0, %s87
    %s91 = sphi 0, %s90
    %s107 = sphi 0, %s91
  $region4: #{shapes_cbm_forward.6} parent=0 // loop_header_branch
    %12 = sbr.rel (%p10) target = $region8
  $region5: #{shapes_cbm_forward.6} parent=0 // loop_body
    %s14 = ssub.s32 %s9, 1
    %s15 = ssub.s32 %s9, 2
    %s16 = sadd.s32 %s9, 1
    %s17 = ssub.s32 %s9, %s16
    %p18 = scmp.eq.s32.totalorder %s17, 0
    %s20 = sadd.s32 %s19, 1
    %s21 = scalar_select %p18, %s19, %s20
    %p24 = pneg %p18
    %p25 = scmp.eq.s32.totalorder %s9, 1
    %p26 = por %p24, %p25
    %p27 = scmp.ne.s32.totalorder %s19, %s22
    %p28 = scmp.eq.s32.totalorder %s9, 0
    %p29 = por %p27, %p28
    %p30 = scmp.ne.s32.totalorder %s19, %s22
    %p31 = scmp.eq.s32.totalorder %s14, 1
    %p32 = por %p30, %p31
    %p33 = scmp.ne.s32.totalorder %s22, %s23
    %p34 = scmp.eq.s32.totalorder %s14, 0
    %p35 = por %p33, %p34
    %p36 = scmp.ne.s32.totalorder %s22, %s23
    %p37 = scmp.eq.s32.totalorder %s15, 1
    %p38 = por %p36, %p37
    %p40 = scmp.ne.s32.totalorder %s23, %s39
    %p41 = scmp.eq.s32.totalorder %s15, 0
    %p42 = por %p40, %p41
    %s44 = sadd.s32 %s43, 1
    %p47 = scmp.eq.s32.totalorder %s9, 1
    %p48 = scmp.ne.s32.totalorder %s43, %s45
    %p49 = scmp.eq.s32.totalorder %s9, 0
    %p50 = por %p48, %p49
    %p51 = scmp.ne.s32.totalorder %s43, %s45
    %p52 = scmp.eq.s32.totalorder %s14, 1
    %p53 = por %p51, %p52
    %p54 = scmp.ne.s32.totalorder %s45, %s46
    %p55 = scmp.eq.s32.totalorder %s14, 0
    %p56 = por %p54, %p55
    %p57 = scmp.ne.s32.totalorder %s45, %s46
    %p58 = scmp.eq.s32.totalorder %s15, 1
    %p59 = por %p57, %p58
    %p61 = scmp.ne.s32.totalorder %s46, %s60
    %p62 = scmp.eq.s32.totalorder %s15, 0
    %p63 = por %p61, %p62
    %s65 = sadd.s32 %s64, 1
    %p68 = scmp.eq.s32.totalorder %s9, 1
    %p69 = scmp.ne.s32.totalorder %s64, %s66
    %p70 = scmp.eq.s32.totalorder %s9, 0
    %p71 = por %p69, %p70
    %p72 = scmp.ne.s32.totalorder %s64, %s66
    %p73 = scmp.eq.s32.totalorder %s14, 1
    %p74 = por %p72, %p73
    %p75 = scmp.ne.s32.totalorder %s66, %s67
    %p76 = scmp.eq.s32.totalorder %s14, 0
    %p77 = por %p75, %p76
    %p78 = scmp.ne.s32.totalorder %s66, %s67
    %p79 = scmp.eq.s32.totalorder %s15, 1
    %p80 = por %p78, %p79
    %p82 = scmp.ne.s32.totalorder %s67, %s81
    %p83 = scmp.eq.s32.totalorder %s15, 0
    %p84 = por %p82, %p83
    %s85 = ssub.s32 %s9, %s16
    %p86 = scmp.eq.s32.totalorder %s85, 0
    %s88 = sadd.s32 %s87, 1
    %s89 = scalar_select %p86, %s87, %s88
    %p92 = pneg %p86
    %p93 = scmp.eq.s32.totalorder %s9, 1
    %p94 = por %p92, %p93
    %p95 = scmp.ne.s32.totalorder %s87, %s90
    %p96 = scmp.eq.s32.totalorder %s9, 0
    %p97 = por %p95, %p96
    %p98 = scmp.ne.s32.totalorder %s87, %s90
    %p99 = scmp.eq.s32.totalorder %s14, 1
    %p100 = por %p98, %p99
    %p101 = scmp.ne.s32.totalorder %s90, %s91
    %p102 = scmp.eq.s32.totalorder %s14, 0
    %p103 = por %p101, %p102
    %p104 = scmp.ne.s32.totalorder %s90, %s91
    %p105 = scmp.eq.s32.totalorder %s15, 1
    %p106 = por %p104, %p105
    %p108 = scmp.ne.s32.totalorder %s91, %s107
    %p109 = scmp.eq.s32.totalorder %s15, 0
    %p110 = por %p108, %p109
    %p111 = scmp.le.s32.totalorder 1, %s9
    %p112 = scmp.lt.s32.totalorder %s9, 3
    %p113 = pnand %p111, %p112
    %p114 = pneg %p113
    // Predicated region
    $region9: #{shapes_cbm_forward.6} parent=5 // pred_check
      _
    $region10: #{shapes_cbm_forward.6} parent=5 // pred_check_branch
      %116 = sbr.rel (%p113) target = $region12
    $region11: #{shapes_cbm_forward.6} parent=5 // pred_region
      %s117 = ssub.s32 %s9, 1
      // Predicated region
      $region13: #{shapes_cbm_forward.6} parent=11 // pred_check
        %p118 = pneg %p56
      $region14: #{shapes_cbm_forward.6} parent=11 // pred_check_branch
        %120 = sbr.rel (%p118) target = $region16
      $region15: #{shapes_cbm_forward.6} parent=11 // pred_region
        _
      $region16: #{shapes_cbm_forward.6} parent=11 // pred_fallthru
        _
      // Predicated region
      $region17: #{shapes_cbm_forward.6} parent=11 // pred_check
        %p121 = pneg %p77
      $region18: #{shapes_cbm_forward.6} parent=11 // pred_check_branch
        %123 = sbr.rel (%p121) target = $region20
      $region19: #{shapes_cbm_forward.6} parent=11 // pred_region
        _
      $region20: #{shapes_cbm_forward.6} parent=11 // pred_fallthru
        _
    $region12: #{shapes_cbm_forward.6} parent=5 // pred_fallthru
      _
    %p124 = scmp.lt.s32.totalorder %s9, 2
    // Predicated region
    $region21: #{shapes_cbm_forward.6} parent=5 // pred_check
      %p125 = pneg %p124
    $region22: #{shapes_cbm_forward.6} parent=5 // pred_check_branch
      %127 = sbr.rel (%p125) target = $region24
    $region23: #{shapes_cbm_forward.6} parent=5 // pred_region
      // Predicated region
      $region25: #{shapes_cbm_forward.6} parent=23 // pred_check
        %p128 = pneg %p29
      $region26: #{shapes_cbm_forward.6} parent=23 // pred_check_branch
        %130 = sbr.rel (%p128) target = $region28
      $region27: #{shapes_cbm_forward.6} parent=23 // pred_region
        %p131 = scmp.lt.s32.totalorder %s9, 1
        %s132 = scalar_select %p131, %s9, 1
        %s133 = smul.addr %s132, 10
        %s134 = smul.addr %s133, 8
        %s135 = scalar_lea.vmem %s0, %s134
      $region28: #{shapes_cbm_forward.6} parent=23 // pred_fallthru
        _
    $region24: #{shapes_cbm_forward.6} parent=5 // pred_fallthru
      _
    %p136 = scmp.le.s32.totalorder 1, %s9
    %p137 = scmp.lt.s32.totalorder %s9, 3
    %p138 = pnand %p136, %p137
    %p139 = pneg %p138
    // Predicated region
    $region29: #{shapes_cbm_forward.6} parent=5 // pred_check
      _
    $region30: #{shapes_cbm_forward.6} parent=5 // pred_check_branch
      %141 = sbr.rel (%p138) target = $region32
    $region31: #{shapes_cbm_forward.6} parent=5 // pred_region
      %s142 = ssub.s32 %s9, 1
      %p143 = scmp.lt.s32.totalorder %s14, 1
      %s144 = scalar_select %p143, %s14, 1
      %s145 = smul.addr %s144, 10
      %s146 = smul.addr %s145, 8
      %s147 = scalar_lea.vmem %s0, %s146
      %p148 = pneg %p35
      %p149 = pneg %p32
      %p150 = pneg %p56
      %p151 = pneg %p53
      %p152 = pneg %p77
      %p153 = pneg %p74
      %p154 = pneg %p103
      %p155 = pneg %p100
      %p156 = scmp.lt.s32.totalorder %s14, 1
      %s157 = scalar_select %p156, %s14, 1
      %s158 = smul.addr %s157, 2
      %s159 = smul.addr %s158, 8
      %s160 = scalar_lea.vmem %s3, %s159
      %p161 = scmp.lt.s32.totalorder %s14, 1
      %s162 = scalar_select %p161, %s14, 1
      %s163 = smul.addr %s162, 10
      %s164 = smul.addr %s163, 8
      %s165 = scalar_lea.vmem %s0, %s164
      %p166 = scmp.lt.s32.totalorder %s14, 1
      %s167 = scalar_select %p166, %s14, 1
      %s168 = smul.addr %s167, 2
      %s169 = smul.addr %s168, 8
      %s170 = scalar_lea.vmem %s3, %s169
      %v171 = vld [vmem:[%s165] sm:$0xff]
      %v172 = vld [vmem:[%s165 + $0x8] sm:$0xff]
      %v173 = vld [vmem:[%s165 + $0x10] sm:$0xff]
      %v174 = vld [vmem:[%s165 + $0x18] sm:$0xff]
      %v175 = vld [vmem:[%s165 + $0x20] sm:$0xff]
      %v176 = vld [vmem:[%s1] sm:$0xff]
      %v177 = vld [vmem:[%s1 + $0x8] sm:$0xff]
      %v178 = vld [vmem:[%s1 + $0x10] sm:$0xff]
      %v179 = vld [vmem:[%s1 + $0x18] sm:$0xff]
      %v180 = vld [vmem:[%s1 + $0x20] sm:$0xff]
      %v181 = vld [vmem:[%s1 + $0x28] sm:$0xff]
      %v182 = vld [vmem:[%s1 + $0x30] sm:$0xff]
      %v183 = vld [vmem:[%s1 + $0x38] sm:$0xff]
      %v184 = vld [vmem:[%s1 + $0x40] sm:$0xff]
      %v185 = vld [vmem:[%s1 + $0x48] sm:$0xff]
      %v186 = vld [vmem:[%s1 + $0x50] sm:$0xff]
      %v187 = vld [vmem:[%s1 + $0x58] sm:$0xff]
      %v188 = vld [vmem:[%s1 + $0x60] sm:$0xff]
      %v189 = vld [vmem:[%s1 + $0x68] sm:$0xff]
      %v190 = vld [vmem:[%s1 + $0x70] sm:$0xff]
      %v191 = vld [vmem:[%s1 + $0x78] sm:$0xff]
      %v192 = vld [vmem:[%s1 + $0x80] sm:$0xff]
      %v193 = vld [vmem:[%s1 + $0x88] sm:$0xff]
      %v194 = vld [vmem:[%s1 + $0x90] sm:$0xff]
      %v195 = vld [vmem:[%s1 + $0x98] sm:$0xff]
      %v196 = vld [vmem:[%s1 + $0xa0] sm:$0xff]
      %v197 = vld [vmem:[%s1 + $0xa8] sm:$0xff]
      %v198 = vld [vmem:[%s1 + $0xb0] sm:$0xff]
      %v199 = vld [vmem:[%s1 + $0xb8] sm:$0xff]
      %v200 = vld [vmem:[%s1 + $0xc0] sm:$0xff]
      %v201 = vld [vmem:[%s1 + $0xc8] sm:$0xff]
      %v202 = vld [vmem:[%s1 + $0xd0] sm:$0xff]
      %v203 = vld [vmem:[%s1 + $0xd8] sm:$0xff]
      %v204 = vld [vmem:[%s1 + $0xe0] sm:$0xff]
      %v205 = vld [vmem:[%s1 + $0xe8] sm:$0xff]
      %v206 = vld [vmem:[%s1 + $0xf0] sm:$0xff]
      %v207 = vld [vmem:[%s1 + $0xf8] sm:$0xff]
      %v208 = vld [vmem:[%s1 + $0x100] sm:$0xff]
      %v209 = vld [vmem:[%s1 + $0x108] sm:$0xff]
      %v210 = vld [vmem:[%s1 + $0x110] sm:$0xff]
      %v211 = vld [vmem:[%s1 + $0x118] sm:$0xff]
      %v212 = vld [vmem:[%s1 + $0x120] sm:$0xff]
      %v213 = vld [vmem:[%s1 + $0x128] sm:$0xff]
      %v214 = vld [vmem:[%s1 + $0x130] sm:$0xff]
      %v215 = vld [vmem:[%s1 + $0x138] sm:$0xff]
      %v216 = vld [vmem:[%s1 + $0x140] sm:$0xff]
      %v217 = vld [vmem:[%s1 + $0x148] sm:$0xff]
      %v218 = vld [vmem:[%s1 + $0x150] sm:$0xff]
      %v219 = vld [vmem:[%s1 + $0x158] sm:$0xff]
      %v220 = vld [vmem:[%s1 + $0x160] sm:$0xff]
      %v221 = vld [vmem:[%s1 + $0x168] sm:$0xff]
      %v222 = vld [vmem:[%s1 + $0x170] sm:$0xff]
      %v223 = vld [vmem:[%s1 + $0x178] sm:$0xff]
      %v224 = vld [vmem:[%s1 + $0x180] sm:$0xff]
      %v225 = vld [vmem:[%s1 + $0x188] sm:$0xff]
      %v226 = vld [vmem:[%s1 + $0x190] sm:$0xff]
      %v227 = vld [vmem:[%s1 + $0x198] sm:$0xff]
      %v228 = vld [vmem:[%s1 + $0x1a0] sm:$0xff]
      %v229 = vld [vmem:[%s1 + $0x1a8] sm:$0xff]
      %v230 = vld [vmem:[%s1 + $0x1b0] sm:$0xff]
      %v231 = vld [vmem:[%s1 + $0x1b8] sm:$0xff]
      %v232 = vld [vmem:[%s1 + $0x1c0] sm:$0xff]
      %v233 = vld [vmem:[%s1 + $0x1c8] sm:$0xff]
      %v234 = vld [vmem:[%s1 + $0x1d0] sm:$0xff]
      %v235 = vld [vmem:[%s1 + $0x1d8] sm:$0xff]
      %v236 = vld [vmem:[%s1 + $0x1e0] sm:$0xff]
      %v237 = vld [vmem:[%s1 + $0x1e8] sm:$0xff]
      %v238 = vld [vmem:[%s1 + $0x1f0] sm:$0xff]
      %v239 = vld [vmem:[%s1 + $0x1f8] sm:$0xff]
      %v240 = vld [vmem:[%s1 + $0x200] sm:$0xff]
      %v241 = vld [vmem:[%s1 + $0x208] sm:$0xff]
      %v242 = vld [vmem:[%s1 + $0x210] sm:$0xff]
      %v243 = vld [vmem:[%s1 + $0x218] sm:$0xff]
      %v244 = vld [vmem:[%s1 + $0x220] sm:$0xff]
      %v245 = vld [vmem:[%s1 + $0x228] sm:$0xff]
      %v246 = vld [vmem:[%s1 + $0x230] sm:$0xff]
      %v247 = vld [vmem:[%s1 + $0x238] sm:$0xff]
      %v248 = vld [vmem:[%s1 + $0x240] sm:$0xff]
      %v249 = vld [vmem:[%s1 + $0x248] sm:$0xff]
      %v250 = vld [vmem:[%s1 + $0x250] sm:$0xff]
      %v251 = vld [vmem:[%s1 + $0x258] sm:$0xff]
      %v252 = vld [vmem:[%s1 + $0x260] sm:$0xff]
      %v253 = vld [vmem:[%s1 + $0x268] sm:$0xff]
      %v254 = vld [vmem:[%s1 + $0x270] sm:$0xff]
      %v255 = vld [vmem:[%s1 + $0x278] sm:$0xff]
      %v256 = vld [vmem:[%s1 + $0x280] sm:$0xff]
      %v257 = vld [vmem:[%s1 + $0x288] sm:$0xff]
      %v258 = vld [vmem:[%s1 + $0x290] sm:$0xff]
      %v259 = vld [vmem:[%s1 + $0x298] sm:$0xff]
      %v260 = vld [vmem:[%s1 + $0x2a0] sm:$0xff]
      %v261 = vld [vmem:[%s1 + $0x2a8] sm:$0xff]
      %v262 = vld [vmem:[%s1 + $0x2b0] sm:$0xff]
      %v263 = vld [vmem:[%s1 + $0x2b8] sm:$0xff]
      %v264 = vld [vmem:[%s1 + $0x2c0] sm:$0xff]
      %v265 = vld [vmem:[%s1 + $0x2c8] sm:$0xff]
      %v266 = vld [vmem:[%s1 + $0x2d0] sm:$0xff]
      %v267 = vld [vmem:[%s1 + $0x2d8] sm:$0xff]
      %v268 = vld [vmem:[%s1 + $0x2e0] sm:$0xff]
      %v269 = vld [vmem:[%s1 + $0x2e8] sm:$0xff]
      %v270 = vld [vmem:[%s1 + $0x2f0] sm:$0xff]
      %v271 = vld [vmem:[%s1 + $0x2f8] sm:$0xff]
      %v272 = vld [vmem:[%s1 + $0x300] sm:$0xff]
      %v273 = vld [vmem:[%s1 + $0x308] sm:$0xff]
      %v274 = vld [vmem:[%s1 + $0x310] sm:$0xff]
      %v275 = vld [vmem:[%s1 + $0x318] sm:$0xff]
      %v276 = vld [vmem:[%s1 + $0x320] sm:$0xff]
      %v277 = vld [vmem:[%s1 + $0x328] sm:$0xff]
      %v278 = vld [vmem:[%s1 + $0x330] sm:$0xff]
      %v279 = vld [vmem:[%s1 + $0x338] sm:$0xff]
      %v280 = vld [vmem:[%s1 + $0x340] sm:$0xff]
      %v281 = vld [vmem:[%s1 + $0x348] sm:$0xff]
      %v282 = vld [vmem:[%s1 + $0x350] sm:$0xff]
      %v283 = vld [vmem:[%s1 + $0x358] sm:$0xff]
      %v284 = vld [vmem:[%s1 + $0x360] sm:$0xff]
      %v285 = vld [vmem:[%s1 + $0x368] sm:$0xff]
      %v286 = vld [vmem:[%s1 + $0x370] sm:$0xff]
      %v287 = vld [vmem:[%s1 + $0x378] sm:$0xff]
      %v288 = vld [vmem:[%s1 + $0x380] sm:$0xff]
      %v289 = vld [vmem:[%s1 + $0x388] sm:$0xff]
      %v290 = vld [vmem:[%s1 + $0x390] sm:$0xff]
      %v291 = vld [vmem:[%s1 + $0x398] sm:$0xff]
      %v292 = vld [vmem:[%s1 + $0x3a0] sm:$0xff]
      %v293 = vld [vmem:[%s1 + $0x3a8] sm:$0xff]
      %v294 = vld [vmem:[%s1 + $0x3b0] sm:$0xff]
      %v295 = vld [vmem:[%s1 + $0x3b8] sm:$0xff]
      %v296 = vld [vmem:[%s1 + $0x3c0] sm:$0xff]
      %v297 = vld [vmem:[%s1 + $0x3c8] sm:$0xff]
      %v298 = vld [vmem:[%s1 + $0x3d0] sm:$0xff]
      %v299 = vld [vmem:[%s1 + $0x3d8] sm:$0xff]
      %v300 = vld [vmem:[%s1 + $0x3e0] sm:$0xff]
      %v301 = vld [vmem:[%s1 + $0x3e8] sm:$0xff]
      %v302 = vld [vmem:[%s1 + $0x3f0] sm:$0xff]
      %v303 = vld [vmem:[%s1 + $0x3f8] sm:$0xff]
      %v304 = vld [vmem:[%s1 + $0x400] sm:$0xff]
      %v305 = vld [vmem:[%s1 + $0x408] sm:$0xff]
      %v306 = vld [vmem:[%s1 + $0x410] sm:$0xff]
      %v307 = vld [vmem:[%s1 + $0x418] sm:$0xff]
      %v308 = vld [vmem:[%s1 + $0x420] sm:$0xff]
      %v309 = vld [vmem:[%s1 + $0x428] sm:$0xff]
      %v310 = vld [vmem:[%s1 + $0x430] sm:$0xff]
      %v311 = vld [vmem:[%s1 + $0x438] sm:$0xff]
      %v312 = vld [vmem:[%s1 + $0x440] sm:$0xff]
      %v313 = vld [vmem:[%s1 + $0x448] sm:$0xff]
      %v314 = vld [vmem:[%s1 + $0x450] sm:$0xff]
      %v315 = vld [vmem:[%s1 + $0x458] sm:$0xff]
      %v316 = vld [vmem:[%s1 + $0x460] sm:$0xff]
      %v317 = vld [vmem:[%s1 + $0x468] sm:$0xff]
      %v318 = vld [vmem:[%s1 + $0x470] sm:$0xff]
      %v319 = vld [vmem:[%s1 + $0x478] sm:$0xff]
      %v320 = vld [vmem:[%s1 + $0x480] sm:$0xff]
      %v321 = vld [vmem:[%s1 + $0x488] sm:$0xff]
      %v322 = vld [vmem:[%s1 + $0x490] sm:$0xff]
      %v323 = vld [vmem:[%s1 + $0x498] sm:$0xff]
      %v324 = vld [vmem:[%s1 + $0x4a0] sm:$0xff]
      %v325 = vld [vmem:[%s1 + $0x4a8] sm:$0xff]
      %v326 = vld [vmem:[%s1 + $0x4b0] sm:$0xff]
      %v327 = vld [vmem:[%s1 + $0x4b8] sm:$0xff]
      %v328 = vld [vmem:[%s1 + $0x4c0] sm:$0xff]
      %v329 = vld [vmem:[%s1 + $0x4c8] sm:$0xff]
      %v330 = vld [vmem:[%s1 + $0x4d0] sm:$0xff]
      %v331 = vld [vmem:[%s1 + $0x4d8] sm:$0xff]
      %v332 = vld [vmem:[%s1 + $0x4e0] sm:$0xff]
      %v333 = vld [vmem:[%s1 + $0x4e8] sm:$0xff]
      %v334 = vld [vmem:[%s1 + $0x4f0] sm:$0xff]
      %v335 = vld [vmem:[%s1 + $0x4f8] sm:$0xff]
      %v336 = vld [vmem:[%s1 + $0x500] sm:$0xff]
      %v337 = vld [vmem:[%s1 + $0x508] sm:$0xff]
      %v338 = vld [vmem:[%s1 + $0x510] sm:$0xff]
      %v339 = vld [vmem:[%s1 + $0x518] sm:$0xff]
      %v340 = vld [vmem:[%s1 + $0x520] sm:$0xff]
      %v341 = vld [vmem:[%s1 + $0x528] sm:$0xff]
      %v342 = vld [vmem:[%s1 + $0x530] sm:$0xff]
      %v343 = vld [vmem:[%s1 + $0x538] sm:$0xff]
      %v344 = vld [vmem:[%s1 + $0x540] sm:$0xff]
      %v345 = vld [vmem:[%s1 + $0x548] sm:$0xff]
      %v346 = vld [vmem:[%s1 + $0x550] sm:$0xff]
      %v347 = vld [vmem:[%s1 + $0x558] sm:$0xff]
      %v348 = vld [vmem:[%s1 + $0x560] sm:$0xff]
      %v349 = vld [vmem:[%s1 + $0x568] sm:$0xff]
      %v350 = vld [vmem:[%s1 + $0x570] sm:$0xff]
      %v351 = vld [vmem:[%s1 + $0x578] sm:$0xff]
      %v352 = vld [vmem:[%s1 + $0x580] sm:$0xff]
      %v353 = vld [vmem:[%s1 + $0x588] sm:$0xff]
      %v354 = vld [vmem:[%s1 + $0x590] sm:$0xff]
      %v355 = vld [vmem:[%s1 + $0x598] sm:$0xff]
      %v356 = vld [vmem:[%s1 + $0x5a0] sm:$0xff]
      %v357 = vld [vmem:[%s1 + $0x5a8] sm:$0xff]
      %v358 = vld [vmem:[%s1 + $0x5b0] sm:$0xff]
      %v359 = vld [vmem:[%s1 + $0x5b8] sm:$0xff]
      %v360 = vld [vmem:[%s1 + $0x5c0] sm:$0xff]
      %v361 = vld [vmem:[%s1 + $0x5c8] sm:$0xff]
      %v362 = vld [vmem:[%s1 + $0x5d0] sm:$0xff]
      %v363 = vld [vmem:[%s1 + $0x5d8] sm:$0xff]
      %v364 = vld [vmem:[%s1 + $0x5e0] sm:$0xff]
      %v365 = vld [vmem:[%s1 + $0x5e8] sm:$0xff]
      %v366 = vld [vmem:[%s1 + $0x5f0] sm:$0xff]
      %v367 = vld [vmem:[%s1 + $0x5f8] sm:$0xff]
      %v368 = vld [vmem:[%s1 + $0x600] sm:$0xff]
      %v369 = vld [vmem:[%s1 + $0x608] sm:$0xff]
      %v370 = vld [vmem:[%s1 + $0x610] sm:$0xff]
      %v371 = vld [vmem:[%s1 + $0x618] sm:$0xff]
      %v372 = vld [vmem:[%s1 + $0x620] sm:$0xff]
      %v373 = vld [vmem:[%s1 + $0x628] sm:$0xff]
      %v374 = vld [vmem:[%s1 + $0x630] sm:$0xff]
      %v375 = vld [vmem:[%s1 + $0x638] sm:$0xff]
      %v376 = vld [vmem:[%s1 + $0x640] sm:$0xff]
      %v377 = vld [vmem:[%s1 + $0x648] sm:$0xff]
      %v378 = vld [vmem:[%s1 + $0x650] sm:$0xff]
      %v379 = vld [vmem:[%s1 + $0x658] sm:$0xff]
      %v380 = vld [vmem:[%s1 + $0x660] sm:$0xff]
      %v381 = vld [vmem:[%s1 + $0x668] sm:$0xff]
      %v382 = vld [vmem:[%s1 + $0x670] sm:$0xff]
      %v383 = vld [vmem:[%s1 + $0x678] sm:$0xff]
      %v384 = vld [vmem:[%s1 + $0x680] sm:$0xff]
      %v385 = vld [vmem:[%s1 + $0x688] sm:$0xff]
      %v386 = vld [vmem:[%s1 + $0x690] sm:$0xff]
      %v387 = vld [vmem:[%s1 + $0x698] sm:$0xff]
      %v388 = vld [vmem:[%s1 + $0x6a0] sm:$0xff]
      %v389 = vld [vmem:[%s1 + $0x6a8] sm:$0xff]
      %v390 = vld [vmem:[%s1 + $0x6b0] sm:$0xff]
      %v391 = vld [vmem:[%s1 + $0x6b8] sm:$0xff]
      %v392 = vld [vmem:[%s1 + $0x6c0] sm:$0xff]
      %v393 = vld [vmem:[%s1 + $0x6c8] sm:$0xff]
      %v394 = vld [vmem:[%s1 + $0x6d0] sm:$0xff]
      %v395 = vld [vmem:[%s1 + $0x6d8] sm:$0xff]
      %v396 = vld [vmem:[%s1 + $0x6e0] sm:$0xff]
      %v397 = vld [vmem:[%s1 + $0x6e8] sm:$0xff]
      %v398 = vld [vmem:[%s1 + $0x6f0] sm:$0xff]
      %v399 = vld [vmem:[%s1 + $0x6f8] sm:$0xff]
      %v400 = vld [vmem:[%s1 + $0x700] sm:$0xff]
      %v401 = vld [vmem:[%s1 + $0x708] sm:$0xff]
      %v402 = vld [vmem:[%s1 + $0x710] sm:$0xff]
      %v403 = vld [vmem:[%s1 + $0x718] sm:$0xff]
      %v404 = vld [vmem:[%s1 + $0x720] sm:$0xff]
      %v405 = vld [vmem:[%s1 + $0x728] sm:$0xff]
      %v406 = vld [vmem:[%s1 + $0x730] sm:$0xff]
      %v407 = vld [vmem:[%s1 + $0x738] sm:$0xff]
      %v408 = vld [vmem:[%s1 + $0x740] sm:$0xff]
      %v409 = vld [vmem:[%s1 + $0x748] sm:$0xff]
      %v410 = vld [vmem:[%s1 + $0x750] sm:$0xff]
      %v411 = vld [vmem:[%s1 + $0x758] sm:$0xff]
      %v412 = vld [vmem:[%s1 + $0x760] sm:$0xff]
      %v413 = vld [vmem:[%s1 + $0x768] sm:$0xff]
      %v414 = vld [vmem:[%s1 + $0x770] sm:$0xff]
      %v415 = vld [vmem:[%s1 + $0x778] sm:$0xff]
      %v416 = vld [vmem:[%s1 + $0x780] sm:$0xff]
      %v417 = vld [vmem:[%s1 + $0x788] sm:$0xff]
      %v418 = vld [vmem:[%s1 + $0x790] sm:$0xff]
      %v419 = vld [vmem:[%s1 + $0x798] sm:$0xff]
      %v420 = vld [vmem:[%s1 + $0x7a0] sm:$0xff]
      %v421 = vld [vmem:[%s1 + $0x7a8] sm:$0xff]
      %v422 = vld [vmem:[%s1 + $0x7b0] sm:$0xff]
      %v423 = vld [vmem:[%s1 + $0x7b8] sm:$0xff]
      %v424 = vld [vmem:[%s1 + $0x7c0] sm:$0xff]
      %v425 = vld [vmem:[%s1 + $0x7c8] sm:$0xff]
      %v426 = vld [vmem:[%s1 + $0x7d0] sm:$0xff]
      %v427 = vld [vmem:[%s1 + $0x7d8] sm:$0xff]
      %v428 = vld [vmem:[%s1 + $0x7e0] sm:$0xff]
      %v429 = vld [vmem:[%s1 + $0x7e8] sm:$0xff]
      %v430 = vld [vmem:[%s1 + $0x7f0] sm:$0xff]
      %v431 = vld [vmem:[%s1 + $0x7f8] sm:$0xff]
      %v432 = vld [vmem:[%s1 + $0x800] sm:$0xff]
      %v433 = vld [vmem:[%s1 + $0x808] sm:$0xff]
      %v434 = vld [vmem:[%s1 + $0x810] sm:$0xff]
      %v435 = vld [vmem:[%s1 + $0x818] sm:$0xff]
      %v436 = vld [vmem:[%s1 + $0x820] sm:$0xff]
      %v437 = vld [vmem:[%s1 + $0x828] sm:$0xff]
      %v438 = vld [vmem:[%s1 + $0x830] sm:$0xff]
      %v439 = vld [vmem:[%s1 + $0x838] sm:$0xff]
      %v440 = vld [vmem:[%s1 + $0x840] sm:$0xff]
      %v441 = vld [vmem:[%s1 + $0x848] sm:$0xff]
      %v442 = vld [vmem:[%s1 + $0x850] sm:$0xff]
      %v443 = vld [vmem:[%s1 + $0x858] sm:$0xff]
      %v444 = vld [vmem:[%s1 + $0x860] sm:$0xff]
      %v445 = vld [vmem:[%s1 + $0x868] sm:$0xff]
      %v446 = vld [vmem:[%s1 + $0x870] sm:$0xff]
      %v447 = vld [vmem:[%s1 + $0x878] sm:$0xff]
      %v448 = vld [vmem:[%s1 + $0x880] sm:$0xff]
      %v449 = vld [vmem:[%s1 + $0x888] sm:$0xff]
      %v450 = vld [vmem:[%s1 + $0x890] sm:$0xff]
      %v451 = vld [vmem:[%s1 + $0x898] sm:$0xff]
      %v452 = vld [vmem:[%s1 + $0x8a0] sm:$0xff]
      %v453 = vld [vmem:[%s1 + $0x8a8] sm:$0xff]
      %v454 = vld [vmem:[%s1 + $0x8b0] sm:$0xff]
      %v455 = vld [vmem:[%s1 + $0x8b8] sm:$0xff]
      %v456 = vld [vmem:[%s1 + $0x8c0] sm:$0xff]
      %v457 = vld [vmem:[%s1 + $0x8c8] sm:$0xff]
      %v458 = vld [vmem:[%s1 + $0x8d0] sm:$0xff]
      %v459 = vld [vmem:[%s1 + $0x8d8] sm:$0xff]
      %v460 = vld [vmem:[%s1 + $0x8e0] sm:$0xff]
      %v461 = vld [vmem:[%s1 + $0x8e8] sm:$0xff]
      %v462 = vld [vmem:[%s1 + $0x8f0] sm:$0xff]
      %v463 = vld [vmem:[%s1 + $0x8f8] sm:$0xff]
      %v464 = vld [vmem:[%s1 + $0x900] sm:$0xff]
      %v465 = vld [vmem:[%s1 + $0x908] sm:$0xff]
      %v466 = vld [vmem:[%s1 + $0x910] sm:$0xff]
      %v467 = vld [vmem:[%s1 + $0x918] sm:$0xff]
      %v468 = vld [vmem:[%s1 + $0x920] sm:$0xff]
      %v469 = vld [vmem:[%s1 + $0x928] sm:$0xff]
      %v470 = vld [vmem:[%s1 + $0x930] sm:$0xff]
      %v471 = vld [vmem:[%s1 + $0x938] sm:$0xff]
      %v472 = vld [vmem:[%s1 + $0x940] sm:$0xff]
      %v473 = vld [vmem:[%s1 + $0x948] sm:$0xff]
      %v474 = vld [vmem:[%s1 + $0x950] sm:$0xff]
      %v475 = vld [vmem:[%s1 + $0x958] sm:$0xff]
      %v476 = vld [vmem:[%s1 + $0x960] sm:$0xff]
      %v477 = vld [vmem:[%s1 + $0x968] sm:$0xff]
      %v478 = vld [vmem:[%s1 + $0x970] sm:$0xff]
      %v479 = vld [vmem:[%s1 + $0x978] sm:$0xff]
      %v480 = vld [vmem:[%s1 + $0x980] sm:$0xff]
      %v481 = vld [vmem:[%s1 + $0x988] sm:$0xff]
      %v482 = vld [vmem:[%s1 + $0x990] sm:$0xff]
      %v483 = vld [vmem:[%s1 + $0x998] sm:$0xff]
      %v484 = vld [vmem:[%s1 + $0x9a0] sm:$0xff]
      %v485 = vld [vmem:[%s1 + $0x9a8] sm:$0xff]
      %v486 = vld [vmem:[%s1 + $0x9b0] sm:$0xff]
      %v487 = vld [vmem:[%s1 + $0x9b8] sm:$0xff]
      %v488 = vld [vmem:[%s1 + $0x9c0] sm:$0xff]
      %v489 = vld [vmem:[%s1 + $0x9c8] sm:$0xff]
      %v490 = vld [vmem:[%s1 + $0x9d0] sm:$0xff]
      %v491 = vld [vmem:[%s1 + $0x9d8] sm:$0xff]
      %v492 = vld [vmem:[%s1 + $0x9e0] sm:$0xff]
      %v493 = vld [vmem:[%s1 + $0x9e8] sm:$0xff]
      %v494 = vld [vmem:[%s1 + $0x9f0] sm:$0xff]
      %v495 = vld [vmem:[%s1 + $0x9f8] sm:$0xff]
      %v496 = vld [vmem:[%s1 + $0xa00] sm:$0xff]
      %v497 = vld [vmem:[%s1 + $0xa08] sm:$0xff]
      %v498 = vld [vmem:[%s1 + $0xa10] sm:$0xff]
      %v499 = vld [vmem:[%s1 + $0xa18] sm:$0xff]
      %v500 = vld [vmem:[%s1 + $0xa20] sm:$0xff]
      %v501 = vld [vmem:[%s1 + $0xa28] sm:$0xff]
      %v502 = vld [vmem:[%s1 + $0xa30] sm:$0xff]
      %v503 = vld [vmem:[%s1 + $0xa38] sm:$0xff]
      %v504 = vld [vmem:[%s1 + $0xa40] sm:$0xff]
      %v505 = vld [vmem:[%s1 + $0xa48] sm:$0xff]
      %v506 = vld [vmem:[%s1 + $0xa50] sm:$0xff]
      %v507 = vld [vmem:[%s1 + $0xa58] sm:$0xff]
      %v508 = vld [vmem:[%s1 + $0xa60] sm:$0xff]
      %v509 = vld [vmem:[%s1 + $0xa68] sm:$0xff]
      %v510 = vld [vmem:[%s1 + $0xa70] sm:$0xff]
      %v511 = vld [vmem:[%s1 + $0xa78] sm:$0xff]
      %v512 = vld [vmem:[%s1 + $0xa80] sm:$0xff]
      %v513 = vld [vmem:[%s1 + $0xa88] sm:$0xff]
      %v514 = vld [vmem:[%s1 + $0xa90] sm:$0xff]
      %v515 = vld [vmem:[%s1 + $0xa98] sm:$0xff]
      %v516 = vld [vmem:[%s1 + $0xaa0] sm:$0xff]
      %v517 = vld [vmem:[%s1 + $0xaa8] sm:$0xff]
      %v518 = vld [vmem:[%s1 + $0xab0] sm:$0xff]
      %v519 = vld [vmem:[%s1 + $0xab8] sm:$0xff]
      %v520 = vld [vmem:[%s1 + $0xac0] sm:$0xff]
      %v521 = vld [vmem:[%s1 + $0xac8] sm:$0xff]
      %v522 = vld [vmem:[%s1 + $0xad0] sm:$0xff]
      %v523 = vld [vmem:[%s1 + $0xad8] sm:$0xff]
      %v524 = vld [vmem:[%s1 + $0xae0] sm:$0xff]
      %v525 = vld [vmem:[%s1 + $0xae8] sm:$0xff]
      %v526 = vld [vmem:[%s1 + $0xaf0] sm:$0xff]
      %v527 = vld [vmem:[%s1 + $0xaf8] sm:$0xff]
      %v528 = vld [vmem:[%s1 + $0xb00] sm:$0xff]
      %v529 = vld [vmem:[%s1 + $0xb08] sm:$0xff]
      %v530 = vld [vmem:[%s1 + $0xb10] sm:$0xff]
      %v531 = vld [vmem:[%s1 + $0xb18] sm:$0xff]
      %v532 = vld [vmem:[%s1 + $0xb20] sm:$0xff]
      %v533 = vld [vmem:[%s1 + $0xb28] sm:$0xff]
      %v534 = vld [vmem:[%s1 + $0xb30] sm:$0xff]
      %v535 = vld [vmem:[%s1 + $0xb38] sm:$0xff]
      %v536 = vld [vmem:[%s1 + $0xb40] sm:$0xff]
      %v537 = vld [vmem:[%s1 + $0xb48] sm:$0xff]
      %v538 = vld [vmem:[%s1 + $0xb50] sm:$0xff]
      %v539 = vld [vmem:[%s1 + $0xb58] sm:$0xff]
      %v540 = vld [vmem:[%s1 + $0xb60] sm:$0xff]
      %v541 = vld [vmem:[%s1 + $0xb68] sm:$0xff]
      %v542 = vld [vmem:[%s1 + $0xb70] sm:$0xff]
      %v543 = vld [vmem:[%s1 + $0xb78] sm:$0xff]
      %v544 = vld [vmem:[%s1 + $0xb80] sm:$0xff]
      %v545 = vld [vmem:[%s1 + $0xb88] sm:$0xff]
      %v546 = vld [vmem:[%s1 + $0xb90] sm:$0xff]
      %v547 = vld [vmem:[%s1 + $0xb98] sm:$0xff]
      %v548 = vld [vmem:[%s1 + $0xba0] sm:$0xff]
      %v549 = vld [vmem:[%s1 + $0xba8] sm:$0xff]
      %v550 = vld [vmem:[%s1 + $0xbb0] sm:$0xff]
      %v551 = vld [vmem:[%s1 + $0xbb8] sm:$0xff]
      %v552 = vld [vmem:[%s1 + $0xbc0] sm:$0xff]
      %v553 = vld [vmem:[%s1 + $0xbc8] sm:$0xff]
      %v554 = vld [vmem:[%s1 + $0xbd0] sm:$0xff]
      %v555 = vld [vmem:[%s1 + $0xbd8] sm:$0xff]
      %v556 = vld [vmem:[%s1 + $0xbe0] sm:$0xff]
      %v557 = vld [vmem:[%s1 + $0xbe8] sm:$0xff]
      %v558 = vld [vmem:[%s1 + $0xbf0] sm:$0xff]
      %v559 = vld [vmem:[%s1 + $0xbf8] sm:$0xff]
      %v560 = vld [vmem:[%s1 + $0xc00] sm:$0xff]
      %v561 = vld [vmem:[%s1 + $0xc08] sm:$0xff]
      %v562 = vld [vmem:[%s1 + $0xc10] sm:$0xff]
      %v563 = vld [vmem:[%s1 + $0xc18] sm:$0xff]
      %v564 = vld [vmem:[%s1 + $0xc20] sm:$0xff]
      %v565 = vld [vmem:[%s1 + $0xc28] sm:$0xff]
      %v566 = vld [vmem:[%s1 + $0xc30] sm:$0xff]
      %v567 = vld [vmem:[%s1 + $0xc38] sm:$0xff]
      %v568 = vld [vmem:[%s1 + $0xc40] sm:$0xff]
      %v569 = vld [vmem:[%s1 + $0xc48] sm:$0xff]
      %v570 = vld [vmem:[%s1 + $0xc50] sm:$0xff]
      %v571 = vld [vmem:[%s1 + $0xc58] sm:$0xff]
      %v572 = vld [vmem:[%s1 + $0xc60] sm:$0xff]
      %v573 = vld [vmem:[%s1 + $0xc68] sm:$0xff]
      %v574 = vld [vmem:[%s1 + $0xc70] sm:$0xff]
      %v575 = vld [vmem:[%s1 + $0xc78] sm:$0xff]
      %v576 = vld [vmem:[%s1 + $0xc80] sm:$0xff]
      %v577 = vld [vmem:[%s1 + $0xc88] sm:$0xff]
      %v578 = vld [vmem:[%s1 + $0xc90] sm:$0xff]
      %v579 = vld [vmem:[%s1 + $0xc98] sm:$0xff]
      %v580 = vld [vmem:[%s1 + $0xca0] sm:$0xff]
      %v581 = vld [vmem:[%s1 + $0xca8] sm:$0xff]
      %v582 = vld [vmem:[%s1 + $0xcb0] sm:$0xff]
      %v583 = vld [vmem:[%s1 + $0xcb8] sm:$0xff]
      %v584 = vld [vmem:[%s1 + $0xcc0] sm:$0xff]
      %v585 = vld [vmem:[%s1 + $0xcc8] sm:$0xff]
      %v586 = vld [vmem:[%s1 + $0xcd0] sm:$0xff]
      %v587 = vld [vmem:[%s1 + $0xcd8] sm:$0xff]
      %v588 = vld [vmem:[%s1 + $0xce0] sm:$0xff]
      %v589 = vld [vmem:[%s1 + $0xce8] sm:$0xff]
      %v590 = vld [vmem:[%s1 + $0xcf0] sm:$0xff]
      %v591 = vld [vmem:[%s1 + $0xcf8] sm:$0xff]
      %v592 = vld [vmem:[%s1 + $0xd00] sm:$0xff]
      %v593 = vld [vmem:[%s1 + $0xd08] sm:$0xff]
      %v594 = vld [vmem:[%s1 + $0xd10] sm:$0xff]
      %v595 = vld [vmem:[%s1 + $0xd18] sm:$0xff]
      %v596 = vld [vmem:[%s1 + $0xd20] sm:$0xff]
      %v597 = vld [vmem:[%s1 + $0xd28] sm:$0xff]
      %v598 = vld [vmem:[%s1 + $0xd30] sm:$0xff]
      %v599 = vld [vmem:[%s1 + $0xd38] sm:$0xff]
      %v600 = vld [vmem:[%s1 + $0xd40] sm:$0xff]
      %v601 = vld [vmem:[%s1 + $0xd48] sm:$0xff]
      %v602 = vld [vmem:[%s1 + $0xd50] sm:$0xff]
      %v603 = vld [vmem:[%s1 + $0xd58] sm:$0xff]
      %v604 = vld [vmem:[%s1 + $0xd60] sm:$0xff]
      %v605 = vld [vmem:[%s1 + $0xd68] sm:$0xff]
      %v606 = vld [vmem:[%s1 + $0xd70] sm:$0xff]
      %v607 = vld [vmem:[%s1 + $0xd78] sm:$0xff]
      %v608 = vld [vmem:[%s1 + $0xd80] sm:$0xff]
      %v609 = vld [vmem:[%s1 + $0xd88] sm:$0xff]
      %v610 = vld [vmem:[%s1 + $0xd90] sm:$0xff]
      %v611 = vld [vmem:[%s1 + $0xd98] sm:$0xff]
      %v612 = vld [vmem:[%s1 + $0xda0] sm:$0xff]
      %v613 = vld [vmem:[%s1 + $0xda8] sm:$0xff]
      %v614 = vld [vmem:[%s1 + $0xdb0] sm:$0xff]
      %v615 = vld [vmem:[%s1 + $0xdb8] sm:$0xff]
      %v616 = vld [vmem:[%s1 + $0xdc0] sm:$0xff]
      %v617 = vld [vmem:[%s1 + $0xdc8] sm:$0xff]
      %v618 = vld [vmem:[%s1 + $0xdd0] sm:$0xff]
      %v619 = vld [vmem:[%s1 + $0xdd8] sm:$0xff]
      %v620 = vld [vmem:[%s1 + $0xde0] sm:$0xff]
      %v621 = vld [vmem:[%s1 + $0xde8] sm:$0xff]
      %v622 = vld [vmem:[%s1 + $0xdf0] sm:$0xff]
      %v623 = vld [vmem:[%s1 + $0xdf8] sm:$0xff]
      %v624 = vld [vmem:[%s1 + $0xe00] sm:$0xff]
      %v625 = vld [vmem:[%s1 + $0xe08] sm:$0xff]
      %v626 = vld [vmem:[%s1 + $0xe10] sm:$0xff]
      %v627 = vld [vmem:[%s1 + $0xe18] sm:$0xff]
      %v628 = vld [vmem:[%s1 + $0xe20] sm:$0xff]
      %v629 = vld [vmem:[%s1 + $0xe28] sm:$0xff]
      %v630 = vld [vmem:[%s1 + $0xe30] sm:$0xff]
      %v631 = vld [vmem:[%s1 + $0xe38] sm:$0xff]
      %v632 = vld [vmem:[%s1 + $0xe40] sm:$0xff]
      %v633 = vld [vmem:[%s1 + $0xe48] sm:$0xff]
      %v634 = vld [vmem:[%s1 + $0xe50] sm:$0xff]
      %v635 = vld [vmem:[%s1 + $0xe58] sm:$0xff]
      %v636 = vld [vmem:[%s1 + $0xe60] sm:$0xff]
      %v637 = vld [vmem:[%s1 + $0xe68] sm:$0xff]
      %v638 = vld [vmem:[%s1 + $0xe70] sm:$0xff]
      %v639 = vld [vmem:[%s1 + $0xe78] sm:$0xff]
      %v640 = vld [vmem:[%s1 + $0xe80] sm:$0xff]
      %v641 = vld [vmem:[%s1 + $0xe88] sm:$0xff]
      %v642 = vld [vmem:[%s1 + $0xe90] sm:$0xff]
      %v643 = vld [vmem:[%s1 + $0xe98] sm:$0xff]
      %v644 = vld [vmem:[%s1 + $0xea0] sm:$0xff]
      %v645 = vld [vmem:[%s1 + $0xea8] sm:$0xff]
      %v646 = vld [vmem:[%s1 + $0xeb0] sm:$0xff]
      %v647 = vld [vmem:[%s1 + $0xeb8] sm:$0xff]
      %v648 = vld [vmem:[%s1 + $0xec0] sm:$0xff]
      %v649 = vld [vmem:[%s1 + $0xec8] sm:$0xff]
      %v650 = vld [vmem:[%s1 + $0xed0] sm:$0xff]
      %v651 = vld [vmem:[%s1 + $0xed8] sm:$0xff]
      %v652 = vld [vmem:[%s1 + $0xee0] sm:$0xff]
      %v653 = vld [vmem:[%s1 + $0xee8] sm:$0xff]
      %v654 = vld [vmem:[%s1 + $0xef0] sm:$0xff]
      %v655 = vld [vmem:[%s1 + $0xef8] sm:$0xff]
      %v656 = vld [vmem:[%s1 + $0xf00] sm:$0xff]
      %v657 = vld [vmem:[%s1 + $0xf08] sm:$0xff]
      %v658 = vld [vmem:[%s1 + $0xf10] sm:$0xff]
      %v659 = vld [vmem:[%s1 + $0xf18] sm:$0xff]
      %v660 = vld [vmem:[%s1 + $0xf20] sm:$0xff]
      %v661 = vld [vmem:[%s1 + $0xf28] sm:$0xff]
      %v662 = vld [vmem:[%s1 + $0xf30] sm:$0xff]
      %v663 = vld [vmem:[%s1 + $0xf38] sm:$0xff]
      %v664 = vld [vmem:[%s1 + $0xf40] sm:$0xff]
      %v665 = vld [vmem:[%s1 + $0xf48] sm:$0xff]
      %v666 = vld [vmem:[%s1 + $0xf50] sm:$0xff]
      %v667 = vld [vmem:[%s1 + $0xf58] sm:$0xff]
      %v668 = vld [vmem:[%s1 + $0xf60] sm:$0xff]
      %v669 = vld [vmem:[%s1 + $0xf68] sm:$0xff]
      %v670 = vld [vmem:[%s1 + $0xf70] sm:$0xff]
      %v671 = vld [vmem:[%s1 + $0xf78] sm:$0xff]
      %v672 = vld [vmem:[%s1 + $0xf80] sm:$0xff]
      %v673 = vld [vmem:[%s1 + $0xf88] sm:$0xff]
      %v674 = vld [vmem:[%s1 + $0xf90] sm:$0xff]
      %v675 = vld [vmem:[%s1 + $0xf98] sm:$0xff]
      %v676 = vld [vmem:[%s1 + $0xfa0] sm:$0xff]
      %v677 = vld [vmem:[%s1 + $0xfa8] sm:$0xff]
      %v678 = vld [vmem:[%s1 + $0xfb0] sm:$0xff]
      %v679 = vld [vmem:[%s1 + $0xfb8] sm:$0xff]
      %v680 = vld [vmem:[%s1 + $0xfc0] sm:$0xff]
      %v681 = vld [vmem:[%s1 + $0xfc8] sm:$0xff]
      %v682 = vld [vmem:[%s1 + $0xfd0] sm:$0xff]
      %v683 = vld [vmem:[%s1 + $0xfd8] sm:$0xff]
      %v684 = vld [vmem:[%s1 + $0xfe0] sm:$0xff]
      %v685 = vld [vmem:[%s1 + $0xfe8] sm:$0xff]
      %v686 = vld [vmem:[%s1 + $0xff0] sm:$0xff]
      %v687 = vld [vmem:[%s1 + $0xff8] sm:$0xff]
      %v688 = vld [vmem:[%s1 + $0x1000] sm:$0xff]
      %v689 = vld [vmem:[%s1 + $0x1008] sm:$0xff]
      %v690 = vld [vmem:[%s1 + $0x1010] sm:$0xff]
      %v691 = vld [vmem:[%s1 + $0x1018] sm:$0xff]
      %v692 = vld [vmem:[%s1 + $0x1020] sm:$0xff]
      %v693 = vld [vmem:[%s1 + $0x1028] sm:$0xff]
      %v694 = vld [vmem:[%s1 + $0x1030] sm:$0xff]
      %v695 = vld [vmem:[%s1 + $0x1038] sm:$0xff]
      %v696 = vld [vmem:[%s1 + $0x1040] sm:$0xff]
      %v697 = vld [vmem:[%s1 + $0x1048] sm:$0xff]
      %v698 = vld [vmem:[%s1 + $0x1050] sm:$0xff]
      %v699 = vld [vmem:[%s1 + $0x1058] sm:$0xff]
      %v700 = vld [vmem:[%s1 + $0x1060] sm:$0xff]
      %v701 = vld [vmem:[%s1 + $0x1068] sm:$0xff]
      %v702 = vld [vmem:[%s1 + $0x1070] sm:$0xff]
      %v703 = vld [vmem:[%s1 + $0x1078] sm:$0xff]
      %v704 = vld [vmem:[%s1 + $0x1080] sm:$0xff]
      %v705 = vld [vmem:[%s1 + $0x1088] sm:$0xff]
      %v706 = vld [vmem:[%s1 + $0x1090] sm:$0xff]
      %v707 = vld [vmem:[%s1 + $0x1098] sm:$0xff]
      %v708 = vld [vmem:[%s1 + $0x10a0] sm:$0xff]
      %v709 = vld [vmem:[%s1 + $0x10a8] sm:$0xff]
      %v710 = vld [vmem:[%s1 + $0x10b0] sm:$0xff]
      %v711 = vld [vmem:[%s1 + $0x10b8] sm:$0xff]
      %v712 = vld [vmem:[%s1 + $0x10c0] sm:$0xff]
      %v713 = vld [vmem:[%s1 + $0x10c8] sm:$0xff]
      %v714 = vld [vmem:[%s1 + $0x10d0] sm:$0xff]
      %v715 = vld [vmem:[%s1 + $0x10d8] sm:$0xff]
      %v716 = vld [vmem:[%s1 + $0x10e0] sm:$0xff]
      %v717 = vld [vmem:[%s1 + $0x10e8] sm:$0xff]
      %v718 = vld [vmem:[%s1 + $0x10f0] sm:$0xff]
      %v719 = vld [vmem:[%s1 + $0x10f8] sm:$0xff]
      %v720 = vld [vmem:[%s1 + $0x1100] sm:$0xff]
      %v721 = vld [vmem:[%s1 + $0x1108] sm:$0xff]
      %v722 = vld [vmem:[%s1 + $0x1110] sm:$0xff]
      %v723 = vld [vmem:[%s1 + $0x1118] sm:$0xff]
      %v724 = vld [vmem:[%s1 + $0x1120] sm:$0xff]
      %v725 = vld [vmem:[%s1 + $0x1128] sm:$0xff]
      %v726 = vld [vmem:[%s1 + $0x1130] sm:$0xff]
      %v727 = vld [vmem:[%s1 + $0x1138] sm:$0xff]
      %v728 = vld [vmem:[%s1 + $0x1140] sm:$0xff]
      %v729 = vld [vmem:[%s1 + $0x1148] sm:$0xff]
      %v730 = vld [vmem:[%s1 + $0x1150] sm:$0xff]
      %v731 = vld [vmem:[%s1 + $0x1158] sm:$0xff]
      %v732 = vld [vmem:[%s1 + $0x1160] sm:$0xff]
      %v733 = vld [vmem:[%s1 + $0x1168] sm:$0xff]
      %v734 = vld [vmem:[%s1 + $0x1170] sm:$0xff]
      %v735 = vld [vmem:[%s1 + $0x1178] sm:$0xff]
      %v736 = vld [vmem:[%s1 + $0x1180] sm:$0xff]
      %v737 = vld [vmem:[%s1 + $0x1188] sm:$0xff]
      %v738 = vld [vmem:[%s1 + $0x1190] sm:$0xff]
      %v739 = vld [vmem:[%s1 + $0x1198] sm:$0xff]
      %v740 = vld [vmem:[%s1 + $0x11a0] sm:$0xff]
      %v741 = vld [vmem:[%s1 + $0x11a8] sm:$0xff]
      %v742 = vld [vmem:[%s1 + $0x11b0] sm:$0xff]
      %v743 = vld [vmem:[%s1 + $0x11b8] sm:$0xff]
      %v744 = vld [vmem:[%s1 + $0x11c0] sm:$0xff]
      %v745 = vld [vmem:[%s1 + $0x11c8] sm:$0xff]
      %v746 = vld [vmem:[%s1 + $0x11d0] sm:$0xff]
      %v747 = vld [vmem:[%s1 + $0x11d8] sm:$0xff]
      %v748 = vld [vmem:[%s1 + $0x11e0] sm:$0xff]
      %v749 = vld [vmem:[%s1 + $0x11e8] sm:$0xff]
      %v750 = vld [vmem:[%s1 + $0x11f0] sm:$0xff]
      %v751 = vld [vmem:[%s1 + $0x11f8] sm:$0xff]
      %v752 = vld [vmem:[%s165] sm:$0xfe]
      %v753 = vld [vmem:[%s165 + $0x8] sm:$0xfe]
      %v754 = vld [vmem:[%s165 + $0x10] sm:$0xfe]
      %v755 = vld [vmem:[%s165 + $0x18] sm:$0xfe]
      %v756 = vld [vmem:[%s165 + $0x20] sm:$0xfe]
      %v757 = vld [vmem:[%s165 + $0x28] sm:$0x1]
      %v758 = vld [vmem:[%s165 + $0x30] sm:$0x1]
      %v759 = vld [vmem:[%s165 + $0x38] sm:$0x1]
      %v760 = vld [vmem:[%s165 + $0x40] sm:$0x1]
      %v761 = vld [vmem:[%s165 + $0x48] sm:$0x1]
      %s762 = scalar_lea.vmem %s1, 4608
      %v763 = vld [vmem:[%s762] sm:$0xff]
      %v764 = vld [vmem:[%s762 + $0x8] sm:$0xff]
      %v765 = vld [vmem:[%s762 + $0x10] sm:$0xff]
      %v766 = vld [vmem:[%s762 + $0x18] sm:$0xff]
      %v767 = vld [vmem:[%s762 + $0x20] sm:$0xff]
      %v768 = vld [vmem:[%s762 + $0x28] sm:$0xff]
      %v769 = vld [vmem:[%s762 + $0x30] sm:$0xff]
      %v770 = vld [vmem:[%s762 + $0x38] sm:$0xff]
      %v771 = vld [vmem:[%s762 + $0x40] sm:$0xff]
      %v772 = vld [vmem:[%s762 + $0x48] sm:$0xff]
      %v773 = vld [vmem:[%s762 + $0x50] sm:$0xff]
      %v774 = vld [vmem:[%s762 + $0x58] sm:$0xff]
      %v775 = vld [vmem:[%s762 + $0x60] sm:$0xff]
      %v776 = vld [vmem:[%s762 + $0x68] sm:$0xff]
      %v777 = vld [vmem:[%s762 + $0x70] sm:$0xff]
      %v778 = vld [vmem:[%s762 + $0x78] sm:$0xff]
      %v779 = vld [vmem:[%s762 + $0x80] sm:$0xff]
      %v780 = vld [vmem:[%s762 + $0x88] sm:$0xff]
      %v781 = vld [vmem:[%s762 + $0x90] sm:$0xff]
      %v782 = vld [vmem:[%s762 + $0x98] sm:$0xff]
      %v783 = vld [vmem:[%s762 + $0xa0] sm:$0xff]
      %v784 = vld [vmem:[%s762 + $0xa8] sm:$0xff]
      %v785 = vld [vmem:[%s762 + $0xb0] sm:$0xff]
      %v786 = vld [vmem:[%s762 + $0xb8] sm:$0xff]
      %v787 = vld [vmem:[%s762 + $0xc0] sm:$0xff]
      %v788 = vld [vmem:[%s762 + $0xc8] sm:$0xff]
      %v789 = vld [vmem:[%s762 + $0xd0] sm:$0xff]
      %v790 = vld [vmem:[%s762 + $0xd8] sm:$0xff]
      %v791 = vld [vmem:[%s762 + $0xe0] sm:$0xff]
      %v792 = vld [vmem:[%s762 + $0xe8] sm:$0xff]
      %v793 = vld [vmem:[%s762 + $0xf0] sm:$0xff]
      %v794 = vld [vmem:[%s762 + $0xf8] sm:$0xff]
      %v795 = vld [vmem:[%s762 + $0x100] sm:$0xff]
      %v796 = vld [vmem:[%s762 + $0x108] sm:$0xff]
      %v797 = vld [vmem:[%s762 + $0x110] sm:$0xff]
      %v798 = vld [vmem:[%s762 + $0x118] sm:$0xff]
      %v799 = vld [vmem:[%s762 + $0x120] sm:$0xff]
      %v800 = vld [vmem:[%s762 + $0x128] sm:$0xff]
      %v801 = vld [vmem:[%s762 + $0x130] sm:$0xff]
      %v802 = vld [vmem:[%s762 + $0x138] sm:$0xff]
      %v803 = vld [vmem:[%s762 + $0x140] sm:$0xff]
      %v804 = vld [vmem:[%s762 + $0x148] sm:$0xff]
      %v805 = vld [vmem:[%s762 + $0x150] sm:$0xff]
      %v806 = vld [vmem:[%s762 + $0x158] sm:$0xff]
      %v807 = vld [vmem:[%s762 + $0x160] sm:$0xff]
      %v808 = vld [vmem:[%s762 + $0x168] sm:$0xff]
      %v809 = vld [vmem:[%s762 + $0x170] sm:$0xff]
      %v810 = vld [vmem:[%s762 + $0x178] sm:$0xff]
      %v811 = vld [vmem:[%s762 + $0x180] sm:$0xff]
      %v812 = vld [vmem:[%s762 + $0x188] sm:$0xff]
      %v813 = vld [vmem:[%s762 + $0x190] sm:$0xff]
      %v814 = vld [vmem:[%s762 + $0x198] sm:$0xff]
      %v815 = vld [vmem:[%s762 + $0x1a0] sm:$0xff]
      %v816 = vld [vmem:[%s762 + $0x1a8] sm:$0xff]
      %v817 = vld [vmem:[%s762 + $0x1b0] sm:$0xff]
      %v818 = vld [vmem:[%s762 + $0x1b8] sm:$0xff]
      %v819 = vld [vmem:[%s762 + $0x1c0] sm:$0xff]
      %v820 = vld [vmem:[%s762 + $0x1c8] sm:$0xff]
      %v821 = vld [vmem:[%s762 + $0x1d0] sm:$0xff]
      %v822 = vld [vmem:[%s762 + $0x1d8] sm:$0xff]
      %v823 = vld [vmem:[%s762 + $0x1e0] sm:$0xff]
      %v824 = vld [vmem:[%s762 + $0x1e8] sm:$0xff]
      %v825 = vld [vmem:[%s762 + $0x1f0] sm:$0xff]
      %v826 = vld [vmem:[%s762 + $0x1f8] sm:$0xff]
      %v827 = vld [vmem:[%s762 + $0x200] sm:$0xff]
      %v828 = vld [vmem:[%s762 + $0x208] sm:$0xff]
      %v829 = vld [vmem:[%s762 + $0x210] sm:$0xff]
      %v830 = vld [vmem:[%s762 + $0x218] sm:$0xff]
      %v831 = vld [vmem:[%s762 + $0x220] sm:$0xff]
      %v832 = vld [vmem:[%s762 + $0x228] sm:$0xff]
      %v833 = vld [vmem:[%s762 + $0x230] sm:$0xff]
      %v834 = vld [vmem:[%s762 + $0x238] sm:$0xff]
      %v835 = vld [vmem:[%s762 + $0x240] sm:$0xff]
      %v836 = vld [vmem:[%s762 + $0x248] sm:$0xff]
      %v837 = vld [vmem:[%s762 + $0x250] sm:$0xff]
      %v838 = vld [vmem:[%s762 + $0x258] sm:$0xff]
      %v839 = vld [vmem:[%s762 + $0x260] sm:$0xff]
      %v840 = vld [vmem:[%s762 + $0x268] sm:$0xff]
      %v841 = vld [vmem:[%s762 + $0x270] sm:$0xff]
      %v842 = vld [vmem:[%s762 + $0x278] sm:$0xff]
      %v843 = vld [vmem:[%s762 + $0x280] sm:$0xff]
      %v844 = vld [vmem:[%s762 + $0x288] sm:$0xff]
      %v845 = vld [vmem:[%s762 + $0x290] sm:$0xff]
      %v846 = vld [vmem:[%s762 + $0x298] sm:$0xff]
      %v847 = vld [vmem:[%s762 + $0x2a0] sm:$0xff]
      %v848 = vld [vmem:[%s762 + $0x2a8] sm:$0xff]
      %v849 = vld [vmem:[%s762 + $0x2b0] sm:$0xff]
      %v850 = vld [vmem:[%s762 + $0x2b8] sm:$0xff]
      %v851 = vld [vmem:[%s762 + $0x2c0] sm:$0xff]
      %v852 = vld [vmem:[%s762 + $0x2c8] sm:$0xff]
      %v853 = vld [vmem:[%s762 + $0x2d0] sm:$0xff]
      %v854 = vld [vmem:[%s762 + $0x2d8] sm:$0xff]
      %v855 = vld [vmem:[%s762 + $0x2e0] sm:$0xff]
      %v856 = vld [vmem:[%s762 + $0x2e8] sm:$0xff]
      %v857 = vld [vmem:[%s762 + $0x2f0] sm:$0xff]
      %v858 = vld [vmem:[%s762 + $0x2f8] sm:$0xff]
      %v859 = vld [vmem:[%s762 + $0x300] sm:$0xff]
      %v860 = vld [vmem:[%s762 + $0x308] sm:$0xff]
      %v861 = vld [vmem:[%s762 + $0x310] sm:$0xff]
      %v862 = vld [vmem:[%s762 + $0x318] sm:$0xff]
      %v863 = vld [vmem:[%s762 + $0x320] sm:$0xff]
      %v864 = vld [vmem:[%s762 + $0x328] sm:$0xff]
      %v865 = vld [vmem:[%s762 + $0x330] sm:$0xff]
      %v866 = vld [vmem:[%s762 + $0x338] sm:$0xff]
      %v867 = vld [vmem:[%s762 + $0x340] sm:$0xff]
      %v868 = vld [vmem:[%s762 + $0x348] sm:$0xff]
      %v869 = vld [vmem:[%s762 + $0x350] sm:$0xff]
      %v870 = vld [vmem:[%s762 + $0x358] sm:$0xff]
      %v871 = vld [vmem:[%s762 + $0x360] sm:$0xff]
      %v872 = vld [vmem:[%s762 + $0x368] sm:$0xff]
      %v873 = vld [vmem:[%s762 + $0x370] sm:$0xff]
      %v874 = vld [vmem:[%s762 + $0x378] sm:$0xff]
      %v875 = vld [vmem:[%s762 + $0x380] sm:$0xff]
      %v876 = vld [vmem:[%s762 + $0x388] sm:$0xff]
      %v877 = vld [vmem:[%s762 + $0x390] sm:$0xff]
      %v878 = vld [vmem:[%s762 + $0x398] sm:$0xff]
      %v879 = vld [vmem:[%s762 + $0x3a0] sm:$0xff]
      %v880 = vld [vmem:[%s762 + $0x3a8] sm:$0xff]
      %v881 = vld [vmem:[%s762 + $0x3b0] sm:$0xff]
      %v882 = vld [vmem:[%s762 + $0x3b8] sm:$0xff]
      %v883 = vld [vmem:[%s762 + $0x3c0] sm:$0xff]
      %v884 = vld [vmem:[%s762 + $0x3c8] sm:$0xff]
      %v885 = vld [vmem:[%s762 + $0x3d0] sm:$0xff]
      %v886 = vld [vmem:[%s762 + $0x3d8] sm:$0xff]
      %v887 = vld [vmem:[%s762 + $0x3e0] sm:$0xff]
      %v888 = vld [vmem:[%s762 + $0x3e8] sm:$0xff]
      %v889 = vld [vmem:[%s762 + $0x3f0] sm:$0xff]
      %v890 = vld [vmem:[%s762 + $0x3f8] sm:$0xff]
      %v891 = vld [vmem:[%s762 + $0x400] sm:$0xff]
      %v892 = vld [vmem:[%s762 + $0x408] sm:$0xff]
      %v893 = vld [vmem:[%s762 + $0x410] sm:$0xff]
      %v894 = vld [vmem:[%s762 + $0x418] sm:$0xff]
      %v895 = vld [vmem:[%s762 + $0x420] sm:$0xff]
      %v896 = vld [vmem:[%s762 + $0x428] sm:$0xff]
      %v897 = vld [vmem:[%s762 + $0x430] sm:$0xff]
      %v898 = vld [vmem:[%s762 + $0x438] sm:$0xff]
      %v899 = vld [vmem:[%s762 + $0x440] sm:$0xff]
      %v900 = vld [vmem:[%s762 + $0x448] sm:$0xff]
      %v901 = vld [vmem:[%s762 + $0x450] sm:$0xff]
      %v902 = vld [vmem:[%s762 + $0x458] sm:$0xff]
      %v903 = vld [vmem:[%s762 + $0x460] sm:$0xff]
      %v904 = vld [vmem:[%s762 + $0x468] sm:$0xff]
      %v905 = vld [vmem:[%s762 + $0x470] sm:$0xff]
      %v906 = vld [vmem:[%s762 + $0x478] sm:$0xff]
      %v907 = vld [vmem:[%s762 + $0x480] sm:$0xff]
      %v908 = vld [vmem:[%s762 + $0x488] sm:$0xff]
      %v909 = vld [vmem:[%s762 + $0x490] sm:$0xff]
      %v910 = vld [vmem:[%s762 + $0x498] sm:$0xff]
      %v911 = vld [vmem:[%s762 + $0x4a0] sm:$0xff]
      %v912 = vld [vmem:[%s762 + $0x4a8] sm:$0xff]
      %v913 = vld [vmem:[%s762 + $0x4b0] sm:$0xff]
      %v914 = vld [vmem:[%s762 + $0x4b8] sm:$0xff]
      %v915 = vld [vmem:[%s762 + $0x4c0] sm:$0xff]
      %v916 = vld [vmem:[%s762 + $0x4c8] sm:$0xff]
      %v917 = vld [vmem:[%s762 + $0x4d0] sm:$0xff]
      %v918 = vld [vmem:[%s762 + $0x4d8] sm:$0xff]
      %v919 = vld [vmem:[%s762 + $0x4e0] sm:$0xff]
      %v920 = vld [vmem:[%s762 + $0x4e8] sm:$0xff]
      %v921 = vld [vmem:[%s762 + $0x4f0] sm:$0xff]
      %v922 = vld [vmem:[%s762 + $0x4f8] sm:$0xff]
      %v923 = vld [vmem:[%s762 + $0x500] sm:$0xff]
      %v924 = vld [vmem:[%s762 + $0x508] sm:$0xff]
      %v925 = vld [vmem:[%s762 + $0x510] sm:$0xff]
      %v926 = vld [vmem:[%s762 + $0x518] sm:$0xff]
      %v927 = vld [vmem:[%s762 + $0x520] sm:$0xff]
      %v928 = vld [vmem:[%s762 + $0x528] sm:$0xff]
      %v929 = vld [vmem:[%s762 + $0x530] sm:$0xff]
      %v930 = vld [vmem:[%s762 + $0x538] sm:$0xff]
      %v931 = vld [vmem:[%s762 + $0x540] sm:$0xff]
      %v932 = vld [vmem:[%s762 + $0x548] sm:$0xff]
      %v933 = vld [vmem:[%s762 + $0x550] sm:$0xff]
      %v934 = vld [vmem:[%s762 + $0x558] sm:$0xff]
      %v935 = vld [vmem:[%s762 + $0x560] sm:$0xff]
      %v936 = vld [vmem:[%s762 + $0x568] sm:$0xff]
      %v937 = vld [vmem:[%s762 + $0x570] sm:$0xff]
      %v938 = vld [vmem:[%s762 + $0x578] sm:$0xff]
      %v939 = vld [vmem:[%s762 + $0x580] sm:$0xff]
      %v940 = vld [vmem:[%s762 + $0x588] sm:$0xff]
      %v941 = vld [vmem:[%s762 + $0x590] sm:$0xff]
      %v942 = vld [vmem:[%s762 + $0x598] sm:$0xff]
      %v943 = vld [vmem:[%s762 + $0x5a0] sm:$0xff]
      %v944 = vld [vmem:[%s762 + $0x5a8] sm:$0xff]
      %v945 = vld [vmem:[%s762 + $0x5b0] sm:$0xff]
      %v946 = vld [vmem:[%s762 + $0x5b8] sm:$0xff]
      %v947 = vld [vmem:[%s762 + $0x5c0] sm:$0xff]
      %v948 = vld [vmem:[%s762 + $0x5c8] sm:$0xff]
      %v949 = vld [vmem:[%s762 + $0x5d0] sm:$0xff]
      %v950 = vld [vmem:[%s762 + $0x5d8] sm:$0xff]
      %v951 = vld [vmem:[%s762 + $0x5e0] sm:$0xff]
      %v952 = vld [vmem:[%s762 + $0x5e8] sm:$0xff]
      %v953 = vld [vmem:[%s762 + $0x5f0] sm:$0xff]
      %v954 = vld [vmem:[%s762 + $0x5f8] sm:$0xff]
      %v955 = vld [vmem:[%s762 + $0x600] sm:$0xff]
      %v956 = vld [vmem:[%s762 + $0x608] sm:$0xff]
      %v957 = vld [vmem:[%s762 + $0x610] sm:$0xff]
      %v958 = vld [vmem:[%s762 + $0x618] sm:$0xff]
      %v959 = vld [vmem:[%s762 + $0x620] sm:$0xff]
      %v960 = vld [vmem:[%s762 + $0x628] sm:$0xff]
      %v961 = vld [vmem:[%s762 + $0x630] sm:$0xff]
      %v962 = vld [vmem:[%s762 + $0x638] sm:$0xff]
      %v963 = vld [vmem:[%s762 + $0x640] sm:$0xff]
      %v964 = vld [vmem:[%s762 + $0x648] sm:$0xff]
      %v965 = vld [vmem:[%s762 + $0x650] sm:$0xff]
      %v966 = vld [vmem:[%s762 + $0x658] sm:$0xff]
      %v967 = vld [vmem:[%s762 + $0x660] sm:$0xff]
      %v968 = vld [vmem:[%s762 + $0x668] sm:$0xff]
      %v969 = vld [vmem:[%s762 + $0x670] sm:$0xff]
      %v970 = vld [vmem:[%s762 + $0x678] sm:$0xff]
      %v971 = vld [vmem:[%s762 + $0x680] sm:$0xff]
      %v972 = vld [vmem:[%s762 + $0x688] sm:$0xff]
      %v973 = vld [vmem:[%s762 + $0x690] sm:$0xff]
      %v974 = vld [vmem:[%s762 + $0x698] sm:$0xff]
      %v975 = vld [vmem:[%s762 + $0x6a0] sm:$0xff]
      %v976 = vld [vmem:[%s762 + $0x6a8] sm:$0xff]
      %v977 = vld [vmem:[%s762 + $0x6b0] sm:$0xff]
      %v978 = vld [vmem:[%s762 + $0x6b8] sm:$0xff]
      %v979 = vld [vmem:[%s762 + $0x6c0] sm:$0xff]
      %v980 = vld [vmem:[%s762 + $0x6c8] sm:$0xff]
      %v981 = vld [vmem:[%s762 + $0x6d0] sm:$0xff]
      %v982 = vld [vmem:[%s762 + $0x6d8] sm:$0xff]
      %v983 = vld [vmem:[%s762 + $0x6e0] sm:$0xff]
      %v984 = vld [vmem:[%s762 + $0x6e8] sm:$0xff]
      %v985 = vld [vmem:[%s762 + $0x6f0] sm:$0xff]
      %v986 = vld [vmem:[%s762 + $0x6f8] sm:$0xff]
      %v987 = vld [vmem:[%s762 + $0x700] sm:$0xff]
      %v988 = vld [vmem:[%s762 + $0x708] sm:$0xff]
      %v989 = vld [vmem:[%s762 + $0x710] sm:$0xff]
      %v990 = vld [vmem:[%s762 + $0x718] sm:$0xff]
      %v991 = vld [vmem:[%s762 + $0x720] sm:$0xff]
      %v992 = vld [vmem:[%s762 + $0x728] sm:$0xff]
      %v993 = vld [vmem:[%s762 + $0x730] sm:$0xff]
      %v994 = vld [vmem:[%s762 + $0x738] sm:$0xff]
      %v995 = vld [vmem:[%s762 + $0x740] sm:$0xff]
      %v996 = vld [vmem:[%s762 + $0x748] sm:$0xff]
      %v997 = vld [vmem:[%s762 + $0x750] sm:$0xff]
      %v998 = vld [vmem:[%s762 + $0x758] sm:$0xff]
      %v999 = vld [vmem:[%s762 + $0x760] sm:$0xff]
      %v1000 = vld [vmem:[%s762 + $0x768] sm:$0xff]
      %v1001 = vld [vmem:[%s762 + $0x770] sm:$0xff]
      %v1002 = vld [vmem:[%s762 + $0x778] sm:$0xff]
      %v1003 = vld [vmem:[%s762 + $0x780] sm:$0xff]
      %v1004 = vld [vmem:[%s762 + $0x788] sm:$0xff]
      %v1005 = vld [vmem:[%s762 + $0x790] sm:$0xff]
      %v1006 = vld [vmem:[%s762 + $0x798] sm:$0xff]
      %v1007 = vld [vmem:[%s762 + $0x7a0] sm:$0xff]
      %v1008 = vld [vmem:[%s762 + $0x7a8] sm:$0xff]
      %v1009 = vld [vmem:[%s762 + $0x7b0] sm:$0xff]
      %v1010 = vld [vmem:[%s762 + $0x7b8] sm:$0xff]
      %v1011 = vld [vmem:[%s762 + $0x7c0] sm:$0xff]
      %v1012 = vld [vmem:[%s762 + $0x7c8] sm:$0xff]
      %v1013 = vld [vmem:[%s762 + $0x7d0] sm:$0xff]
      %v1014 = vld [vmem:[%s762 + $0x7d8] sm:$0xff]
      %v1015 = vld [vmem:[%s762 + $0x7e0] sm:$0xff]
      %v1016 = vld [vmem:[%s762 + $0x7e8] sm:$0xff]
      %v1017 = vld [vmem:[%s762 + $0x7f0] sm:$0xff]
      %v1018 = vld [vmem:[%s762 + $0x7f8] sm:$0xff]
      %v1019 = vld [vmem:[%s762 + $0x800] sm:$0xff]
      %v1020 = vld [vmem:[%s762 + $0x808] sm:$0xff]
      %v1021 = vld [vmem:[%s762 + $0x810] sm:$0xff]
      %v1022 = vld [vmem:[%s762 + $0x818] sm:$0xff]
      %v1023 = vld [vmem:[%s762 + $0x820] sm:$0xff]
      %v1024 = vld [vmem:[%s762 + $0x828] sm:$0xff]
      %v1025 = vld [vmem:[%s762 + $0x830] sm:$0xff]
      %v1026 = vld [vmem:[%s762 + $0x838] sm:$0xff]
      %v1027 = vld [vmem:[%s762 + $0x840] sm:$0xff]
      %v1028 = vld [vmem:[%s762 + $0x848] sm:$0xff]
      %v1029 = vld [vmem:[%s762 + $0x850] sm:$0xff]
      %v1030 = vld [vmem:[%s762 + $0x858] sm:$0xff]
      %v1031 = vld [vmem:[%s762 + $0x860] sm:$0xff]
      %v1032 = vld [vmem:[%s762 + $0x868] sm:$0xff]
      %v1033 = vld [vmem:[%s762 + $0x870] sm:$0xff]
      %v1034 = vld [vmem:[%s762 + $0x878] sm:$0xff]
      %v1035 = vld [vmem:[%s762 + $0x880] sm:$0xff]
      %v1036 = vld [vmem:[%s762 + $0x888] sm:$0xff]
      %v1037 = vld [vmem:[%s762 + $0x890] sm:$0xff]
      %v1038 = vld [vmem:[%s762 + $0x898] sm:$0xff]
      %v1039 = vld [vmem:[%s762 + $0x8a0] sm:$0xff]
      %v1040 = vld [vmem:[%s762 + $0x8a8] sm:$0xff]
      %v1041 = vld [vmem:[%s762 + $0x8b0] sm:$0xff]
      %v1042 = vld [vmem:[%s762 + $0x8b8] sm:$0xff]
      %v1043 = vld [vmem:[%s762 + $0x8c0] sm:$0xff]
      %v1044 = vld [vmem:[%s762 + $0x8c8] sm:$0xff]
      %v1045 = vld [vmem:[%s762 + $0x8d0] sm:$0xff]
      %v1046 = vld [vmem:[%s762 + $0x8d8] sm:$0xff]
      %v1047 = vld [vmem:[%s762 + $0x8e0] sm:$0xff]
      %v1048 = vld [vmem:[%s762 + $0x8e8] sm:$0xff]
      %v1049 = vld [vmem:[%s762 + $0x8f0] sm:$0xff]
      %v1050 = vld [vmem:[%s762 + $0x8f8] sm:$0xff]
      %v1051 = vld [vmem:[%s762 + $0x900] sm:$0xff]
      %v1052 = vld [vmem:[%s762 + $0x908] sm:$0xff]
      %v1053 = vld [vmem:[%s762 + $0x910] sm:$0xff]
      %v1054 = vld [vmem:[%s762 + $0x918] sm:$0xff]
      %v1055 = vld [vmem:[%s762 + $0x920] sm:$0xff]
      %v1056 = vld [vmem:[%s762 + $0x928] sm:$0xff]
      %v1057 = vld [vmem:[%s762 + $0x930] sm:$0xff]
      %v1058 = vld [vmem:[%s762 + $0x938] sm:$0xff]
      %v1059 = vld [vmem:[%s762 + $0x940] sm:$0xff]
      %v1060 = vld [vmem:[%s762 + $0x948] sm:$0xff]
      %v1061 = vld [vmem:[%s762 + $0x950] sm:$0xff]
      %v1062 = vld [vmem:[%s762 + $0x958] sm:$0xff]
      %v1063 = vld [vmem:[%s762 + $0x960] sm:$0xff]
      %v1064 = vld [vmem:[%s762 + $0x968] sm:$0xff]
      %v1065 = vld [vmem:[%s762 + $0x970] sm:$0xff]
      %v1066 = vld [vmem:[%s762 + $0x978] sm:$0xff]
      %v1067 = vld [vmem:[%s762 + $0x980] sm:$0xff]
      %v1068 = vld [vmem:[%s762 + $0x988] sm:$0xff]
      %v1069 = vld [vmem:[%s762 + $0x990] sm:$0xff]
      %v1070 = vld [vmem:[%s762 + $0x998] sm:$0xff]
      %v1071 = vld [vmem:[%s762 + $0x9a0] sm:$0xff]
      %v1072 = vld [vmem:[%s762 + $0x9a8] sm:$0xff]
      %v1073 = vld [vmem:[%s762 + $0x9b0] sm:$0xff]
      %v1074 = vld [vmem:[%s762 + $0x9b8] sm:$0xff]
      %v1075 = vld [vmem:[%s762 + $0x9c0] sm:$0xff]
      %v1076 = vld [vmem:[%s762 + $0x9c8] sm:$0xff]
      %v1077 = vld [vmem:[%s762 + $0x9d0] sm:$0xff]
      %v1078 = vld [vmem:[%s762 + $0x9d8] sm:$0xff]
      %v1079 = vld [vmem:[%s762 + $0x9e0] sm:$0xff]
      %v1080 = vld [vmem:[%s762 + $0x9e8] sm:$0xff]
      %v1081 = vld [vmem:[%s762 + $0x9f0] sm:$0xff]
      %v1082 = vld [vmem:[%s762 + $0x9f8] sm:$0xff]
      %v1083 = vld [vmem:[%s762 + $0xa00] sm:$0xff]
      %v1084 = vld [vmem:[%s762 + $0xa08] sm:$0xff]
      %v1085 = vld [vmem:[%s762 + $0xa10] sm:$0xff]
      %v1086 = vld [vmem:[%s762 + $0xa18] sm:$0xff]
      %v1087 = vld [vmem:[%s762 + $0xa20] sm:$0xff]
      %v1088 = vld [vmem:[%s762 + $0xa28] sm:$0xff]
      %v1089 = vld [vmem:[%s762 + $0xa30] sm:$0xff]
      %v1090 = vld [vmem:[%s762 + $0xa38] sm:$0xff]
      %v1091 = vld [vmem:[%s762 + $0xa40] sm:$0xff]
      %v1092 = vld [vmem:[%s762 + $0xa48] sm:$0xff]
      %v1093 = vld [vmem:[%s762 + $0xa50] sm:$0xff]
      %v1094 = vld [vmem:[%s762 + $0xa58] sm:$0xff]
      %v1095 = vld [vmem:[%s762 + $0xa60] sm:$0xff]
      %v1096 = vld [vmem:[%s762 + $0xa68] sm:$0xff]
      %v1097 = vld [vmem:[%s762 + $0xa70] sm:$0xff]
      %v1098 = vld [vmem:[%s762 + $0xa78] sm:$0xff]
      %v1099 = vld [vmem:[%s762 + $0xa80] sm:$0xff]
      %v1100 = vld [vmem:[%s762 + $0xa88] sm:$0xff]
      %v1101 = vld [vmem:[%s762 + $0xa90] sm:$0xff]
      %v1102 = vld [vmem:[%s762 + $0xa98] sm:$0xff]
      %v1103 = vld [vmem:[%s762 + $0xaa0] sm:$0xff]
      %v1104 = vld [vmem:[%s762 + $0xaa8] sm:$0xff]
      %v1105 = vld [vmem:[%s762 + $0xab0] sm:$0xff]
      %v1106 = vld [vmem:[%s762 + $0xab8] sm:$0xff]
      %v1107 = vld [vmem:[%s762 + $0xac0] sm:$0xff]
      %v1108 = vld [vmem:[%s762 + $0xac8] sm:$0xff]
      %v1109 = vld [vmem:[%s762 + $0xad0] sm:$0xff]
      %v1110 = vld [vmem:[%s762 + $0xad8] sm:$0xff]
      %v1111 = vld [vmem:[%s762 + $0xae0] sm:$0xff]
      %v1112 = vld [vmem:[%s762 + $0xae8] sm:$0xff]
      %v1113 = vld [vmem:[%s762 + $0xaf0] sm:$0xff]
      %v1114 = vld [vmem:[%s762 + $0xaf8] sm:$0xff]
      %v1115 = vld [vmem:[%s762 + $0xb00] sm:$0xff]
      %v1116 = vld [vmem:[%s762 + $0xb08] sm:$0xff]
      %v1117 = vld [vmem:[%s762 + $0xb10] sm:$0xff]
      %v1118 = vld [vmem:[%s762 + $0xb18] sm:$0xff]
      %v1119 = vld [vmem:[%s762 + $0xb20] sm:$0xff]
      %v1120 = vld [vmem:[%s762 + $0xb28] sm:$0xff]
      %v1121 = vld [vmem:[%s762 + $0xb30] sm:$0xff]
      %v1122 = vld [vmem:[%s762 + $0xb38] sm:$0xff]
      %v1123 = vld [vmem:[%s762 + $0xb40] sm:$0xff]
      %v1124 = vld [vmem:[%s762 + $0xb48] sm:$0xff]
      %v1125 = vld [vmem:[%s762 + $0xb50] sm:$0xff]
      %v1126 = vld [vmem:[%s762 + $0xb58] sm:$0xff]
      %v1127 = vld [vmem:[%s762 + $0xb60] sm:$0xff]
      %v1128 = vld [vmem:[%s762 + $0xb68] sm:$0xff]
      %v1129 = vld [vmem:[%s762 + $0xb70] sm:$0xff]
      %v1130 = vld [vmem:[%s762 + $0xb78] sm:$0xff]
      %v1131 = vld [vmem:[%s762 + $0xb80] sm:$0xff]
      %v1132 = vld [vmem:[%s762 + $0xb88] sm:$0xff]
      %v1133 = vld [vmem:[%s762 + $0xb90] sm:$0xff]
      %v1134 = vld [vmem:[%s762 + $0xb98] sm:$0xff]
      %v1135 = vld [vmem:[%s762 + $0xba0] sm:$0xff]
      %v1136 = vld [vmem:[%s762 + $0xba8] sm:$0xff]
      %v1137 = vld [vmem:[%s762 + $0xbb0] sm:$0xff]
      %v1138 = vld [vmem:[%s762 + $0xbb8] sm:$0xff]
      %v1139 = vld [vmem:[%s762 + $0xbc0] sm:$0xff]
      %v1140 = vld [vmem:[%s762 + $0xbc8] sm:$0xff]
      %v1141 = vld [vmem:[%s762 + $0xbd0] sm:$0xff]
      %v1142 = vld [vmem:[%s762 + $0xbd8] sm:$0xff]
      %v1143 = vld [vmem:[%s762 + $0xbe0] sm:$0xff]
      %v1144 = vld [vmem:[%s762 + $0xbe8] sm:$0xff]
      %v1145 = vld [vmem:[%s762 + $0xbf0] sm:$0xff]
      %v1146 = vld [vmem:[%s762 + $0xbf8] sm:$0xff]
      %v1147 = vld [vmem:[%s762 + $0xc00] sm:$0xff]
      %v1148 = vld [vmem:[%s762 + $0xc08] sm:$0xff]
      %v1149 = vld [vmem:[%s762 + $0xc10] sm:$0xff]
      %v1150 = vld [vmem:[%s762 + $0xc18] sm:$0xff]
      %v1151 = vld [vmem:[%s762 + $0xc20] sm:$0xff]
      %v1152 = vld [vmem:[%s762 + $0xc28] sm:$0xff]
      %v1153 = vld [vmem:[%s762 + $0xc30] sm:$0xff]
      %v1154 = vld [vmem:[%s762 + $0xc38] sm:$0xff]
      %v1155 = vld [vmem:[%s762 + $0xc40] sm:$0xff]
      %v1156 = vld [vmem:[%s762 + $0xc48] sm:$0xff]
      %v1157 = vld [vmem:[%s762 + $0xc50] sm:$0xff]
      %v1158 = vld [vmem:[%s762 + $0xc58] sm:$0xff]
      %v1159 = vld [vmem:[%s762 + $0xc60] sm:$0xff]
      %v1160 = vld [vmem:[%s762 + $0xc68] sm:$0xff]
      %v1161 = vld [vmem:[%s762 + $0xc70] sm:$0xff]
      %v1162 = vld [vmem:[%s762 + $0xc78] sm:$0xff]
      %v1163 = vld [vmem:[%s762 + $0xc80] sm:$0xff]
      %v1164 = vld [vmem:[%s762 + $0xc88] sm:$0xff]
      %v1165 = vld [vmem:[%s762 + $0xc90] sm:$0xff]
      %v1166 = vld [vmem:[%s762 + $0xc98] sm:$0xff]
      %v1167 = vld [vmem:[%s762 + $0xca0] sm:$0xff]
      %v1168 = vld [vmem:[%s762 + $0xca8] sm:$0xff]
      %v1169 = vld [vmem:[%s762 + $0xcb0] sm:$0xff]
      %v1170 = vld [vmem:[%s762 + $0xcb8] sm:$0xff]
      %v1171 = vld [vmem:[%s762 + $0xcc0] sm:$0xff]
      %v1172 = vld [vmem:[%s762 + $0xcc8] sm:$0xff]
      %v1173 = vld [vmem:[%s762 + $0xcd0] sm:$0xff]
      %v1174 = vld [vmem:[%s762 + $0xcd8] sm:$0xff]
      %v1175 = vld [vmem:[%s762 + $0xce0] sm:$0xff]
      %v1176 = vld [vmem:[%s762 + $0xce8] sm:$0xff]
      %v1177 = vld [vmem:[%s762 + $0xcf0] sm:$0xff]
      %v1178 = vld [vmem:[%s762 + $0xcf8] sm:$0xff]
      %v1179 = vld [vmem:[%s762 + $0xd00] sm:$0xff]
      %v1180 = vld [vmem:[%s762 + $0xd08] sm:$0xff]
      %v1181 = vld [vmem:[%s762 + $0xd10] sm:$0xff]
      %v1182 = vld [vmem:[%s762 + $0xd18] sm:$0xff]
      %v1183 = vld [vmem:[%s762 + $0xd20] sm:$0xff]
      %v1184 = vld [vmem:[%s762 + $0xd28] sm:$0xff]
      %v1185 = vld [vmem:[%s762 + $0xd30] sm:$0xff]
      %v1186 = vld [vmem:[%s762 + $0xd38] sm:$0xff]
      %v1187 = vld [vmem:[%s762 + $0xd40] sm:$0xff]
      %v1188 = vld [vmem:[%s762 + $0xd48] sm:$0xff]
      %v1189 = vld [vmem:[%s762 + $0xd50] sm:$0xff]
      %v1190 = vld [vmem:[%s762 + $0xd58] sm:$0xff]
      %v1191 = vld [vmem:[%s762 + $0xd60] sm:$0xff]
      %v1192 = vld [vmem:[%s762 + $0xd68] sm:$0xff]
      %v1193 = vld [vmem:[%s762 + $0xd70] sm:$0xff]
      %v1194 = vld [vmem:[%s762 + $0xd78] sm:$0xff]
      %v1195 = vld [vmem:[%s762 + $0xd80] sm:$0xff]
      %v1196 = vld [vmem:[%s762 + $0xd88] sm:$0xff]
      %v1197 = vld [vmem:[%s762 + $0xd90] sm:$0xff]
      %v1198 = vld [vmem:[%s762 + $0xd98] sm:$0xff]
      %v1199 = vld [vmem:[%s762 + $0xda0] sm:$0xff]
      %v1200 = vld [vmem:[%s762 + $0xda8] sm:$0xff]
      %v1201 = vld [vmem:[%s762 + $0xdb0] sm:$0xff]
      %v1202 = vld [vmem:[%s762 + $0xdb8] sm:$0xff]
      %v1203 = vld [vmem:[%s762 + $0xdc0] sm:$0xff]
      %v1204 = vld [vmem:[%s762 + $0xdc8] sm:$0xff]
      %v1205 = vld [vmem:[%s762 + $0xdd0] sm:$0xff]
      %v1206 = vld [vmem:[%s762 + $0xdd8] sm:$0xff]
      %v1207 = vld [vmem:[%s762 + $0xde0] sm:$0xff]
      %v1208 = vld [vmem:[%s762 + $0xde8] sm:$0xff]
      %v1209 = vld [vmem:[%s762 + $0xdf0] sm:$0xff]
      %v1210 = vld [vmem:[%s762 + $0xdf8] sm:$0xff]
      %v1211 = vld [vmem:[%s762 + $0xe00] sm:$0xff]
      %v1212 = vld [vmem:[%s762 + $0xe08] sm:$0xff]
      %v1213 = vld [vmem:[%s762 + $0xe10] sm:$0xff]
      %v1214 = vld [vmem:[%s762 + $0xe18] sm:$0xff]
      %v1215 = vld [vmem:[%s762 + $0xe20] sm:$0xff]
      %v1216 = vld [vmem:[%s762 + $0xe28] sm:$0xff]
      %v1217 = vld [vmem:[%s762 + $0xe30] sm:$0xff]
      %v1218 = vld [vmem:[%s762 + $0xe38] sm:$0xff]
      %v1219 = vld [vmem:[%s762 + $0xe40] sm:$0xff]
      %v1220 = vld [vmem:[%s762 + $0xe48] sm:$0xff]
      %v1221 = vld [vmem:[%s762 + $0xe50] sm:$0xff]
      %v1222 = vld [vmem:[%s762 + $0xe58] sm:$0xff]
      %v1223 = vld [vmem:[%s762 + $0xe60] sm:$0xff]
      %v1224 = vld [vmem:[%s762 + $0xe68] sm:$0xff]
      %v1225 = vld [vmem:[%s762 + $0xe70] sm:$0xff]
      %v1226 = vld [vmem:[%s762 + $0xe78] sm:$0xff]
      %v1227 = vld [vmem:[%s762 + $0xe80] sm:$0xff]
      %v1228 = vld [vmem:[%s762 + $0xe88] sm:$0xff]
      %v1229 = vld [vmem:[%s762 + $0xe90] sm:$0xff]
      %v1230 = vld [vmem:[%s762 + $0xe98] sm:$0xff]
      %v1231 = vld [vmem:[%s762 + $0xea0] sm:$0xff]
      %v1232 = vld [vmem:[%s762 + $0xea8] sm:$0xff]
      %v1233 = vld [vmem:[%s762 + $0xeb0] sm:$0xff]
      %v1234 = vld [vmem:[%s762 + $0xeb8] sm:$0xff]
      %v1235 = vld [vmem:[%s762 + $0xec0] sm:$0xff]
      %v1236 = vld [vmem:[%s762 + $0xec8] sm:$0xff]
      %v1237 = vld [vmem:[%s762 + $0xed0] sm:$0xff]
      %v1238 = vld [vmem:[%s762 + $0xed8] sm:$0xff]
      %v1239 = vld [vmem:[%s762 + $0xee0] sm:$0xff]
      %v1240 = vld [vmem:[%s762 + $0xee8] sm:$0xff]
      %v1241 = vld [vmem:[%s762 + $0xef0] sm:$0xff]
      %v1242 = vld [vmem:[%s762 + $0xef8] sm:$0xff]
      %v1243 = vld [vmem:[%s762 + $0xf00] sm:$0xff]
      %v1244 = vld [vmem:[%s762 + $0xf08] sm:$0xff]
      %v1245 = vld [vmem:[%s762 + $0xf10] sm:$0xff]
      %v1246 = vld [vmem:[%s762 + $0xf18] sm:$0xff]
      %v1247 = vld [vmem:[%s762 + $0xf20] sm:$0xff]
      %v1248 = vld [vmem:[%s762 + $0xf28] sm:$0xff]
      %v1249 = vld [vmem:[%s762 + $0xf30] sm:$0xff]
      %v1250 = vld [vmem:[%s762 + $0xf38] sm:$0xff]
      %v1251 = vld [vmem:[%s762 + $0xf40] sm:$0xff]
      %v1252 = vld [vmem:[%s762 + $0xf48] sm:$0xff]
      %v1253 = vld [vmem:[%s762 + $0xf50] sm:$0xff]
      %v1254 = vld [vmem:[%s762 + $0xf58] sm:$0xff]
      %v1255 = vld [vmem:[%s762 + $0xf60] sm:$0xff]
      %v1256 = vld [vmem:[%s762 + $0xf68] sm:$0xff]
      %v1257 = vld [vmem:[%s762 + $0xf70] sm:$0xff]
      %v1258 = vld [vmem:[%s762 + $0xf78] sm:$0xff]
      %v1259 = vld [vmem:[%s762 + $0xf80] sm:$0xff]
      %v1260 = vld [vmem:[%s762 + $0xf88] sm:$0xff]
      %v1261 = vld [vmem:[%s762 + $0xf90] sm:$0xff]
      %v1262 = vld [vmem:[%s762 + $0xf98] sm:$0xff]
      %v1263 = vld [vmem:[%s762 + $0xfa0] sm:$0xff]
      %v1264 = vld [vmem:[%s762 + $0xfa8] sm:$0xff]
      %v1265 = vld [vmem:[%s762 + $0xfb0] sm:$0xff]
      %v1266 = vld [vmem:[%s762 + $0xfb8] sm:$0xff]
      %v1267 = vld [vmem:[%s762 + $0xfc0] sm:$0xff]
      %v1268 = vld [vmem:[%s762 + $0xfc8] sm:$0xff]
      %v1269 = vld [vmem:[%s762 + $0xfd0] sm:$0xff]
      %v1270 = vld [vmem:[%s762 + $0xfd8] sm:$0xff]
      %v1271 = vld [vmem:[%s762 + $0xfe0] sm:$0xff]
      %v1272 = vld [vmem:[%s762 + $0xfe8] sm:$0xff]
      %v1273 = vld [vmem:[%s762 + $0xff0] sm:$0xff]
      %v1274 = vld [vmem:[%s762 + $0xff8] sm:$0xff]
      %v1275 = vld [vmem:[%s762 + $0x1000] sm:$0xff]
      %v1276 = vld [vmem:[%s762 + $0x1008] sm:$0xff]
      %v1277 = vld [vmem:[%s762 + $0x1010] sm:$0xff]
      %v1278 = vld [vmem:[%s762 + $0x1018] sm:$0xff]
      %v1279 = vld [vmem:[%s762 + $0x1020] sm:$0xff]
      %v1280 = vld [vmem:[%s762 + $0x1028] sm:$0xff]
      %v1281 = vld [vmem:[%s762 + $0x1030] sm:$0xff]
      %v1282 = vld [vmem:[%s762 + $0x1038] sm:$0xff]
      %v1283 = vld [vmem:[%s762 + $0x1040] sm:$0xff]
      %v1284 = vld [vmem:[%s762 + $0x1048] sm:$0xff]
      %v1285 = vld [vmem:[%s762 + $0x1050] sm:$0xff]
      %v1286 = vld [vmem:[%s762 + $0x1058] sm:$0xff]
      %v1287 = vld [vmem:[%s762 + $0x1060] sm:$0xff]
      %v1288 = vld [vmem:[%s762 + $0x1068] sm:$0xff]
      %v1289 = vld [vmem:[%s762 + $0x1070] sm:$0xff]
      %v1290 = vld [vmem:[%s762 + $0x1078] sm:$0xff]
      %v1291 = vld [vmem:[%s762 + $0x1080] sm:$0xff]
      %v1292 = vld [vmem:[%s762 + $0x1088] sm:$0xff]
      %v1293 = vld [vmem:[%s762 + $0x1090] sm:$0xff]
      %v1294 = vld [vmem:[%s762 + $0x1098] sm:$0xff]
      %v1295 = vld [vmem:[%s762 + $0x10a0] sm:$0xff]
      %v1296 = vld [vmem:[%s762 + $0x10a8] sm:$0xff]
      %v1297 = vld [vmem:[%s762 + $0x10b0] sm:$0xff]
      %v1298 = vld [vmem:[%s762 + $0x10b8] sm:$0xff]
      %v1299 = vld [vmem:[%s762 + $0x10c0] sm:$0xff]
      %v1300 = vld [vmem:[%s762 + $0x10c8] sm:$0xff]
      %v1301 = vld [vmem:[%s762 + $0x10d0] sm:$0xff]
      %v1302 = vld [vmem:[%s762 + $0x10d8] sm:$0xff]
      %v1303 = vld [vmem:[%s762 + $0x10e0] sm:$0xff]
      %v1304 = vld [vmem:[%s762 + $0x10e8] sm:$0xff]
      %v1305 = vld [vmem:[%s762 + $0x10f0] sm:$0xff]
      %v1306 = vld [vmem:[%s762 + $0x10f8] sm:$0xff]
      %v1307 = vld [vmem:[%s762 + $0x1100] sm:$0xff]
      %v1308 = vld [vmem:[%s762 + $0x1108] sm:$0xff]
      %v1309 = vld [vmem:[%s762 + $0x1110] sm:$0xff]
      %v1310 = vld [vmem:[%s762 + $0x1118] sm:$0xff]
      %v1311 = vld [vmem:[%s762 + $0x1120] sm:$0xff]
      %v1312 = vld [vmem:[%s762 + $0x1128] sm:$0xff]
      %v1313 = vld [vmem:[%s762 + $0x1130] sm:$0xff]
      %v1314 = vld [vmem:[%s762 + $0x1138] sm:$0xff]
      %v1315 = vld [vmem:[%s762 + $0x1140] sm:$0xff]
      %v1316 = vld [vmem:[%s762 + $0x1148] sm:$0xff]
      %v1317 = vld [vmem:[%s762 + $0x1150] sm:$0xff]
      %v1318 = vld [vmem:[%s762 + $0x1158] sm:$0xff]
      %v1319 = vld [vmem:[%s762 + $0x1160] sm:$0xff]
      %v1320 = vld [vmem:[%s762 + $0x1168] sm:$0xff]
      %v1321 = vld [vmem:[%s762 + $0x1170] sm:$0xff]
      %v1322 = vld [vmem:[%s762 + $0x1178] sm:$0xff]
      %v1323 = vld [vmem:[%s762 + $0x1180] sm:$0xff]
      %v1324 = vld [vmem:[%s762 + $0x1188] sm:$0xff]
      %v1325 = vld [vmem:[%s762 + $0x1190] sm:$0xff]
      %v1326 = vld [vmem:[%s762 + $0x1198] sm:$0xff]
      %v1327 = vld [vmem:[%s762 + $0x11a0] sm:$0xff]
      %v1328 = vld [vmem:[%s762 + $0x11a8] sm:$0xff]
      %v1329 = vld [vmem:[%s762 + $0x11b0] sm:$0xff]
      %v1330 = vld [vmem:[%s762 + $0x11b8] sm:$0xff]
      %v1331 = vld [vmem:[%s762 + $0x11c0] sm:$0xff]
      %v1332 = vld [vmem:[%s762 + $0x11c8] sm:$0xff]
      %v1333 = vld [vmem:[%s762 + $0x11d0] sm:$0xff]
      %v1334 = vld [vmem:[%s762 + $0x11d8] sm:$0xff]
      %v1335 = vld [vmem:[%s762 + $0x11e0] sm:$0xff]
      %v1336 = vld [vmem:[%s762 + $0x11e8] sm:$0xff]
      %v1337 = vld [vmem:[%s762 + $0x11f0] sm:$0xff]
      %v1338 = vld [vmem:[%s762 + $0x11f8] sm:$0xff]
      %vm1349 = vcmask 1046528
      %v1350 = vrot.slane %v752, 1
      %v1351 = vrot.slane %v757, 1
      %v1352 = vsel %vm1349, %v1350, %v1351
      %v1353 = vrot.slane %v753, 1
      %v1354 = vrot.slane %v758, 1
      %v1355 = vsel %vm1349, %v1353, %v1354
      %v1356 = vrot.slane %v754, 1
      %v1357 = vrot.slane %v759, 1
      %v1358 = vsel %vm1349, %v1356, %v1357
      %v1359 = vrot.slane %v755, 1
      %v1360 = vrot.slane %v760, 1
      %v1361 = vsel %vm1349, %v1359, %v1360
      %v1362 = vrot.slane %v756, 1
      %v1363 = vrot.slane %v761, 1
      %v1364 = vsel %vm1349, %v1362, %v1363
      %vm1369 = vcmask 523264
      %v1370 = vsel %vm1369, %v1364, 0
      %1372 = vmatprep.subr.mxu0 %v764
      %1373 = vmatpush1.msra.mxu0 %v763
      %1374 = vmatprep.subr.mxu0 %v772
      %1375 = vmatpush1.msra.mxu0 %v771
      %1376 = vmatprep.subr.mxu0 %v780
      %1377 = vmatpush1.msra.mxu0 %v779
      %1378 = vmatprep.subr.mxu0 %v788
      %1379 = vmatpush1.msra.mxu0 %v787
      %1380 = vmatprep.subr.mxu0 %v796
      %1381 = vmatpush1.msra.mxu0 %v795
      %1382 = vmatprep.subr.mxu0 %v804
      %1383 = vmatpush1.msra.mxu0 %v803
      %1384 = vmatprep.subr.mxu0 %v812
      %1385 = vmatpush1.msra.mxu0 %v811
      %1386 = vmatprep.subr.mxu0 %v820
      %1387 = vmatpush1.msra.mxu0 %v819
      %1388 = vmatprep.subr.mxu0 %v828
      %1389 = vmatpush1.msra.mxu0 %v827
      %1390 = vmatprep.subr.mxu0 %v836
      %1391 = vmatpush1.msra.mxu0 %v835
      %1392 = vmatprep.subr.mxu0 %v844
      %1393 = vmatpush1.msra.mxu0 %v843
      %1394 = vmatprep.subr.mxu0 %v852
      %1395 = vmatpush1.msra.mxu0 %v851
      %1396 = vmatprep.subr.mxu0 %v860
      %1397 = vmatpush1.msra.mxu0 %v859
      %1398 = vmatprep.subr.mxu0 %v868
      %1399 = vmatpush1.msra.mxu0 %v867
      %1400 = vmatprep.subr.mxu0 %v876
      %1401 = vmatpush1.msra.mxu0 %v875
      %1402 = vmatprep.subr.mxu0 %v884
      %1403 = vmatpush1.msra.mxu0 %v883
      %1404 = vmatprep.subr.mxu0 %v892
      %1405 = vmatpush1.msra.mxu0 %v891
      %1406 = vmatprep.subr.mxu0 %v900
      %1407 = vmatpush1.msra.mxu0 %v899
      %1408 = vmatprep.subr.mxu0 %v908
      %1409 = vmatpush1.msra.mxu0 %v907
      %1410 = vmatprep.subr.mxu0 %v916
      %1411 = vmatpush1.msra.mxu0 %v915
      %1412 = vmatprep.subr.mxu0 %v924
      %1413 = vmatpush1.msra.mxu0 %v923
      %1414 = vmatprep.subr.mxu0 %v932
      %1415 = vmatpush1.msra.mxu0 %v931
      %1416 = vmatprep.subr.mxu0 %v940
      %1417 = vmatpush1.msra.mxu0 %v939
      %1418 = vmatprep.subr.mxu0 %v948
      %1419 = vmatpush1.msra.mxu0 %v947
      %1420 = vmatprep.subr.mxu0 %v956
      %1421 = vmatpush1.msra.mxu0 %v955
      %1422 = vmatprep.subr.mxu0 %v964
      %1423 = vmatpush1.msra.mxu0 %v963
      %1424 = vmatprep.subr.mxu0 %v972
      %1425 = vmatpush1.msra.mxu0 %v971
      %1426 = vmatprep.subr.mxu0 %v980
      %1427 = vmatpush1.msra.mxu0 %v979
      %1428 = vmatprep.subr.mxu0 %v988
      %1429 = vmatpush1.msra.mxu0 %v987
      %1430 = vmatprep.subr.mxu0 %v996
      %1431 = vmatpush1.msra.mxu0 %v995
      %1432 = vmatprep.subr.mxu0 %v1004
      %1433 = vmatpush1.msra.mxu0 %v1003
      %1434 = vmatprep.subr.mxu0 %v1012
      %1435 = vmatpush1.msra.mxu0 %v1011
      %1436 = vmatprep.mubr.f32.mxu0 %v1355
      %1437 = vmatmul.mubr.f32.gmra.mrb[0].mxu0 %v1352
      %v1438 = vpop.f32.mrb[0].mxu0
      %v1439 = vadd.f32 0.0, %v1438
      %v1440 = vpop.f32.mrb[0].mxu0
      %v1441 = vadd.f32 0.0, %v1440
      %1442 = vdwg.mxu0
      %1443 = vmatprep.subr.mxu0 %v1020
      %1444 = vmatpush1.msra.mxu0 %v1019
      %1445 = vmatprep.subr.mxu0 %v1028
      %1446 = vmatpush1.msra.mxu0 %v1027
      %1447 = vmatprep.subr.mxu0 %v1036
      %1448 = vmatpush1.msra.mxu0 %v1035
      %1449 = vmatprep.subr.mxu0 %v1044
      %1450 = vmatpush1.msra.mxu0 %v1043
      %1451 = vmatprep.subr.mxu0 %v1052
      %1452 = vmatpush1.msra.mxu0 %v1051
      %1453 = vmatprep.subr.mxu0 %v1060
      %1454 = vmatpush1.msra.mxu0 %v1059
      %1455 = vmatprep.subr.mxu0 %v1068
      %1456 = vmatpush1.msra.mxu0 %v1067
      %1457 = vmatprep.subr.mxu0 %v1076
      %1458 = vmatpush1.msra.mxu0 %v1075
      %1459 = vmatprep.subr.mxu0 %v1084
      %1460 = vmatpush1.msra.mxu0 %v1083
      %1461 = vmatprep.subr.mxu0 %v1092
      %1462 = vmatpush1.msra.mxu0 %v1091
      %1463 = vmatprep.subr.mxu0 %v1100
      %1464 = vmatpush1.msra.mxu0 %v1099
      %1465 = vmatprep.subr.mxu0 %v1108
      %1466 = vmatpush1.msra.mxu0 %v1107
      %1467 = vmatprep.subr.mxu0 %v1116
      %1468 = vmatpush1.msra.mxu0 %v1115
      %1469 = vmatprep.subr.mxu0 %v1124
      %1470 = vmatpush1.msra.mxu0 %v1123
      %1471 = vmatprep.subr.mxu0 %v1132
      %1472 = vmatpush1.msra.mxu0 %v1131
      %1473 = vmatprep.subr.mxu0 %v1140
      %1474 = vmatpush1.msra.mxu0 %v1139
      %1475 = vmatprep.subr.mxu0 %v1148
      %1476 = vmatpush1.msra.mxu0 %v1147
      %1477 = vmatprep.subr.mxu0 %v1156
      %1478 = vmatpush1.msra.mxu0 %v1155
      %1479 = vmatprep.subr.mxu0 %v1164
      %1480 = vmatpush1.msra.mxu0 %v1163
      %1481 = vmatprep.subr.mxu0 %v1172
      %1482 = vmatpush1.msra.mxu0 %v1171
      %1483 = vmatprep.subr.mxu0 %v1180
      %1484 = vmatpush1.msra.mxu0 %v1179
      %1485 = vmatprep.subr.mxu0 %v1188
      %1486 = vmatpush1.msra.mxu0 %v1187
      %1487 = vmatprep.subr.mxu0 %v1196
      %1488 = vmatpush1.msra.mxu0 %v1195
      %1489 = vmatprep.subr.mxu0 %v1204
      %1490 = vmatpush1.msra.mxu0 %v1203
      %1491 = vmatprep.subr.mxu0 %v1212
      %1492 = vmatpush1.msra.mxu0 %v1211
      %1493 = vmatprep.subr.mxu0 %v1220
      %1494 = vmatpush1.msra.mxu0 %v1219
      %1495 = vmatprep.subr.mxu0 %v1228
      %1496 = vmatpush1.msra.mxu0 %v1227
      %1497 = vmatprep.subr.mxu0 %v1236
      %1498 = vmatpush1.msra.mxu0 %v1235
      %1499 = vmatprep.subr.mxu0 %v1244
      %1500 = vmatpush1.msra.mxu0 %v1243
      %1501 = vmatprep.subr.mxu0 %v1252
      %1502 = vmatpush1.msra.mxu0 %v1251
      %1503 = vmatprep.subr.mxu0 %v1260
      %1504 = vmatpush1.msra.mxu0 %v1259
      %1505 = vmatprep.subr.mxu0 %v1268
      %1506 = vmatpush1.msra.mxu0 %v1267
      %1507 = vmatprep.mubr.f32.mxu0 %v1361
      %1508 = vmatmul.mubr.f32.gmra.mrb[0].mxu0 %v1358
      %v1509 = vpop.f32.mrb[0].mxu0
      %v1510 = vadd.f32 %v1439, %v1509
      %v1511 = vpop.f32.mrb[0].mxu0
      %v1512 = vadd.f32 %v1441, %v1511
      %1513 = vdwg.mxu0
      %1514 = vmatprep.subr.mxu0 %v1276
      %1515 = vmatpush1.msra.mxu0 %v1275
      %1516 = vmatprep.subr.mxu0 %v1284
      %1517 = vmatpush1.msra.mxu0 %v1283
      %1518 = vmatprep.subr.mxu0 %v1292
      %1519 = vmatpush1.msra.mxu0 %v1291
      %1520 = vmatprep.subr.mxu0 %v1300
      %1521 = vmatpush1.msra.mxu0 %v1299
      %1522 = vmatprep.subr.mxu0 %v1308
      %1523 = vmatpush1.msra.mxu0 %v1307
      %1524 = vmatprep.subr.mxu0 %v1316
      %1525 = vmatpush1.msra.mxu0 %v1315
      %1526 = vmatprep.subr.mxu0 %v1324
      %1527 = vmatpush1.msra.mxu0 %v1323
      %1528 = vmatprep.subr.mxu0 %v1332
      %1529 = vmatpush1.msra.mxu0 %v1331
      %1530 = vmatprep.subr.mxu0 0.0
      %1531 = vmatpush1.msra.mxu0 0.0
      %1532 = vmatprep.subr.mxu0 0.0
      %1533 = vmatpush1.msra.mxu0 0.0
      %1534 = vmatprep.subr.mxu0 0.0
      %1535 = vmatpush1.msra.mxu0 0.0
      %1536 = vmatprep.subr.mxu0 0.0
      %1537 = vmatpush1.msra.mxu0 0.0
      %1538 = vmatprep.subr.mxu0 0.0
      %1539 = vmatpush1.msra.mxu0 0.0
      %1540 = vmatprep.subr.mxu0 0.0
      %1541 = vmatpush1.msra.mxu0 0.0
      %1542 = vmatprep.subr.mxu0 0.0
      %1543 = vmatpush1.msra.mxu0 0.0
      %1544 = vmatprep.subr.mxu0 0.0
      %1545 = vmatpush1.msra.mxu0 0.0
      %1546 = vmatprep.subr.mxu0 0.0
      %1547 = vmatpush1.msra.mxu0 0.0
      %1548 = vmatprep.subr.mxu0 0.0
      %1549 = vmatpush1.msra.mxu0 0.0
      %1550 = vmatprep.subr.mxu0 0.0
      %1551 = vmatpush1.msra.mxu0 0.0
      %1552 = vmatprep.subr.mxu0 0.0
      %1553 = vmatpush1.msra.mxu0 0.0
      %1554 = vmatprep.subr.mxu0 0.0
      %1555 = vmatpush1.msra.mxu0 0.0
      %1556 = vmatprep.subr.mxu0 0.0
      %1557 = vmatpush1.msra.mxu0 0.0
      %1558 = vmatprep.subr.mxu0 0.0
      %1559 = vmatpush1.msra.mxu0 0.0
      %1560 = vmatprep.subr.mxu0 0.0
      %1561 = vmatpush1.msra.mxu0 0.0
      %1562 = vmatprep.subr.mxu0 0.0
      %1563 = vmatpush1.msra.mxu0 0.0
      %1564 = vmatprep.subr.mxu0 0.0
      %1565 = vmatpush1.msra.mxu0 0.0
      %1566 = vmatprep.subr.mxu0 0.0
      %1567 = vmatpush1.msra.mxu0 0.0
      %1568 = vmatprep.subr.mxu0 0.0
      %1569 = vmatpush1.msra.mxu0 0.0
      %1570 = vmatprep.subr.mxu0 0.0
      %1571 = vmatpush1.msra.mxu0 0.0
      %1572 = vmatprep.subr.mxu0 0.0
      %1573 = vmatpush1.msra.mxu0 0.0
      %1574 = vmatprep.subr.mxu0 0.0
      %1575 = vmatpush1.msra.mxu0 0.0
      %1576 = vmatprep.subr.mxu0 0.0
      %1577 = vmatpush1.msra.mxu0 0.0
      %1578 = vmatprep.mubr.f32.mxu0 0.0
      %1579 = vmatmul.mubr.f32.gmra.mrb[0].mxu0 %v1370
      %v1580 = vpop.f32.mrb[0].mxu0
      %v1581 = vadd.f32 %v1510, %v1580
      %v1582 = vpop.f32.mrb[0].mxu0
      %v1583 = vadd.f32 %v1512, %v1582
      %1584 = vdwg.mxu0
      %1585 = vmatprep.subr.mxu0 %v766
      %1586 = vmatpush1.msra.mxu0 %v765
      %1587 = vmatprep.subr.mxu0 %v774
      %1588 = vmatpush1.msra.mxu0 %v773
      %1589 = vmatprep.subr.mxu0 %v782
      %1590 = vmatpush1.msra.mxu0 %v781
      %1591 = vmatprep.subr.mxu0 %v790
      %1592 = vmatpush1.msra.mxu0 %v789
      %1593 = vmatprep.subr.mxu0 %v798
      %1594 = vmatpush1.msra.mxu0 %v797
      %1595 = vmatprep.subr.mxu0 %v806
      %1596 = vmatpush1.msra.mxu0 %v805
      %1597 = vmatprep.subr.mxu0 %v814
      %1598 = vmatpush1.msra.mxu0 %v813
      %1599 = vmatprep.subr.mxu0 %v822
      %1600 = vmatpush1.msra.mxu0 %v821
      %1601 = vmatprep.subr.mxu0 %v830
      %1602 = vmatpush1.msra.mxu0 %v829
      %1603 = vmatprep.subr.mxu0 %v838
      %1604 = vmatpush1.msra.mxu0 %v837
      %1605 = vmatprep.subr.mxu0 %v846
      %1606 = vmatpush1.msra.mxu0 %v845
      %1607 = vmatprep.subr.mxu0 %v854
      %1608 = vmatpush1.msra.mxu0 %v853
      %1609 = vmatprep.subr.mxu0 %v862
      %1610 = vmatpush1.msra.mxu0 %v861
      %1611 = vmatprep.subr.mxu0 %v870
      %1612 = vmatpush1.msra.mxu0 %v869
      %1613 = vmatprep.subr.mxu0 %v878
      %1614 = vmatpush1.msra.mxu0 %v877
      %1615 = vmatprep.subr.mxu0 %v886
      %1616 = vmatpush1.msra.mxu0 %v885
      %1617 = vmatprep.subr.mxu0 %v894
      %1618 = vmatpush1.msra.mxu0 %v893
      %1619 = vmatprep.subr.mxu0 %v902
      %1620 = vmatpush1.msra.mxu0 %v901
      %1621 = vmatprep.subr.mxu0 %v910
      %1622 = vmatpush1.msra.mxu0 %v909
      %1623 = vmatprep.subr.mxu0 %v918
      %1624 = vmatpush1.msra.mxu0 %v917
      %1625 = vmatprep.subr.mxu0 %v926
      %1626 = vmatpush1.msra.mxu0 %v925
      %1627 = vmatprep.subr.mxu0 %v934
      %1628 = vmatpush1.msra.mxu0 %v933
      %1629 = vmatprep.subr.mxu0 %v942
      %1630 = vmatpush1.msra.mxu0 %v941
      %1631 = vmatprep.subr.mxu0 %v950
      %1632 = vmatpush1.msra.mxu0 %v949
      %1633 = vmatprep.subr.mxu0 %v958
      %1634 = vmatpush1.msra.mxu0 %v957
      %1635 = vmatprep.subr.mxu0 %v966
      %1636 = vmatpush1.msra.mxu0 %v965
      %1637 = vmatprep.subr.mxu0 %v974
      %1638 = vmatpush1.msra.mxu0 %v973
      %1639 = vmatprep.subr.mxu0 %v982
      %1640 = vmatpush1.msra.mxu0 %v981
      %1641 = vmatprep.subr.mxu0 %v990
      %1642 = vmatpush1.msra.mxu0 %v989
      %1643 = vmatprep.subr.mxu0 %v998
      %1644 = vmatpush1.msra.mxu0 %v997
      %1645 = vmatprep.subr.mxu0 %v1006
      %1646 = vmatpush1.msra.mxu0 %v1005
      %1647 = vmatprep.subr.mxu0 %v1014
      %1648 = vmatpush1.msra.mxu0 %v1013
      %1649 = vmatprep.mubr.f32.mxu0 %v1355
      %1650 = vmatmul.mubr.f32.gmra.mrb[0].mxu0 %v1352
      %v1651 = vpop.f32.mrb[0].mxu0
      %v1652 = vadd.f32 0.0, %v1651
      %v1653 = vpop.f32.mrb[0].mxu0
      %v1654 = vadd.f32 0.0, %v1653
      %1655 = vdwg.mxu0
      %1656 = vmatprep.subr.mxu0 %v1022
      %1657 = vmatpush1.msra.mxu0 %v1021
      %1658 = vmatprep.subr.mxu0 %v1030
      %1659 = vmatpush1.msra.mxu0 %v1029
      %1660 = vmatprep.subr.mxu0 %v1038
      %1661 = vmatpush1.msra.mxu0 %v1037
      %1662 = vmatprep.subr.mxu0 %v1046
      %1663 = vmatpush1.msra.mxu0 %v1045
      %1664 = vmatprep.subr.mxu0 %v1054
      %1665 = vmatpush1.msra.mxu0 %v1053
      %1666 = vmatprep.subr.mxu0 %v1062
      %1667 = vmatpush1.msra.mxu0 %v1061
      %1668 = vmatprep.subr.mxu0 %v1070
      %1669 = vmatpush1.msra.mxu0 %v1069
      %1670 = vmatprep.subr.mxu0 %v1078
      %1671 = vmatpush1.msra.mxu0 %v1077
      %1672 = vmatprep.subr.mxu0 %v1086
      %1673 = vmatpush1.msra.mxu0 %v1085
      %1674 = vmatprep.subr.mxu0 %v1094
      %1675 = vmatpush1.msra.mxu0 %v1093
      %1676 = vmatprep.subr.mxu0 %v1102
      %1677 = vmatpush1.msra.mxu0 %v1101
      %1678 = vmatprep.subr.mxu0 %v1110
      %1679 = vmatpush1.msra.mxu0 %v1109
      %1680 = vmatprep.subr.mxu0 %v1118
      %1681 = vmatpush1.msra.mxu0 %v1117
      %1682 = vmatprep.subr.mxu0 %v1126
      %1683 = vmatpush1.msra.mxu0 %v1125
      %1684 = vmatprep.subr.mxu0 %v1134
      %1685 = vmatpush1.msra.mxu0 %v1133
      %1686 = vmatprep.subr.mxu0 %v1142
      %1687 = vmatpush1.msra.mxu0 %v1141
      %1688 = vmatprep.subr.mxu0 %v1150
      %1689 = vmatpush1.msra.mxu0 %v1149
      %1690 = vmatprep.subr.mxu0 %v1158
      %1691 = vmatpush1.msra.mxu0 %v1157
      %1692 = vmatprep.subr.mxu0 %v1166
      %1693 = vmatpush1.msra.mxu0 %v1165
      %1694 = vmatprep.subr.mxu0 %v1174
      %1695 = vmatpush1.msra.mxu0 %v1173
      %1696 = vmatprep.subr.mxu0 %v1182
      %1697 = vmatpush1.msra.mxu0 %v1181
      %1698 = vmatprep.subr.mxu0 %v1190
      %1699 = vmatpush1.msra.mxu0 %v1189
      %1700 = vmatprep.subr.mxu0 %v1198
      %1701 = vmatpush1.msra.mxu0 %v1197
      %1702 = vmatprep.subr.mxu0 %v1206
      %1703 = vmatpush1.msra.mxu0 %v1205
      %1704 = vmatprep.subr.mxu0 %v1214
      %1705 = vmatpush1.msra.mxu0 %v1213
      %1706 = vmatprep.subr.mxu0 %v1222
      %1707 = vmatpush1.msra.mxu0 %v1221
      %1708 = vmatprep.subr.mxu0 %v1230
      %1709 = vmatpush1.msra.mxu0 %v1229
      %1710 = vmatprep.subr.mxu0 %v1238
      %1711 = vmatpush1.msra.mxu0 %v1237
      %1712 = vmatprep.subr.mxu0 %v1246
      %1713 = vmatpush1.msra.mxu0 %v1245
      %1714 = vmatprep.subr.mxu0 %v1254
      %1715 = vmatpush1.msra.mxu0 %v1253
      %1716 = vmatprep.subr.mxu0 %v1262
      %1717 = vmatpush1.msra.mxu0 %v1261
      %1718 = vmatprep.subr.mxu0 %v1270
      %1719 = vmatpush1.msra.mxu0 %v1269
      %1720 = vmatprep.mubr.f32.mxu0 %v1361
      %1721 = vmatmul.mubr.f32.gmra.mrb[0].mxu0 %v1358
      %v1722 = vpop.f32.mrb[0].mxu0
      %v1723 = vadd.f32 %v1652, %v1722
      %v1724 = vpop.f32.mrb[0].mxu0
      %v1725 = vadd.f32 %v1654, %v1724
      %1726 = vdwg.mxu0
      %1727 = vmatprep.subr.mxu0 %v1278
      %1728 = vmatpush1.msra.mxu0 %v1277
      %1729 = vmatprep.subr.mxu0 %v1286
      %1730 = vmatpush1.msra.mxu0 %v1285
      %1731 = vmatprep.subr.mxu0 %v1294
      %1732 = vmatpush1.msra.mxu0 %v1293
      %1733 = vmatprep.subr.mxu0 %v1302
      %1734 = vmatpush1.msra.mxu0 %v1301
      %1735 = vmatprep.subr.mxu0 %v1310
      %1736 = vmatpush1.msra.mxu0 %v1309
      %1737 = vmatprep.subr.mxu0 %v1318
      %1738 = vmatpush1.msra.mxu0 %v1317
      %1739 = vmatprep.subr.mxu0 %v1326
      %1740 = vmatpush1.msra.mxu0 %v1325
      %1741 = vmatprep.subr.mxu0 %v1334
      %1742 = vmatpush1.msra.mxu0 %v1333
      %1743 = vmatprep.subr.mxu0 0.0
      %1744 = vmatpush1.msra.mxu0 0.0
      %1745 = vmatprep.subr.mxu0 0.0
      %1746 = vmatpush1.msra.mxu0 0.0
      %1747 = vmatprep.subr.mxu0 0.0
      %1748 = vmatpush1.msra.mxu0 0.0
      %1749 = vmatprep.subr.mxu0 0.0
      %1750 = vmatpush1.msra.mxu0 0.0
      %1751 = vmatprep.subr.mxu0 0.0
      %1752 = vmatpush1.msra.mxu0 0.0
      %1753 = vmatprep.subr.mxu0 0.0
      %1754 = vmatpush1.msra.mxu0 0.0
      %1755 = vmatprep.subr.mxu0 0.0
      %1756 = vmatpush1.msra.mxu0 0.0
      %1757 = vmatprep.subr.mxu0 0.0
      %1758 = vmatpush1.msra.mxu0 0.0
      %1759 = vmatprep.subr.mxu0 0.0
      %1760 = vmatpush1.msra.mxu0 0.0
      %1761 = vmatprep.subr.mxu0 0.0
      %1762 = vmatpush1.msra.mxu0 0.0
      %1763 = vmatprep.subr.mxu0 0.0
      %1764 = vmatpush1.msra.mxu0 0.0
      %1765 = vmatprep.subr.mxu0 0.0
      %1766 = vmatpush1.msra.mxu0 0.0
      %1767 = vmatprep.subr.mxu0 0.0
      %1768 = vmatpush1.msra.mxu0 0.0
      %1769 = vmatprep.subr.mxu0 0.0
      %1770 = vmatpush1.msra.mxu0 0.0
      %1771 = vmatprep.subr.mxu0 0.0
      %1772 = vmatpush1.msra.mxu0 0.0
      %1773 = vmatprep.subr.mxu0 0.0
      %1774 = vmatpush1.msra.mxu0 0.0
      %1775 = vmatprep.subr.mxu0 0.0
      %1776 = vmatpush1.msra.mxu0 0.0
      %1777 = vmatprep.subr.mxu0 0.0
      %1778 = vmatpush1.msra.mxu0 0.0
      %1779 = vmatprep.subr.mxu0 0.0
      %1780 = vmatpush1.msra.mxu0 0.0
      %1781 = vmatprep.subr.mxu0 0.0
      %1782 = vmatpush1.msra.mxu0 0.0
      %1783 = vmatprep.subr.mxu0 0.0
      %1784 = vmatpush1.msra.mxu0 0.0
      %1785 = vmatprep.subr.mxu0 0.0
      %1786 = vmatpush1.msra.mxu0 0.0
      %1787 = vmatprep.subr.mxu0 0.0
      %1788 = vmatpush1.msra.mxu0 0.0
      %1789 = vmatprep.subr.mxu0 0.0
      %1790 = vmatpush1.msra.mxu0 0.0
      %1791 = vmatprep.mubr.f32.mxu0 0.0
      %1792 = vmatmul.mubr.f32.gmra.mrb[0].mxu0 %v1370
      %v1793 = vpop.f32.mrb[0].mxu0
      %v1794 = vadd.f32 %v1723, %v1793
      %v1795 = vpop.f32.mrb[0].mxu0
      %v1796 = vadd.f32 %v1725, %v1795
      %1797 = vdwg.mxu0
      %1798 = vmatprep.subr.mxu0 %v768
      %1799 = vmatpush1.msra.mxu0 %v767
      %1800 = vmatprep.subr.mxu0 %v776
      %1801 = vmatpush1.msra.mxu0 %v775
      %1802 = vmatprep.subr.mxu0 %v784
      %1803 = vmatpush1.msra.mxu0 %v783
      %1804 = vmatprep.subr.mxu0 %v792
      %1805 = vmatpush1.msra.mxu0 %v791
      %1806 = vmatprep.subr.mxu0 %v800
      %1807 = vmatpush1.msra.mxu0 %v799
      %1808 = vmatprep.subr.mxu0 %v808
      %1809 = vmatpush1.msra.mxu0 %v807
      %1810 = vmatprep.subr.mxu0 %v816
      %1811 = vmatpush1.msra.mxu0 %v815
      %1812 = vmatprep.subr.mxu0 %v824
      %1813 = vmatpush1.msra.mxu0 %v823
      %1814 = vmatprep.subr.mxu0 %v832
      %1815 = vmatpush1.msra.mxu0 %v831
      %1816 = vmatprep.subr.mxu0 %v840
      %1817 = vmatpush1.msra.mxu0 %v839
      %1818 = vmatprep.subr.mxu0 %v848
      %1819 = vmatpush1.msra.mxu0 %v847
      %1820 = vmatprep.subr.mxu0 %v856
      %1821 = vmatpush1.msra.mxu0 %v855
      %1822 = vmatprep.subr.mxu0 %v864
      %1823 = vmatpush1.msra.mxu0 %v863
      %1824 = vmatprep.subr.mxu0 %v872
      %1825 = vmatpush1.msra.mxu0 %v871
      %1826 = vmatprep.subr.mxu0 %v880
      %1827 = vmatpush1.msra.mxu0 %v879
      %1828 = vmatprep.subr.mxu0 %v888
      %1829 = vmatpush1.msra.mxu0 %v887
      %1830 = vmatprep.subr.mxu0 %v896
      %1831 = vmatpush1.msra.mxu0 %v895
      %1832 = vmatprep.subr.mxu0 %v904
      %1833 = vmatpush1.msra.mxu0 %v903
      %1834 = vmatprep.subr.mxu0 %v912
      %1835 = vmatpush1.msra.mxu0 %v911
      %1836 = vmatprep.subr.mxu0 %v920
      %1837 = vmatpush1.msra.mxu0 %v919
      %1838 = vmatprep.subr.mxu0 %v928
      %1839 = vmatpush1.msra.mxu0 %v927
      %1840 = vmatprep.subr.mxu0 %v936
      %1841 = vmatpush1.msra.mxu0 %v935
      %1842 = vmatprep.subr.mxu0 %v944
      %1843 = vmatpush1.msra.mxu0 %v943
      %1844 = vmatprep.subr.mxu0 %v952
      %1845 = vmatpush1.msra.mxu0 %v951
      %1846 = vmatprep.subr.mxu0 %v960
      %1847 = vmatpush1.msra.mxu0 %v959
      %1848 = vmatprep.subr.mxu0 %v968
      %1849 = vmatpush1.msra.mxu0 %v967
      %1850 = vmatprep.subr.mxu0 %v976
      %1851 = vmatpush1.msra.mxu0 %v975
      %1852 = vmatprep.subr.mxu0 %v984
      %1853 = vmatpush1.msra.mxu0 %v983
      %1854 = vmatprep.subr.mxu0 %v992
      %1855 = vmatpush1.msra.mxu0 %v991
      %1856 = vmatprep.subr.mxu0 %v1000
      %1857 = vmatpush1.msra.mxu0 %v999
      %1858 = vmatprep.subr.mxu0 %v1008
      %1859 = vmatpush1.msra.mxu0 %v1007
      %1860 = vmatprep.subr.mxu0 %v1016
      %1861 = vmatpush1.msra.mxu0 %v1015
      %1862 = vmatprep.mubr.f32.mxu0 %v1355
      %1863 = vmatmul.mubr.f32.gmra.mrb[0].mxu0 %v1352
      %v1864 = vpop.f32.mrb[0].mxu0
      %v1865 = vadd.f32 0.0, %v1864
      %v1866 = vpop.f32.mrb[0].mxu0
      %v1867 = vadd.f32 0.0, %v1866
      %1868 = vdwg.mxu0
      %1869 = vmatprep.subr.mxu0 %v1024
      %1870 = vmatpush1.msra.mxu0 %v1023
      %1871 = vmatprep.subr.mxu0 %v1032
      %1872 = vmatpush1.msra.mxu0 %v1031
      %1873 = vmatprep.subr.mxu0 %v1040
      %1874 = vmatpush1.msra.mxu0 %v1039
      %1875 = vmatprep.subr.mxu0 %v1048
      %1876 = vmatpush1.msra.mxu0 %v1047
      %1877 = vmatprep.subr.mxu0 %v1056
      %1878 = vmatpush1.msra.mxu0 %v1055
      %1879 = vmatprep.subr.mxu0 %v1064
      %1880 = vmatpush1.msra.mxu0 %v1063
      %1881 = vmatprep.subr.mxu0 %v1072
      %1882 = vmatpush1.msra.mxu0 %v1071
      %1883 = vmatprep.subr.mxu0 %v1080
      %1884 = vmatpush1.msra.mxu0 %v1079
      %1885 = vmatprep.subr.mxu0 %v1088
      %1886 = vmatpush1.msra.mxu0 %v1087
      %1887 = vmatprep.subr.mxu0 %v1096
      %1888 = vmatpush1.msra.mxu0 %v1095
      %1889 = vmatprep.subr.mxu0 %v1104
      %1890 = vmatpush1.msra.mxu0 %v1103
      %1891 = vmatprep.subr.mxu0 %v1112
      %1892 = vmatpush1.msra.mxu0 %v1111
      %1893 = vmatprep.subr.mxu0 %v1120
      %1894 = vmatpush1.msra.mxu0 %v1119
      %1895 = vmatprep.subr.mxu0 %v1128
      %1896 = vmatpush1.msra.mxu0 %v1127
      %1897 = vmatprep.subr.mxu0 %v1136
      %1898 = vmatpush1.msra.mxu0 %v1135
      %1899 = vmatprep.subr.mxu0 %v1144
      %1900 = vmatpush1.msra.mxu0 %v1143
      %1901 = vmatprep.subr.mxu0 %v1152
      %1902 = vmatpush1.msra.mxu0 %v1151
      %1903 = vmatprep.subr.mxu0 %v1160
      %1904 = vmatpush1.msra.mxu0 %v1159
      %1905 = vmatprep.subr.mxu0 %v1168
      %1906 = vmatpush1.msra.mxu0 %v1167
      %1907 = vmatprep.subr.mxu0 %v1176
      %1908 = vmatpush1.msra.mxu0 %v1175
      %1909 = vmatprep.subr.mxu0 %v1184
      %1910 = vmatpush1.msra.mxu0 %v1183
      %1911 = vmatprep.subr.mxu0 %v1192
      %1912 = vmatpush1.msra.mxu0 %v1191
      %1913 = vmatprep.subr.mxu0 %v1200
      %1914 = vmatpush1.msra.mxu0 %v1199
      %1915 = vmatprep.subr.mxu0 %v1208
      %1916 = vmatpush1.msra.mxu0 %v1207
      %1917 = vmatprep.subr.mxu0 %v1216
      %1918 = vmatpush1.msra.mxu0 %v1215
      %1919 = vmatprep.subr.mxu0 %v1224
      %1920 = vmatpush1.msra.mxu0 %v1223
      %1921 = vmatprep.subr.mxu0 %v1232
      %1922 = vmatpush1.msra.mxu0 %v1231
      %1923 = vmatprep.subr.mxu0 %v1240
      %1924 = vmatpush1.msra.mxu0 %v1239
      %1925 = vmatprep.subr.mxu0 %v1248
      %1926 = vmatpush1.msra.mxu0 %v1247
      %1927 = vmatprep.subr.mxu0 %v1256
      %1928 = vmatpush1.msra.mxu0 %v1255
      %1929 = vmatprep.subr.mxu0 %v1264
      %1930 = vmatpush1.msra.mxu0 %v1263
      %1931 = vmatprep.subr.mxu0 %v1272
      %1932 = vmatpush1.msra.mxu0 %v1271
      %1933 = vmatprep.mubr.f32.mxu0 %v1361
      %1934 = vmatmul.mubr.f32.gmra.mrb[0].mxu0 %v1358
      %v1935 = vpop.f32.mrb[0].mxu0
      %v1936 = vadd.f32 %v1865, %v1935
      %v1937 = vpop.f32.mrb[0].mxu0
      %v1938 = vadd.f32 %v1867, %v1937
      %1939 = vdwg.mxu0
      %1940 = vmatprep.subr.mxu0 %v1280
      %1941 = vmatpush1.msra.mxu0 %v1279
      %1942 = vmatprep.subr.mxu0 %v1288
      %1943 = vmatpush1.msra.mxu0 %v1287
      %1944 = vmatprep.subr.mxu0 %v1296
      %1945 = vmatpush1.msra.mxu0 %v1295
      %1946 = vmatprep.subr.mxu0 %v1304
      %1947 = vmatpush1.msra.mxu0 %v1303
      %1948 = vmatprep.subr.mxu0 %v1312
      %1949 = vmatpush1.msra.mxu0 %v1311
      %1950 = vmatprep.subr.mxu0 %v1320
      %1951 = vmatpush1.msra.mxu0 %v1319
      %1952 = vmatprep.subr.mxu0 %v1328
      %1953 = vmatpush1.msra.mxu0 %v1327
      %1954 = vmatprep.subr.mxu0 %v1336
      %1955 = vmatpush1.msra.mxu0 %v1335
      %1956 = vmatprep.subr.mxu0 0.0
      %1957 = vmatpush1.msra.mxu0 0.0
      %1958 = vmatprep.subr.mxu0 0.0
      %1959 = vmatpush1.msra.mxu0 0.0
      %1960 = vmatprep.subr.mxu0 0.0
      %1961 = vmatpush1.msra.mxu0 0.0
      %1962 = vmatprep.subr.mxu0 0.0
      %1963 = vmatpush1.msra.mxu0 0.0
      %1964 = vmatprep.subr.mxu0 0.0
      %1965 = vmatpush1.msra.mxu0 0.0
      %1966 = vmatprep.subr.mxu0 0.0
      %1967 = vmatpush1.msra.mxu0 0.0
      %1968 = vmatprep.subr.mxu0 0.0
      %1969 = vmatpush1.msra.mxu0 0.0
      %1970 = vmatprep.subr.mxu0 0.0
      %1971 = vmatpush1.msra.mxu0 0.0
      %1972 = vmatprep.subr.mxu0 0.0
      %1973 = vmatpush1.msra.mxu0 0.0
      %1974 = vmatprep.subr.mxu0 0.0
      %1975 = vmatpush1.msra.mxu0 0.0
      %1976 = vmatprep.subr.mxu0 0.0
      %1977 = vmatpush1.msra.mxu0 0.0
      %1978 = vmatprep.subr.mxu0 0.0
      %1979 = vmatpush1.msra.mxu0 0.0
      %1980 = vmatprep.subr.mxu0 0.0
      %1981 = vmatpush1.msra.mxu0 0.0
      %1982 = vmatprep.subr.mxu0 0.0
      %1983 = vmatpush1.msra.mxu0 0.0
      %1984 = vmatprep.subr.mxu0 0.0
      %1985 = vmatpush1.msra.mxu0 0.0
      %1986 = vmatprep.subr.mxu0 0.0
      %1987 = vmatpush1.msra.mxu0 0.0
      %1988 = vmatprep.subr.mxu0 0.0
      %1989 = vmatpush1.msra.mxu0 0.0
      %1990 = vmatprep.subr.mxu0 0.0
      %1991 = vmatpush1.msra.mxu0 0.0
      %1992 = vmatprep.subr.mxu0 0.0
      %1993 = vmatpush1.msra.mxu0 0.0
      %1994 = vmatprep.subr.mxu0 0.0
      %1995 = vmatpush1.msra.mxu0 0.0
      %1996 = vmatprep.subr.mxu0 0.0
      %1997 = vmatpush1.msra.mxu0 0.0
      %1998 = vmatprep.subr.mxu0 0.0
      %1999 = vmatpush1.msra.mxu0 0.0
      %2000 = vmatprep.subr.mxu0 0.0
      %2001 = vmatpush1.msra.mxu0 0.0
      %2002 = vmatprep.subr.mxu0 0.0
      %2003 = vmatpush1.msra.mxu0 0.0
      %2004 = vmatprep.mubr.f32.mxu0 0.0
      %2005 = vmatmul.mubr.f32.gmra.mrb[0].mxu0 %v1370
      %v2006 = vpop.f32.mrb[0].mxu0
      %v2007 = vadd.f32 %v1936, %v2006
      %v2008 = vpop.f32.mrb[0].mxu0
      %v2009 = vadd.f32 %v1938, %v2008
      %2010 = vdwg.mxu0
      %2011 = vmatprep.subr.mxu0 %v770
      %2012 = vmatpush1.msra.mxu0 %v769
      %2013 = vmatprep.subr.mxu0 %v778
      %2014 = vmatpush1.msra.mxu0 %v777
      %2015 = vmatprep.subr.mxu0 %v786
      %2016 = vmatpush1.msra.mxu0 %v785
      %2017 = vmatprep.subr.mxu0 %v794
      %2018 = vmatpush1.msra.mxu0 %v793
      %2019 = vmatprep.subr.mxu0 %v802
      %2020 = vmatpush1.msra.mxu0 %v801
      %2021 = vmatprep.subr.mxu0 %v810
      %2022 = vmatpush1.msra.mxu0 %v809
      %2023 = vmatprep.subr.mxu0 %v818
      %2024 = vmatpush1.msra.mxu0 %v817
      %2025 = vmatprep.subr.mxu0 %v826
      %2026 = vmatpush1.msra.mxu0 %v825
      %2027 = vmatprep.subr.mxu0 %v834
      %2028 = vmatpush1.msra.mxu0 %v833
      %2029 = vmatprep.subr.mxu0 %v842
      %2030 = vmatpush1.msra.mxu0 %v841
      %2031 = vmatprep.subr.mxu0 %v850
      %2032 = vmatpush1.msra.mxu0 %v849
      %2033 = vmatprep.subr.mxu0 %v858
      %2034 = vmatpush1.msra.mxu0 %v857
      %2035 = vmatprep.subr.mxu0 %v866
      %2036 = vmatpush1.msra.mxu0 %v865
      %2037 = vmatprep.subr.mxu0 %v874
      %2038 = vmatpush1.msra.mxu0 %v873
      %2039 = vmatprep.subr.mxu0 %v882
      %2040 = vmatpush1.msra.mxu0 %v881
      %2041 = vmatprep.subr.mxu0 %v890
      %2042 = vmatpush1.msra.mxu0 %v889
      %2043 = vmatprep.subr.mxu0 %v898
      %2044 = vmatpush1.msra.mxu0 %v897
      %2045 = vmatprep.subr.mxu0 %v906
      %2046 = vmatpush1.msra.mxu0 %v905
      %2047 = vmatprep.subr.mxu0 %v914
      %2048 = vmatpush1.msra.mxu0 %v913
      %2049 = vmatprep.subr.mxu0 %v922
      %2050 = vmatpush1.msra.mxu0 %v921
      %2051 = vmatprep.subr.mxu0 %v930
      %2052 = vmatpush1.msra.mxu0 %v929
      %2053 = vmatprep.subr.mxu0 %v938
      %2054 = vmatpush1.msra.mxu0 %v937
      %2055 = vmatprep.subr.mxu0 %v946
      %2056 = vmatpush1.msra.mxu0 %v945
      %2057 = vmatprep.subr.mxu0 %v954
      %2058 = vmatpush1.msra.mxu0 %v953
      %2059 = vmatprep.subr.mxu0 %v962
      %2060 = vmatpush1.msra.mxu0 %v961
      %2061 = vmatprep.subr.mxu0 %v970
      %2062 = vmatpush1.msra.mxu0 %v969
      %2063 = vmatprep.subr.mxu0 %v978
      %2064 = vmatpush1.msra.mxu0 %v977
      %2065 = vmatprep.subr.mxu0 %v986
      %2066 = vmatpush1.msra.mxu0 %v985
      %2067 = vmatprep.subr.mxu0 %v994
      %2068 = vmatpush1.msra.mxu0 %v993
      %2069 = vmatprep.subr.mxu0 %v1002
      %2070 = vmatpush1.msra.mxu0 %v1001
      %2071 = vmatprep.subr.mxu0 %v1010
      %2072 = vmatpush1.msra.mxu0 %v1009
      %2073 = vmatprep.subr.mxu0 %v1018
      %2074 = vmatpush1.msra.mxu0 %v1017
      %2075 = vmatprep.mubr.f32.mxu0 %v1355
      %2076 = vmatmul.mubr.f32.gmra.mrb[0].mxu0 %v1352
      %v2077 = vpop.f32.mrb[0].mxu0
      %v2078 = vadd.f32 0.0, %v2077
      %v2079 = vpop.f32.mrb[0].mxu0
      %v2080 = vadd.f32 0.0, %v2079
      %2081 = vdwg.mxu0
      %2082 = vmatprep.subr.mxu0 %v1026
      %2083 = vmatpush1.msra.mxu0 %v1025
      %2084 = vmatprep.subr.mxu0 %v1034
      %2085 = vmatpush1.msra.mxu0 %v1033
      %2086 = vmatprep.subr.mxu0 %v1042
      %2087 = vmatpush1.msra.mxu0 %v1041
      %2088 = vmatprep.subr.mxu0 %v1050
      %2089 = vmatpush1.msra.mxu0 %v1049
      %2090 = vmatprep.subr.mxu0 %v1058
      %2091 = vmatpush1.msra.mxu0 %v1057
      %2092 = vmatprep.subr.mxu0 %v1066
      %2093 = vmatpush1.msra.mxu0 %v1065
      %2094 = vmatprep.subr.mxu0 %v1074
      %2095 = vmatpush1.msra.mxu0 %v1073
      %2096 = vmatprep.subr.mxu0 %v1082
      %2097 = vmatpush1.msra.mxu0 %v1081
      %2098 = vmatprep.subr.mxu0 %v1090
      %2099 = vmatpush1.msra.mxu0 %v1089
      %2100 = vmatprep.subr.mxu0 %v1098
      %2101 = vmatpush1.msra.mxu0 %v1097
      %2102 = vmatprep.subr.mxu0 %v1106
      %2103 = vmatpush1.msra.mxu0 %v1105
      %2104 = vmatprep.subr.mxu0 %v1114
      %2105 = vmatpush1.msra.mxu0 %v1113
      %2106 = vmatprep.subr.mxu0 %v1122
      %2107 = vmatpush1.msra.mxu0 %v1121
      %2108 = vmatprep.subr.mxu0 %v1130
      %2109 = vmatpush1.msra.mxu0 %v1129
      %2110 = vmatprep.subr.mxu0 %v1138
      %2111 = vmatpush1.msra.mxu0 %v1137
      %2112 = vmatprep.subr.mxu0 %v1146
      %2113 = vmatpush1.msra.mxu0 %v1145
      %2114 = vmatprep.subr.mxu0 %v1154
      %2115 = vmatpush1.msra.mxu0 %v1153
      %2116 = vmatprep.subr.mxu0 %v1162
      %2117 = vmatpush1.msra.mxu0 %v1161
      %2118 = vmatprep.subr.mxu0 %v1170
      %2119 = vmatpush1.msra.mxu0 %v1169
      %2120 = vmatprep.subr.mxu0 %v1178
      %2121 = vmatpush1.msra.mxu0 %v1177
      %2122 = vmatprep.subr.mxu0 %v1186
      %2123 = vmatpush1.msra.mxu0 %v1185
      %2124 = vmatprep.subr.mxu0 %v1194
      %2125 = vmatpush1.msra.mxu0 %v1193
      %2126 = vmatprep.subr.mxu0 %v1202
      %2127 = vmatpush1.msra.mxu0 %v1201
      %2128 = vmatprep.subr.mxu0 %v1210
      %2129 = vmatpush1.msra.mxu0 %v1209
      %2130 = vmatprep.subr.mxu0 %v1218
      %2131 = vmatpush1.msra.mxu0 %v1217
      %2132 = vmatprep.subr.mxu0 %v1226
      %2133 = vmatpush1.msra.mxu0 %v1225
      %2134 = vmatprep.subr.mxu0 %v1234
      %2135 = vmatpush1.msra.mxu0 %v1233
      %2136 = vmatprep.subr.mxu0 %v1242
      %2137 = vmatpush1.msra.mxu0 %v1241
      %2138 = vmatprep.subr.mxu0 %v1250
      %2139 = vmatpush1.msra.mxu0 %v1249
      %2140 = vmatprep.subr.mxu0 %v1258
      %2141 = vmatpush1.msra.mxu0 %v1257
      %2142 = vmatprep.subr.mxu0 %v1266
      %2143 = vmatpush1.msra.mxu0 %v1265
      %2144 = vmatprep.subr.mxu0 %v1274
      %2145 = vmatpush1.msra.mxu0 %v1273
      %2146 = vmatprep.mubr.f32.mxu0 %v1361
      %2147 = vmatmul.mubr.f32.gmra.mrb[0].mxu0 %v1358
      %v2148 = vpop.f32.mrb[0].mxu0
      %v2149 = vadd.f32 %v2078, %v2148
      %v2150 = vpop.f32.mrb[0].mxu0
      %v2151 = vadd.f32 %v2080, %v2150
      %2152 = vdwg.mxu0
      %2153 = vmatprep.subr.mxu0 %v1282
      %2154 = vmatpush1.msra.mxu0 %v1281
      %2155 = vmatprep.subr.mxu0 %v1290
      %2156 = vmatpush1.msra.mxu0 %v1289
      %2157 = vmatprep.subr.mxu0 %v1298
      %2158 = vmatpush1.msra.mxu0 %v1297
      %2159 = vmatprep.subr.mxu0 %v1306
      %2160 = vmatpush1.msra.mxu0 %v1305
      %2161 = vmatprep.subr.mxu0 %v1314
      %2162 = vmatpush1.msra.mxu0 %v1313
      %2163 = vmatprep.subr.mxu0 %v1322
      %2164 = vmatpush1.msra.mxu0 %v1321
      %2165 = vmatprep.subr.mxu0 %v1330
      %2166 = vmatpush1.msra.mxu0 %v1329
      %2167 = vmatprep.subr.mxu0 %v1338
      %2168 = vmatpush1.msra.mxu0 %v1337
      %2169 = vmatprep.subr.mxu0 0.0
      %2170 = vmatpush1.msra.mxu0 0.0
      %2171 = vmatprep.subr.mxu0 0.0
      %2172 = vmatpush1.msra.mxu0 0.0
      %2173 = vmatprep.subr.mxu0 0.0
      %2174 = vmatpush1.msra.mxu0 0.0
      %2175 = vmatprep.subr.mxu0 0.0
      %2176 = vmatpush1.msra.mxu0 0.0
      %2177 = vmatprep.subr.mxu0 0.0
      %2178 = vmatpush1.msra.mxu0 0.0
      %2179 = vmatprep.subr.mxu0 0.0
      %2180 = vmatpush1.msra.mxu0 0.0
      %2181 = vmatprep.subr.mxu0 0.0
      %2182 = vmatpush1.msra.mxu0 0.0
      %2183 = vmatprep.subr.mxu0 0.0
      %2184 = vmatpush1.msra.mxu0 0.0
      %2185 = vmatprep.subr.mxu0 0.0
      %2186 = vmatpush1.msra.mxu0 0.0
      %2187 = vmatprep.subr.mxu0 0.0
      %2188 = vmatpush1.msra.mxu0 0.0
      %2189 = vmatprep.subr.mxu0 0.0
      %2190 = vmatpush1.msra.mxu0 0.0
      %2191 = vmatprep.subr.mxu0 0.0
      %2192 = vmatpush1.msra.mxu0 0.0
      %2193 = vmatprep.subr.mxu0 0.0
      %2194 = vmatpush1.msra.mxu0 0.0
      %2195 = vmatprep.subr.mxu0 0.0
      %2196 = vmatpush1.msra.mxu0 0.0
      %2197 = vmatprep.subr.mxu0 0.0
      %2198 = vmatpush1.msra.mxu0 0.0
      %2199 = vmatprep.subr.mxu0 0.0
      %2200 = vmatpush1.msra.mxu0 0.0
      %2201 = vmatprep.subr.mxu0 0.0
      %2202 = vmatpush1.msra.mxu0 0.0
      %2203 = vmatprep.subr.mxu0 0.0
      %2204 = vmatpush1.msra.mxu0 0.0
      %2205 = vmatprep.subr.mxu0 0.0
      %2206 = vmatpush1.msra.mxu0 0.0
      %2207 = vmatprep.subr.mxu0 0.0
      %2208 = vmatpush1.msra.mxu0 0.0
      %2209 = vmatprep.subr.mxu0 0.0
      %2210 = vmatpush1.msra.mxu0 0.0
      %2211 = vmatprep.subr.mxu0 0.0
      %2212 = vmatpush1.msra.mxu0 0.0
      %2213 = vmatprep.subr.mxu0 0.0
      %2214 = vmatpush1.msra.mxu0 0.0
      %2215 = vmatprep.subr.mxu0 0.0
      %2216 = vmatpush1.msra.mxu0 0.0
      %2217 = vmatprep.mubr.f32.mxu0 0.0
      %2218 = vmatmul.mubr.f32.gmra.mrb[0].mxu0 %v1370
      %v2219 = vpop.f32.mrb[0].mxu0
      %v2220 = vadd.f32 %v2149, %v2219
      %v2221 = vpop.f32.mrb[0].mxu0
      %v2222 = vadd.f32 %v2151, %v2221
      %2223 = vdwg.mxu0
      %v2225 = vsel %vm1369, %v175, 0
      %2227 = vmatprep.subr.mxu0 %v177
      %2228 = vmatpush1.msra.mxu0 %v176
      %2229 = vmatprep.subr.mxu0 %v185
      %2230 = vmatpush1.msra.mxu0 %v184
      %2231 = vmatprep.subr.mxu0 %v193
      %2232 = vmatpush1.msra.mxu0 %v192
      %2233 = vmatprep.subr.mxu0 %v201
      %2234 = vmatpush1.msra.mxu0 %v200
      %2235 = vmatprep.subr.mxu0 %v209
      %2236 = vmatpush1.msra.mxu0 %v208
      %2237 = vmatprep.subr.mxu0 %v217
      %2238 = vmatpush1.msra.mxu0 %v216
      %2239 = vmatprep.subr.mxu0 %v225
      %2240 = vmatpush1.msra.mxu0 %v224
      %2241 = vmatprep.subr.mxu0 %v233
      %2242 = vmatpush1.msra.mxu0 %v232
      %2243 = vmatprep.subr.mxu0 %v241
      %2244 = vmatpush1.msra.mxu0 %v240
      %2245 = vmatprep.subr.mxu0 %v249
      %2246 = vmatpush1.msra.mxu0 %v248
      %2247 = vmatprep.subr.mxu0 %v257
      %2248 = vmatpush1.msra.mxu0 %v256
      %2249 = vmatprep.subr.mxu0 %v265
      %2250 = vmatpush1.msra.mxu0 %v264
      %2251 = vmatprep.subr.mxu0 %v273
      %2252 = vmatpush1.msra.mxu0 %v272
      %2253 = vmatprep.subr.mxu0 %v281
      %2254 = vmatpush1.msra.mxu0 %v280
      %2255 = vmatprep.subr.mxu0 %v289
      %2256 = vmatpush1.msra.mxu0 %v288
      %2257 = vmatprep.subr.mxu0 %v297
      %2258 = vmatpush1.msra.mxu0 %v296
      %2259 = vmatprep.subr.mxu0 %v305
      %2260 = vmatpush1.msra.mxu0 %v304
      %2261 = vmatprep.subr.mxu0 %v313
      %2262 = vmatpush1.msra.mxu0 %v312
      %2263 = vmatprep.subr.mxu0 %v321
      %2264 = vmatpush1.msra.mxu0 %v320
      %2265 = vmatprep.subr.mxu0 %v329
      %2266 = vmatpush1.msra.mxu0 %v328
      %2267 = vmatprep.subr.mxu0 %v337
      %2268 = vmatpush1.msra.mxu0 %v336
      %2269 = vmatprep.subr.mxu0 %v345
      %2270 = vmatpush1.msra.mxu0 %v344
      %2271 = vmatprep.subr.mxu0 %v353
      %2272 = vmatpush1.msra.mxu0 %v352
      %2273 = vmatprep.subr.mxu0 %v361
      %2274 = vmatpush1.msra.mxu0 %v360
      %2275 = vmatprep.subr.mxu0 %v369
      %2276 = vmatpush1.msra.mxu0 %v368
      %2277 = vmatprep.subr.mxu0 %v377
      %2278 = vmatpush1.msra.mxu0 %v376
      %2279 = vmatprep.subr.mxu0 %v385
      %2280 = vmatpush1.msra.mxu0 %v384
      %2281 = vmatprep.subr.mxu0 %v393
      %2282 = vmatpush1.msra.mxu0 %v392
      %2283 = vmatprep.subr.mxu0 %v401
      %2284 = vmatpush1.msra.mxu0 %v400
      %2285 = vmatprep.subr.mxu0 %v409
      %2286 = vmatpush1.msra.mxu0 %v408
      %2287 = vmatprep.subr.mxu0 %v417
      %2288 = vmatpush1.msra.mxu0 %v416
      %2289 = vmatprep.subr.mxu0 %v425
      %2290 = vmatpush1.msra.mxu0 %v424
      %2291 = vmatprep.mubr.f32.mxu0 %v172
      %2292 = vmatmul.mubr.f32.gmra.mrb[0].mxu0 %v171
      %v2293 = vpop.f32.mrb[0].mxu0
      %v2294 = vadd.f32 %v1581, %v2293
      %v2295 = vpop.f32.mrb[0].mxu0
      %v2296 = vadd.f32 %v1583, %v2295
      %2297 = vdwg.mxu0
      %2298 = vmatprep.subr.mxu0 %v433
      %2299 = vmatpush1.msra.mxu0 %v432
      %2300 = vmatprep.subr.mxu0 %v441
      %2301 = vmatpush1.msra.mxu0 %v440
      %2302 = vmatprep.subr.mxu0 %v449
      %2303 = vmatpush1.msra.mxu0 %v448
      %2304 = vmatprep.subr.mxu0 %v457
      %2305 = vmatpush1.msra.mxu0 %v456
      %2306 = vmatprep.subr.mxu0 %v465
      %2307 = vmatpush1.msra.mxu0 %v464
      %2308 = vmatprep.subr.mxu0 %v473
      %2309 = vmatpush1.msra.mxu0 %v472
      %2310 = vmatprep.subr.mxu0 %v481
      %2311 = vmatpush1.msra.mxu0 %v480
      %2312 = vmatprep.subr.mxu0 %v489
      %2313 = vmatpush1.msra.mxu0 %v488
      %2314 = vmatprep.subr.mxu0 %v497
      %2315 = vmatpush1.msra.mxu0 %v496
      %2316 = vmatprep.subr.mxu0 %v505
      %2317 = vmatpush1.msra.mxu0 %v504
      %2318 = vmatprep.subr.mxu0 %v513
      %2319 = vmatpush1.msra.mxu0 %v512
      %2320 = vmatprep.subr.mxu0 %v521
      %2321 = vmatpush1.msra.mxu0 %v520
      %2322 = vmatprep.subr.mxu0 %v529
      %2323 = vmatpush1.msra.mxu0 %v528
      %2324 = vmatprep.subr.mxu0 %v537
      %2325 = vmatpush1.msra.mxu0 %v536
      %2326 = vmatprep.subr.mxu0 %v545
      %2327 = vmatpush1.msra.mxu0 %v544
      %2328 = vmatprep.subr.mxu0 %v553
      %2329 = vmatpush1.msra.mxu0 %v552
      %2330 = vmatprep.subr.mxu0 %v561
      %2331 = vmatpush1.msra.mxu0 %v560
      %2332 = vmatprep.subr.mxu0 %v569
      %2333 = vmatpush1.msra.mxu0 %v568
      %2334 = vmatprep.subr.mxu0 %v577
      %2335 = vmatpush1.msra.mxu0 %v576
      %2336 = vmatprep.subr.mxu0 %v585
      %2337 = vmatpush1.msra.mxu0 %v584
      %2338 = vmatprep.subr.mxu0 %v593
      %2339 = vmatpush1.msra.mxu0 %v592
      %2340 = vmatprep.subr.mxu0 %v601
      %2341 = vmatpush1.msra.mxu0 %v600
      %2342 = vmatprep.subr.mxu0 %v609
      %2343 = vmatpush1.msra.mxu0 %v608
      %2344 = vmatprep.subr.mxu0 %v617
      %2345 = vmatpush1.msra.mxu0 %v616
      %2346 = vmatprep.subr.mxu0 %v625
      %2347 = vmatpush1.msra.mxu0 %v624
      %2348 = vmatprep.subr.mxu0 %v633
      %2349 = vmatpush1.msra.mxu0 %v632
      %2350 = vmatprep.subr.mxu0 %v641
      %2351 = vmatpush1.msra.mxu0 %v640
      %2352 = vmatprep.subr.mxu0 %v649
      %2353 = vmatpush1.msra.mxu0 %v648
      %2354 = vmatprep.subr.mxu0 %v657
      %2355 = vmatpush1.msra.mxu0 %v656
      %2356 = vmatprep.subr.mxu0 %v665
      %2357 = vmatpush1.msra.mxu0 %v664
      %2358 = vmatprep.subr.mxu0 %v673
      %2359 = vmatpush1.msra.mxu0 %v672
      %2360 = vmatprep.subr.mxu0 %v681
      %2361 = vmatpush1.msra.mxu0 %v680
      %2362 = vmatprep.mubr.f32.mxu0 %v174
      %2363 = vmatmul.mubr.f32.gmra.mrb[0].mxu0 %v173
      %v2364 = vpop.f32.mrb[0].mxu0
      %v2365 = vadd.f32 %v2294, %v2364
      %v2366 = vpop.f32.mrb[0].mxu0
      %v2367 = vadd.f32 %v2296, %v2366
      %2368 = vdwg.mxu0
      %2369 = vmatprep.subr.mxu0 %v689
      %2370 = vmatpush1.msra.mxu0 %v688
      %2371 = vmatprep.subr.mxu0 %v697
      %2372 = vmatpush1.msra.mxu0 %v696
      %2373 = vmatprep.subr.mxu0 %v705
      %2374 = vmatpush1.msra.mxu0 %v704
      %2375 = vmatprep.subr.mxu0 %v713
      %2376 = vmatpush1.msra.mxu0 %v712
      %2377 = vmatprep.subr.mxu0 %v721
      %2378 = vmatpush1.msra.mxu0 %v720
      %2379 = vmatprep.subr.mxu0 %v729
      %2380 = vmatpush1.msra.mxu0 %v728
      %2381 = vmatprep.subr.mxu0 %v737
      %2382 = vmatpush1.msra.mxu0 %v736
      %2383 = vmatprep.subr.mxu0 %v745
      %2384 = vmatpush1.msra.mxu0 %v744
      %2385 = vmatprep.subr.mxu0 0.0
      %2386 = vmatpush1.msra.mxu0 0.0
      %2387 = vmatprep.subr.mxu0 0.0
      %2388 = vmatpush1.msra.mxu0 0.0
      %2389 = vmatprep.subr.mxu0 0.0
      %2390 = vmatpush1.msra.mxu0 0.0
      %2391 = vmatprep.subr.mxu0 0.0
      %2392 = vmatpush1.msra.mxu0 0.0
      %2393 = vmatprep.subr.mxu0 0.0
      %2394 = vmatpush1.msra.mxu0 0.0
      %2395 = vmatprep.subr.mxu0 0.0
      %2396 = vmatpush1.msra.mxu0 0.0
      %2397 = vmatprep.subr.mxu0 0.0
      %2398 = vmatpush1.msra.mxu0 0.0
      %2399 = vmatprep.subr.mxu0 0.0
      %2400 = vmatpush1.msra.mxu0 0.0
      %2401 = vmatprep.subr.mxu0 0.0
      %2402 = vmatpush1.msra.mxu0 0.0
      %2403 = vmatprep.subr.mxu0 0.0
      %2404 = vmatpush1.msra.mxu0 0.0
      %2405 = vmatprep.subr.mxu0 0.0
      %2406 = vmatpush1.msra.mxu0 0.0
      %2407 = vmatprep.subr.mxu0 0.0
      %2408 = vmatpush1.msra.mxu0 0.0
      %2409 = vmatprep.subr.mxu0 0.0
      %2410 = vmatpush1.msra.mxu0 0.0
      %2411 = vmatprep.subr.mxu0 0.0
      %2412 = vmatpush1.msra.mxu0 0.0
      %2413 = vmatprep.subr.mxu0 0.0
      %2414 = vmatpush1.msra.mxu0 0.0
      %2415 = vmatprep.subr.mxu0 0.0
      %2416 = vmatpush1.msra.mxu0 0.0
      %2417 = vmatprep.subr.mxu0 0.0
      %2418 = vmatpush1.msra.mxu0 0.0
      %2419 = vmatprep.subr.mxu0 0.0
      %2420 = vmatpush1.msra.mxu0 0.0
      %2421 = vmatprep.subr.mxu0 0.0
      %2422 = vmatpush1.msra.mxu0 0.0
      %2423 = vmatprep.subr.mxu0 0.0
      %2424 = vmatpush1.msra.mxu0 0.0
      %2425 = vmatprep.subr.mxu0 0.0
      %2426 = vmatpush1.msra.mxu0 0.0
      %2427 = vmatprep.subr.mxu0 0.0
      %2428 = vmatpush1.msra.mxu0 0.0
      %2429 = vmatprep.subr.mxu0 0.0
      %2430 = vmatpush1.msra.mxu0 0.0
      %2431 = vmatprep.subr.mxu0 0.0
      %2432 = vmatpush1.msra.mxu0 0.0
      %2433 = vmatprep.mubr.f32.mxu0 0.0
      %2434 = vmatmul.mubr.f32.gmra.mrb[0].mxu0 %v2225
      %v2435 = vpop.f32.mrb[0].mxu0
      %v2436 = vadd.f32 %v2365, %v2435
      %v2437 = vpop.f32.mrb[0].mxu0
      %v2438 = vadd.f32 %v2367, %v2437
      %2439 = vdwg.mxu0
      %2440 = vmatprep.subr.mxu0 %v179
      %2441 = vmatpush1.msra.mxu0 %v178
      %2442 = vmatprep.subr.mxu0 %v187
      %2443 = vmatpush1.msra.mxu0 %v186
      %2444 = vmatprep.subr.mxu0 %v195
      %2445 = vmatpush1.msra.mxu0 %v194
      %2446 = vmatprep.subr.mxu0 %v203
      %2447 = vmatpush1.msra.mxu0 %v202
      %2448 = vmatprep.subr.mxu0 %v211
      %2449 = vmatpush1.msra.mxu0 %v210
      %2450 = vmatprep.subr.mxu0 %v219
      %2451 = vmatpush1.msra.mxu0 %v218
      %2452 = vmatprep.subr.mxu0 %v227
      %2453 = vmatpush1.msra.mxu0 %v226
      %2454 = vmatprep.subr.mxu0 %v235
      %2455 = vmatpush1.msra.mxu0 %v234
      %2456 = vmatprep.subr.mxu0 %v243
      %2457 = vmatpush1.msra.mxu0 %v242
      %2458 = vmatprep.subr.mxu0 %v251
      %2459 = vmatpush1.msra.mxu0 %v250
      %2460 = vmatprep.subr.mxu0 %v259
      %2461 = vmatpush1.msra.mxu0 %v258
      %2462 = vmatprep.subr.mxu0 %v267
      %2463 = vmatpush1.msra.mxu0 %v266
      %2464 = vmatprep.subr.mxu0 %v275
      %2465 = vmatpush1.msra.mxu0 %v274
      %2466 = vmatprep.subr.mxu0 %v283
      %2467 = vmatpush1.msra.mxu0 %v282
      %2468 = vmatprep.subr.mxu0 %v291
      %2469 = vmatpush1.msra.mxu0 %v290
      %2470 = vmatprep.subr.mxu0 %v299
      %2471 = vmatpush1.msra.mxu0 %v298
      %2472 = vmatprep.subr.mxu0 %v307
      %2473 = vmatpush1.msra.mxu0 %v306
      %2474 = vmatprep.subr.mxu0 %v315
      %2475 = vmatpush1.msra.mxu0 %v314
      %2476 = vmatprep.subr.mxu0 %v323
      %2477 = vmatpush1.msra.mxu0 %v322
      %2478 = vmatprep.subr.mxu0 %v331
      %2479 = vmatpush1.msra.mxu0 %v330
      %2480 = vmatprep.subr.mxu0 %v339
      %2481 = vmatpush1.msra.mxu0 %v338
      %2482 = vmatprep.subr.mxu0 %v347
      %2483 = vmatpush1.msra.mxu0 %v346
      %2484 = vmatprep.subr.mxu0 %v355
      %2485 = vmatpush1.msra.mxu0 %v354
      %2486 = vmatprep.subr.mxu0 %v363
      %2487 = vmatpush1.msra.mxu0 %v362
      %2488 = vmatprep.subr.mxu0 %v371
      %2489 = vmatpush1.msra.mxu0 %v370
      %2490 = vmatprep.subr.mxu0 %v379
      %2491 = vmatpush1.msra.mxu0 %v378
      %2492 = vmatprep.subr.mxu0 %v387
      %2493 = vmatpush1.msra.mxu0 %v386
      %2494 = vmatprep.subr.mxu0 %v395
      %2495 = vmatpush1.msra.mxu0 %v394
      %2496 = vmatprep.subr.mxu0 %v403
      %2497 = vmatpush1.msra.mxu0 %v402
      %2498 = vmatprep.subr.mxu0 %v411
      %2499 = vmatpush1.msra.mxu0 %v410
      %2500 = vmatprep.subr.mxu0 %v419
      %2501 = vmatpush1.msra.mxu0 %v418
      %2502 = vmatprep.subr.mxu0 %v427
      %2503 = vmatpush1.msra.mxu0 %v426
      %2504 = vmatprep.mubr.f32.mxu0 %v172
      %2505 = vmatmul.mubr.f32.gmra.mrb[0].mxu0 %v171
      %v2506 = vpop.f32.mrb[0].mxu0
      %v2507 = vadd.f32 %v1794, %v2506
      %v2508 = vpop.f32.mrb[0].mxu0
      %v2509 = vadd.f32 %v1796, %v2508
      %2510 = vdwg.mxu0
      %2511 = vmatprep.subr.mxu0 %v435
      %2512 = vmatpush1.msra.mxu0 %v434
      %2513 = vmatprep.subr.mxu0 %v443
      %2514 = vmatpush1.msra.mxu0 %v442
      %2515 = vmatprep.subr.mxu0 %v451
      %2516 = vmatpush1.msra.mxu0 %v450
      %2517 = vmatprep.subr.mxu0 %v459
      %2518 = vmatpush1.msra.mxu0 %v458
      %2519 = vmatprep.subr.mxu0 %v467
      %2520 = vmatpush1.msra.mxu0 %v466
      %2521 = vmatprep.subr.mxu0 %v475
      %2522 = vmatpush1.msra.mxu0 %v474
      %2523 = vmatprep.subr.mxu0 %v483
      %2524 = vmatpush1.msra.mxu0 %v482
      %2525 = vmatprep.subr.mxu0 %v491
      %2526 = vmatpush1.msra.mxu0 %v490
      %2527 = vmatprep.subr.mxu0 %v499
      %2528 = vmatpush1.msra.mxu0 %v498
      %2529 = vmatprep.subr.mxu0 %v507
      %2530 = vmatpush1.msra.mxu0 %v506
      %2531 = vmatprep.subr.mxu0 %v515
      %2532 = vmatpush1.msra.mxu0 %v514
      %2533 = vmatprep.subr.mxu0 %v523
      %2534 = vmatpush1.msra.mxu0 %v522
      %2535 = vmatprep.subr.mxu0 %v531
      %2536 = vmatpush1.msra.mxu0 %v530
      %2537 = vmatprep.subr.mxu0 %v539
      %2538 = vmatpush1.msra.mxu0 %v538
      %2539 = vmatprep.subr.mxu0 %v547
      %2540 = vmatpush1.msra.mxu0 %v546
      %2541 = vmatprep.subr.mxu0 %v555
      %2542 = vmatpush1.msra.mxu0 %v554
      %2543 = vmatprep.subr.mxu0 %v563
      %2544 = vmatpush1.msra.mxu0 %v562
      %2545 = vmatprep.subr.mxu0 %v571
      %2546 = vmatpush1.msra.mxu0 %v570
      %2547 = vmatprep.subr.mxu0 %v579
      %2548 = vmatpush1.msra.mxu0 %v578
      %2549 = vmatprep.subr.mxu0 %v587
      %2550 = vmatpush1.msra.mxu0 %v586
      %2551 = vmatprep.subr.mxu0 %v595
      %2552 = vmatpush1.msra.mxu0 %v594
      %2553 = vmatprep.subr.mxu0 %v603
      %2554 = vmatpush1.msra.mxu0 %v602
      %2555 = vmatprep.subr.mxu0 %v611
      %2556 = vmatpush1.msra.mxu0 %v610
      %2557 = vmatprep.subr.mxu0 %v619
      %2558 = vmatpush1.msra.mxu0 %v618
      %2559 = vmatprep.subr.mxu0 %v627
      %2560 = vmatpush1.msra.mxu0 %v626
      %2561 = vmatprep.subr.mxu0 %v635
      %2562 = vmatpush1.msra.mxu0 %v634
      %2563 = vmatprep.subr.mxu0 %v643
      %2564 = vmatpush1.msra.mxu0 %v642
      %2565 = vmatprep.subr.mxu0 %v651
      %2566 = vmatpush1.msra.mxu0 %v650
      %2567 = vmatprep.subr.mxu0 %v659
      %2568 = vmatpush1.msra.mxu0 %v658
      %2569 = vmatprep.subr.mxu0 %v667
      %2570 = vmatpush1.msra.mxu0 %v666
      %2571 = vmatprep.subr.mxu0 %v675
      %2572 = vmatpush1.msra.mxu0 %v674
      %2573 = vmatprep.subr.mxu0 %v683
      %2574 = vmatpush1.msra.mxu0 %v682
      %2575 = vmatprep.mubr.f32.mxu0 %v174
      %2576 = vmatmul.mubr.f32.gmra.mrb[0].mxu0 %v173
      %v2577 = vpop.f32.mrb[0].mxu0
      %v2578 = vadd.f32 %v2507, %v2577
      %v2579 = vpop.f32.mrb[0].mxu0
      %v2580 = vadd.f32 %v2509, %v2579
      %2581 = vdwg.mxu0
      %2582 = vmatprep.subr.mxu0 %v691
      %2583 = vmatpush1.msra.mxu0 %v690
      %2584 = vmatprep.subr.mxu0 %v699
      %2585 = vmatpush1.msra.mxu0 %v698
      %2586 = vmatprep.subr.mxu0 %v707
      %2587 = vmatpush1.msra.mxu0 %v706
      %2588 = vmatprep.subr.mxu0 %v715
      %2589 = vmatpush1.msra.mxu0 %v714
      %2590 = vmatprep.subr.mxu0 %v723
      %2591 = vmatpush1.msra.mxu0 %v722
      %2592 = vmatprep.subr.mxu0 %v731
      %2593 = vmatpush1.msra.mxu0 %v730
      %2594 = vmatprep.subr.mxu0 %v739
      %2595 = vmatpush1.msra.mxu0 %v738
      %2596 = vmatprep.subr.mxu0 %v747
      %2597 = vmatpush1.msra.mxu0 %v746
      %2598 = vmatprep.subr.mxu0 0.0
      %2599 = vmatpush1.msra.mxu0 0.0
      %2600 = vmatprep.subr.mxu0 0.0
      %2601 = vmatpush1.msra.mxu0 0.0
      %2602 = vmatprep.subr.mxu0 0.0
      %2603 = vmatpush1.msra.mxu0 0.0
      %2604 = vmatprep.subr.mxu0 0.0
      %2605 = vmatpush1.msra.mxu0 0.0
      %2606 = vmatprep.subr.mxu0 0.0
      %2607 = vmatpush1.msra.mxu0 0.0
      %2608 = vmatprep.subr.mxu0 0.0
      %2609 = vmatpush1.msra.mxu0 0.0
      %2610 = vmatprep.subr.mxu0 0.0
      %2611 = vmatpush1.msra.mxu0 0.0
      %2612 = vmatprep.subr.mxu0 0.0
      %2613 = vmatpush1.msra.mxu0 0.0
      %2614 = vmatprep.subr.mxu0 0.0
      %2615 = vmatpush1.msra.mxu0 0.0
      %2616 = vmatprep.subr.mxu0 0.0
      %2617 = vmatpush1.msra.mxu0 0.0
      %2618 = vmatprep.subr.mxu0 0.0
      %2619 = vmatpush1.msra.mxu0 0.0
      %2620 = vmatprep.subr.mxu0 0.0
      %2621 = vmatpush1.msra.mxu0 0.0
      %2622 = vmatprep.subr.mxu0 0.0
      %2623 = vmatpush1.msra.mxu0 0.0
      %2624 = vmatprep.subr.mxu0 0.0
      %2625 = vmatpush1.msra.mxu0 0.0
      %2626 = vmatprep.subr.mxu0 0.0
      %2627 = vmatpush1.msra.mxu0 0.0
      %2628 = vmatprep.subr.mxu0 0.0
      %2629 = vmatpush1.msra.mxu0 0.0
      %2630 = vmatprep.subr.mxu0 0.0
      %2631 = vmatpush1.msra.mxu0 0.0
      %2632 = vmatprep.subr.mxu0 0.0
      %2633 = vmatpush1.msra.mxu0 0.0
      %2634 = vmatprep.subr.mxu0 0.0
      %2635 = vmatpush1.msra.mxu0 0.0
      %2636 = vmatprep.subr.mxu0 0.0
      %2637 = vmatpush1.msra.mxu0 0.0
      %2638 = vmatprep.subr.mxu0 0.0
      %2639 = vmatpush1.msra.mxu0 0.0
      %2640 = vmatprep.subr.mxu0 0.0
      %2641 = vmatpush1.msra.mxu0 0.0
      %2642 = vmatprep.subr.mxu0 0.0
      %2643 = vmatpush1.msra.mxu0 0.0
      %2644 = vmatprep.subr.mxu0 0.0
      %2645 = vmatpush1.msra.mxu0 0.0
      %2646 = vmatprep.mubr.f32.mxu0 0.0
      %2647 = vmatmul.mubr.f32.gmra.mrb[0].mxu0 %v2225
      %v2648 = vpop.f32.mrb[0].mxu0
      %v2649 = vadd.f32 %v2578, %v2648
      %v2650 = vpop.f32.mrb[0].mxu0
      %v2651 = vadd.f32 %v2580, %v2650
      %2652 = vdwg.mxu0
      %2653 = vmatprep.subr.mxu0 %v181
      %2654 = vmatpush1.msra.mxu0 %v180
      %2655 = vmatprep.subr.mxu0 %v189
      %2656 = vmatpush1.msra.mxu0 %v188
      %2657 = vmatprep.subr.mxu0 %v197
      %2658 = vmatpush1.msra.mxu0 %v196
      %2659 = vmatprep.subr.mxu0 %v205
      %2660 = vmatpush1.msra.mxu0 %v204
      %2661 = vmatprep.subr.mxu0 %v213
      %2662 = vmatpush1.msra.mxu0 %v212
      %2663 = vmatprep.subr.mxu0 %v221
      %2664 = vmatpush1.msra.mxu0 %v220
      %2665 = vmatprep.subr.mxu0 %v229
      %2666 = vmatpush1.msra.mxu0 %v228
      %2667 = vmatprep.subr.mxu0 %v237
      %2668 = vmatpush1.msra.mxu0 %v236
      %2669 = vmatprep.subr.mxu0 %v245
      %2670 = vmatpush1.msra.mxu0 %v244
      %2671 = vmatprep.subr.mxu0 %v253
      %2672 = vmatpush1.msra.mxu0 %v252
      %2673 = vmatprep.subr.mxu0 %v261
      %2674 = vmatpush1.msra.mxu0 %v260
      %2675 = vmatprep.subr.mxu0 %v269
      %2676 = vmatpush1.msra.mxu0 %v268
      %2677 = vmatprep.subr.mxu0 %v277
      %2678 = vmatpush1.msra.mxu0 %v276
      %2679 = vmatprep.subr.mxu0 %v285
      %2680 = vmatpush1.msra.mxu0 %v284
      %2681 = vmatprep.subr.mxu0 %v293
      %2682 = vmatpush1.msra.mxu0 %v292
      %2683 = vmatprep.subr.mxu0 %v301
      %2684 = vmatpush1.msra.mxu0 %v300
      %2685 = vmatprep.subr.mxu0 %v309
      %2686 = vmatpush1.msra.mxu0 %v308
      %2687 = vmatprep.subr.mxu0 %v317
      %2688 = vmatpush1.msra.mxu0 %v316
      %2689 = vmatprep.subr.mxu0 %v325
      %2690 = vmatpush1.msra.mxu0 %v324
      %2691 = vmatprep.subr.mxu0 %v333
      %2692 = vmatpush1.msra.mxu0 %v332
      %2693 = vmatprep.subr.mxu0 %v341
      %2694 = vmatpush1.msra.mxu0 %v340
      %2695 = vmatprep.subr.mxu0 %v349
      %2696 = vmatpush1.msra.mxu0 %v348
      %2697 = vmatprep.subr.mxu0 %v357
      %2698 = vmatpush1.msra.mxu0 %v356
      %2699 = vmatprep.subr.mxu0 %v365
      %2700 = vmatpush1.msra.mxu0 %v364
      %2701 = vmatprep.subr.mxu0 %v373
      %2702 = vmatpush1.msra.mxu0 %v372
      %2703 = vmatprep.subr.mxu0 %v381
      %2704 = vmatpush1.msra.mxu0 %v380
      %2705 = vmatprep.subr.mxu0 %v389
      %2706 = vmatpush1.msra.mxu0 %v388
      %2707 = vmatprep.subr.mxu0 %v397
      %2708 = vmatpush1.msra.mxu0 %v396
      %2709 = vmatprep.subr.mxu0 %v405
      %2710 = vmatpush1.msra.mxu0 %v404
      %2711 = vmatprep.subr.mxu0 %v413
      %2712 = vmatpush1.msra.mxu0 %v412
      %2713 = vmatprep.subr.mxu0 %v421
      %2714 = vmatpush1.msra.mxu0 %v420
      %2715 = vmatprep.subr.mxu0 %v429
      %2716 = vmatpush1.msra.mxu0 %v428
      %2717 = vmatprep.mubr.f32.mxu0 %v172
      %2718 = vmatmul.mubr.f32.gmra.mrb[0].mxu0 %v171
      %v2719 = vpop.f32.mrb[0].mxu0
      %v2720 = vadd.f32 %v2007, %v2719
      %v2721 = vpop.f32.mrb[0].mxu0
      %v2722 = vadd.f32 %v2009, %v2721
      %2723 = vdwg.mxu0
      %2724 = vmatprep.subr.mxu0 %v437
      %2725 = vmatpush1.msra.mxu0 %v436
      %2726 = vmatprep.subr.mxu0 %v445
      %2727 = vmatpush1.msra.mxu0 %v444
      %2728 = vmatprep.subr.mxu0 %v453
      %2729 = vmatpush1.msra.mxu0 %v452
      %2730 = vmatprep.subr.mxu0 %v461
      %2731 = vmatpush1.msra.mxu0 %v460
      %2732 = vmatprep.subr.mxu0 %v469
      %2733 = vmatpush1.msra.mxu0 %v468
      %2734 = vmatprep.subr.mxu0 %v477
      %2735 = vmatpush1.msra.mxu0 %v476
      %2736 = vmatprep.subr.mxu0 %v485
      %2737 = vmatpush1.msra.mxu0 %v484
      %2738 = vmatprep.subr.mxu0 %v493
      %2739 = vmatpush1.msra.mxu0 %v492
      %2740 = vmatprep.subr.mxu0 %v501
      %2741 = vmatpush1.msra.mxu0 %v500
      %2742 = vmatprep.subr.mxu0 %v509
      %2743 = vmatpush1.msra.mxu0 %v508
      %2744 = vmatprep.subr.mxu0 %v517
      %2745 = vmatpush1.msra.mxu0 %v516
      %2746 = vmatprep.subr.mxu0 %v525
      %2747 = vmatpush1.msra.mxu0 %v524
      %2748 = vmatprep.subr.mxu0 %v533
      %2749 = vmatpush1.msra.mxu0 %v532
      %2750 = vmatprep.subr.mxu0 %v541
      %2751 = vmatpush1.msra.mxu0 %v540
      %2752 = vmatprep.subr.mxu0 %v549
      %2753 = vmatpush1.msra.mxu0 %v548
      %2754 = vmatprep.subr.mxu0 %v557
      %2755 = vmatpush1.msra.mxu0 %v556
      %2756 = vmatprep.subr.mxu0 %v565
      %2757 = vmatpush1.msra.mxu0 %v564
      %2758 = vmatprep.subr.mxu0 %v573
      %2759 = vmatpush1.msra.mxu0 %v572
      %2760 = vmatprep.subr.mxu0 %v581
      %2761 = vmatpush1.msra.mxu0 %v580
      %2762 = vmatprep.subr.mxu0 %v589
      %2763 = vmatpush1.msra.mxu0 %v588
      %2764 = vmatprep.subr.mxu0 %v597
      %2765 = vmatpush1.msra.mxu0 %v596
      %2766 = vmatprep.subr.mxu0 %v605
      %2767 = vmatpush1.msra.mxu0 %v604
      %2768 = vmatprep.subr.mxu0 %v613
      %2769 = vmatpush1.msra.mxu0 %v612
      %2770 = vmatprep.subr.mxu0 %v621
      %2771 = vmatpush1.msra.mxu0 %v620
      %2772 = vmatprep.subr.mxu0 %v629
      %2773 = vmatpush1.msra.mxu0 %v628
      %2774 = vmatprep.subr.mxu0 %v637
      %2775 = vmatpush1.msra.mxu0 %v636
      %2776 = vmatprep.subr.mxu0 %v645
      %2777 = vmatpush1.msra.mxu0 %v644
      %2778 = vmatprep.subr.mxu0 %v653
      %2779 = vmatpush1.msra.mxu0 %v652
      %2780 = vmatprep.subr.mxu0 %v661
      %2781 = vmatpush1.msra.mxu0 %v660
      %2782 = vmatprep.subr.mxu0 %v669
      %2783 = vmatpush1.msra.mxu0 %v668
      %2784 = vmatprep.subr.mxu0 %v677
      %2785 = vmatpush1.msra.mxu0 %v676
      %2786 = vmatprep.subr.mxu0 %v685
      %2787 = vmatpush1.msra.mxu0 %v684
      %2788 = vmatprep.mubr.f32.mxu0 %v174
      %2789 = vmatmul.mubr.f32.gmra.mrb[0].mxu0 %v173
      %v2790 = vpop.f32.mrb[0].mxu0
      %v2791 = vadd.f32 %v2720, %v2790
      %v2792 = vpop.f32.mrb[0].mxu0
      %v2793 = vadd.f32 %v2722, %v2792
      %2794 = vdwg.mxu0
      %2795 = vmatprep.subr.mxu0 %v693
      %2796 = vmatpush1.msra.mxu0 %v692
      %2797 = vmatprep.subr.mxu0 %v701
      %2798 = vmatpush1.msra.mxu0 %v700
      %2799 = vmatprep.subr.mxu0 %v709
      %2800 = vmatpush1.msra.mxu0 %v708
      %2801 = vmatprep.subr.mxu0 %v717
      %2802 = vmatpush1.msra.mxu0 %v716
      %2803 = vmatprep.subr.mxu0 %v725
      %2804 = vmatpush1.msra.mxu0 %v724
      %2805 = vmatprep.subr.mxu0 %v733
      %2806 = vmatpush1.msra.mxu0 %v732
      %2807 = vmatprep.subr.mxu0 %v741
      %2808 = vmatpush1.msra.mxu0 %v740
      %2809 = vmatprep.subr.mxu0 %v749
      %2810 = vmatpush1.msra.mxu0 %v748
      %2811 = vmatprep.subr.mxu0 0.0
      %2812 = vmatpush1.msra.mxu0 0.0
      %2813 = vmatprep.subr.mxu0 0.0
      %2814 = vmatpush1.msra.mxu0 0.0
      %2815 = vmatprep.subr.mxu0 0.0
      %2816 = vmatpush1.msra.mxu0 0.0
      %2817 = vmatprep.subr.mxu0 0.0
      %2818 = vmatpush1.msra.mxu0 0.0
      %2819 = vmatprep.subr.mxu0 0.0
      %2820 = vmatpush1.msra.mxu0 0.0
      %2821 = vmatprep.subr.mxu0 0.0
      %2822 = vmatpush1.msra.mxu0 0.0
      %2823 = vmatprep.subr.mxu0 0.0
      %2824 = vmatpush1.msra.mxu0 0.0
      %2825 = vmatprep.subr.mxu0 0.0
      %2826 = vmatpush1.msra.mxu0 0.0
      %2827 = vmatprep.subr.mxu0 0.0
      %2828 = vmatpush1.msra.mxu0 0.0
      %2829 = vmatprep.subr.mxu0 0.0
      %2830 = vmatpush1.msra.mxu0 0.0
      %2831 = vmatprep.subr.mxu0 0.0
      %2832 = vmatpush1.msra.mxu0 0.0
      %2833 = vmatprep.subr.mxu0 0.0
      %2834 = vmatpush1.msra.mxu0 0.0
      %2835 = vmatprep.subr.mxu0 0.0
      %2836 = vmatpush1.msra.mxu0 0.0
      %2837 = vmatprep.subr.mxu0 0.0
      %2838 = vmatpush1.msra.mxu0 0.0
      %2839 = vmatprep.subr.mxu0 0.0
      %2840 = vmatpush1.msra.mxu0 0.0
      %2841 = vmatprep.subr.mxu0 0.0
      %2842 = vmatpush1.msra.mxu0 0.0
      %2843 = vmatprep.subr.mxu0 0.0
      %2844 = vmatpush1.msra.mxu0 0.0
      %2845 = vmatprep.subr.mxu0 0.0
      %2846 = vmatpush1.msra.mxu0 0.0
      %2847 = vmatprep.subr.mxu0 0.0
      %2848 = vmatpush1.msra.mxu0 0.0
      %2849 = vmatprep.subr.mxu0 0.0
      %2850 = vmatpush1.msra.mxu0 0.0
      %2851 = vmatprep.subr.mxu0 0.0
      %2852 = vmatpush1.msra.mxu0 0.0
      %2853 = vmatprep.subr.mxu0 0.0
      %2854 = vmatpush1.msra.mxu0 0.0
      %2855 = vmatprep.subr.mxu0 0.0
      %2856 = vmatpush1.msra.mxu0 0.0
      %2857 = vmatprep.subr.mxu0 0.0
      %2858 = vmatpush1.msra.mxu0 0.0
      %2859 = vmatprep.mubr.f32.mxu0 0.0
      %2860 = vmatmul.mubr.f32.gmra.mrb[0].mxu0 %v2225
      %v2861 = vpop.f32.mrb[0].mxu0
      %v2862 = vadd.f32 %v2791, %v2861
      %v2863 = vpop.f32.mrb[0].mxu0
      %v2864 = vadd.f32 %v2793, %v2863
      %2865 = vdwg.mxu0
      %2866 = vmatprep.subr.mxu0 %v183
      %2867 = vmatpush1.msra.mxu0 %v182
      %2868 = vmatprep.subr.mxu0 %v191
      %2869 = vmatpush1.msra.mxu0 %v190
      %2870 = vmatprep.subr.mxu0 %v199
      %2871 = vmatpush1.msra.mxu0 %v198
      %2872 = vmatprep.subr.mxu0 %v207
      %2873 = vmatpush1.msra.mxu0 %v206
      %2874 = vmatprep.subr.mxu0 %v215
      %2875 = vmatpush1.msra.mxu0 %v214
      %2876 = vmatprep.subr.mxu0 %v223
      %2877 = vmatpush1.msra.mxu0 %v222
      %2878 = vmatprep.subr.mxu0 %v231
      %2879 = vmatpush1.msra.mxu0 %v230
      %2880 = vmatprep.subr.mxu0 %v239
      %2881 = vmatpush1.msra.mxu0 %v238
      %2882 = vmatprep.subr.mxu0 %v247
      %2883 = vmatpush1.msra.mxu0 %v246
      %2884 = vmatprep.subr.mxu0 %v255
      %2885 = vmatpush1.msra.mxu0 %v254
      %2886 = vmatprep.subr.mxu0 %v263
      %2887 = vmatpush1.msra.mxu0 %v262
      %2888 = vmatprep.subr.mxu0 %v271
      %2889 = vmatpush1.msra.mxu0 %v270
      %2890 = vmatprep.subr.mxu0 %v279
      %2891 = vmatpush1.msra.mxu0 %v278
      %2892 = vmatprep.subr.mxu0 %v287
      %2893 = vmatpush1.msra.mxu0 %v286
      %2894 = vmatprep.subr.mxu0 %v295
      %2895 = vmatpush1.msra.mxu0 %v294
      %2896 = vmatprep.subr.mxu0 %v303
      %2897 = vmatpush1.msra.mxu0 %v302
      %2898 = vmatprep.subr.mxu0 %v311
      %2899 = vmatpush1.msra.mxu0 %v310
      %2900 = vmatprep.subr.mxu0 %v319
      %2901 = vmatpush1.msra.mxu0 %v318
      %2902 = vmatprep.subr.mxu0 %v327
      %2903 = vmatpush1.msra.mxu0 %v326
      %2904 = vmatprep.subr.mxu0 %v335
      %2905 = vmatpush1.msra.mxu0 %v334
      %2906 = vmatprep.subr.mxu0 %v343
      %2907 = vmatpush1.msra.mxu0 %v342
      %2908 = vmatprep.subr.mxu0 %v351
      %2909 = vmatpush1.msra.mxu0 %v350
      %2910 = vmatprep.subr.mxu0 %v359
      %2911 = vmatpush1.msra.mxu0 %v358
      %2912 = vmatprep.subr.mxu0 %v367
      %2913 = vmatpush1.msra.mxu0 %v366
      %2914 = vmatprep.subr.mxu0 %v375
      %2915 = vmatpush1.msra.mxu0 %v374
      %2916 = vmatprep.subr.mxu0 %v383
      %2917 = vmatpush1.msra.mxu0 %v382
      %2918 = vmatprep.subr.mxu0 %v391
      %2919 = vmatpush1.msra.mxu0 %v390
      %2920 = vmatprep.subr.mxu0 %v399
      %2921 = vmatpush1.msra.mxu0 %v398
      %2922 = vmatprep.subr.mxu0 %v407
      %2923 = vmatpush1.msra.mxu0 %v406
      %2924 = vmatprep.subr.mxu0 %v415
      %2925 = vmatpush1.msra.mxu0 %v414
      %2926 = vmatprep.subr.mxu0 %v423
      %2927 = vmatpush1.msra.mxu0 %v422
      %2928 = vmatprep.subr.mxu0 %v431
      %2929 = vmatpush1.msra.mxu0 %v430
      %2930 = vmatprep.mubr.f32.mxu0 %v172
      %2931 = vmatmul.mubr.f32.gmra.mrb[0].mxu0 %v171
      %v2932 = vpop.f32.mrb[0].mxu0
      %v2933 = vadd.f32 %v2220, %v2932
      %v2934 = vpop.f32.mrb[0].mxu0
      %v2935 = vadd.f32 %v2222, %v2934
      %2936 = vdwg.mxu0
      %2937 = vmatprep.subr.mxu0 %v439
      %2938 = vmatpush1.msra.mxu0 %v438
      %2939 = vmatprep.subr.mxu0 %v447
      %2940 = vmatpush1.msra.mxu0 %v446
      %2941 = vmatprep.subr.mxu0 %v455
      %2942 = vmatpush1.msra.mxu0 %v454
      %2943 = vmatprep.subr.mxu0 %v463
      %2944 = vmatpush1.msra.mxu0 %v462
      %2945 = vmatprep.subr.mxu0 %v471
      %2946 = vmatpush1.msra.mxu0 %v470
      %2947 = vmatprep.subr.mxu0 %v479
      %2948 = vmatpush1.msra.mxu0 %v478
      %2949 = vmatprep.subr.mxu0 %v487
      %2950 = vmatpush1.msra.mxu0 %v486
      %2951 = vmatprep.subr.mxu0 %v495
      %2952 = vmatpush1.msra.mxu0 %v494
      %2953 = vmatprep.subr.mxu0 %v503
      %2954 = vmatpush1.msra.mxu0 %v502
      %2955 = vmatprep.subr.mxu0 %v511
      %2956 = vmatpush1.msra.mxu0 %v510
      %2957 = vmatprep.subr.mxu0 %v519
      %2958 = vmatpush1.msra.mxu0 %v518
      %2959 = vmatprep.subr.mxu0 %v527
      %2960 = vmatpush1.msra.mxu0 %v526
      %2961 = vmatprep.subr.mxu0 %v535
      %2962 = vmatpush1.msra.mxu0 %v534
      %2963 = vmatprep.subr.mxu0 %v543
      %2964 = vmatpush1.msra.mxu0 %v542
      %2965 = vmatprep.subr.mxu0 %v551
      %2966 = vmatpush1.msra.mxu0 %v550
      %2967 = vmatprep.subr.mxu0 %v559
      %2968 = vmatpush1.msra.mxu0 %v558
      %2969 = vmatprep.subr.mxu0 %v567
      %2970 = vmatpush1.msra.mxu0 %v566
      %2971 = vmatprep.subr.mxu0 %v575
      %2972 = vmatpush1.msra.mxu0 %v574
      %2973 = vmatprep.subr.mxu0 %v583
      %2974 = vmatpush1.msra.mxu0 %v582
      %2975 = vmatprep.subr.mxu0 %v591
      %2976 = vmatpush1.msra.mxu0 %v590
      %2977 = vmatprep.subr.mxu0 %v599
      %2978 = vmatpush1.msra.mxu0 %v598
      %2979 = vmatprep.subr.mxu0 %v607
      %2980 = vmatpush1.msra.mxu0 %v606
      %2981 = vmatprep.subr.mxu0 %v615
      %2982 = vmatpush1.msra.mxu0 %v614
      %2983 = vmatprep.subr.mxu0 %v623
      %2984 = vmatpush1.msra.mxu0 %v622
      %2985 = vmatprep.subr.mxu0 %v631
      %2986 = vmatpush1.msra.mxu0 %v630
      %2987 = vmatprep.subr.mxu0 %v639
      %2988 = vmatpush1.msra.mxu0 %v638
      %2989 = vmatprep.subr.mxu0 %v647
      %2990 = vmatpush1.msra.mxu0 %v646
      %2991 = vmatprep.subr.mxu0 %v655
      %2992 = vmatpush1.msra.mxu0 %v654
      %2993 = vmatprep.subr.mxu0 %v663
      %2994 = vmatpush1.msra.mxu0 %v662
      %2995 = vmatprep.subr.mxu0 %v671
      %2996 = vmatpush1.msra.mxu0 %v670
      %2997 = vmatprep.subr.mxu0 %v679
      %2998 = vmatpush1.msra.mxu0 %v678
      %2999 = vmatprep.subr.mxu0 %v687
      %3000 = vmatpush1.msra.mxu0 %v686
      %3001 = vmatprep.mubr.f32.mxu0 %v174
      %3002 = vmatmul.mubr.f32.gmra.mrb[0].mxu0 %v173
      %v3003 = vpop.f32.mrb[0].mxu0
      %v3004 = vadd.f32 %v2933, %v3003
      %v3005 = vpop.f32.mrb[0].mxu0
      %v3006 = vadd.f32 %v2935, %v3005
      %3007 = vdwg.mxu0
      %3008 = vmatprep.subr.mxu0 %v695
      %3009 = vmatpush1.msra.mxu0 %v694
      %3010 = vmatprep.subr.mxu0 %v703
      %3011 = vmatpush1.msra.mxu0 %v702
      %3012 = vmatprep.subr.mxu0 %v711
      %3013 = vmatpush1.msra.mxu0 %v710
      %3014 = vmatprep.subr.mxu0 %v719
      %3015 = vmatpush1.msra.mxu0 %v718
      %3016 = vmatprep.subr.mxu0 %v727
      %3017 = vmatpush1.msra.mxu0 %v726
      %3018 = vmatprep.subr.mxu0 %v735
      %3019 = vmatpush1.msra.mxu0 %v734
      %3020 = vmatprep.subr.mxu0 %v743
      %3021 = vmatpush1.msra.mxu0 %v742
      %3022 = vmatprep.subr.mxu0 %v751
      %3023 = vmatpush1.msra.mxu0 %v750
      %3024 = vmatprep.subr.mxu0 0.0
      %3025 = vmatpush1.msra.mxu0 0.0
      %3026 = vmatprep.subr.mxu0 0.0
      %3027 = vmatpush1.msra.mxu0 0.0
      %3028 = vmatprep.subr.mxu0 0.0
      %3029 = vmatpush1.msra.mxu0 0.0
      %3030 = vmatprep.subr.mxu0 0.0
      %3031 = vmatpush1.msra.mxu0 0.0
      %3032 = vmatprep.subr.mxu0 0.0
      %3033 = vmatpush1.msra.mxu0 0.0
      %3034 = vmatprep.subr.mxu0 0.0
      %3035 = vmatpush1.msra.mxu0 0.0
      %3036 = vmatprep.subr.mxu0 0.0
      %3037 = vmatpush1.msra.mxu0 0.0
      %3038 = vmatprep.subr.mxu0 0.0
      %3039 = vmatpush1.msra.mxu0 0.0
      %3040 = vmatprep.subr.mxu0 0.0
      %3041 = vmatpush1.msra.mxu0 0.0
      %3042 = vmatprep.subr.mxu0 0.0
      %3043 = vmatpush1.msra.mxu0 0.0
      %3044 = vmatprep.subr.mxu0 0.0
      %3045 = vmatpush1.msra.mxu0 0.0
      %3046 = vmatprep.subr.mxu0 0.0
      %3047 = vmatpush1.msra.mxu0 0.0
      %3048 = vmatprep.subr.mxu0 0.0
      %3049 = vmatpush1.msra.mxu0 0.0
      %3050 = vmatprep.subr.mxu0 0.0
      %3051 = vmatpush1.msra.mxu0 0.0
      %3052 = vmatprep.subr.mxu0 0.0
      %3053 = vmatpush1.msra.mxu0 0.0
      %3054 = vmatprep.subr.mxu0 0.0
      %3055 = vmatpush1.msra.mxu0 0.0
      %3056 = vmatprep.subr.mxu0 0.0
      %3057 = vmatpush1.msra.mxu0 0.0
      %3058 = vmatprep.subr.mxu0 0.0
      %3059 = vmatpush1.msra.mxu0 0.0
      %3060 = vmatprep.subr.mxu0 0.0
      %3061 = vmatpush1.msra.mxu0 0.0
      %3062 = vmatprep.subr.mxu0 0.0
      %3063 = vmatpush1.msra.mxu0 0.0
      %3064 = vmatprep.subr.mxu0 0.0
      %3065 = vmatpush1.msra.mxu0 0.0
      %3066 = vmatprep.subr.mxu0 0.0
      %3067 = vmatpush1.msra.mxu0 0.0
      %3068 = vmatprep.subr.mxu0 0.0
      %3069 = vmatpush1.msra.mxu0 0.0
      %3070 = vmatprep.subr.mxu0 0.0
      %3071 = vmatpush1.msra.mxu0 0.0
      %3072 = vmatprep.mubr.f32.mxu0 0.0
      %3073 = vmatmul.mubr.f32.gmra.mrb[0].mxu0 %v2225
      %v3074 = vpop.f32.mrb[0].mxu0
      %v3075 = vadd.f32 %v3004, %v3074
      %v3076 = vpop.f32.mrb[0].mxu0
      %v3077 = vadd.f32 %v3006, %v3076
      %3078 = vdwg.mxu0
      %v3079 = vmax.f32 %v2436, %v2862
      %v3080 = vmax.f32 %v2438, %v2864
      %v3081 = vmax.f32 %v2649, %v3075
      %v3082 = vmax.f32 %v2651, %v3077
      %v3083 = vld [vmem:[%s2] sm:$0xf]
      %v3085 = vlaneseq
      %v3086 = vshrl.u32 %v3085, 7
      %v3087 = vsub.s32 0, %v3086
      %v3088 = vrot.slane %v3083, %v3087
      %v3089 = vlaneseq
      %v3090 = vshrl.u32 %v3089, 7
      %v3091 = vsub.s32 1, %v3090
      %v3092 = vrot.slane %v3083, %v3091
      %v3093 = vlaneseq
      %v3094 = vshrl.u32 %v3093, 7
      %v3095 = vsub.s32 2, %v3094
      %v3096 = vrot.slane %v3083, %v3095
      %v3097 = vlaneseq
      %v3098 = vshrl.u32 %v3097, 7
      %v3099 = vsub.s32 3, %v3098
      %v3100 = vrot.slane %v3083, %v3099
      %v3105 = vadd.f32 %v3079, %v3088
      %v3106 = vadd.f32 %v3080, %v3092
      %v3107 = vadd.f32 %v3081, %v3096
      %v3108 = vadd.f32 %v3082, %v3100
      %v3109 = vmax.f32 %v3105, 0.0
      %v3110 = vmax.f32 %v3106, 0.0
      %v3111 = vmax.f32 %v3107, 0.0
      %v3112 = vmax.f32 %v3108, 0.0
      %v3113 = vmax.f32 %v3109, %v3111
      %v3114 = vmax.f32 %v3110, %v3112
      %3115 = vst [vmem:[%s170] sm:$0xff] %v3113
      %3116 = vst [vmem:[%s170 + $0x8] sm:$0xff] %v3114
      %p3117 = scmp.lt.s32.totalorder %s14, 1
      %s3118 = scalar_select %p3117, %s14, 1
      %s3119 = smul.addr %s3118, 2
      %s3120 = smul.addr %s3119, 8
      %s3121 = scalar_lea.vmem %s3, %s3120
      // Predicated region
      $region33: #{shapes_cbm_forward.6} parent=31 // pred_check
        %p3122 = pneg %p100
      $region34: #{shapes_cbm_forward.6} parent=31 // pred_check_branch
        %3124 = sbr.rel (%p3122) target = $region36
      $region35: #{shapes_cbm_forward.6} parent=31 // pred_region
        _
      $region36: #{shapes_cbm_forward.6} parent=31 // pred_fallthru
        _
    $region32: #{shapes_cbm_forward.6} parent=5 // pred_fallthru
      _
    %p3125 = scmp.le.s32.totalorder 2, %s9
    // Predicated region
    $region37: #{shapes_cbm_forward.6} parent=5 // pred_check
      %p3126 = pneg %p3125
    $region38: #{shapes_cbm_forward.6} parent=5 // pred_check_branch
      %3128 = sbr.rel (%p3126) target = $region40
    $region39: #{shapes_cbm_forward.6} parent=5 // pred_region
      %s3129 = ssub.s32 %s9, 2
      // Predicated region
      $region41: #{shapes_cbm_forward.6} parent=39 // pred_check
        %p3130 = pneg %p106
      $region42: #{shapes_cbm_forward.6} parent=39 // pred_check_branch
        %3132 = sbr.rel (%p3130) target = $region44
      $region43: #{shapes_cbm_forward.6} parent=39 // pred_region
        %p3133 = scmp.lt.s32.totalorder %s15, 1
        %s3134 = scalar_select %p3133, %s15, 1
        %s3135 = smul.addr %s3134, 2
        %s3136 = smul.addr %s3135, 8
        %s3137 = scalar_lea.vmem %s3, %s3136
      $region44: #{shapes_cbm_forward.6} parent=39 // pred_fallthru
        _
    $region40: #{shapes_cbm_forward.6} parent=5 // pred_fallthru
      _
  $region6: #{shapes_cbm_forward.6} parent=0 // loop_footer
    %s13 = sadd.s32 1, %s9
  $region7: #{shapes_cbm_forward.6} parent=0 // loop_footer_branch
    %8 = sbr.rel target = $region3
  $region8: #{shapes_cbm_forward.6} parent=0 // loop_exit
    _

// kernel: shapes_cbm_forward.7
$region0: #{shapes_cbm_forward.7}
  #allocation0 [shape = 'u32[]', space=smem, size = 0x4, offset = 0x4, fixed_abs, tag = 'smem constant byte address 0x4 - core index']
  #allocation1 [shape = 'u32[144,128]{1,0:T(1,128)}', space=vmem, size = 0x12000, scoped, tag = 'internal scratch']
  %s0 = inlined_call_operand.vmem [shape: f32[2,2048], index: 0, kind: input, shape index: {}]
  %s1 = inlined_call_operand.vmem [shape: f32[2048,64], index: 1, kind: input, shape index: {}]
  %s2 = inlined_call_operand.vmem [shape: f32[1,64], index: 2, kind: input, shape index: {}]
  %s3 = inlined_call_operand.vmem [shape: f32[64,8], index: 3, kind: input, shape index: {}]
  %s4 = inlined_call_operand.vmem [shape: f32[1,8], index: 4, kind: input, shape index: {}]
  %s5 = inlined_call_operand.vmem [shape: f32[8,8], index: 5, kind: input, shape index: {}]
  %s6 = inlined_call_operand.vmem [shape: f32[1,8], index: 6, kind: input, shape index: {}]
  %s7 = inlined_call_operand.vmem [shape: f32[8,5], index: 7, kind: input, shape index: {}]
  %s8 = inlined_call_operand.vmem [shape: f32[1,5], index: 8, kind: input, shape index: {}]
  %s9 = inlined_call_operand.hbm [shape: f32[2,5], index: 9, kind: output, shape index: {0}]
  %s10 = inlined_call_operand.hbm [shape: f32[2,8], index: 10, kind: output, shape index: {1}]
  %11 = xla_tuple %s9, %s10
  %s12 = sld [smem:[#allocation0]]
  $region54: #{shapes_cbm_forward.7} parent=0
    _
  %s14 = ssub.s32 1, %s12
  %s15 = scalar_select 0, %s14, %s12
  $region1: #{shapes_cbm_forward.7} parent=0
    #allocation2 [shape = 'u8[1024]{0}', space=vmem, size = 0x400, scoped, tag = 'output window, operand 0, single buffered']
    #allocation3 [shape = 's32[1]{0}', space=sflag, size = 0x4, scoped, tag = 'scoped memory for shapes_cbm_forward.7']
    #allocation4 [shape = 'u8[1024]{0}', space=vmem, size = 0x400, scoped, tag = 'output window, operand 1, single buffered']
    #allocation5 [shape = 's32[1]{0}', space=sflag, size = 0x4, scoped, tag = 'scoped memory for shapes_cbm_forward.7']
    %16 = vsyncpa [#allocation3], 0
    %17 = vsyncpa [#allocation5], 0
    // Predicated region
    $region2: #{shapes_cbm_forward.7} parent=1 // pred_check
      _
    $region3: #{shapes_cbm_forward.7} parent=1 // pred_check_branch
      %19 = sbr.rel (0) target = $region5
    $region4: #{shapes_cbm_forward.7} parent=1 // pred_region
      _
    $region5: #{shapes_cbm_forward.7} parent=1 // pred_fallthru
      _
    // Predicated region
    $region6: #{shapes_cbm_forward.7} parent=1 // pred_check
      _
    $region7: #{shapes_cbm_forward.7} parent=1 // pred_check_branch
      %21 = sbr.rel (0) target = $region9
    $region8: #{shapes_cbm_forward.7} parent=1 // pred_region
      _
    $region9: #{shapes_cbm_forward.7} parent=1 // pred_fallthru
      _
    // Predicated region
    $region10: #{shapes_cbm_forward.7} parent=1 // pred_check
      _
    $region11: #{shapes_cbm_forward.7} parent=1 // pred_check_branch
      %23 = sbr.rel (0) target = $region13
    $region12: #{shapes_cbm_forward.7} parent=1 // pred_region
      _
    $region13: #{shapes_cbm_forward.7} parent=1 // pred_fallthru
      _
    // Predicated region
    $region14: #{shapes_cbm_forward.7} parent=1 // pred_check
      _
    $region15: #{shapes_cbm_forward.7} parent=1 // pred_check_branch
      %25 = sbr.rel (0) target = $region17
    $region16: #{shapes_cbm_forward.7} parent=1 // pred_region
      _
    $region17: #{shapes_cbm_forward.7} parent=1 // pred_fallthru
      _
    // Predicated region
    $region18: #{shapes_cbm_forward.7} parent=1 // pred_check
      _
    $region19: #{shapes_cbm_forward.7} parent=1 // pred_check_branch
      %27 = sbr.rel (0) target = $region21
    $region20: #{shapes_cbm_forward.7} parent=1 // pred_region
      _
    $region21: #{shapes_cbm_forward.7} parent=1 // pred_fallthru
      _
    // Predicated region
    $region22: #{shapes_cbm_forward.7} parent=1 // pred_check
      _
    $region23: #{shapes_cbm_forward.7} parent=1 // pred_check_branch
      %29 = sbr.rel (0) target = $region25
    $region24: #{shapes_cbm_forward.7} parent=1 // pred_region
      _
    $region25: #{shapes_cbm_forward.7} parent=1 // pred_fallthru
      _
    // Predicated region
    $region26: #{shapes_cbm_forward.7} parent=1 // pred_check
      _
    $region27: #{shapes_cbm_forward.7} parent=1 // pred_check_branch
      %31 = sbr.rel (0) target = $region29
    $region28: #{shapes_cbm_forward.7} parent=1 // pred_region
      _
    $region29: #{shapes_cbm_forward.7} parent=1 // pred_fallthru
      _
    // Predicated region
    $region30: #{shapes_cbm_forward.7} parent=1 // pred_check
      _
    $region31: #{shapes_cbm_forward.7} parent=1 // pred_check_branch
      %33 = sbr.rel (0) target = $region33
    $region32: #{shapes_cbm_forward.7} parent=1 // pred_region
      _
    $region33: #{shapes_cbm_forward.7} parent=1 // pred_fallthru
      _
    // Predicated region
    $region34: #{shapes_cbm_forward.7} parent=1 // pred_check
      _
    $region35: #{shapes_cbm_forward.7} parent=1 // pred_check_branch
      %35 = sbr.rel (0) target = $region37
    $region36: #{shapes_cbm_forward.7} parent=1 // pred_region
      _
    $region37: #{shapes_cbm_forward.7} parent=1 // pred_fallthru
      _
    %v36 = vld [vmem:[%s0] sm:$0xff]
    %v37 = vld [vmem:[%s0 + $0x8] sm:$0xff]
    %v38 = vld [vmem:[%s0 + $0x10] sm:$0xff]
    %v39 = vld [vmem:[%s0 + $0x18] sm:$0xff]
    %v40 = vld [vmem:[%s1] sm:$0xff]
    %v41 = vld [vmem:[%s1 + $0x8] sm:$0xff]
    %v42 = vld [vmem:[%s1 + $0x10] sm:$0xff]
    %v43 = vld [vmem:[%s1 + $0x18] sm:$0xff]
    %v44 = vld [vmem:[%s1 + $0x20] sm:$0xff]
    %v45 = vld [vmem:[%s1 + $0x28] sm:$0xff]
    %v46 = vld [vmem:[%s1 + $0x30] sm:$0xff]
    %v47 = vld [vmem:[%s1 + $0x38] sm:$0xff]
    %v48 = vld [vmem:[%s1 + $0x40] sm:$0xff]
    %v49 = vld [vmem:[%s1 + $0x48] sm:$0xff]
    %v50 = vld [vmem:[%s1 + $0x50] sm:$0xff]
    %v51 = vld [vmem:[%s1 + $0x58] sm:$0xff]
    %v52 = vld [vmem:[%s1 + $0x60] sm:$0xff]
    %v53 = vld [vmem:[%s1 + $0x68] sm:$0xff]
    %v54 = vld [vmem:[%s1 + $0x70] sm:$0xff]
    %v55 = vld [vmem:[%s1 + $0x78] sm:$0xff]
    %v56 = vld [vmem:[%s1 + $0x80] sm:$0xff]
    %v57 = vld [vmem:[%s1 + $0x88] sm:$0xff]
    %v58 = vld [vmem:[%s1 + $0x90] sm:$0xff]
    %v59 = vld [vmem:[%s1 + $0x98] sm:$0xff]
    %v60 = vld [vmem:[%s1 + $0xa0] sm:$0xff]
    %v61 = vld [vmem:[%s1 + $0xa8] sm:$0xff]
    %v62 = vld [vmem:[%s1 + $0xb0] sm:$0xff]
    %v63 = vld [vmem:[%s1 + $0xb8] sm:$0xff]
    %v64 = vld [vmem:[%s1 + $0xc0] sm:$0xff]
    %v65 = vld [vmem:[%s1 + $0xc8] sm:$0xff]
    %v66 = vld [vmem:[%s1 + $0xd0] sm:$0xff]
    %v67 = vld [vmem:[%s1 + $0xd8] sm:$0xff]
    %v68 = vld [vmem:[%s1 + $0xe0] sm:$0xff]
    %v69 = vld [vmem:[%s1 + $0xe8] sm:$0xff]
    %v70 = vld [vmem:[%s1 + $0xf0] sm:$0xff]
    %v71 = vld [vmem:[%s1 + $0xf8] sm:$0xff]
    %v72 = vld [vmem:[%s1 + $0x100] sm:$0xff]
    %v73 = vld [vmem:[%s1 + $0x108] sm:$0xff]
    %v74 = vld [vmem:[%s1 + $0x110] sm:$0xff]
    %v75 = vld [vmem:[%s1 + $0x118] sm:$0xff]
    %v76 = vld [vmem:[%s1 + $0x120] sm:$0xff]
    %v77 = vld [vmem:[%s1 + $0x128] sm:$0xff]
    %v78 = vld [vmem:[%s1 + $0x130] sm:$0xff]
    %v79 = vld [vmem:[%s1 + $0x138] sm:$0xff]
    %v80 = vld [vmem:[%s1 + $0x140] sm:$0xff]
    %v81 = vld [vmem:[%s1 + $0x148] sm:$0xff]
    %v82 = vld [vmem:[%s1 + $0x150] sm:$0xff]
    %v83 = vld [vmem:[%s1 + $0x158] sm:$0xff]
    %v84 = vld [vmem:[%s1 + $0x160] sm:$0xff]
    %v85 = vld [vmem:[%s1 + $0x168] sm:$0xff]
    %v86 = vld [vmem:[%s1 + $0x170] sm:$0xff]
    %v87 = vld [vmem:[%s1 + $0x178] sm:$0xff]
    %v88 = vld [vmem:[%s1 + $0x180] sm:$0xff]
    %v89 = vld [vmem:[%s1 + $0x188] sm:$0xff]
    %v90 = vld [vmem:[%s1 + $0x190] sm:$0xff]
    %v91 = vld [vmem:[%s1 + $0x198] sm:$0xff]
    %v92 = vld [vmem:[%s1 + $0x1a0] sm:$0xff]
    %v93 = vld [vmem:[%s1 + $0x1a8] sm:$0xff]
    %v94 = vld [vmem:[%s1 + $0x1b0] sm:$0xff]
    %v95 = vld [vmem:[%s1 + $0x1b8] sm:$0xff]
    %v96 = vld [vmem:[%s1 + $0x1c0] sm:$0xff]
    %v97 = vld [vmem:[%s1 + $0x1c8] sm:$0xff]
    %v98 = vld [vmem:[%s1 + $0x1d0] sm:$0xff]
    %v99 = vld [vmem:[%s1 + $0x1d8] sm:$0xff]
    %v100 = vld [vmem:[%s1 + $0x1e0] sm:$0xff]
    %v101 = vld [vmem:[%s1 + $0x1e8] sm:$0xff]
    %v102 = vld [vmem:[%s1 + $0x1f0] sm:$0xff]
    %v103 = vld [vmem:[%s1 + $0x1f8] sm:$0xff]
    %v104 = vld [vmem:[%s1 + $0x200] sm:$0xff]
    %v105 = vld [vmem:[%s1 + $0x208] sm:$0xff]
    %v106 = vld [vmem:[%s1 + $0x210] sm:$0xff]
    %v107 = vld [vmem:[%s1 + $0x218] sm:$0xff]
    %v108 = vld [vmem:[%s1 + $0x220] sm:$0xff]
    %v109 = vld [vmem:[%s1 + $0x228] sm:$0xff]
    %v110 = vld [vmem:[%s1 + $0x230] sm:$0xff]
    %v111 = vld [vmem:[%s1 + $0x238] sm:$0xff]
    %v112 = vld [vmem:[%s1 + $0x240] sm:$0xff]
    %v113 = vld [vmem:[%s1 + $0x248] sm:$0xff]
    %v114 = vld [vmem:[%s1 + $0x250] sm:$0xff]
    %v115 = vld [vmem:[%s1 + $0x258] sm:$0xff]
    %v116 = vld [vmem:[%s1 + $0x260] sm:$0xff]
    %v117 = vld [vmem:[%s1 + $0x268] sm:$0xff]
    %v118 = vld [vmem:[%s1 + $0x270] sm:$0xff]
    %v119 = vld [vmem:[%s1 + $0x278] sm:$0xff]
    %v120 = vld [vmem:[%s1 + $0x280] sm:$0xff]
    %v121 = vld [vmem:[%s1 + $0x288] sm:$0xff]
    %v122 = vld [vmem:[%s1 + $0x290] sm:$0xff]
    %v123 = vld [vmem:[%s1 + $0x298] sm:$0xff]
    %v124 = vld [vmem:[%s1 + $0x2a0] sm:$0xff]
    %v125 = vld [vmem:[%s1 + $0x2a8] sm:$0xff]
    %v126 = vld [vmem:[%s1 + $0x2b0] sm:$0xff]
    %v127 = vld [vmem:[%s1 + $0x2b8] sm:$0xff]
    %v128 = vld [vmem:[%s1 + $0x2c0] sm:$0xff]
    %v129 = vld [vmem:[%s1 + $0x2c8] sm:$0xff]
    %v130 = vld [vmem:[%s1 + $0x2d0] sm:$0xff]
    %v131 = vld [vmem:[%s1 + $0x2d8] sm:$0xff]
    %v132 = vld [vmem:[%s1 + $0x2e0] sm:$0xff]
    %v133 = vld [vmem:[%s1 + $0x2e8] sm:$0xff]
    %v134 = vld [vmem:[%s1 + $0x2f0] sm:$0xff]
    %v135 = vld [vmem:[%s1 + $0x2f8] sm:$0xff]
    %v136 = vld [vmem:[%s1 + $0x300] sm:$0xff]
    %v137 = vld [vmem:[%s1 + $0x308] sm:$0xff]
    %v138 = vld [vmem:[%s1 + $0x310] sm:$0xff]
    %v139 = vld [vmem:[%s1 + $0x318] sm:$0xff]
    %v140 = vld [vmem:[%s1 + $0x320] sm:$0xff]
    %v141 = vld [vmem:[%s1 + $0x328] sm:$0xff]
    %v142 = vld [vmem:[%s1 + $0x330] sm:$0xff]
    %v143 = vld [vmem:[%s1 + $0x338] sm:$0xff]
    %v144 = vld [vmem:[%s1 + $0x340] sm:$0xff]
    %v145 = vld [vmem:[%s1 + $0x348] sm:$0xff]
    %v146 = vld [vmem:[%s1 + $0x350] sm:$0xff]
    %v147 = vld [vmem:[%s1 + $0x358] sm:$0xff]
    %v148 = vld [vmem:[%s1 + $0x360] sm:$0xff]
    %v149 = vld [vmem:[%s1 + $0x368] sm:$0xff]
    %v150 = vld [vmem:[%s1 + $0x370] sm:$0xff]
    %v151 = vld [vmem:[%s1 + $0x378] sm:$0xff]
    %v152 = vld [vmem:[%s1 + $0x380] sm:$0xff]
    %v153 = vld [vmem:[%s1 + $0x388] sm:$0xff]
    %v154 = vld [vmem:[%s1 + $0x390] sm:$0xff]
    %v155 = vld [vmem:[%s1 + $0x398] sm:$0xff]
    %v156 = vld [vmem:[%s1 + $0x3a0] sm:$0xff]
    %v157 = vld [vmem:[%s1 + $0x3a8] sm:$0xff]
    %v158 = vld [vmem:[%s1 + $0x3b0] sm:$0xff]
    %v159 = vld [vmem:[%s1 + $0x3b8] sm:$0xff]
    %v160 = vld [vmem:[%s1 + $0x3c0] sm:$0xff]
    %v161 = vld [vmem:[%s1 + $0x3c8] sm:$0xff]
    %v162 = vld [vmem:[%s1 + $0x3d0] sm:$0xff]
    %v163 = vld [vmem:[%s1 + $0x3d8] sm:$0xff]
    %v164 = vld [vmem:[%s1 + $0x3e0] sm:$0xff]
    %v165 = vld [vmem:[%s1 + $0x3e8] sm:$0xff]
    %v166 = vld [vmem:[%s1 + $0x3f0] sm:$0xff]
    %v167 = vld [vmem:[%s1 + $0x3f8] sm:$0xff]
    %v168 = vld [vmem:[%s1 + $0x400] sm:$0xff]
    %v169 = vld [vmem:[%s1 + $0x408] sm:$0xff]
    %v170 = vld [vmem:[%s1 + $0x410] sm:$0xff]
    %v171 = vld [vmem:[%s1 + $0x418] sm:$0xff]
    %v172 = vld [vmem:[%s1 + $0x420] sm:$0xff]
    %v173 = vld [vmem:[%s1 + $0x428] sm:$0xff]
    %v174 = vld [vmem:[%s1 + $0x430] sm:$0xff]
    %v175 = vld [vmem:[%s1 + $0x438] sm:$0xff]
    %v176 = vld [vmem:[%s1 + $0x440] sm:$0xff]
    %v177 = vld [vmem:[%s1 + $0x448] sm:$0xff]
    %v178 = vld [vmem:[%s1 + $0x450] sm:$0xff]
    %v179 = vld [vmem:[%s1 + $0x458] sm:$0xff]
    %v180 = vld [vmem:[%s1 + $0x460] sm:$0xff]
    %v181 = vld [vmem:[%s1 + $0x468] sm:$0xff]
    %v182 = vld [vmem:[%s1 + $0x470] sm:$0xff]
    %v183 = vld [vmem:[%s1 + $0x478] sm:$0xff]
    %v184 = vld [vmem:[%s1 + $0x480] sm:$0xff]
    %v185 = vld [vmem:[%s1 + $0x488] sm:$0xff]
    %v186 = vld [vmem:[%s1 + $0x490] sm:$0xff]
    %v187 = vld [vmem:[%s1 + $0x498] sm:$0xff]
    %v188 = vld [vmem:[%s1 + $0x4a0] sm:$0xff]
    %v189 = vld [vmem:[%s1 + $0x4a8] sm:$0xff]
    %v190 = vld [vmem:[%s1 + $0x4b0] sm:$0xff]
    %v191 = vld [vmem:[%s1 + $0x4b8] sm:$0xff]
    %v192 = vld [vmem:[%s1 + $0x4c0] sm:$0xff]
    %v193 = vld [vmem:[%s1 + $0x4c8] sm:$0xff]
    %v194 = vld [vmem:[%s1 + $0x4d0] sm:$0xff]
    %v195 = vld [vmem:[%s1 + $0x4d8] sm:$0xff]
    %v196 = vld [vmem:[%s1 + $0x4e0] sm:$0xff]
    %v197 = vld [vmem:[%s1 + $0x4e8] sm:$0xff]
    %v198 = vld [vmem:[%s1 + $0x4f0] sm:$0xff]
    %v199 = vld [vmem:[%s1 + $0x4f8] sm:$0xff]
    %v200 = vld [vmem:[%s1 + $0x500] sm:$0xff]
    %v201 = vld [vmem:[%s1 + $0x508] sm:$0xff]
    %v202 = vld [vmem:[%s1 + $0x510] sm:$0xff]
    %v203 = vld [vmem:[%s1 + $0x518] sm:$0xff]
    %v204 = vld [vmem:[%s1 + $0x520] sm:$0xff]
    %v205 = vld [vmem:[%s1 + $0x528] sm:$0xff]
    %v206 = vld [vmem:[%s1 + $0x530] sm:$0xff]
    %v207 = vld [vmem:[%s1 + $0x538] sm:$0xff]
    %v208 = vld [vmem:[%s1 + $0x540] sm:$0xff]
    %v209 = vld [vmem:[%s1 + $0x548] sm:$0xff]
    %v210 = vld [vmem:[%s1 + $0x550] sm:$0xff]
    %v211 = vld [vmem:[%s1 + $0x558] sm:$0xff]
    %v212 = vld [vmem:[%s1 + $0x560] sm:$0xff]
    %v213 = vld [vmem:[%s1 + $0x568] sm:$0xff]
    %v214 = vld [vmem:[%s1 + $0x570] sm:$0xff]
    %v215 = vld [vmem:[%s1 + $0x578] sm:$0xff]
    %v216 = vld [vmem:[%s1 + $0x580] sm:$0xff]
    %v217 = vld [vmem:[%s1 + $0x588] sm:$0xff]
    %v218 = vld [vmem:[%s1 + $0x590] sm:$0xff]
    %v219 = vld [vmem:[%s1 + $0x598] sm:$0xff]
    %v220 = vld [vmem:[%s1 + $0x5a0] sm:$0xff]
    %v221 = vld [vmem:[%s1 + $0x5a8] sm:$0xff]
    %v222 = vld [vmem:[%s1 + $0x5b0] sm:$0xff]
    %v223 = vld [vmem:[%s1 + $0x5b8] sm:$0xff]
    %v224 = vld [vmem:[%s1 + $0x5c0] sm:$0xff]
    %v225 = vld [vmem:[%s1 + $0x5c8] sm:$0xff]
    %v226 = vld [vmem:[%s1 + $0x5d0] sm:$0xff]
    %v227 = vld [vmem:[%s1 + $0x5d8] sm:$0xff]
    %v228 = vld [vmem:[%s1 + $0x5e0] sm:$0xff]
    %v229 = vld [vmem:[%s1 + $0x5e8] sm:$0xff]
    %v230 = vld [vmem:[%s1 + $0x5f0] sm:$0xff]
    %v231 = vld [vmem:[%s1 + $0x5f8] sm:$0xff]
    %v232 = vld [vmem:[%s1 + $0x600] sm:$0xff]
    %v233 = vld [vmem:[%s1 + $0x608] sm:$0xff]
    %v234 = vld [vmem:[%s1 + $0x610] sm:$0xff]
    %v235 = vld [vmem:[%s1 + $0x618] sm:$0xff]
    %v236 = vld [vmem:[%s1 + $0x620] sm:$0xff]
    %v237 = vld [vmem:[%s1 + $0x628] sm:$0xff]
    %v238 = vld [vmem:[%s1 + $0x630] sm:$0xff]
    %v239 = vld [vmem:[%s1 + $0x638] sm:$0xff]
    %v240 = vld [vmem:[%s1 + $0x640] sm:$0xff]
    %v241 = vld [vmem:[%s1 + $0x648] sm:$0xff]
    %v242 = vld [vmem:[%s1 + $0x650] sm:$0xff]
    %v243 = vld [vmem:[%s1 + $0x658] sm:$0xff]
    %v244 = vld [vmem:[%s1 + $0x660] sm:$0xff]
    %v245 = vld [vmem:[%s1 + $0x668] sm:$0xff]
    %v246 = vld [vmem:[%s1 + $0x670] sm:$0xff]
    %v247 = vld [vmem:[%s1 + $0x678] sm:$0xff]
    %v248 = vld [vmem:[%s1 + $0x680] sm:$0xff]
    %v249 = vld [vmem:[%s1 + $0x688] sm:$0xff]
    %v250 = vld [vmem:[%s1 + $0x690] sm:$0xff]
    %v251 = vld [vmem:[%s1 + $0x698] sm:$0xff]
    %v252 = vld [vmem:[%s1 + $0x6a0] sm:$0xff]
    %v253 = vld [vmem:[%s1 + $0x6a8] sm:$0xff]
    %v254 = vld [vmem:[%s1 + $0x6b0] sm:$0xff]
    %v255 = vld [vmem:[%s1 + $0x6b8] sm:$0xff]
    %v256 = vld [vmem:[%s1 + $0x6c0] sm:$0xff]
    %v257 = vld [vmem:[%s1 + $0x6c8] sm:$0xff]
    %v258 = vld [vmem:[%s1 + $0x6d0] sm:$0xff]
    %v259 = vld [vmem:[%s1 + $0x6d8] sm:$0xff]
    %v260 = vld [vmem:[%s1 + $0x6e0] sm:$0xff]
    %v261 = vld [vmem:[%s1 + $0x6e8] sm:$0xff]
    %v262 = vld [vmem:[%s1 + $0x6f0] sm:$0xff]
    %v263 = vld [vmem:[%s1 + $0x6f8] sm:$0xff]
    %v264 = vld [vmem:[%s1 + $0x700] sm:$0xff]
    %v265 = vld [vmem:[%s1 + $0x708] sm:$0xff]
    %v266 = vld [vmem:[%s1 + $0x710] sm:$0xff]
    %v267 = vld [vmem:[%s1 + $0x718] sm:$0xff]
    %v268 = vld [vmem:[%s1 + $0x720] sm:$0xff]
    %v269 = vld [vmem:[%s1 + $0x728] sm:$0xff]
    %v270 = vld [vmem:[%s1 + $0x730] sm:$0xff]
    %v271 = vld [vmem:[%s1 + $0x738] sm:$0xff]
    %v272 = vld [vmem:[%s1 + $0x740] sm:$0xff]
    %v273 = vld [vmem:[%s1 + $0x748] sm:$0xff]
    %v274 = vld [vmem:[%s1 + $0x750] sm:$0xff]
    %v275 = vld [vmem:[%s1 + $0x758] sm:$0xff]
    %v276 = vld [vmem:[%s1 + $0x760] sm:$0xff]
    %v277 = vld [vmem:[%s1 + $0x768] sm:$0xff]
    %v278 = vld [vmem:[%s1 + $0x770] sm:$0xff]
    %v279 = vld [vmem:[%s1 + $0x778] sm:$0xff]
    %v280 = vld [vmem:[%s1 + $0x780] sm:$0xff]
    %v281 = vld [vmem:[%s1 + $0x788] sm:$0xff]
    %v282 = vld [vmem:[%s1 + $0x790] sm:$0xff]
    %v283 = vld [vmem:[%s1 + $0x798] sm:$0xff]
    %v284 = vld [vmem:[%s1 + $0x7a0] sm:$0xff]
    %v285 = vld [vmem:[%s1 + $0x7a8] sm:$0xff]
    %v286 = vld [vmem:[%s1 + $0x7b0] sm:$0xff]
    %v287 = vld [vmem:[%s1 + $0x7b8] sm:$0xff]
    %v288 = vld [vmem:[%s1 + $0x7c0] sm:$0xff]
    %v289 = vld [vmem:[%s1 + $0x7c8] sm:$0xff]
    %v290 = vld [vmem:[%s1 + $0x7d0] sm:$0xff]
    %v291 = vld [vmem:[%s1 + $0x7d8] sm:$0xff]
    %v292 = vld [vmem:[%s1 + $0x7e0] sm:$0xff]
    %v293 = vld [vmem:[%s1 + $0x7e8] sm:$0xff]
    %v294 = vld [vmem:[%s1 + $0x7f0] sm:$0xff]
    %v295 = vld [vmem:[%s1 + $0x7f8] sm:$0xff]
    %v296 = vld [vmem:[%s2] sm:$0x1]
    %v298 = vlaneseq
    %v299 = vshrl.u32 %v298, 7
    %v300 = vsub.s32 0, %v299
    %v301 = vrot.slane %v296, %v300
    %v307 = vcombine.high %v36, %v36
    %v309 = vunpack.c.l.s4 1983009808
    %v310 = vunpack.c.0.s8 %v309
    %v311 = vlaneseq
    %v312 = vshrl.u32 %v311, 7
    %v313 = vsub.s32 %v310, %v312
    %v314 = vrot.slane %v36, %v313
    %v316 = vunpack.c.l.s4 1983009808
    %v317 = vunpack.c.0.s8 %v316
    %v318 = vlaneseq
    %v319 = vshrl.u32 %v318, 7
    %v320 = vsub.s32 %v317, %v319
    %v321 = vrot.slane %v307, %v320
    %v322 = vcombine.high %v314, %v314
    %v323 = vcombine.high %v321, %v321
    %v324 = vcombine.high %v37, %v37
    %v326 = vunpack.c.l.s4 1983009808
    %v327 = vunpack.c.0.s8 %v326
    %v328 = vlaneseq
    %v329 = vshrl.u32 %v328, 7
    %v330 = vsub.s32 %v327, %v329
    %v331 = vrot.slane %v37, %v330
    %v333 = vunpack.c.l.s4 1983009808
    %v334 = vunpack.c.0.s8 %v333
    %v335 = vlaneseq
    %v336 = vshrl.u32 %v335, 7
    %v337 = vsub.s32 %v334, %v336
    %v338 = vrot.slane %v324, %v337
    %v339 = vcombine.high %v331, %v331
    %v340 = vcombine.high %v338, %v338
    %v341 = vcombine.high %v38, %v38
    %v343 = vunpack.c.l.s4 1983009808
    %v344 = vunpack.c.0.s8 %v343
    %v345 = vlaneseq
    %v346 = vshrl.u32 %v345, 7
    %v347 = vsub.s32 %v344, %v346
    %v348 = vrot.slane %v38, %v347
    %v350 = vunpack.c.l.s4 1983009808
    %v351 = vunpack.c.0.s8 %v350
    %v352 = vlaneseq
    %v353 = vshrl.u32 %v352, 7
    %v354 = vsub.s32 %v351, %v353
    %v355 = vrot.slane %v341, %v354
    %v356 = vcombine.high %v348, %v348
    %v357 = vcombine.high %v355, %v355
    %v358 = vcombine.high %v39, %v39
    %v360 = vunpack.c.l.s4 1983009808
    %v361 = vunpack.c.0.s8 %v360
    %v362 = vlaneseq
    %v363 = vshrl.u32 %v362, 7
    %v364 = vsub.s32 %v361, %v363
    %v365 = vrot.slane %v39, %v364
    %v367 = vunpack.c.l.s4 1983009808
    %v368 = vunpack.c.0.s8 %v367
    %v369 = vlaneseq
    %v370 = vshrl.u32 %v369, 7
    %v371 = vsub.s32 %v368, %v370
    %v372 = vrot.slane %v358, %v371
    %v373 = vcombine.high %v365, %v365
    %v374 = vcombine.high %v372, %v372
    %391 = vmatprep.subr.mxu0 0.0
    %392 = vmatpush1.msra.mxu0 %v40
    %393 = vmatprep.subr.mxu0 0.0
    %394 = vmatpush1.msra.mxu0 %v41
    %395 = vmatprep.subr.mxu0 0.0
    %396 = vmatpush1.msra.mxu0 %v42
    %397 = vmatprep.subr.mxu0 0.0
    %398 = vmatpush1.msra.mxu0 %v43
    %399 = vmatprep.subr.mxu0 0.0
    %400 = vmatpush1.msra.mxu0 %v44
    %401 = vmatprep.subr.mxu0 0.0
    %402 = vmatpush1.msra.mxu0 %v45
    %403 = vmatprep.subr.mxu0 0.0
    %404 = vmatpush1.msra.mxu0 %v46
    %405 = vmatprep.subr.mxu0 0.0
    %406 = vmatpush1.msra.mxu0 %v47
    %407 = vmatprep.subr.mxu0 0.0
    %408 = vmatpush1.msra.mxu0 %v48
    %409 = vmatprep.subr.mxu0 0.0
    %410 = vmatpush1.msra.mxu0 %v49
    %411 = vmatprep.subr.mxu0 0.0
    %412 = vmatpush1.msra.mxu0 %v50
    %413 = vmatprep.subr.mxu0 0.0
    %414 = vmatpush1.msra.mxu0 %v51
    %415 = vmatprep.subr.mxu0 0.0
    %416 = vmatpush1.msra.mxu0 %v52
    %417 = vmatprep.subr.mxu0 0.0
    %418 = vmatpush1.msra.mxu0 %v53
    %419 = vmatprep.subr.mxu0 0.0
    %420 = vmatpush1.msra.mxu0 %v54
    %421 = vmatprep.subr.mxu0 0.0
    %422 = vmatpush1.msra.mxu0 %v55
    %423 = vmatprep.subr.mxu0 0.0
    %424 = vmatpush1.msra.mxu0 %v56
    %425 = vmatprep.subr.mxu0 0.0
    %426 = vmatpush1.msra.mxu0 %v57
    %427 = vmatprep.subr.mxu0 0.0
    %428 = vmatpush1.msra.mxu0 %v58
    %429 = vmatprep.subr.mxu0 0.0
    %430 = vmatpush1.msra.mxu0 %v59
    %431 = vmatprep.subr.mxu0 0.0
    %432 = vmatpush1.msra.mxu0 %v60
    %433 = vmatprep.subr.mxu0 0.0
    %434 = vmatpush1.msra.mxu0 %v61
    %435 = vmatprep.subr.mxu0 0.0
    %436 = vmatpush1.msra.mxu0 %v62
    %437 = vmatprep.subr.mxu0 0.0
    %438 = vmatpush1.msra.mxu0 %v63
    %439 = vmatprep.subr.mxu0 0.0
    %440 = vmatpush1.msra.mxu0 %v64
    %441 = vmatprep.subr.mxu0 0.0
    %442 = vmatpush1.msra.mxu0 %v65
    %443 = vmatprep.subr.mxu0 0.0
    %444 = vmatpush1.msra.mxu0 %v66
    %445 = vmatprep.subr.mxu0 0.0
    %446 = vmatpush1.msra.mxu0 %v67
    %447 = vmatprep.subr.mxu0 0.0
    %448 = vmatpush1.msra.mxu0 %v68
    %449 = vmatprep.subr.mxu0 0.0
    %450 = vmatpush1.msra.mxu0 %v69
    %451 = vmatprep.subr.mxu0 0.0
    %452 = vmatpush1.msra.mxu0 %v70
    %453 = vmatprep.subr.mxu0 0.0
    %454 = vmatpush1.msra.mxu0 %v71
    %455 = vmatprep.mubr.f32.mxu0 %v322
    %456 = vmatmul.mubr.f32.gmra.mrb[0].mxu0 %v314
    %v457 = vpop.f32.mrb[0].mxu0
    %v458 = vadd.f32 %v301, %v457
    %v459 = vpop.f32.mrb[0].mxu0
    %460 = vdwg.mxu0
    %461 = vmatprep.subr.mxu0 0.0
    %462 = vmatpush1.msra.mxu0 %v72
    %463 = vmatprep.subr.mxu0 0.0
    %464 = vmatpush1.msra.mxu0 %v73
    %465 = vmatprep.subr.mxu0 0.0
    %466 = vmatpush1.msra.mxu0 %v74
    %467 = vmatprep.subr.mxu0 0.0
    %468 = vmatpush1.msra.mxu0 %v75
    %469 = vmatprep.subr.mxu0 0.0
    %470 = vmatpush1.msra.mxu0 %v76
    %471 = vmatprep.subr.mxu0 0.0
    %472 = vmatpush1.msra.mxu0 %v77
    %473 = vmatprep.subr.mxu0 0.0
    %474 = vmatpush1.msra.mxu0 %v78
    %475 = vmatprep.subr.mxu0 0.0
    %476 = vmatpush1.msra.mxu0 %v79
    %477 = vmatprep.subr.mxu0 0.0
    %478 = vmatpush1.msra.mxu0 %v80
    %479 = vmatprep.subr.mxu0 0.0
    %480 = vmatpush1.msra.mxu0 %v81
    %481 = vmatprep.subr.mxu0 0.0
    %482 = vmatpush1.msra.mxu0 %v82
    %483 = vmatprep.subr.mxu0 0.0
    %484 = vmatpush1.msra.mxu0 %v83
    %485 = vmatprep.subr.mxu0 0.0
    %486 = vmatpush1.msra.mxu0 %v84
    %487 = vmatprep.subr.mxu0 0.0
    %488 = vmatpush1.msra.mxu0 %v85
    %489 = vmatprep.subr.mxu0 0.0
    %490 = vmatpush1.msra.mxu0 %v86
    %491 = vmatprep.subr.mxu0 0.0
    %492 = vmatpush1.msra.mxu0 %v87
    %493 = vmatprep.subr.mxu0 0.0
    %494 = vmatpush1.msra.mxu0 %v88
    %495 = vmatprep.subr.mxu0 0.0
    %496 = vmatpush1.msra.mxu0 %v89
    %497 = vmatprep.subr.mxu0 0.0
    %498 = vmatpush1.msra.mxu0 %v90
    %499 = vmatprep.subr.mxu0 0.0
    %500 = vmatpush1.msra.mxu0 %v91
    %501 = vmatprep.subr.mxu0 0.0
    %502 = vmatpush1.msra.mxu0 %v92
    %503 = vmatprep.subr.mxu0 0.0
    %504 = vmatpush1.msra.mxu0 %v93
    %505 = vmatprep.subr.mxu0 0.0
    %506 = vmatpush1.msra.mxu0 %v94
    %507 = vmatprep.subr.mxu0 0.0
    %508 = vmatpush1.msra.mxu0 %v95
    %509 = vmatprep.subr.mxu0 0.0
    %510 = vmatpush1.msra.mxu0 %v96
    %511 = vmatprep.subr.mxu0 0.0
    %512 = vmatpush1.msra.mxu0 %v97
    %513 = vmatprep.subr.mxu0 0.0
    %514 = vmatpush1.msra.mxu0 %v98
    %515 = vmatprep.subr.mxu0 0.0
    %516 = vmatpush1.msra.mxu0 %v99
    %517 = vmatprep.subr.mxu0 0.0
    %518 = vmatpush1.msra.mxu0 %v100
    %519 = vmatprep.subr.mxu0 0.0
    %520 = vmatpush1.msra.mxu0 %v101
    %521 = vmatprep.subr.mxu0 0.0
    %522 = vmatpush1.msra.mxu0 %v102
    %523 = vmatprep.subr.mxu0 0.0
    %524 = vmatpush1.msra.mxu0 %v103
    %525 = vmatprep.mubr.f32.mxu0 %v323
    %526 = vmatmul.mubr.f32.gmra.mrb[0].mxu0 %v321
    %v527 = vpop.f32.mrb[0].mxu0
    %v528 = vadd.f32 %v458, %v527
    %v529 = vpop.f32.mrb[0].mxu0
    %530 = vdwg.mxu0
    %531 = vmatprep.subr.mxu0 0.0
    %532 = vmatpush1.msra.mxu0 %v104
    %533 = vmatprep.subr.mxu0 0.0
    %534 = vmatpush1.msra.mxu0 %v105
    %535 = vmatprep.subr.mxu0 0.0
    %536 = vmatpush1.msra.mxu0 %v106
    %537 = vmatprep.subr.mxu0 0.0
    %538 = vmatpush1.msra.mxu0 %v107
    %539 = vmatprep.subr.mxu0 0.0
    %540 = vmatpush1.msra.mxu0 %v108
    %541 = vmatprep.subr.mxu0 0.0
    %542 = vmatpush1.msra.mxu0 %v109
    %543 = vmatprep.subr.mxu0 0.0
    %544 = vmatpush1.msra.mxu0 %v110
    %545 = vmatprep.subr.mxu0 0.0
    %546 = vmatpush1.msra.mxu0 %v111
    %547 = vmatprep.subr.mxu0 0.0
    %548 = vmatpush1.msra.mxu0 %v112
    %549 = vmatprep.subr.mxu0 0.0
    %550 = vmatpush1.msra.mxu0 %v113
    %551 = vmatprep.subr.mxu0 0.0
    %552 = vmatpush1.msra.mxu0 %v114
    %553 = vmatprep.subr.mxu0 0.0
    %554 = vmatpush1.msra.mxu0 %v115
    %555 = vmatprep.subr.mxu0 0.0
    %556 = vmatpush1.msra.mxu0 %v116
    %557 = vmatprep.subr.mxu0 0.0
    %558 = vmatpush1.msra.mxu0 %v117
    %559 = vmatprep.subr.mxu0 0.0
    %560 = vmatpush1.msra.mxu0 %v118
    %561 = vmatprep.subr.mxu0 0.0
    %562 = vmatpush1.msra.mxu0 %v119
    %563 = vmatprep.subr.mxu0 0.0
    %564 = vmatpush1.msra.mxu0 %v120
    %565 = vmatprep.subr.mxu0 0.0
    %566 = vmatpush1.msra.mxu0 %v121
    %567 = vmatprep.subr.mxu0 0.0
    %568 = vmatpush1.msra.mxu0 %v122
    %569 = vmatprep.subr.mxu0 0.0
    %570 = vmatpush1.msra.mxu0 %v123
    %571 = vmatprep.subr.mxu0 0.0
    %572 = vmatpush1.msra.mxu0 %v124
    %573 = vmatprep.subr.mxu0 0.0
    %574 = vmatpush1.msra.mxu0 %v125
    %575 = vmatprep.subr.mxu0 0.0
    %576 = vmatpush1.msra.mxu0 %v126
    %577 = vmatprep.subr.mxu0 0.0
    %578 = vmatpush1.msra.mxu0 %v127
    %579 = vmatprep.subr.mxu0 0.0
    %580 = vmatpush1.msra.mxu0 %v128
    %581 = vmatprep.subr.mxu0 0.0
    %582 = vmatpush1.msra.mxu0 %v129
    %583 = vmatprep.subr.mxu0 0.0
    %584 = vmatpush1.msra.mxu0 %v130
    %585 = vmatprep.subr.mxu0 0.0
    %586 = vmatpush1.msra.mxu0 %v131
    %587 = vmatprep.subr.mxu0 0.0
    %588 = vmatpush1.msra.mxu0 %v132
    %589 = vmatprep.subr.mxu0 0.0
    %590 = vmatpush1.msra.mxu0 %v133
    %591 = vmatprep.subr.mxu0 0.0
    %592 = vmatpush1.msra.mxu0 %v134
    %593 = vmatprep.subr.mxu0 0.0
    %594 = vmatpush1.msra.mxu0 %v135
    %595 = vmatprep.mubr.f32.mxu0 %v339
    %596 = vmatmul.mubr.f32.gmra.mrb[0].mxu0 %v331
    %v597 = vpop.f32.mrb[0].mxu0
    %v598 = vadd.f32 %v528, %v597
    %v599 = vpop.f32.mrb[0].mxu0
    %600 = vdwg.mxu0
    %601 = vmatprep.subr.mxu0 0.0
    %602 = vmatpush1.msra.mxu0 %v136
    %603 = vmatprep.subr.mxu0 0.0
    %604 = vmatpush1.msra.mxu0 %v137
    %605 = vmatprep.subr.mxu0 0.0
    %606 = vmatpush1.msra.mxu0 %v138
    %607 = vmatprep.subr.mxu0 0.0
    %608 = vmatpush1.msra.mxu0 %v139
    %609 = vmatprep.subr.mxu0 0.0
    %610 = vmatpush1.msra.mxu0 %v140
    %611 = vmatprep.subr.mxu0 0.0
    %612 = vmatpush1.msra.mxu0 %v141
    %613 = vmatprep.subr.mxu0 0.0
    %614 = vmatpush1.msra.mxu0 %v142
    %615 = vmatprep.subr.mxu0 0.0
    %616 = vmatpush1.msra.mxu0 %v143
    %617 = vmatprep.subr.mxu0 0.0
    %618 = vmatpush1.msra.mxu0 %v144
    %619 = vmatprep.subr.mxu0 0.0
    %620 = vmatpush1.msra.mxu0 %v145
    %621 = vmatprep.subr.mxu0 0.0
    %622 = vmatpush1.msra.mxu0 %v146
    %623 = vmatprep.subr.mxu0 0.0
    %624 = vmatpush1.msra.mxu0 %v147
    %625 = vmatprep.subr.mxu0 0.0
    %626 = vmatpush1.msra.mxu0 %v148
    %627 = vmatprep.subr.mxu0 0.0
    %628 = vmatpush1.msra.mxu0 %v149
    %629 = vmatprep.subr.mxu0 0.0
    %630 = vmatpush1.msra.mxu0 %v150
    %631 = vmatprep.subr.mxu0 0.0
    %632 = vmatpush1.msra.mxu0 %v151
    %633 = vmatprep.subr.mxu0 0.0
    %634 = vmatpush1.msra.mxu0 %v152
    %635 = vmatprep.subr.mxu0 0.0
    %636 = vmatpush1.msra.mxu0 %v153
    %637 = vmatprep.subr.mxu0 0.0
    %638 = vmatpush1.msra.mxu0 %v154
    %639 = vmatprep.subr.mxu0 0.0
    %640 = vmatpush1.msra.mxu0 %v155
    %641 = vmatprep.subr.mxu0 0.0
    %642 = vmatpush1.msra.mxu0 %v156
    %643 = vmatprep.subr.mxu0 0.0
    %644 = vmatpush1.msra.mxu0 %v157
    %645 = vmatprep.subr.mxu0 0.0
    %646 = vmatpush1.msra.mxu0 %v158
    %647 = vmatprep.subr.mxu0 0.0
    %648 = vmatpush1.msra.mxu0 %v159
    %649 = vmatprep.subr.mxu0 0.0
    %650 = vmatpush1.msra.mxu0 %v160
    %651 = vmatprep.subr.mxu0 0.0
    %652 = vmatpush1.msra.mxu0 %v161
    %653 = vmatprep.subr.mxu0 0.0
    %654 = vmatpush1.msra.mxu0 %v162
    %655 = vmatprep.subr.mxu0 0.0
    %656 = vmatpush1.msra.mxu0 %v163
    %657 = vmatprep.subr.mxu0 0.0
    %658 = vmatpush1.msra.mxu0 %v164
    %659 = vmatprep.subr.mxu0 0.0
    %660 = vmatpush1.msra.mxu0 %v165
    %661 = vmatprep.subr.mxu0 0.0
    %662 = vmatpush1.msra.mxu0 %v166
    %663 = vmatprep.subr.mxu0 0.0
    %664 = vmatpush1.msra.mxu0 %v167
    %665 = vmatprep.mubr.f32.mxu0 %v340
    %666 = vmatmul.mubr.f32.gmra.mrb[0].mxu0 %v338
    %v667 = vpop.f32.mrb[0].mxu0
    %v668 = vadd.f32 %v598, %v667
    %v669 = vpop.f32.mrb[0].mxu0
    %670 = vdwg.mxu0
    %671 = vmatprep.subr.mxu0 0.0
    %672 = vmatpush1.msra.mxu0 %v168
    %673 = vmatprep.subr.mxu0 0.0
    %674 = vmatpush1.msra.mxu0 %v169
    %675 = vmatprep.subr.mxu0 0.0
    %676 = vmatpush1.msra.mxu0 %v170
    %677 = vmatprep.subr.mxu0 0.0
    %678 = vmatpush1.msra.mxu0 %v171
    %679 = vmatprep.subr.mxu0 0.0
    %680 = vmatpush1.msra.mxu0 %v172
    %681 = vmatprep.subr.mxu0 0.0
    %682 = vmatpush1.msra.mxu0 %v173
    %683 = vmatprep.subr.mxu0 0.0
    %684 = vmatpush1.msra.mxu0 %v174
    %685 = vmatprep.subr.mxu0 0.0
    %686 = vmatpush1.msra.mxu0 %v175
    %687 = vmatprep.subr.mxu0 0.0
    %688 = vmatpush1.msra.mxu0 %v176
    %689 = vmatprep.subr.mxu0 0.0
    %690 = vmatpush1.msra.mxu0 %v177
    %691 = vmatprep.subr.mxu0 0.0
    %692 = vmatpush1.msra.mxu0 %v178
    %693 = vmatprep.subr.mxu0 0.0
    %694 = vmatpush1.msra.mxu0 %v179
    %695 = vmatprep.subr.mxu0 0.0
    %696 = vmatpush1.msra.mxu0 %v180
    %697 = vmatprep.subr.mxu0 0.0
    %698 = vmatpush1.msra.mxu0 %v181
    %699 = vmatprep.subr.mxu0 0.0
    %700 = vmatpush1.msra.mxu0 %v182
    %701 = vmatprep.subr.mxu0 0.0
    %702 = vmatpush1.msra.mxu0 %v183
    %703 = vmatprep.subr.mxu0 0.0
    %704 = vmatpush1.msra.mxu0 %v184
    %705 = vmatprep.subr.mxu0 0.0
    %706 = vmatpush1.msra.mxu0 %v185
    %707 = vmatprep.subr.mxu0 0.0
    %708 = vmatpush1.msra.mxu0 %v186
    %709 = vmatprep.subr.mxu0 0.0
    %710 = vmatpush1.msra.mxu0 %v187
    %711 = vmatprep.subr.mxu0 0.0
    %712 = vmatpush1.msra.mxu0 %v188
    %713 = vmatprep.subr.mxu0 0.0
    %714 = vmatpush1.msra.mxu0 %v189
    %715 = vmatprep.subr.mxu0 0.0
    %716 = vmatpush1.msra.mxu0 %v190
    %717 = vmatprep.subr.mxu0 0.0
    %718 = vmatpush1.msra.mxu0 %v191
    %719 = vmatprep.subr.mxu0 0.0
    %720 = vmatpush1.msra.mxu0 %v192
    %721 = vmatprep.subr.mxu0 0.0
    %722 = vmatpush1.msra.mxu0 %v193
    %723 = vmatprep.subr.mxu0 0.0
    %724 = vmatpush1.msra.mxu0 %v194
    %725 = vmatprep.subr.mxu0 0.0
    %726 = vmatpush1.msra.mxu0 %v195
    %727 = vmatprep.subr.mxu0 0.0
    %728 = vmatpush1.msra.mxu0 %v196
    %729 = vmatprep.subr.mxu0 0.0
    %730 = vmatpush1.msra.mxu0 %v197
    %731 = vmatprep.subr.mxu0 0.0
    %732 = vmatpush1.msra.mxu0 %v198
    %733 = vmatprep.subr.mxu0 0.0
    %734 = vmatpush1.msra.mxu0 %v199
    %735 = vmatprep.mubr.f32.mxu0 %v356
    %736 = vmatmul.mubr.f32.gmra.mrb[0].mxu0 %v348
    %v737 = vpop.f32.mrb[0].mxu0
    %v738 = vadd.f32 %v668, %v737
    %v739 = vpop.f32.mrb[0].mxu0
    %740 = vdwg.mxu0
    %741 = vmatprep.subr.mxu0 0.0
    %742 = vmatpush1.msra.mxu0 %v200
    %743 = vmatprep.subr.mxu0 0.0
    %744 = vmatpush1.msra.mxu0 %v201
    %745 = vmatprep.subr.mxu0 0.0
    %746 = vmatpush1.msra.mxu0 %v202
    %747 = vmatprep.subr.mxu0 0.0
    %748 = vmatpush1.msra.mxu0 %v203
    %749 = vmatprep.subr.mxu0 0.0
    %750 = vmatpush1.msra.mxu0 %v204
    %751 = vmatprep.subr.mxu0 0.0
    %752 = vmatpush1.msra.mxu0 %v205
    %753 = vmatprep.subr.mxu0 0.0
    %754 = vmatpush1.msra.mxu0 %v206
    %755 = vmatprep.subr.mxu0 0.0
    %756 = vmatpush1.msra.mxu0 %v207
    %757 = vmatprep.subr.mxu0 0.0
    %758 = vmatpush1.msra.mxu0 %v208
    %759 = vmatprep.subr.mxu0 0.0
    %760 = vmatpush1.msra.mxu0 %v209
    %761 = vmatprep.subr.mxu0 0.0
    %762 = vmatpush1.msra.mxu0 %v210
    %763 = vmatprep.subr.mxu0 0.0
    %764 = vmatpush1.msra.mxu0 %v211
    %765 = vmatprep.subr.mxu0 0.0
    %766 = vmatpush1.msra.mxu0 %v212
    %767 = vmatprep.subr.mxu0 0.0
    %768 = vmatpush1.msra.mxu0 %v213
    %769 = vmatprep.subr.mxu0 0.0
    %770 = vmatpush1.msra.mxu0 %v214
    %771 = vmatprep.subr.mxu0 0.0
    %772 = vmatpush1.msra.mxu0 %v215
    %773 = vmatprep.subr.mxu0 0.0
    %774 = vmatpush1.msra.mxu0 %v216
    %775 = vmatprep.subr.mxu0 0.0
    %776 = vmatpush1.msra.mxu0 %v217
    %777 = vmatprep.subr.mxu0 0.0
    %778 = vmatpush1.msra.mxu0 %v218
    %779 = vmatprep.subr.mxu0 0.0
    %780 = vmatpush1.msra.mxu0 %v219
    %781 = vmatprep.subr.mxu0 0.0
    %782 = vmatpush1.msra.mxu0 %v220
    %783 = vmatprep.subr.mxu0 0.0
    %784 = vmatpush1.msra.mxu0 %v221
    %785 = vmatprep.subr.mxu0 0.0
    %786 = vmatpush1.msra.mxu0 %v222
    %787 = vmatprep.subr.mxu0 0.0
    %788 = vmatpush1.msra.mxu0 %v223
    %789 = vmatprep.subr.mxu0 0.0
    %790 = vmatpush1.msra.mxu0 %v224
    %791 = vmatprep.subr.mxu0 0.0
    %792 = vmatpush1.msra.mxu0 %v225
    %793 = vmatprep.subr.mxu0 0.0
    %794 = vmatpush1.msra.mxu0 %v226
    %795 = vmatprep.subr.mxu0 0.0
    %796 = vmatpush1.msra.mxu0 %v227
    %797 = vmatprep.subr.mxu0 0.0
    %798 = vmatpush1.msra.mxu0 %v228
    %799 = vmatprep.subr.mxu0 0.0
    %800 = vmatpush1.msra.mxu0 %v229
    %801 = vmatprep.subr.mxu0 0.0
    %802 = vmatpush1.msra.mxu0 %v230
    %803 = vmatprep.subr.mxu0 0.0
    %804 = vmatpush1.msra.mxu0 %v231
    %805 = vmatprep.mubr.f32.mxu0 %v357
    %806 = vmatmul.mubr.f32.gmra.mrb[0].mxu0 %v355
    %v807 = vpop.f32.mrb[0].mxu0
    %v808 = vadd.f32 %v738, %v807
    %v809 = vpop.f32.mrb[0].mxu0
    %810 = vdwg.mxu0
    %811 = vmatprep.subr.mxu0 0.0
    %812 = vmatpush1.msra.mxu0 %v232
    %813 = vmatprep.subr.mxu0 0.0
    %814 = vmatpush1.msra.mxu0 %v233
    %815 = vmatprep.subr.mxu0 0.0
    %816 = vmatpush1.msra.mxu0 %v234
    %817 = vmatprep.subr.mxu0 0.0
    %818 = vmatpush1.msra.mxu0 %v235
    %819 = vmatprep.subr.mxu0 0.0
    %820 = vmatpush1.msra.mxu0 %v236
    %821 = vmatprep.subr.mxu0 0.0
    %822 = vmatpush1.msra.mxu0 %v237
    %823 = vmatprep.subr.mxu0 0.0
    %824 = vmatpush1.msra.mxu0 %v238
    %825 = vmatprep.subr.mxu0 0.0
    %826 = vmatpush1.msra.mxu0 %v239
    %827 = vmatprep.subr.mxu0 0.0
    %828 = vmatpush1.msra.mxu0 %v240
    %829 = vmatprep.subr.mxu0 0.0
    %830 = vmatpush1.msra.mxu0 %v241
    %831 = vmatprep.subr.mxu0 0.0
    %832 = vmatpush1.msra.mxu0 %v242
    %833 = vmatprep.subr.mxu0 0.0
    %834 = vmatpush1.msra.mxu0 %v243
    %835 = vmatprep.subr.mxu0 0.0
    %836 = vmatpush1.msra.mxu0 %v244
    %837 = vmatprep.subr.mxu0 0.0
    %838 = vmatpush1.msra.mxu0 %v245
    %839 = vmatprep.subr.mxu0 0.0
    %840 = vmatpush1.msra.mxu0 %v246
    %841 = vmatprep.subr.mxu0 0.0
    %842 = vmatpush1.msra.mxu0 %v247
    %843 = vmatprep.subr.mxu0 0.0
    %844 = vmatpush1.msra.mxu0 %v248
    %845 = vmatprep.subr.mxu0 0.0
    %846 = vmatpush1.msra.mxu0 %v249
    %847 = vmatprep.subr.mxu0 0.0
    %848 = vmatpush1.msra.mxu0 %v250
    %849 = vmatprep.subr.mxu0 0.0
    %850 = vmatpush1.msra.mxu0 %v251
    %851 = vmatprep.subr.mxu0 0.0
    %852 = vmatpush1.msra.mxu0 %v252
    %853 = vmatprep.subr.mxu0 0.0
    %854 = vmatpush1.msra.mxu0 %v253
    %855 = vmatprep.subr.mxu0 0.0
    %856 = vmatpush1.msra.mxu0 %v254
    %857 = vmatprep.subr.mxu0 0.0
    %858 = vmatpush1.msra.mxu0 %v255
    %859 = vmatprep.subr.mxu0 0.0
    %860 = vmatpush1.msra.mxu0 %v256
    %861 = vmatprep.subr.mxu0 0.0
    %862 = vmatpush1.msra.mxu0 %v257
    %863 = vmatprep.subr.mxu0 0.0
    %864 = vmatpush1.msra.mxu0 %v258
    %865 = vmatprep.subr.mxu0 0.0
    %866 = vmatpush1.msra.mxu0 %v259
    %867 = vmatprep.subr.mxu0 0.0
    %868 = vmatpush1.msra.mxu0 %v260
    %869 = vmatprep.subr.mxu0 0.0
    %870 = vmatpush1.msra.mxu0 %v261
    %871 = vmatprep.subr.mxu0 0.0
    %872 = vmatpush1.msra.mxu0 %v262
    %873 = vmatprep.subr.mxu0 0.0
    %874 = vmatpush1.msra.mxu0 %v263
    %875 = vmatprep.mubr.f32.mxu0 %v373
    %876 = vmatmul.mubr.f32.gmra.mrb[0].mxu0 %v365
    %v877 = vpop.f32.mrb[0].mxu0
    %v878 = vadd.f32 %v808, %v877
    %v879 = vpop.f32.mrb[0].mxu0
    %880 = vdwg.mxu0
    %881 = vmatprep.subr.mxu0 0.0
    %882 = vmatpush1.msra.mxu0 %v264
    %883 = vmatprep.subr.mxu0 0.0
    %884 = vmatpush1.msra.mxu0 %v265
    %885 = vmatprep.subr.mxu0 0.0
    %886 = vmatpush1.msra.mxu0 %v266
    %887 = vmatprep.subr.mxu0 0.0
    %888 = vmatpush1.msra.mxu0 %v267
    %889 = vmatprep.subr.mxu0 0.0
    %890 = vmatpush1.msra.mxu0 %v268
    %891 = vmatprep.subr.mxu0 0.0
    %892 = vmatpush1.msra.mxu0 %v269
    %893 = vmatprep.subr.mxu0 0.0
    %894 = vmatpush1.msra.mxu0 %v270
    %895 = vmatprep.subr.mxu0 0.0
    %896 = vmatpush1.msra.mxu0 %v271
    %897 = vmatprep.subr.mxu0 0.0
    %898 = vmatpush1.msra.mxu0 %v272
    %899 = vmatprep.subr.mxu0 0.0
    %900 = vmatpush1.msra.mxu0 %v273
    %901 = vmatprep.subr.mxu0 0.0
    %902 = vmatpush1.msra.mxu0 %v274
    %903 = vmatprep.subr.mxu0 0.0
    %904 = vmatpush1.msra.mxu0 %v275
    %905 = vmatprep.subr.mxu0 0.0
    %906 = vmatpush1.msra.mxu0 %v276
    %907 = vmatprep.subr.mxu0 0.0
    %908 = vmatpush1.msra.mxu0 %v277
    %909 = vmatprep.subr.mxu0 0.0
    %910 = vmatpush1.msra.mxu0 %v278
    %911 = vmatprep.subr.mxu0 0.0
    %912 = vmatpush1.msra.mxu0 %v279
    %913 = vmatprep.subr.mxu0 0.0
    %914 = vmatpush1.msra.mxu0 %v280
    %915 = vmatprep.subr.mxu0 0.0
    %916 = vmatpush1.msra.mxu0 %v281
    %917 = vmatprep.subr.mxu0 0.0
    %918 = vmatpush1.msra.mxu0 %v282
    %919 = vmatprep.subr.mxu0 0.0
    %920 = vmatpush1.msra.mxu0 %v283
    %921 = vmatprep.subr.mxu0 0.0
    %922 = vmatpush1.msra.mxu0 %v284
    %923 = vmatprep.subr.mxu0 0.0
    %924 = vmatpush1.msra.mxu0 %v285
    %925 = vmatprep.subr.mxu0 0.0
    %926 = vmatpush1.msra.mxu0 %v286
    %927 = vmatprep.subr.mxu0 0.0
    %928 = vmatpush1.msra.mxu0 %v287
    %929 = vmatprep.subr.mxu0 0.0
    %930 = vmatpush1.msra.mxu0 %v288
    %931 = vmatprep.subr.mxu0 0.0
    %932 = vmatpush1.msra.mxu0 %v289
    %933 = vmatprep.subr.mxu0 0.0
    %934 = vmatpush1.msra.mxu0 %v290
    %935 = vmatprep.subr.mxu0 0.0
    %936 = vmatpush1.msra.mxu0 %v291
    %937 = vmatprep.subr.mxu0 0.0
    %938 = vmatpush1.msra.mxu0 %v292
    %939 = vmatprep.subr.mxu0 0.0
    %940 = vmatpush1.msra.mxu0 %v293
    %941 = vmatprep.subr.mxu0 0.0
    %942 = vmatpush1.msra.mxu0 %v294
    %943 = vmatprep.subr.mxu0 0.0
    %944 = vmatpush1.msra.mxu0 %v295
    %945 = vmatprep.mubr.f32.mxu0 %v374
    %946 = vmatmul.mubr.f32.gmra.mrb[0].mxu0 %v372
    %v947 = vpop.f32.mrb[0].mxu0
    %v948 = vadd.f32 %v878, %v947
    %v949 = vpop.f32.mrb[0].mxu0
    %950 = vdwg.mxu0
    %v951 = vmax.f32 %v948, 0.0
    %v952 = vld [vmem:[%s3] sm:$0xff]
    %v953 = vld [vmem:[%s3 + $0x8] sm:$0xff]
    %v954 = vld [vmem:[%s3 + $0x10] sm:$0xff]
    %v955 = vld [vmem:[%s3 + $0x18] sm:$0xff]
    %v956 = vld [vmem:[%s3 + $0x20] sm:$0xff]
    %v957 = vld [vmem:[%s3 + $0x28] sm:$0xff]
    %v958 = vld [vmem:[%s3 + $0x30] sm:$0xff]
    %v959 = vld [vmem:[%s3 + $0x38] sm:$0xff]
    %v960 = vld [vmem:[%s4] sm:$0x1]
    %v962 = vlaneseq
    %v963 = vshrl.u32 %v962, 7
    %v964 = vsub.s32 0, %v963
    %v965 = vrot.slane %v960, %v964
    %vm967 = vcmask 523264
    %v969 = vsel %vm967, %v951, 0
    %971 = vmatprep.subr.mxu0 0.0
    %972 = vmatpush1.msra.mxu0 %v952
    %973 = vmatprep.subr.mxu0 0.0
    %974 = vmatpush1.msra.mxu0 %v953
    %975 = vmatprep.subr.mxu0 0.0
    %976 = vmatpush1.msra.mxu0 %v954
    %977 = vmatprep.subr.mxu0 0.0
    %978 = vmatpush1.msra.mxu0 %v955
    %979 = vmatprep.subr.mxu0 0.0
    %980 = vmatpush1.msra.mxu0 %v956
    %981 = vmatprep.subr.mxu0 0.0
    %982 = vmatpush1.msra.mxu0 %v957
    %983 = vmatprep.subr.mxu0 0.0
    %984 = vmatpush1.msra.mxu0 %v958
    %985 = vmatprep.subr.mxu0 0.0
    %986 = vmatpush1.msra.mxu0 %v959
    %987 = vmatprep.subr.mxu0 0.0
    %988 = vmatpush1.msra.mxu0 0.0
    %989 = vmatprep.subr.mxu0 0.0
    %990 = vmatpush1.msra.mxu0 0.0
    %991 = vmatprep.subr.mxu0 0.0
    %992 = vmatpush1.msra.mxu0 0.0
    %993 = vmatprep.subr.mxu0 0.0
    %994 = vmatpush1.msra.mxu0 0.0
    %995 = vmatprep.subr.mxu0 0.0
    %996 = vmatpush1.msra.mxu0 0.0
    %997 = vmatprep.subr.mxu0 0.0
    %998 = vmatpush1.msra.mxu0 0.0
    %999 = vmatprep.subr.mxu0 0.0
    %1000 = vmatpush1.msra.mxu0 0.0
    %1001 = vmatprep.subr.mxu0 0.0
    %1002 = vmatpush1.msra.mxu0 0.0
    %1003 = vmatprep.subr.mxu0 0.0
    %1004 = vmatpush1.msra.mxu0 0.0
    %1005 = vmatprep.subr.mxu0 0.0
    %1006 = vmatpush1.msra.mxu0 0.0
    %1007 = vmatprep.subr.mxu0 0.0
    %1008 = vmatpush1.msra.mxu0 0.0
    %1009 = vmatprep.subr.mxu0 0.0
    %1010 = vmatpush1.msra.mxu0 0.0
    %1011 = vmatprep.subr.mxu0 0.0
    %1012 = vmatpush1.msra.mxu0 0.0
    %1013 = vmatprep.subr.mxu0 0.0
    %1014 = vmatpush1.msra.mxu0 0.0
    %1015 = vmatprep.subr.mxu0 0.0
    %1016 = vmatpush1.msra.mxu0 0.0
    %1017 = vmatprep.subr.mxu0 0.0
    %1018 = vmatpush1.msra.mxu0 0.0
    %1019 = vmatprep.subr.mxu0 0.0
    %1020 = vmatpush1.msra.mxu0 0.0
    %1021 = vmatprep.subr.mxu0 0.0
    %1022 = vmatpush1.msra.mxu0 0.0
    %1023 = vmatprep.subr.mxu0 0.0
    %1024 = vmatpush1.msra.mxu0 0.0
    %1025 = vmatprep.subr.mxu0 0.0
    %1026 = vmatpush1.msra.mxu0 0.0
    %1027 = vmatprep.subr.mxu0 0.0
    %1028 = vmatpush1.msra.mxu0 0.0
    %1029 = vmatprep.subr.mxu0 0.0
    %1030 = vmatpush1.msra.mxu0 0.0
    %1031 = vmatprep.subr.mxu0 0.0
    %1032 = vmatpush1.msra.mxu0 0.0
    %1033 = vmatprep.subr.mxu0 0.0
    %1034 = vmatpush1.msra.mxu0 0.0
    %1035 = vmatprep.mubr.f32.mxu0 0.0
    %1036 = vmatmul.mubr.f32.gmra.mrb[0].mxu0 %v969
    %v1037 = vpop.f32.mrb[0].mxu0
    %v1038 = vadd.f32 %v965, %v1037
    %v1039 = vpop.f32.mrb[0].mxu0
    %1040 = vdwg.mxu0
    %vm1041 = vcmask 58368
    %1042 = vst.msk [vmem:[#allocation4] sm:$0x3] %vm1041, %v1038
    %v1043 = vld [vmem:[%s5] sm:$0xff]
    %v1044 = vld [vmem:[%s6] sm:$0x1]
    %v1046 = vlaneseq
    %v1047 = vshrl.u32 %v1046, 7
    %v1048 = vsub.s32 0, %v1047
    %v1049 = vrot.slane %v1044, %v1048
    %vm1051 = vcmask 64512
    %v1053 = vsel %vm1051, %v1038, 0
    %1055 = vmatprep.subr.mxu0 0.0
    %1056 = vmatpush1.msra.mxu0 %v1043
    %1057 = vmatprep.subr.mxu0 0.0
    %1058 = vmatpush1.msra.mxu0 0.0
    %1059 = vmatprep.subr.mxu0 0.0
    %1060 = vmatpush1.msra.mxu0 0.0
    %1061 = vmatprep.subr.mxu0 0.0
    %1062 = vmatpush1.msra.mxu0 0.0
    %1063 = vmatprep.subr.mxu0 0.0
    %1064 = vmatpush1.msra.mxu0 0.0
    %1065 = vmatprep.subr.mxu0 0.0
    %1066 = vmatpush1.msra.mxu0 0.0
    %1067 = vmatprep.subr.mxu0 0.0
    %1068 = vmatpush1.msra.mxu0 0.0
    %1069 = vmatprep.subr.mxu0 0.0
    %1070 = vmatpush1.msra.mxu0 0.0
    %1071 = vmatprep.subr.mxu0 0.0
    %1072 = vmatpush1.msra.mxu0 0.0
    %1073 = vmatprep.subr.mxu0 0.0
    %1074 = vmatpush1.msra.mxu0 0.0
    %1075 = vmatprep.subr.mxu0 0.0
    %1076 = vmatpush1.msra.mxu0 0.0
    %1077 = vmatprep.subr.mxu0 0.0
    %1078 = vmatpush1.msra.mxu0 0.0
    %1079 = vmatprep.subr.mxu0 0.0
    %1080 = vmatpush1.msra.mxu0 0.0
    %1081 = vmatprep.subr.mxu0 0.0
    %1082 = vmatpush1.msra.mxu0 0.0
    %1083 = vmatprep.subr.mxu0 0.0
    %1084 = vmatpush1.msra.mxu0 0.0
    %1085 = vmatprep.subr.mxu0 0.0
    %1086 = vmatpush1.msra.mxu0 0.0
    %1087 = vmatprep.subr.mxu0 0.0
    %1088 = vmatpush1.msra.mxu0 0.0
    %1089 = vmatprep.subr.mxu0 0.0
    %1090 = vmatpush1.msra.mxu0 0.0
    %1091 = vmatprep.subr.mxu0 0.0
    %1092 = vmatpush1.msra.mxu0 0.0
    %1093 = vmatprep.subr.mxu0 0.0
    %1094 = vmatpush1.msra.mxu0 0.0
    %1095 = vmatprep.subr.mxu0 0.0
    %1096 = vmatpush1.msra.mxu0 0.0
    %1097 = vmatprep.subr.mxu0 0.0
    %1098 = vmatpush1.msra.mxu0 0.0
    %1099 = vmatprep.subr.mxu0 0.0
    %1100 = vmatpush1.msra.mxu0 0.0
    %1101 = vmatprep.subr.mxu0 0.0
    %1102 = vmatpush1.msra.mxu0 0.0
    %1103 = vmatprep.subr.mxu0 0.0
    %1104 = vmatpush1.msra.mxu0 0.0
    %1105 = vmatprep.subr.mxu0 0.0
    %1106 = vmatpush1.msra.mxu0 0.0
    %1107 = vmatprep.subr.mxu0 0.0
    %1108 = vmatpush1.msra.mxu0 0.0
    %1109 = vmatprep.subr.mxu0 0.0
    %1110 = vmatpush1.msra.mxu0 0.0
    %1111 = vmatprep.subr.mxu0 0.0
    %1112 = vmatpush1.msra.mxu0 0.0
    %1113 = vmatprep.subr.mxu0 0.0
    %1114 = vmatpush1.msra.mxu0 0.0
    %1115 = vmatprep.subr.mxu0 0.0
    %1116 = vmatpush1.msra.mxu0 0.0
    %1117 = vmatprep.subr.mxu0 0.0
    %1118 = vmatpush1.msra.mxu0 0.0
    %1119 = vmatprep.mubr.f32.mxu0 0.0
    %1120 = vmatmul.mubr.f32.gmra.mrb[0].mxu0 %v1053
    %v1121 = vpop.f32.mrb[0].mxu0
    %v1122 = vadd.f32 %v1049, %v1121
    %v1123 = vpop.f32.mrb[0].mxu0
    %1124 = vdwg.mxu0
    %v1125 = vmax.f32 %v1122, 0.0
    %v1126 = vld [vmem:[%s7] sm:$0xff]
    %v1127 = vld [vmem:[%s8] sm:$0x1]
    %v1129 = vlaneseq
    %v1130 = vshrl.u32 %v1129, 7
    %v1131 = vsub.s32 0, %v1130
    %v1132 = vrot.slane %v1127, %v1131
    %v1135 = vsel %vm1051, %v1125, 0
    %1137 = vmatprep.subr.mxu0 0.0
    %1138 = vmatpush1.msra.mxu0 %v1126
    %1139 = vmatprep.subr.mxu0 0.0
    %1140 = vmatpush1.msra.mxu0 0.0
    %1141 = vmatprep.subr.mxu0 0.0
    %1142 = vmatpush1.msra.mxu0 0.0
    %1143 = vmatprep.subr.mxu0 0.0
    %1144 = vmatpush1.msra.mxu0 0.0
    %1145 = vmatprep.subr.mxu0 0.0
    %1146 = vmatpush1.msra.mxu0 0.0
    %1147 = vmatprep.subr.mxu0 0.0
    %1148 = vmatpush1.msra.mxu0 0.0
    %1149 = vmatprep.subr.mxu0 0.0
    %1150 = vmatpush1.msra.mxu0 0.0
    %1151 = vmatprep.subr.mxu0 0.0
    %1152 = vmatpush1.msra.mxu0 0.0
    %1153 = vmatprep.subr.mxu0 0.0
    %1154 = vmatpush1.msra.mxu0 0.0
    %1155 = vmatprep.subr.mxu0 0.0
    %1156 = vmatpush1.msra.mxu0 0.0
    %1157 = vmatprep.subr.mxu0 0.0
    %1158 = vmatpush1.msra.mxu0 0.0
    %1159 = vmatprep.subr.mxu0 0.0
    %1160 = vmatpush1.msra.mxu0 0.0
    %1161 = vmatprep.subr.mxu0 0.0
    %1162 = vmatpush1.msra.mxu0 0.0
    %1163 = vmatprep.subr.mxu0 0.0
    %1164 = vmatpush1.msra.mxu0 0.0
    %1165 = vmatprep.subr.mxu0 0.0
    %1166 = vmatpush1.msra.mxu0 0.0
    %1167 = vmatprep.subr.mxu0 0.0
    %1168 = vmatpush1.msra.mxu0 0.0
    %1169 = vmatprep.subr.mxu0 0.0
    %1170 = vmatpush1.msra.mxu0 0.0
    %1171 = vmatprep.subr.mxu0 0.0
    %1172 = vmatpush1.msra.mxu0 0.0
    %1173 = vmatprep.subr.mxu0 0.0
    %1174 = vmatpush1.msra.mxu0 0.0
    %1175 = vmatprep.subr.mxu0 0.0
    %1176 = vmatpush1.msra.mxu0 0.0
    %1177 = vmatprep.subr.mxu0 0.0
    %1178 = vmatpush1.msra.mxu0 0.0
    %1179 = vmatprep.subr.mxu0 0.0
    %1180 = vmatpush1.msra.mxu0 0.0
    %1181 = vmatprep.subr.mxu0 0.0
    %1182 = vmatpush1.msra.mxu0 0.0
    %1183 = vmatprep.subr.mxu0 0.0
    %1184 = vmatpush1.msra.mxu0 0.0
    %1185 = vmatprep.subr.mxu0 0.0
    %1186 = vmatpush1.msra.mxu0 0.0
    %1187 = vmatprep.subr.mxu0 0.0
    %1188 = vmatpush1.msra.mxu0 0.0
    %1189 = vmatprep.subr.mxu0 0.0
    %1190 = vmatpush1.msra.mxu0 0.0
    %1191 = vmatprep.subr.mxu0 0.0
    %1192 = vmatpush1.msra.mxu0 0.0
    %1193 = vmatprep.subr.mxu0 0.0
    %1194 = vmatpush1.msra.mxu0 0.0
    %1195 = vmatprep.subr.mxu0 0.0
    %1196 = vmatpush1.msra.mxu0 0.0
    %1197 = vmatprep.subr.mxu0 0.0
    %1198 = vmatpush1.msra.mxu0 0.0
    %1199 = vmatprep.subr.mxu0 0.0
    %1200 = vmatpush1.msra.mxu0 0.0
    %1201 = vmatprep.mubr.f32.mxu0 0.0
    %1202 = vmatmul.mubr.f32.gmra.mrb[0].mxu0 %v1135
    %v1203 = vpop.f32.mrb[0].mxu0
    %v1204 = vadd.f32 %v1132, %v1203
    %v1205 = vpop.f32.mrb[0].mxu0
    %1206 = vdwg.mxu0
    %vm1207 = vcmask 33792
    %1208 = vst.msk [vmem:[#allocation2] sm:$0x3] %vm1207, %v1204
    // Predicated region
    $region38: #{shapes_cbm_forward.7} parent=1 // pred_check
      _
    $region39: #{shapes_cbm_forward.7} parent=1 // pred_check_branch
      %1210 = sbr.rel (0) target = $region41
    $region40: #{shapes_cbm_forward.7} parent=1 // pred_region
      %s1212 = ssub.s32 32, 32
      %1213 = vsyncadd [#allocation3], %s1212
      %s1215 = sshll.u32 [#allocation2], 4
      %s1216 = int_to_ptr.vmem [resolvable:$true] %s1215
      %1218 = dma.vmem_to_hbm [thread:$0]  %s1216, 32, %s9, [#allocation3]
    $region41: #{shapes_cbm_forward.7} parent=1 // pred_fallthru
      _
    // Predicated region
    $region42: #{shapes_cbm_forward.7} parent=1 // pred_check
      _
    $region43: #{shapes_cbm_forward.7} parent=1 // pred_check_branch
      %1220 = sbr.rel (0) target = $region45
    $region44: #{shapes_cbm_forward.7} parent=1 // pred_region
      %s1222 = ssub.s32 32, 32
      %1223 = vsyncadd [#allocation5], %s1222
      %s1225 = sshll.u32 [#allocation4], 4
      %s1226 = int_to_ptr.vmem [resolvable:$true] %s1225
      %1228 = dma.vmem_to_hbm [thread:$0]  %s1226, 32, %s10, [#allocation5]
    $region45: #{shapes_cbm_forward.7} parent=1 // pred_fallthru
      _
    // Predicated region
    $region46: #{shapes_cbm_forward.7} parent=1 // pred_check
      _
    $region47: #{shapes_cbm_forward.7} parent=1 // pred_check_branch
      %1230 = sbr.rel (0) target = $region49
    $region48: #{shapes_cbm_forward.7} parent=1 // pred_region
      %1231 = dma.done [#allocation3], 32
    $region49: #{shapes_cbm_forward.7} parent=1 // pred_fallthru
      _
    // Predicated region
    $region50: #{shapes_cbm_forward.7} parent=1 // pred_check
      _
    $region51: #{shapes_cbm_forward.7} parent=1 // pred_check_branch
      %1233 = sbr.rel (0) target = $region53
    $region52: #{shapes_cbm_forward.7} parent=1 // pred_region
      %1234 = dma.done [#allocation5], 32
    $region53: #{shapes_cbm_forward.7} parent=1 // pred_fallthru
      _
    %1235 = vsyncpa [#allocation3], 1
    %1236 = vsyncpa [#allocation5], 1

</llo_original>
